<compile_context>
chip_gen: v5e
topology: v5e:2x2
jax: 0.10.0
libtpu: 0.0.40
codegen_flags: <defaults>
</compile_context>

<pallas_src>
import jax
import jax.numpy as jnp
from jax.experimental import pallas as pl
from jax.experimental.pallas import tpu as pltpu

EPS = 1e-5


def color_transform_kernel(cols1_ref, w1_ref, b1_ref, g1_ref, be1_ref,
                           w2_ref, b2_ref, g2_ref, be2_ref,
                           w3_ref, b3_ref,
                           o_ref, p_ref):
    """cols1_ref: (B*H*W, 9*Cin) bf16  (layer-1 im2col, done in the wrapper)
    w1_ref:    (9*Cin, C1) bf16
    w2_ref:    (9*C1, C1)  bf16
    w3_ref:    (9*C1, C3pad=128) bf16 (output channels zero-padded)
    b*/g*/be*: (1, C) f32
    o_ref:     (B*H*W, 128) f32 lane-dense output
    p_ref:     (B, H+2, W+2, C1) f32 scratch, shared zero-halo activation buffer."""
    B, Hp, Wp, C1 = p_ref.shape
    H, W = Hp - 2, Wp - 2
    M = B * H * W

    def bn_relu(y, g, be):
        # Training-mode BatchNorm: batch mean / biased variance over (B, H, W),
        # all statistics in f32.
        mean = jnp.mean(y, axis=0, keepdims=True)
        var = jnp.mean(jnp.square(y - mean), axis=0, keepdims=True)
        yn = (y - mean) * jax.lax.rsqrt(var + EPS) * g + be
        return jnp.maximum(yn, 0.0)

    def im2col(p):
        # p: (B, H+2, W+2, C1) f32 value -> (M, 9*C1) bf16 patch matrix.
        patches = [p[:, dy:dy + H, dx:dx + W, :].reshape(M, C1)
                   for dy in range(3) for dx in range(3)]
        return jnp.concatenate(patches, axis=-1).astype(jnp.bfloat16)

    # Zero the scratch once; only the 1-pixel halo has to stay zero — the interior
    # is overwritten by each layer's activations.
    p_ref[...] = jnp.zeros_like(p_ref)

    # ---- layer 1: single (M, 27) @ (27, C1) matmul -> BN (batch stats) -> ReLU --
    y1 = jnp.dot(cols1_ref[...], w1_ref[...],
                 preferred_element_type=jnp.float32) + b1_ref[...]
    h1 = bn_relu(y1, g1_ref[...], be1_ref[...])
    p_ref[:, 1:H + 1, 1:W + 1, :] = h1.reshape(B, H, W, C1)

    # ---- layer 2: in-kernel im2col (K = 9*C1 = 576) -> single matmul -> BN/ReLU -
    y2 = jnp.dot(im2col(p_ref[...]), w2_ref[...],
                 preferred_element_type=jnp.float32) + b2_ref[...]
    h2 = bn_relu(y2, g2_ref[...], be2_ref[...])
    p_ref[:, 1:H + 1, 1:W + 1, :] = h2.reshape(B, H, W, C1)

    # ---- layer 3: single matmul into a lane-dense (M, 128) output --------------
    o_ref[...] = jnp.dot(im2col(p_ref[...]), w3_ref[...],
                         preferred_element_type=jnp.float32) + b3_ref[...]


def color_transform_forward(x_nchw, params):
    """x_nchw: (B, 3, H, W) float32.  Returns (B, 3, H, W) float32."""
    (w1, b1, g1, be1, w2, b2, g2, be2, w3, b3) = params
    B, Cin, H, W = x_nchw.shape
    C1 = w1.shape[-1]
    C3 = w3.shape[-1]
    C3P = 128  # pad conv3 output channels to a full lane tile (unmasked stores)

    # NCHW -> NHWC, zero pad, and layer-1 im2col (pure layout work) in the wrapper.
    x = jnp.transpose(x_nchw, (0, 2, 3, 1)).astype(jnp.float32)
    xp = jnp.pad(x, ((0, 0), (1, 1), (1, 1), (0, 0)))
    cols1 = jnp.concatenate(
        [xp[:, dy:dy + H, dx:dx + W, :] for dy in range(3) for dx in range(3)],
        axis=-1).reshape(B * H * W, 9 * Cin).astype(jnp.bfloat16)

    # Flatten conv weights to im2col layout (dy, dx, cin) x cout; bf16 for the MXU.
    w1f = w1.reshape(9 * Cin, C1).astype(jnp.bfloat16)
    w2f = w2.reshape(9 * C1, C1).astype(jnp.bfloat16)
    w3f = jnp.zeros((9 * C1, C3P), jnp.bfloat16).at[:, :C3].set(
        w3.reshape(9 * C1, C3).astype(jnp.bfloat16))
    b3p = jnp.zeros((1, C3P), jnp.float32).at[:, :C3].set(b3)

    out = pl.pallas_call(
        color_transform_kernel,
        out_shape=jax.ShapeDtypeStruct((B * H * W, C3P), jnp.float32),
        in_specs=[pl.BlockSpec(memory_space=pltpu.MemorySpace.VMEM)] * 11,
        out_specs=pl.BlockSpec(memory_space=pltpu.MemorySpace.VMEM),
        scratch_shapes=[
            pltpu.VMEM((B, H + 2, W + 2, C1), jnp.float32),
        ],
        compiler_params=pltpu.CompilerParams(
            vmem_limit_bytes=32 * 1024 * 1024),
    )(cols1, w1f, b1, g1, be1, w2f, b2, g2, be2, w3f, b3p)

    out = out[:, :C3].reshape(B, H, W, C3)
    return jnp.transpose(out, (0, 3, 1, 2))


def init_params(key):
    """Deterministic synthetic parameters matching ColorTransform.__init__ shapes.
    Conv weights stored as (3, 3, Cin, Cout) (HWIO); biases / BN params as (1, C)."""
    ks = jax.random.split(key, 8)
    w1 = 0.1 * jax.random.normal(ks[0], (3, 3, 3, 64), jnp.float32)
    b1 = 0.1 * jax.random.normal(ks[1], (1, 64), jnp.float32)
    g1 = 1.0 + 0.1 * jax.random.normal(ks[2], (1, 64), jnp.float32)
    be1 = 0.1 * jax.random.normal(ks[3], (1, 64), jnp.float32)
    w2 = 0.05 * jax.random.normal(ks[4], (3, 3, 64, 64), jnp.float32)
    b2 = 0.1 * jax.random.normal(ks[5], (1, 64), jnp.float32)
    g2 = 1.0 + 0.1 * jax.random.normal(ks[6], (1, 64), jnp.float32)
    be2 = 0.1 * jax.random.normal(ks[7], (1, 64), jnp.float32)
    k2 = jax.random.split(key, 3)
    w3 = 0.05 * jax.random.normal(k2[1], (3, 3, 64, 3), jnp.float32)
    b3 = 0.1 * jax.random.normal(k2[2], (1, 3), jnp.float32)
    return (w1, b1, g1, be1, w2, b2, g2, be2, w3, b3)


def reference_forward(x_nchw, params):
    """Pure-JAX f32 reference (same math as the PyTorch module in training mode)."""
    (w1, b1, g1, be1, w2, b2, g2, be2, w3, b3) = params
    x = jnp.transpose(x_nchw, (0, 2, 3, 1)).astype(jnp.float32)

    def conv(h, w, b):
        y = jax.lax.conv_general_dilated(
            h, w, window_strides=(1, 1), padding="SAME",
            dimension_numbers=("NHWC", "HWIO", "NHWC"))
        return y + b

    def bn_relu(h, g, be):
        m = jnp.mean(h, axis=(0, 1, 2), keepdims=True)
        v = jnp.mean((h - m) ** 2, axis=(0, 1, 2), keepdims=True)
        return jax.nn.relu((h - m) * jax.lax.rsqrt(v + EPS) * g + be)

    h = bn_relu(conv(x, w1, b1), g1, be1)
    h = bn_relu(conv(h, w2, b2), g2, be2)
    y = conv(h, w3, b3)
    return jnp.transpose(y, (0, 3, 1, 2))


if __name__ == "__main__":
    key = jax.random.PRNGKey(0)
    k_x, k_p = jax.random.split(key)

    B, C, H, W = 2, 3, 16, 16
    x = jax.random.normal(k_x, (B, C, H, W), jnp.float32)
    params = init_params(k_p)

    out = jax.block_until_ready(color_transform_forward(x, params))
    ref = jax.block_until_ready(reference_forward(x, params))

    assert out.shape == (B, 3, H, W), out.shape
    # bf16 MXU inputs (f32 accumulation) vs the pure-f32 reference: allow a
    # slightly looser tolerance than a pure-f32 kernel would need.
    max_err = float(jnp.max(jnp.abs(out - ref)))
    assert jnp.allclose(out, ref, rtol=3e-2, atol=3e-2), max_err

    print("KERNEL_OK")
</pallas_src>

<mosaic_0001>
module attributes {stable_mosaic.version = 11 : i64} {
  func.func @color_transform_kernel(%arg0: memref<512x27xbf16, #tpu.memory_space<vmem>>, %arg1: memref<27x64xbf16, #tpu.memory_space<vmem>>, %arg2: memref<1x64xf32, #tpu.memory_space<vmem>>, %arg3: memref<1x64xf32, #tpu.memory_space<vmem>>, %arg4: memref<1x64xf32, #tpu.memory_space<vmem>>, %arg5: memref<576x64xbf16, #tpu.memory_space<vmem>>, %arg6: memref<1x64xf32, #tpu.memory_space<vmem>>, %arg7: memref<1x64xf32, #tpu.memory_space<vmem>>, %arg8: memref<1x64xf32, #tpu.memory_space<vmem>>, %arg9: memref<576x128xbf16, #tpu.memory_space<vmem>>, %arg10: memref<1x128xf32, #tpu.memory_space<vmem>>, %arg11: memref<512x128xf32, #tpu.memory_space<vmem>>, %arg12: memref<2x18x18x64xf32, #tpu.memory_space<vmem>>) attributes {dimension_semantics = [], scalar_prefetch = 0 : i64, scratch_operands = 1 : i64, tpu.core_type = #tpu.core_type<tc>} {
    %cst = arith.constant 0.000000e+00 : f32
    %0 = vector.broadcast %cst : f32 to vector<2x18x18x64xf32>
    %c0 = arith.constant 0 : index
    %c0_0 = arith.constant 0 : index
    %c0_1 = arith.constant 0 : index
    %c0_2 = arith.constant 0 : index
    %1 = vector.load %arg12[%c0, %c0_0, %c0_1, %c0_2] : memref<2x18x18x64xf32, #tpu.memory_space<vmem>>, vector<2x18x18x64xf32>
    tpu.vector_store %arg12[%c0, %c0_0, %c0_1, %c0_2], %0 {strides = array<i32>} : memref<2x18x18x64xf32, #tpu.memory_space<vmem>>, vector<2x18x18x64xf32>,
    %c0_3 = arith.constant 0 : index
    %c0_4 = arith.constant 0 : index
    %2 = vector.load %arg0[%c0_3, %c0_4] : memref<512x27xbf16, #tpu.memory_space<vmem>>, vector<512x27xbf16>
    %c0_5 = arith.constant 0 : index
    %c0_6 = arith.constant 0 : index
    %3 = vector.load %arg1[%c0_5, %c0_6] : memref<27x64xbf16, #tpu.memory_space<vmem>>, vector<27x64xbf16>
    %cst_7 = arith.constant dense<0.000000e+00> : vector<512x64xf32>
    %4 = tpu.matmul %2, %3, %cst_7 {dimension_numbers = #tpu.dot_dimension_numbers<[1], [0], [0], [1], [0, 0, 1, 1], [], []>} : vector<512x27xbf16>, vector<27x64xbf16>, vector<512x64xf32> -> vector<512x64xf32>
    %c0_8 = arith.constant 0 : index
    %c0_9 = arith.constant 0 : index
    %5 = vector.load %arg2[%c0_8, %c0_9] : memref<1x64xf32, #tpu.memory_space<vmem>>, vector<1x64xf32>
    %6 = vector.broadcast %5 : vector<1x64xf32> to vector<512x64xf32>
    %7 = arith.addf %4, %6 : vector<512x64xf32>
    %c0_10 = arith.constant 0 : index
    %c0_11 = arith.constant 0 : index
    %8 = vector.load %arg3[%c0_10, %c0_11] : memref<1x64xf32, #tpu.memory_space<vmem>>, vector<1x64xf32>
    %c0_12 = arith.constant 0 : index
    %c0_13 = arith.constant 0 : index
    %9 = vector.load %arg4[%c0_12, %c0_13] : memref<1x64xf32, #tpu.memory_space<vmem>>, vector<1x64xf32>
    %cst_14 = arith.constant dense<0.000000e+00> : vector<64xf32>
    %10 = vector.multi_reduction <add>, %7, %cst_14 [0] : vector<512x64xf32> to vector<64xf32>
    %11 = vector.shape_cast %10 : vector<64xf32> to vector<1x64xf32>
    %cst_15 = arith.constant 5.120000e+02 : f32
    %12 = vector.broadcast %cst_15 : f32 to vector<1x64xf32>
    %13 = arith.divf %11, %12 : vector<1x64xf32>
    %14 = vector.broadcast %13 : vector<1x64xf32> to vector<512x64xf32>
    %15 = arith.subf %7, %14 : vector<512x64xf32>
    %16 = arith.mulf %15, %15 : vector<512x64xf32>
    %cst_16 = arith.constant dense<0.000000e+00> : vector<64xf32>
    %17 = vector.multi_reduction <add>, %16, %cst_16 [0] : vector<512x64xf32> to vector<64xf32>
    %18 = vector.shape_cast %17 : vector<64xf32> to vector<1x64xf32>
    %cst_17 = arith.constant 5.120000e+02 : f32
    %19 = vector.broadcast %cst_17 : f32 to vector<1x64xf32>
    %20 = arith.divf %18, %19 : vector<1x64xf32>
    %21 = vector.broadcast %13 : vector<1x64xf32> to vector<512x64xf32>
    %22 = arith.subf %7, %21 : vector<512x64xf32>
    %cst_18 = arith.constant 9.99999974E-6 : f32
    %23 = vector.broadcast %cst_18 : f32 to vector<1x64xf32>
    %24 = arith.addf %20, %23 : vector<1x64xf32>
    %25 = math.rsqrt %24 : vector<1x64xf32>
    %26 = vector.broadcast %25 : vector<1x64xf32> to vector<512x64xf32>
    %27 = arith.mulf %22, %26 : vector<512x64xf32>
    %28 = vector.broadcast %8 : vector<1x64xf32> to vector<512x64xf32>
    %29 = arith.mulf %27, %28 : vector<512x64xf32>
    %30 = vector.broadcast %9 : vector<1x64xf32> to vector<512x64xf32>
    %31 = arith.addf %29, %30 : vector<512x64xf32>
    %cst_19 = arith.constant 0.000000e+00 : f32
    %32 = vector.broadcast %cst_19 : f32 to vector<512x64xf32>
    %33 = arith.maximumf %31, %32 : vector<512x64xf32>
    %34 = vector.shape_cast %33 : vector<512x64xf32> to vector<2x16x16x64xf32>
    %c0_20 = arith.constant 0 : index
    %c1 = arith.constant 1 : index
    %c1_21 = arith.constant 1 : index
    %c0_22 = arith.constant 0 : index
    %35 = vector.load %arg12[%c0_20, %c1, %c1_21, %c0_22] : memref<2x18x18x64xf32, #tpu.memory_space<vmem>>, vector<2x16x16x64xf32>
    tpu.vector_store %arg12[%c0_20, %c1, %c1_21, %c0_22], %34 {strides = array<i32>} : memref<2x18x18x64xf32, #tpu.memory_space<vmem>>, vector<2x16x16x64xf32>,
    %c0_23 = arith.constant 0 : index
    %c0_24 = arith.constant 0 : index
    %c0_25 = arith.constant 0 : index
    %c0_26 = arith.constant 0 : index
    %36 = vector.load %arg12[%c0_23, %c0_24, %c0_25, %c0_26] : memref<2x18x18x64xf32, #tpu.memory_space<vmem>>, vector<2x18x18x64xf32>
    %37 = vector.extract_strided_slice %36 {offsets = [0, 0, 0, 0], sizes = [2, 16, 16, 64], strides = [1, 1, 1, 1]} : vector<2x18x18x64xf32> to vector<2x16x16x64xf32>
    %38 = vector.shape_cast %37 : vector<2x16x16x64xf32> to vector<512x64xf32>
    %39 = vector.extract_strided_slice %36 {offsets = [0, 0, 1, 0], sizes = [2, 16, 16, 64], strides = [1, 1, 1, 1]} : vector<2x18x18x64xf32> to vector<2x16x16x64xf32>
    %40 = vector.shape_cast %39 : vector<2x16x16x64xf32> to vector<512x64xf32>
    %41 = vector.extract_strided_slice %36 {offsets = [0, 0, 2, 0], sizes = [2, 16, 16, 64], strides = [1, 1, 1, 1]} : vector<2x18x18x64xf32> to vector<2x16x16x64xf32>
    %42 = vector.shape_cast %41 : vector<2x16x16x64xf32> to vector<512x64xf32>
    %43 = vector.extract_strided_slice %36 {offsets = [0, 1, 0, 0], sizes = [2, 16, 16, 64], strides = [1, 1, 1, 1]} : vector<2x18x18x64xf32> to vector<2x16x16x64xf32>
    %44 = vector.shape_cast %43 : vector<2x16x16x64xf32> to vector<512x64xf32>
    %45 = vector.extract_strided_slice %36 {offsets = [0, 1, 1, 0], sizes = [2, 16, 16, 64], strides = [1, 1, 1, 1]} : vector<2x18x18x64xf32> to vector<2x16x16x64xf32>
    %46 = vector.shape_cast %45 : vector<2x16x16x64xf32> to vector<512x64xf32>
    %47 = vector.extract_strided_slice %36 {offsets = [0, 1, 2, 0], sizes = [2, 16, 16, 64], strides = [1, 1, 1, 1]} : vector<2x18x18x64xf32> to vector<2x16x16x64xf32>
    %48 = vector.shape_cast %47 : vector<2x16x16x64xf32> to vector<512x64xf32>
    %49 = vector.extract_strided_slice %36 {offsets = [0, 2, 0, 0], sizes = [2, 16, 16, 64], strides = [1, 1, 1, 1]} : vector<2x18x18x64xf32> to vector<2x16x16x64xf32>
    %50 = vector.shape_cast %49 : vector<2x16x16x64xf32> to vector<512x64xf32>
    %51 = vector.extract_strided_slice %36 {offsets = [0, 2, 1, 0], sizes = [2, 16, 16, 64], strides = [1, 1, 1, 1]} : vector<2x18x18x64xf32> to vector<2x16x16x64xf32>
    %52 = vector.shape_cast %51 : vector<2x16x16x64xf32> to vector<512x64xf32>
    %53 = vector.extract_strided_slice %36 {offsets = [0, 2, 2, 0], sizes = [2, 16, 16, 64], strides = [1, 1, 1, 1]} : vector<2x18x18x64xf32> to vector<2x16x16x64xf32>
    %54 = vector.shape_cast %53 : vector<2x16x16x64xf32> to vector<512x64xf32>
    %55 = tpu.concatenate %38, %40, %42, %44, %46, %48, %50, %52, %54 in 1 : vector<512x64xf32>, vector<512x64xf32>, vector<512x64xf32>, vector<512x64xf32>, vector<512x64xf32>, vector<512x64xf32>, vector<512x64xf32>, vector<512x64xf32>, vector<512x64xf32> -> vector<512x576xf32>
    %56 = arith.truncf %55 : vector<512x576xf32> to vector<512x576xbf16>
    %c0_27 = arith.constant 0 : index
    %c0_28 = arith.constant 0 : index
    %57 = vector.load %arg5[%c0_27, %c0_28] : memref<576x64xbf16, #tpu.memory_space<vmem>>, vector<576x64xbf16>
    %cst_29 = arith.constant dense<0.000000e+00> : vector<512x64xf32>
    %58 = tpu.matmul %56, %57, %cst_29 {dimension_numbers = #tpu.dot_dimension_numbers<[1], [0], [0], [1], [0, 0, 1, 1], [], []>} : vector<512x576xbf16>, vector<576x64xbf16>, vector<512x64xf32> -> vector<512x64xf32>
    %c0_30 = arith.constant 0 : index
    %c0_31 = arith.constant 0 : index
    %59 = vector.load %arg6[%c0_30, %c0_31] : memref<1x64xf32, #tpu.memory_space<vmem>>, vector<1x64xf32>
    %60 = vector.broadcast %59 : vector<1x64xf32> to vector<512x64xf32>
    %61 = arith.addf %58, %60 : vector<512x64xf32>
    %c0_32 = arith.constant 0 : index
    %c0_33 = arith.constant 0 : index
    %62 = vector.load %arg7[%c0_32, %c0_33] : memref<1x64xf32, #tpu.memory_space<vmem>>, vector<1x64xf32>
    %c0_34 = arith.constant 0 : index
    %c0_35 = arith.constant 0 : index
    %63 = vector.load %arg8[%c0_34, %c0_35] : memref<1x64xf32, #tpu.memory_space<vmem>>, vector<1x64xf32>
    %cst_36 = arith.constant dense<0.000000e+00> : vector<64xf32>
    %64 = vector.multi_reduction <add>, %61, %cst_36 [0] : vector<512x64xf32> to vector<64xf32>
    %65 = vector.shape_cast %64 : vector<64xf32> to vector<1x64xf32>
    %cst_37 = arith.constant 5.120000e+02 : f32
    %66 = vector.broadcast %cst_37 : f32 to vector<1x64xf32>
    %67 = arith.divf %65, %66 : vector<1x64xf32>
    %68 = vector.broadcast %67 : vector<1x64xf32> to vector<512x64xf32>
    %69 = arith.subf %61, %68 : vector<512x64xf32>
    %70 = arith.mulf %69, %69 : vector<512x64xf32>
    %cst_38 = arith.constant dense<0.000000e+00> : vector<64xf32>
    %71 = vector.multi_reduction <add>, %70, %cst_38 [0] : vector<512x64xf32> to vector<64xf32>
    %72 = vector.shape_cast %71 : vector<64xf32> to vector<1x64xf32>
    %cst_39 = arith.constant 5.120000e+02 : f32
    %73 = vector.broadcast %cst_39 : f32 to vector<1x64xf32>
    %74 = arith.divf %72, %73 : vector<1x64xf32>
    %75 = vector.broadcast %67 : vector<1x64xf32> to vector<512x64xf32>
    %76 = arith.subf %61, %75 : vector<512x64xf32>
    %cst_40 = arith.constant 9.99999974E-6 : f32
    %77 = vector.broadcast %cst_40 : f32 to vector<1x64xf32>
    %78 = arith.addf %74, %77 : vector<1x64xf32>
    %79 = math.rsqrt %78 : vector<1x64xf32>
    %80 = vector.broadcast %79 : vector<1x64xf32> to vector<512x64xf32>
    %81 = arith.mulf %76, %80 : vector<512x64xf32>
    %82 = vector.broadcast %62 : vector<1x64xf32> to vector<512x64xf32>
    %83 = arith.mulf %81, %82 : vector<512x64xf32>
    %84 = vector.broadcast %63 : vector<1x64xf32> to vector<512x64xf32>
    %85 = arith.addf %83, %84 : vector<512x64xf32>
    %cst_41 = arith.constant 0.000000e+00 : f32
    %86 = vector.broadcast %cst_41 : f32 to vector<512x64xf32>
    %87 = arith.maximumf %85, %86 : vector<512x64xf32>
    %88 = vector.shape_cast %87 : vector<512x64xf32> to vector<2x16x16x64xf32>
    %c0_42 = arith.constant 0 : index
    %c1_43 = arith.constant 1 : index
    %c1_44 = arith.constant 1 : index
    %c0_45 = arith.constant 0 : index
    %89 = vector.load %arg12[%c0_42, %c1_43, %c1_44, %c0_45] : memref<2x18x18x64xf32, #tpu.memory_space<vmem>>, vector<2x16x16x64xf32>
    tpu.vector_store %arg12[%c0_42, %c1_43, %c1_44, %c0_45], %88 {strides = array<i32>} : memref<2x18x18x64xf32, #tpu.memory_space<vmem>>, vector<2x16x16x64xf32>,
    %c0_46 = arith.constant 0 : index
    %c0_47 = arith.constant 0 : index
    %c0_48 = arith.constant 0 : index
    %c0_49 = arith.constant 0 : index
    %90 = vector.load %arg12[%c0_46, %c0_47, %c0_48, %c0_49] : memref<2x18x18x64xf32, #tpu.memory_space<vmem>>, vector<2x18x18x64xf32>
    %91 = vector.extract_strided_slice %90 {offsets = [0, 0, 0, 0], sizes = [2, 16, 16, 64], strides = [1, 1, 1, 1]} : vector<2x18x18x64xf32> to vector<2x16x16x64xf32>
    %92 = vector.shape_cast %91 : vector<2x16x16x64xf32> to vector<512x64xf32>
    %93 = vector.extract_strided_slice %90 {offsets = [0, 0, 1, 0], sizes = [2, 16, 16, 64], strides = [1, 1, 1, 1]} : vector<2x18x18x64xf32> to vector<2x16x16x64xf32>
    %94 = vector.shape_cast %93 : vector<2x16x16x64xf32> to vector<512x64xf32>
    %95 = vector.extract_strided_slice %90 {offsets = [0, 0, 2, 0], sizes = [2, 16, 16, 64], strides = [1, 1, 1, 1]} : vector<2x18x18x64xf32> to vector<2x16x16x64xf32>
    %96 = vector.shape_cast %95 : vector<2x16x16x64xf32> to vector<512x64xf32>
    %97 = vector.extract_strided_slice %90 {offsets = [0, 1, 0, 0], sizes = [2, 16, 16, 64], strides = [1, 1, 1, 1]} : vector<2x18x18x64xf32> to vector<2x16x16x64xf32>
    %98 = vector.shape_cast %97 : vector<2x16x16x64xf32> to vector<512x64xf32>
    %99 = vector.extract_strided_slice %90 {offsets = [0, 1, 1, 0], sizes = [2, 16, 16, 64], strides = [1, 1, 1, 1]} : vector<2x18x18x64xf32> to vector<2x16x16x64xf32>
    %100 = vector.shape_cast %99 : vector<2x16x16x64xf32> to vector<512x64xf32>
    %101 = vector.extract_strided_slice %90 {offsets = [0, 1, 2, 0], sizes = [2, 16, 16, 64], strides = [1, 1, 1, 1]} : vector<2x18x18x64xf32> to vector<2x16x16x64xf32>
    %102 = vector.shape_cast %101 : vector<2x16x16x64xf32> to vector<512x64xf32>
    %103 = vector.extract_strided_slice %90 {offsets = [0, 2, 0, 0], sizes = [2, 16, 16, 64], strides = [1, 1, 1, 1]} : vector<2x18x18x64xf32> to vector<2x16x16x64xf32>
    %104 = vector.shape_cast %103 : vector<2x16x16x64xf32> to vector<512x64xf32>
    %105 = vector.extract_strided_slice %90 {offsets = [0, 2, 1, 0], sizes = [2, 16, 16, 64], strides = [1, 1, 1, 1]} : vector<2x18x18x64xf32> to vector<2x16x16x64xf32>
    %106 = vector.shape_cast %105 : vector<2x16x16x64xf32> to vector<512x64xf32>
    %107 = vector.extract_strided_slice %90 {offsets = [0, 2, 2, 0], sizes = [2, 16, 16, 64], strides = [1, 1, 1, 1]} : vector<2x18x18x64xf32> to vector<2x16x16x64xf32>
    %108 = vector.shape_cast %107 : vector<2x16x16x64xf32> to vector<512x64xf32>
    %109 = tpu.concatenate %92, %94, %96, %98, %100, %102, %104, %106, %108 in 1 : vector<512x64xf32>, vector<512x64xf32>, vector<512x64xf32>, vector<512x64xf32>, vector<512x64xf32>, vector<512x64xf32>, vector<512x64xf32>, vector<512x64xf32>, vector<512x64xf32> -> vector<512x576xf32>
    %110 = arith.truncf %109 : vector<512x576xf32> to vector<512x576xbf16>
    %c0_50 = arith.constant 0 : index
    %c0_51 = arith.constant 0 : index
    %111 = vector.load %arg9[%c0_50, %c0_51] : memref<576x128xbf16, #tpu.memory_space<vmem>>, vector<576x128xbf16>
    %cst_52 = arith.constant dense<0.000000e+00> : vector<512x128xf32>
    %112 = tpu.matmul %110, %111, %cst_52 {dimension_numbers = #tpu.dot_dimension_numbers<[1], [0], [0], [1], [0, 0, 1, 1], [], []>} : vector<512x576xbf16>, vector<576x128xbf16>, vector<512x128xf32> -> vector<512x128xf32>
    %c0_53 = arith.constant 0 : index
    %c0_54 = arith.constant 0 : index
    %113 = vector.load %arg10[%c0_53, %c0_54] : memref<1x128xf32, #tpu.memory_space<vmem>>, vector<1x128xf32>
    %114 = vector.broadcast %113 : vector<1x128xf32> to vector<512x128xf32>
    %115 = arith.addf %112, %114 : vector<512x128xf32>
    %c0_55 = arith.constant 0 : index
    %c0_56 = arith.constant 0 : index
    %116 = vector.load %arg11[%c0_55, %c0_56] : memref<512x128xf32, #tpu.memory_space<vmem>>, vector<512x128xf32>
    tpu.vector_store %arg11[%c0_55, %c0_56], %115 {strides = array<i32>} : memref<512x128xf32, #tpu.memory_space<vmem>>, vector<512x128xf32>,
    return
  }
}

</mosaic_0001>

<llo_original>
// kernel: tpu_custom_call.1
$region0: #{tpu_custom_call.1}
  #allocation0 [shape = 'u32[]', space=smem, size = 0x4, offset = 0x4, fixed_abs, tag = 'smem constant byte address 0x4 - core index']
  #allocation1 [shape = 'u32[72,128]{1,0:T(1,128)}', space=vmem, size = 0x9000, scoped, tag = 'internal scratch']
  #allocation2 [shape = 'f32[2,18,18,64]{3,2,1,0:T(8,128)}', space=vmem, size = 0x6c000, scoped, tag = 'scratch operand']
  %s0 = inlined_call_operand.vmem [shape: bf16[512,27], index: 0, kind: input, shape index: {}]
  %s1 = inlined_call_operand.vmem [shape: bf16[27,64], index: 1, kind: input, shape index: {}]
  %s2 = inlined_call_operand.vmem [shape: f32[1,64], index: 2, kind: input, shape index: {}]
  %s3 = inlined_call_operand.vmem [shape: f32[1,64], index: 3, kind: input, shape index: {}]
  %s4 = inlined_call_operand.vmem [shape: f32[1,64], index: 4, kind: input, shape index: {}]
  %s5 = inlined_call_operand.vmem [shape: bf16[576,64], index: 5, kind: input, shape index: {}]
  %s6 = inlined_call_operand.vmem [shape: f32[1,64], index: 6, kind: input, shape index: {}]
  %s7 = inlined_call_operand.vmem [shape: f32[1,64], index: 7, kind: input, shape index: {}]
  %s8 = inlined_call_operand.vmem [shape: f32[1,64], index: 8, kind: input, shape index: {}]
  %s9 = inlined_call_operand.vmem [shape: bf16[576,128], index: 9, kind: input, shape index: {}]
  %s10 = inlined_call_operand.vmem [shape: f32[1,128], index: 10, kind: input, shape index: {}]
  %s11 = inlined_call_operand.hbm [shape: f32[512,128], index: 11, kind: output, shape index: {}]
  %s12 = sld [smem:[#allocation0]]
  $region54: #{tpu_custom_call.1} parent=0
    _
  %s14 = ssub.s32 1, %s12
  %s15 = scalar_select 0, %s14, %s12
  $region1: #{tpu_custom_call.1} parent=0
    #allocation3 [shape = 'u8[262144]{0}', space=vmem, size = 0x40000, scoped, tag = 'output window, operand 0, single buffered']
    #allocation4 [shape = 's32[1]{0}', space=sflag, size = 0x4, scoped, tag = 'scoped memory for tpu_custom_call.1']
    %16 = vsyncpa [#allocation4], 0
    // Predicated region
    $region2: #{tpu_custom_call.1} parent=1 // pred_check
      _
    $region3: #{tpu_custom_call.1} parent=1 // pred_check_branch
      %18 = sbr.rel (0) target = $region5
    $region4: #{tpu_custom_call.1} parent=1 // pred_region
      _
    $region5: #{tpu_custom_call.1} parent=1 // pred_fallthru
      _
    // Predicated region
    $region6: #{tpu_custom_call.1} parent=1 // pred_check
      _
    $region7: #{tpu_custom_call.1} parent=1 // pred_check_branch
      %20 = sbr.rel (0) target = $region9
    $region8: #{tpu_custom_call.1} parent=1 // pred_region
      _
    $region9: #{tpu_custom_call.1} parent=1 // pred_fallthru
      _
    // Predicated region
    $region10: #{tpu_custom_call.1} parent=1 // pred_check
      _
    $region11: #{tpu_custom_call.1} parent=1 // pred_check_branch
      %22 = sbr.rel (0) target = $region13
    $region12: #{tpu_custom_call.1} parent=1 // pred_region
      _
    $region13: #{tpu_custom_call.1} parent=1 // pred_fallthru
      _
    // Predicated region
    $region14: #{tpu_custom_call.1} parent=1 // pred_check
      _
    $region15: #{tpu_custom_call.1} parent=1 // pred_check_branch
      %24 = sbr.rel (0) target = $region17
    $region16: #{tpu_custom_call.1} parent=1 // pred_region
      _
    $region17: #{tpu_custom_call.1} parent=1 // pred_fallthru
      _
    // Predicated region
    $region18: #{tpu_custom_call.1} parent=1 // pred_check
      _
    $region19: #{tpu_custom_call.1} parent=1 // pred_check_branch
      %26 = sbr.rel (0) target = $region21
    $region20: #{tpu_custom_call.1} parent=1 // pred_region
      _
    $region21: #{tpu_custom_call.1} parent=1 // pred_fallthru
      _
    // Predicated region
    $region22: #{tpu_custom_call.1} parent=1 // pred_check
      _
    $region23: #{tpu_custom_call.1} parent=1 // pred_check_branch
      %28 = sbr.rel (0) target = $region25
    $region24: #{tpu_custom_call.1} parent=1 // pred_region
      _
    $region25: #{tpu_custom_call.1} parent=1 // pred_fallthru
      _
    // Predicated region
    $region26: #{tpu_custom_call.1} parent=1 // pred_check
      _
    $region27: #{tpu_custom_call.1} parent=1 // pred_check_branch
      %30 = sbr.rel (0) target = $region29
    $region28: #{tpu_custom_call.1} parent=1 // pred_region
      _
    $region29: #{tpu_custom_call.1} parent=1 // pred_fallthru
      _
    // Predicated region
    $region30: #{tpu_custom_call.1} parent=1 // pred_check
      _
    $region31: #{tpu_custom_call.1} parent=1 // pred_check_branch
      %32 = sbr.rel (0) target = $region33
    $region32: #{tpu_custom_call.1} parent=1 // pred_region
      _
    $region33: #{tpu_custom_call.1} parent=1 // pred_fallthru
      _
    // Predicated region
    $region34: #{tpu_custom_call.1} parent=1 // pred_check
      _
    $region35: #{tpu_custom_call.1} parent=1 // pred_check_branch
      %34 = sbr.rel (0) target = $region37
    $region36: #{tpu_custom_call.1} parent=1 // pred_region
      _
    $region37: #{tpu_custom_call.1} parent=1 // pred_fallthru
      _
    // Predicated region
    $region38: #{tpu_custom_call.1} parent=1 // pred_check
      _
    $region39: #{tpu_custom_call.1} parent=1 // pred_check_branch
      %36 = sbr.rel (0) target = $region41
    $region40: #{tpu_custom_call.1} parent=1 // pred_region
      _
    $region41: #{tpu_custom_call.1} parent=1 // pred_fallthru
      _
    // Predicated region
    $region42: #{tpu_custom_call.1} parent=1 // pred_check
      _
    $region43: #{tpu_custom_call.1} parent=1 // pred_check_branch
      %38 = sbr.rel (0) target = $region45
    $region44: #{tpu_custom_call.1} parent=1 // pred_region
      _
    $region45: #{tpu_custom_call.1} parent=1 // pred_fallthru
      _
    %vm40 = vcmask 523264
    %41 = vst.msk [vmem:[#allocation2] sm:$0xff] %vm40, 0.0
    %42 = vst.msk [vmem:[#allocation2 + $0x8] sm:$0xff] %vm40, 0.0
    %vm43 = vcmask 517120
    %44 = vst.msk [vmem:[#allocation2 + $0x10] sm:$0x3] %vm43, 0.0
    %45 = vst.msk [vmem:[#allocation2 + $0x18] sm:$0xff] %vm40, 0.0
    %46 = vst.msk [vmem:[#allocation2 + $0x20] sm:$0xff] %vm40, 0.0
    %47 = vst.msk [vmem:[#allocation2 + $0x28] sm:$0x3] %vm43, 0.0
    %48 = vst.msk [vmem:[#allocation2 + $0x30] sm:$0xff] %vm40, 0.0
    %49 = vst.msk [vmem:[#allocation2 + $0x38] sm:$0xff] %vm40, 0.0
    %50 = vst.msk [vmem:[#allocation2 + $0x40] sm:$0x3] %vm43, 0.0
    %51 = vst.msk [vmem:[#allocation2 + $0x48] sm:$0xff] %vm40, 0.0
    %52 = vst.msk [vmem:[#allocation2 + $0x50] sm:$0xff] %vm40, 0.0
    %53 = vst.msk [vmem:[#allocation2 + $0x58] sm:$0x3] %vm43, 0.0
    %54 = vst.msk [vmem:[#allocation2 + $0x60] sm:$0xff] %vm40, 0.0
    %55 = vst.msk [vmem:[#allocation2 + $0x68] sm:$0xff] %vm40, 0.0
    %56 = vst.msk [vmem:[#allocation2 + $0x70] sm:$0x3] %vm43, 0.0
    %57 = vst.msk [vmem:[#allocation2 + $0x78] sm:$0xff] %vm40, 0.0
    %58 = vst.msk [vmem:[#allocation2 + $0x80] sm:$0xff] %vm40, 0.0
    %59 = vst.msk [vmem:[#allocation2 + $0x88] sm:$0x3] %vm43, 0.0
    %60 = vst.msk [vmem:[#allocation2 + $0x90] sm:$0xff] %vm40, 0.0
    %61 = vst.msk [vmem:[#allocation2 + $0x98] sm:$0xff] %vm40, 0.0
    %62 = vst.msk [vmem:[#allocation2 + $0xa0] sm:$0x3] %vm43, 0.0
    %63 = vst.msk [vmem:[#allocation2 + $0xa8] sm:$0xff] %vm40, 0.0
    %64 = vst.msk [vmem:[#allocation2 + $0xb0] sm:$0xff] %vm40, 0.0
    %65 = vst.msk [vmem:[#allocation2 + $0xb8] sm:$0x3] %vm43, 0.0
    %66 = vst.msk [vmem:[#allocation2 + $0xc0] sm:$0xff] %vm40, 0.0
    %67 = vst.msk [vmem:[#allocation2 + $0xc8] sm:$0xff] %vm40, 0.0
    %68 = vst.msk [vmem:[#allocation2 + $0xd0] sm:$0x3] %vm43, 0.0
    %69 = vst.msk [vmem:[#allocation2 + $0xd8] sm:$0xff] %vm40, 0.0
    %70 = vst.msk [vmem:[#allocation2 + $0xe0] sm:$0xff] %vm40, 0.0
    %71 = vst.msk [vmem:[#allocation2 + $0xe8] sm:$0x3] %vm43, 0.0
    %72 = vst.msk [vmem:[#allocation2 + $0xf0] sm:$0xff] %vm40, 0.0
    %73 = vst.msk [vmem:[#allocation2 + $0xf8] sm:$0xff] %vm40, 0.0
    %74 = vst.msk [vmem:[#allocation2 + $0x100] sm:$0x3] %vm43, 0.0
    %75 = vst.msk [vmem:[#allocation2 + $0x108] sm:$0xff] %vm40, 0.0
    %76 = vst.msk [vmem:[#allocation2 + $0x110] sm:$0xff] %vm40, 0.0
    %77 = vst.msk [vmem:[#allocation2 + $0x118] sm:$0x3] %vm43, 0.0
    %78 = vst.msk [vmem:[#allocation2 + $0x120] sm:$0xff] %vm40, 0.0
    %79 = vst.msk [vmem:[#allocation2 + $0x128] sm:$0xff] %vm40, 0.0
    %80 = vst.msk [vmem:[#allocation2 + $0x130] sm:$0x3] %vm43, 0.0
    %81 = vst.msk [vmem:[#allocation2 + $0x138] sm:$0xff] %vm40, 0.0
    %82 = vst.msk [vmem:[#allocation2 + $0x140] sm:$0xff] %vm40, 0.0
    %83 = vst.msk [vmem:[#allocation2 + $0x148] sm:$0x3] %vm43, 0.0
    %84 = vst.msk [vmem:[#allocation2 + $0x150] sm:$0xff] %vm40, 0.0
    %85 = vst.msk [vmem:[#allocation2 + $0x158] sm:$0xff] %vm40, 0.0
    %86 = vst.msk [vmem:[#allocation2 + $0x160] sm:$0x3] %vm43, 0.0
    %87 = vst.msk [vmem:[#allocation2 + $0x168] sm:$0xff] %vm40, 0.0
    %88 = vst.msk [vmem:[#allocation2 + $0x170] sm:$0xff] %vm40, 0.0
    %89 = vst.msk [vmem:[#allocation2 + $0x178] sm:$0x3] %vm43, 0.0
    %90 = vst.msk [vmem:[#allocation2 + $0x180] sm:$0xff] %vm40, 0.0
    %91 = vst.msk [vmem:[#allocation2 + $0x188] sm:$0xff] %vm40, 0.0
    %92 = vst.msk [vmem:[#allocation2 + $0x190] sm:$0x3] %vm43, 0.0
    %93 = vst.msk [vmem:[#allocation2 + $0x198] sm:$0xff] %vm40, 0.0
    %94 = vst.msk [vmem:[#allocation2 + $0x1a0] sm:$0xff] %vm40, 0.0
    %95 = vst.msk [vmem:[#allocation2 + $0x1a8] sm:$0x3] %vm43, 0.0
    %96 = vst.msk [vmem:[#allocation2 + $0x1b0] sm:$0xff] %vm40, 0.0
    %97 = vst.msk [vmem:[#allocation2 + $0x1b8] sm:$0xff] %vm40, 0.0
    %98 = vst.msk [vmem:[#allocation2 + $0x1c0] sm:$0x3] %vm43, 0.0
    %99 = vst.msk [vmem:[#allocation2 + $0x1c8] sm:$0xff] %vm40, 0.0
    %100 = vst.msk [vmem:[#allocation2 + $0x1d0] sm:$0xff] %vm40, 0.0
    %101 = vst.msk [vmem:[#allocation2 + $0x1d8] sm:$0x3] %vm43, 0.0
    %102 = vst.msk [vmem:[#allocation2 + $0x1e0] sm:$0xff] %vm40, 0.0
    %103 = vst.msk [vmem:[#allocation2 + $0x1e8] sm:$0xff] %vm40, 0.0
    %104 = vst.msk [vmem:[#allocation2 + $0x1f0] sm:$0x3] %vm43, 0.0
    %105 = vst.msk [vmem:[#allocation2 + $0x1f8] sm:$0xff] %vm40, 0.0
    %106 = vst.msk [vmem:[#allocation2 + $0x200] sm:$0xff] %vm40, 0.0
    %107 = vst.msk [vmem:[#allocation2 + $0x208] sm:$0x3] %vm43, 0.0
    %108 = vst.msk [vmem:[#allocation2 + $0x210] sm:$0xff] %vm40, 0.0
    %109 = vst.msk [vmem:[#allocation2 + $0x218] sm:$0xff] %vm40, 0.0
    %110 = vst.msk [vmem:[#allocation2 + $0x220] sm:$0x3] %vm43, 0.0
    %111 = vst.msk [vmem:[#allocation2 + $0x228] sm:$0xff] %vm40, 0.0
    %112 = vst.msk [vmem:[#allocation2 + $0x230] sm:$0xff] %vm40, 0.0
    %113 = vst.msk [vmem:[#allocation2 + $0x238] sm:$0x3] %vm43, 0.0
    %114 = vst.msk [vmem:[#allocation2 + $0x240] sm:$0xff] %vm40, 0.0
    %115 = vst.msk [vmem:[#allocation2 + $0x248] sm:$0xff] %vm40, 0.0
    %116 = vst.msk [vmem:[#allocation2 + $0x250] sm:$0x3] %vm43, 0.0
    %117 = vst.msk [vmem:[#allocation2 + $0x258] sm:$0xff] %vm40, 0.0
    %118 = vst.msk [vmem:[#allocation2 + $0x260] sm:$0xff] %vm40, 0.0
    %119 = vst.msk [vmem:[#allocation2 + $0x268] sm:$0x3] %vm43, 0.0
    %120 = vst.msk [vmem:[#allocation2 + $0x270] sm:$0xff] %vm40, 0.0
    %121 = vst.msk [vmem:[#allocation2 + $0x278] sm:$0xff] %vm40, 0.0
    %122 = vst.msk [vmem:[#allocation2 + $0x280] sm:$0x3] %vm43, 0.0
    %123 = vst.msk [vmem:[#allocation2 + $0x288] sm:$0xff] %vm40, 0.0
    %124 = vst.msk [vmem:[#allocation2 + $0x290] sm:$0xff] %vm40, 0.0
    %125 = vst.msk [vmem:[#allocation2 + $0x298] sm:$0x3] %vm43, 0.0
    %126 = vst.msk [vmem:[#allocation2 + $0x2a0] sm:$0xff] %vm40, 0.0
    %127 = vst.msk [vmem:[#allocation2 + $0x2a8] sm:$0xff] %vm40, 0.0
    %128 = vst.msk [vmem:[#allocation2 + $0x2b0] sm:$0x3] %vm43, 0.0
    %129 = vst.msk [vmem:[#allocation2 + $0x2b8] sm:$0xff] %vm40, 0.0
    %130 = vst.msk [vmem:[#allocation2 + $0x2c0] sm:$0xff] %vm40, 0.0
    %131 = vst.msk [vmem:[#allocation2 + $0x2c8] sm:$0x3] %vm43, 0.0
    %132 = vst.msk [vmem:[#allocation2 + $0x2d0] sm:$0xff] %vm40, 0.0
    %133 = vst.msk [vmem:[#allocation2 + $0x2d8] sm:$0xff] %vm40, 0.0
    %134 = vst.msk [vmem:[#allocation2 + $0x2e0] sm:$0x3] %vm43, 0.0
    %135 = vst.msk [vmem:[#allocation2 + $0x2e8] sm:$0xff] %vm40, 0.0
    %136 = vst.msk [vmem:[#allocation2 + $0x2f0] sm:$0xff] %vm40, 0.0
    %137 = vst.msk [vmem:[#allocation2 + $0x2f8] sm:$0x3] %vm43, 0.0
    %138 = vst.msk [vmem:[#allocation2 + $0x300] sm:$0xff] %vm40, 0.0
    %139 = vst.msk [vmem:[#allocation2 + $0x308] sm:$0xff] %vm40, 0.0
    %140 = vst.msk [vmem:[#allocation2 + $0x310] sm:$0x3] %vm43, 0.0
    %141 = vst.msk [vmem:[#allocation2 + $0x318] sm:$0xff] %vm40, 0.0
    %142 = vst.msk [vmem:[#allocation2 + $0x320] sm:$0xff] %vm40, 0.0
    %143 = vst.msk [vmem:[#allocation2 + $0x328] sm:$0x3] %vm43, 0.0
    %144 = vst.msk [vmem:[#allocation2 + $0x330] sm:$0xff] %vm40, 0.0
    %145 = vst.msk [vmem:[#allocation2 + $0x338] sm:$0xff] %vm40, 0.0
    %146 = vst.msk [vmem:[#allocation2 + $0x340] sm:$0x3] %vm43, 0.0
    %147 = vst.msk [vmem:[#allocation2 + $0x348] sm:$0xff] %vm40, 0.0
    %148 = vst.msk [vmem:[#allocation2 + $0x350] sm:$0xff] %vm40, 0.0
    %149 = vst.msk [vmem:[#allocation2 + $0x358] sm:$0x3] %vm43, 0.0
    %v150 = vld [vmem:[%s0] sm:$0xf]
    %v151 = vld [vmem:[%s0 + $0x4] sm:$0xf]
    %v152 = vld [vmem:[%s0 + $0x8] sm:$0xf]
    %v153 = vld [vmem:[%s0 + $0xc] sm:$0xf]
    %v154 = vld [vmem:[%s0 + $0x10] sm:$0xf]
    %v155 = vld [vmem:[%s0 + $0x14] sm:$0xf]
    %v156 = vld [vmem:[%s0 + $0x18] sm:$0xf]
    %v157 = vld [vmem:[%s0 + $0x1c] sm:$0xf]
    %v158 = vld [vmem:[%s0 + $0x20] sm:$0xf]
    %v159 = vld [vmem:[%s0 + $0x24] sm:$0xf]
    %v160 = vld [vmem:[%s0 + $0x28] sm:$0xf]
    %v161 = vld [vmem:[%s0 + $0x2c] sm:$0xf]
    %v162 = vld [vmem:[%s0 + $0x30] sm:$0xf]
    %v163 = vld [vmem:[%s0 + $0x34] sm:$0xf]
    %v164 = vld [vmem:[%s0 + $0x38] sm:$0xf]
    %v165 = vld [vmem:[%s0 + $0x3c] sm:$0xf]
    %v166 = vld [vmem:[%s0 + $0x40] sm:$0xf]
    %v167 = vld [vmem:[%s0 + $0x44] sm:$0xf]
    %v168 = vld [vmem:[%s0 + $0x48] sm:$0xf]
    %v169 = vld [vmem:[%s0 + $0x4c] sm:$0xf]
    %v170 = vld [vmem:[%s0 + $0x50] sm:$0xf]
    %v171 = vld [vmem:[%s0 + $0x54] sm:$0xf]
    %v172 = vld [vmem:[%s0 + $0x58] sm:$0xf]
    %v173 = vld [vmem:[%s0 + $0x5c] sm:$0xf]
    %v174 = vld [vmem:[%s0 + $0x60] sm:$0xf]
    %v175 = vld [vmem:[%s0 + $0x64] sm:$0xf]
    %v176 = vld [vmem:[%s0 + $0x68] sm:$0xf]
    %v177 = vld [vmem:[%s0 + $0x6c] sm:$0xf]
    %v178 = vld [vmem:[%s0 + $0x70] sm:$0xf]
    %v179 = vld [vmem:[%s0 + $0x74] sm:$0xf]
    %v180 = vld [vmem:[%s0 + $0x78] sm:$0xf]
    %v181 = vld [vmem:[%s0 + $0x7c] sm:$0xf]
    %v182 = vld [vmem:[%s0 + $0x80] sm:$0xf]
    %v183 = vld [vmem:[%s0 + $0x84] sm:$0xf]
    %v184 = vld [vmem:[%s0 + $0x88] sm:$0xf]
    %v185 = vld [vmem:[%s0 + $0x8c] sm:$0xf]
    %v186 = vld [vmem:[%s0 + $0x90] sm:$0xf]
    %v187 = vld [vmem:[%s0 + $0x94] sm:$0xf]
    %v188 = vld [vmem:[%s0 + $0x98] sm:$0xf]
    %v189 = vld [vmem:[%s0 + $0x9c] sm:$0xf]
    %v190 = vld [vmem:[%s0 + $0xa0] sm:$0xf]
    %v191 = vld [vmem:[%s0 + $0xa4] sm:$0xf]
    %v192 = vld [vmem:[%s0 + $0xa8] sm:$0xf]
    %v193 = vld [vmem:[%s0 + $0xac] sm:$0xf]
    %v194 = vld [vmem:[%s0 + $0xb0] sm:$0xf]
    %v195 = vld [vmem:[%s0 + $0xb4] sm:$0xf]
    %v196 = vld [vmem:[%s0 + $0xb8] sm:$0xf]
    %v197 = vld [vmem:[%s0 + $0xbc] sm:$0xf]
    %v198 = vld [vmem:[%s0 + $0xc0] sm:$0xf]
    %v199 = vld [vmem:[%s0 + $0xc4] sm:$0xf]
    %v200 = vld [vmem:[%s0 + $0xc8] sm:$0xf]
    %v201 = vld [vmem:[%s0 + $0xcc] sm:$0xf]
    %v202 = vld [vmem:[%s0 + $0xd0] sm:$0xf]
    %v203 = vld [vmem:[%s0 + $0xd4] sm:$0xf]
    %v204 = vld [vmem:[%s0 + $0xd8] sm:$0xf]
    %v205 = vld [vmem:[%s0 + $0xdc] sm:$0xf]
    %v206 = vld [vmem:[%s0 + $0xe0] sm:$0xf]
    %v207 = vld [vmem:[%s0 + $0xe4] sm:$0xf]
    %v208 = vld [vmem:[%s0 + $0xe8] sm:$0xf]
    %v209 = vld [vmem:[%s0 + $0xec] sm:$0xf]
    %v210 = vld [vmem:[%s0 + $0xf0] sm:$0xf]
    %v211 = vld [vmem:[%s0 + $0xf4] sm:$0xf]
    %v212 = vld [vmem:[%s0 + $0xf8] sm:$0xf]
    %v213 = vld [vmem:[%s0 + $0xfc] sm:$0xf]
    %v214 = vld [vmem:[%s1] sm:$0xf]
    %v215 = vld [vmem:[%s1 + $0x4] sm:$0xf]
    %v216 = vld [vmem:[%s1 + $0x8] sm:$0xf]
    %v217 = vld [vmem:[%s1 + $0xc] sm:$0x3]
    %v218 = vld [vmem:[%s2] sm:$0x1]
    %v220 = vperm.slane %v218, 0
    %v286 = vunpack.c.l.b16 %v150
    %v287 = vunpack.c.l.b16 %v151
    %v288 = vunpack.c.l.b16 %v152
    %v289 = vunpack.c.l.b16 %v153
    %v290 = vunpack.c.l.b16 %v154
    %v291 = vunpack.c.l.b16 %v155
    %v292 = vunpack.c.l.b16 %v156
    %v293 = vunpack.c.l.b16 %v157
    %v294 = vunpack.c.l.b16 %v158
    %v295 = vunpack.c.l.b16 %v159
    %v296 = vunpack.c.l.b16 %v160
    %v297 = vunpack.c.l.b16 %v161
    %v298 = vunpack.c.l.b16 %v162
    %v299 = vunpack.c.l.b16 %v163
    %v300 = vunpack.c.l.b16 %v164
    %v301 = vunpack.c.l.b16 %v165
    %v302 = vunpack.c.l.b16 %v166
    %v303 = vunpack.c.l.b16 %v167
    %v304 = vunpack.c.l.b16 %v168
    %v305 = vunpack.c.l.b16 %v169
    %v306 = vunpack.c.l.b16 %v170
    %v307 = vunpack.c.l.b16 %v171
    %v308 = vunpack.c.l.b16 %v172
    %v309 = vunpack.c.l.b16 %v173
    %v310 = vunpack.c.l.b16 %v174
    %v311 = vunpack.c.l.b16 %v175
    %v312 = vunpack.c.l.b16 %v176
    %v313 = vunpack.c.l.b16 %v177
    %v314 = vunpack.c.l.b16 %v178
    %v315 = vunpack.c.l.b16 %v179
    %v316 = vunpack.c.l.b16 %v180
    %v317 = vunpack.c.l.b16 %v181
    %v318 = vunpack.c.l.b16 %v182
    %v319 = vunpack.c.l.b16 %v183
    %v320 = vunpack.c.l.b16 %v184
    %v321 = vunpack.c.l.b16 %v185
    %v322 = vunpack.c.l.b16 %v186
    %v323 = vunpack.c.l.b16 %v187
    %v324 = vunpack.c.l.b16 %v188
    %v325 = vunpack.c.l.b16 %v189
    %v326 = vunpack.c.l.b16 %v190
    %v327 = vunpack.c.l.b16 %v191
    %v328 = vunpack.c.l.b16 %v192
    %v329 = vunpack.c.l.b16 %v193
    %v330 = vunpack.c.l.b16 %v194
    %v331 = vunpack.c.l.b16 %v195
    %v332 = vunpack.c.l.b16 %v196
    %v333 = vunpack.c.l.b16 %v197
    %v334 = vunpack.c.l.b16 %v198
    %v335 = vunpack.c.l.b16 %v199
    %v336 = vunpack.c.l.b16 %v200
    %v337 = vunpack.c.l.b16 %v201
    %v338 = vunpack.c.l.b16 %v202
    %v339 = vunpack.c.l.b16 %v203
    %v340 = vunpack.c.l.b16 %v204
    %v341 = vunpack.c.l.b16 %v205
    %v342 = vunpack.c.l.b16 %v206
    %v343 = vunpack.c.l.b16 %v207
    %v344 = vunpack.c.l.b16 %v208
    %v345 = vunpack.c.l.b16 %v209
    %v346 = vunpack.c.l.b16 %v210
    %v347 = vunpack.c.l.b16 %v211
    %v348 = vunpack.c.l.b16 %v212
    %v349 = vunpack.c.l.b16 %v213
    %v350 = vpack.c.b16 %v287, %v286
    %v351 = vpack.c.b16 %v289, %v288
    %v352 = vpack.c.b16 %v291, %v290
    %v353 = vpack.c.b16 %v293, %v292
    %v354 = vpack.c.b16 %v295, %v294
    %v355 = vpack.c.b16 %v297, %v296
    %v356 = vpack.c.b16 %v299, %v298
    %v357 = vpack.c.b16 %v301, %v300
    %v358 = vpack.c.b16 %v303, %v302
    %v359 = vpack.c.b16 %v305, %v304
    %v360 = vpack.c.b16 %v307, %v306
    %v361 = vpack.c.b16 %v309, %v308
    %v362 = vpack.c.b16 %v311, %v310
    %v363 = vpack.c.b16 %v313, %v312
    %v364 = vpack.c.b16 %v315, %v314
    %v365 = vpack.c.b16 %v317, %v316
    %v366 = vpack.c.b16 %v319, %v318
    %v367 = vpack.c.b16 %v321, %v320
    %v368 = vpack.c.b16 %v323, %v322
    %v369 = vpack.c.b16 %v325, %v324
    %v370 = vpack.c.b16 %v327, %v326
    %v371 = vpack.c.b16 %v329, %v328
    %v372 = vpack.c.b16 %v331, %v330
    %v373 = vpack.c.b16 %v333, %v332
    %v374 = vpack.c.b16 %v335, %v334
    %v375 = vpack.c.b16 %v337, %v336
    %v376 = vpack.c.b16 %v339, %v338
    %v377 = vpack.c.b16 %v341, %v340
    %v378 = vpack.c.b16 %v343, %v342
    %v379 = vpack.c.b16 %v345, %v344
    %v380 = vpack.c.b16 %v347, %v346
    %v381 = vpack.c.b16 %v349, %v348
    %v386 = vunpack.c.l.b16 %v214
    %v387 = vunpack.c.l.b16 %v215
    %v388 = vunpack.c.l.b16 %v216
    %v389 = vunpack.c.l.b16 %v217
    %v390 = vpack.c.b16 %v387, %v386
    %v391 = vpack.c.b16 %v389, %v388
    %vm393 = vcmask 220160
    %v395 = vsel %vm393, %v350, 0
    %v398 = vsel %vm393, %v351, 0
    %v401 = vsel %vm393, %v352, 0
    %v404 = vsel %vm393, %v353, 0
    %v407 = vsel %vm393, %v354, 0
    %v410 = vsel %vm393, %v355, 0
    %v413 = vsel %vm393, %v356, 0
    %v416 = vsel %vm393, %v357, 0
    %v419 = vsel %vm393, %v358, 0
    %v422 = vsel %vm393, %v359, 0
    %v425 = vsel %vm393, %v360, 0
    %v428 = vsel %vm393, %v361, 0
    %v431 = vsel %vm393, %v362, 0
    %v434 = vsel %vm393, %v363, 0
    %v437 = vsel %vm393, %v364, 0
    %v440 = vsel %vm393, %v365, 0
    %v443 = vsel %vm393, %v366, 0
    %v446 = vsel %vm393, %v367, 0
    %v449 = vsel %vm393, %v368, 0
    %v452 = vsel %vm393, %v369, 0
    %v455 = vsel %vm393, %v370, 0
    %v458 = vsel %vm393, %v371, 0
    %v461 = vsel %vm393, %v372, 0
    %v464 = vsel %vm393, %v373, 0
    %v467 = vsel %vm393, %v374, 0
    %v470 = vsel %vm393, %v375, 0
    %v473 = vsel %vm393, %v376, 0
    %v476 = vsel %vm393, %v377, 0
    %v479 = vsel %vm393, %v378, 0
    %v482 = vsel %vm393, %v379, 0
    %v485 = vsel %vm393, %v380, 0
    %v488 = vsel %vm393, %v381, 0
    %vm490 = vcmask 1044480
    %vm491 = vcmask 1045504
    %v492 = vsel %vm490, 4294967295, 65535
    %v493 = vsel %vm491, %v492, 0
    %v495 = vand.u32 %v391, %v493
    %497 = vmatpush.bf16.msra.mxu0 0
    %498 = vmatpush.bf16.msra.mxu0 0
    %499 = vmatpush.bf16.msra.mxu0 0
    %500 = vmatpush.bf16.msra.mxu0 0
    %501 = vmatpush.bf16.msra.mxu0 0
    %502 = vmatpush.bf16.msra.mxu0 0
    %503 = vmatpush.bf16.msra.mxu0 %v495
    %504 = vmatpush.bf16.msra.mxu0 %v390
    %505 = vmatmul.bf16.gmra.mxu0 %v395
    %v506 = vpop.f32.mrf.mxu0
    %v507 = vadd.f32 %v220, %v506
    %v508 = vpop.f32.mrf.mxu0
    %v509 = vadd.f32 %v220, %v508
    %510 = vmatmul.bf16.gmra.mxu0 %v398
    %v511 = vpop.f32.mrf.mxu0
    %v512 = vadd.f32 %v220, %v511
    %v513 = vpop.f32.mrf.mxu0
    %v514 = vadd.f32 %v220, %v513
    %515 = vmatmul.bf16.gmra.mxu0 %v401
    %v516 = vpop.f32.mrf.mxu0
    %v517 = vadd.f32 %v220, %v516
    %v518 = vpop.f32.mrf.mxu0
    %v519 = vadd.f32 %v220, %v518
    %520 = vmatmul.bf16.gmra.mxu0 %v404
    %v521 = vpop.f32.mrf.mxu0
    %v522 = vadd.f32 %v220, %v521
    %v523 = vpop.f32.mrf.mxu0
    %v524 = vadd.f32 %v220, %v523
    %525 = vmatmul.bf16.gmra.mxu0 %v407
    %v526 = vpop.f32.mrf.mxu0
    %v527 = vadd.f32 %v220, %v526
    %v528 = vpop.f32.mrf.mxu0
    %v529 = vadd.f32 %v220, %v528
    %530 = vmatmul.bf16.gmra.mxu0 %v410
    %v531 = vpop.f32.mrf.mxu0
    %v532 = vadd.f32 %v220, %v531
    %v533 = vpop.f32.mrf.mxu0
    %v534 = vadd.f32 %v220, %v533
    %535 = vmatmul.bf16.gmra.mxu0 %v413
    %v536 = vpop.f32.mrf.mxu0
    %v537 = vadd.f32 %v220, %v536
    %v538 = vpop.f32.mrf.mxu0
    %v539 = vadd.f32 %v220, %v538
    %540 = vmatmul.bf16.gmra.mxu0 %v416
    %v541 = vpop.f32.mrf.mxu0
    %v542 = vadd.f32 %v220, %v541
    %v543 = vpop.f32.mrf.mxu0
    %v544 = vadd.f32 %v220, %v543
    %545 = vmatmul.bf16.gmra.mxu0 %v419
    %v546 = vpop.f32.mrf.mxu0
    %v547 = vadd.f32 %v220, %v546
    %v548 = vpop.f32.mrf.mxu0
    %v549 = vadd.f32 %v220, %v548
    %550 = vmatmul.bf16.gmra.mxu0 %v422
    %v551 = vpop.f32.mrf.mxu0
    %v552 = vadd.f32 %v220, %v551
    %v553 = vpop.f32.mrf.mxu0
    %v554 = vadd.f32 %v220, %v553
    %555 = vmatmul.bf16.gmra.mxu0 %v425
    %v556 = vpop.f32.mrf.mxu0
    %v557 = vadd.f32 %v220, %v556
    %v558 = vpop.f32.mrf.mxu0
    %v559 = vadd.f32 %v220, %v558
    %560 = vmatmul.bf16.gmra.mxu0 %v428
    %v561 = vpop.f32.mrf.mxu0
    %v562 = vadd.f32 %v220, %v561
    %v563 = vpop.f32.mrf.mxu0
    %v564 = vadd.f32 %v220, %v563
    %565 = vmatmul.bf16.gmra.mxu0 %v431
    %v566 = vpop.f32.mrf.mxu0
    %v567 = vadd.f32 %v220, %v566
    %v568 = vpop.f32.mrf.mxu0
    %v569 = vadd.f32 %v220, %v568
    %570 = vmatmul.bf16.gmra.mxu0 %v434
    %v571 = vpop.f32.mrf.mxu0
    %v572 = vadd.f32 %v220, %v571
    %v573 = vpop.f32.mrf.mxu0
    %v574 = vadd.f32 %v220, %v573
    %575 = vmatmul.bf16.gmra.mxu0 %v437
    %v576 = vpop.f32.mrf.mxu0
    %v577 = vadd.f32 %v220, %v576
    %v578 = vpop.f32.mrf.mxu0
    %v579 = vadd.f32 %v220, %v578
    %580 = vmatmul.bf16.gmra.mxu0 %v440
    %v581 = vpop.f32.mrf.mxu0
    %v582 = vadd.f32 %v220, %v581
    %v583 = vpop.f32.mrf.mxu0
    %v584 = vadd.f32 %v220, %v583
    %585 = vmatmul.bf16.gmra.mxu0 %v443
    %v586 = vpop.f32.mrf.mxu0
    %v587 = vadd.f32 %v220, %v586
    %v588 = vpop.f32.mrf.mxu0
    %v589 = vadd.f32 %v220, %v588
    %590 = vmatmul.bf16.gmra.mxu0 %v446
    %v591 = vpop.f32.mrf.mxu0
    %v592 = vadd.f32 %v220, %v591
    %v593 = vpop.f32.mrf.mxu0
    %v594 = vadd.f32 %v220, %v593
    %595 = vmatmul.bf16.gmra.mxu0 %v449
    %v596 = vpop.f32.mrf.mxu0
    %v597 = vadd.f32 %v220, %v596
    %v598 = vpop.f32.mrf.mxu0
    %v599 = vadd.f32 %v220, %v598
    %600 = vmatmul.bf16.gmra.mxu0 %v452
    %v601 = vpop.f32.mrf.mxu0
    %v602 = vadd.f32 %v220, %v601
    %v603 = vpop.f32.mrf.mxu0
    %v604 = vadd.f32 %v220, %v603
    %605 = vmatmul.bf16.gmra.mxu0 %v455
    %v606 = vpop.f32.mrf.mxu0
    %v607 = vadd.f32 %v220, %v606
    %v608 = vpop.f32.mrf.mxu0
    %v609 = vadd.f32 %v220, %v608
    %610 = vmatmul.bf16.gmra.mxu0 %v458
    %v611 = vpop.f32.mrf.mxu0
    %v612 = vadd.f32 %v220, %v611
    %v613 = vpop.f32.mrf.mxu0
    %v614 = vadd.f32 %v220, %v613
    %615 = vmatmul.bf16.gmra.mxu0 %v461
    %v616 = vpop.f32.mrf.mxu0
    %v617 = vadd.f32 %v220, %v616
    %v618 = vpop.f32.mrf.mxu0
    %v619 = vadd.f32 %v220, %v618
    %620 = vmatmul.bf16.gmra.mxu0 %v464
    %v621 = vpop.f32.mrf.mxu0
    %v622 = vadd.f32 %v220, %v621
    %v623 = vpop.f32.mrf.mxu0
    %v624 = vadd.f32 %v220, %v623
    %625 = vmatmul.bf16.gmra.mxu0 %v467
    %v626 = vpop.f32.mrf.mxu0
    %v627 = vadd.f32 %v220, %v626
    %v628 = vpop.f32.mrf.mxu0
    %v629 = vadd.f32 %v220, %v628
    %630 = vmatmul.bf16.gmra.mxu0 %v470
    %v631 = vpop.f32.mrf.mxu0
    %v632 = vadd.f32 %v220, %v631
    %v633 = vpop.f32.mrf.mxu0
    %v634 = vadd.f32 %v220, %v633
    %635 = vmatmul.bf16.gmra.mxu0 %v473
    %v636 = vpop.f32.mrf.mxu0
    %v637 = vadd.f32 %v220, %v636
    %v638 = vpop.f32.mrf.mxu0
    %v639 = vadd.f32 %v220, %v638
    %640 = vmatmul.bf16.gmra.mxu0 %v476
    %v641 = vpop.f32.mrf.mxu0
    %v642 = vadd.f32 %v220, %v641
    %v643 = vpop.f32.mrf.mxu0
    %v644 = vadd.f32 %v220, %v643
    %645 = vmatmul.bf16.gmra.mxu0 %v479
    %v646 = vpop.f32.mrf.mxu0
    %v647 = vadd.f32 %v220, %v646
    %v648 = vpop.f32.mrf.mxu0
    %v649 = vadd.f32 %v220, %v648
    %650 = vmatmul.bf16.gmra.mxu0 %v482
    %v651 = vpop.f32.mrf.mxu0
    %v652 = vadd.f32 %v220, %v651
    %v653 = vpop.f32.mrf.mxu0
    %v654 = vadd.f32 %v220, %v653
    %655 = vmatmul.bf16.gmra.mxu0 %v485
    %v656 = vpop.f32.mrf.mxu0
    %v657 = vadd.f32 %v220, %v656
    %v658 = vpop.f32.mrf.mxu0
    %v659 = vadd.f32 %v220, %v658
    %660 = vmatmul.bf16.gmra.mxu0 %v488
    %v661 = vpop.f32.mrf.mxu0
    %v662 = vadd.f32 %v220, %v661
    %v663 = vpop.f32.mrf.mxu0
    %v664 = vadd.f32 %v220, %v663
    %665 = vdwg.mxu0
    %v666 = vld [vmem:[%s3] sm:$0x1]
    %v667 = vld [vmem:[%s4] sm:$0x1]
    %v668 = vsel %vm40, %v507, 0.0
    %v669 = vsel %vm40, %v509, 0.0
    %v670 = vadd.f32 %v668, %v669
    %v671 = vsel %vm40, %v512, 0.0
    %v672 = vadd.f32 %v670, %v671
    %v673 = vsel %vm40, %v514, 0.0
    %v674 = vadd.f32 %v672, %v673
    %v675 = vsel %vm40, %v517, 0.0
    %v676 = vadd.f32 %v674, %v675
    %v677 = vsel %vm40, %v519, 0.0
    %v678 = vadd.f32 %v676, %v677
    %v679 = vsel %vm40, %v522, 0.0
    %v680 = vadd.f32 %v678, %v679
    %v681 = vsel %vm40, %v524, 0.0
    %v682 = vadd.f32 %v680, %v681
    %v683 = vsel %vm40, %v527, 0.0
    %v684 = vadd.f32 %v682, %v683
    %v685 = vsel %vm40, %v529, 0.0
    %v686 = vadd.f32 %v684, %v685
    %v687 = vsel %vm40, %v532, 0.0
    %v688 = vadd.f32 %v686, %v687
    %v689 = vsel %vm40, %v534, 0.0
    %v690 = vadd.f32 %v688, %v689
    %v691 = vsel %vm40, %v537, 0.0
    %v692 = vadd.f32 %v690, %v691
    %v693 = vsel %vm40, %v539, 0.0
    %v694 = vadd.f32 %v692, %v693
    %v695 = vsel %vm40, %v542, 0.0
    %v696 = vadd.f32 %v694, %v695
    %v697 = vsel %vm40, %v544, 0.0
    %v698 = vadd.f32 %v696, %v697
    %v699 = vsel %vm40, %v547, 0.0
    %v700 = vadd.f32 %v698, %v699
    %v701 = vsel %vm40, %v549, 0.0
    %v702 = vadd.f32 %v700, %v701
    %v703 = vsel %vm40, %v552, 0.0
    %v704 = vadd.f32 %v702, %v703
    %v705 = vsel %vm40, %v554, 0.0
    %v706 = vadd.f32 %v704, %v705
    %v707 = vsel %vm40, %v557, 0.0
    %v708 = vadd.f32 %v706, %v707
    %v709 = vsel %vm40, %v559, 0.0
    %v710 = vadd.f32 %v708, %v709
    %v711 = vsel %vm40, %v562, 0.0
    %v712 = vadd.f32 %v710, %v711
    %v713 = vsel %vm40, %v564, 0.0
    %v714 = vadd.f32 %v712, %v713
    %v715 = vsel %vm40, %v567, 0.0
    %v716 = vadd.f32 %v714, %v715
    %v717 = vsel %vm40, %v569, 0.0
    %v718 = vadd.f32 %v716, %v717
    %v719 = vsel %vm40, %v572, 0.0
    %v720 = vadd.f32 %v718, %v719
    %v721 = vsel %vm40, %v574, 0.0
    %v722 = vadd.f32 %v720, %v721
    %v723 = vsel %vm40, %v577, 0.0
    %v724 = vadd.f32 %v722, %v723
    %v725 = vsel %vm40, %v579, 0.0
    %v726 = vadd.f32 %v724, %v725
    %v727 = vsel %vm40, %v582, 0.0
    %v728 = vadd.f32 %v726, %v727
    %v729 = vsel %vm40, %v584, 0.0
    %v730 = vadd.f32 %v728, %v729
    %v731 = vsel %vm40, %v587, 0.0
    %v732 = vadd.f32 %v730, %v731
    %v733 = vsel %vm40, %v589, 0.0
    %v734 = vadd.f32 %v732, %v733
    %v735 = vsel %vm40, %v592, 0.0
    %v736 = vadd.f32 %v734, %v735
    %v737 = vsel %vm40, %v594, 0.0
    %v738 = vadd.f32 %v736, %v737
    %v739 = vsel %vm40, %v597, 0.0
    %v740 = vadd.f32 %v738, %v739
    %v741 = vsel %vm40, %v599, 0.0
    %v742 = vadd.f32 %v740, %v741
    %v743 = vsel %vm40, %v602, 0.0
    %v744 = vadd.f32 %v742, %v743
    %v745 = vsel %vm40, %v604, 0.0
    %v746 = vadd.f32 %v744, %v745
    %v747 = vsel %vm40, %v607, 0.0
    %v748 = vadd.f32 %v746, %v747
    %v749 = vsel %vm40, %v609, 0.0
    %v750 = vadd.f32 %v748, %v749
    %v751 = vsel %vm40, %v612, 0.0
    %v752 = vadd.f32 %v750, %v751
    %v753 = vsel %vm40, %v614, 0.0
    %v754 = vadd.f32 %v752, %v753
    %v755 = vsel %vm40, %v617, 0.0
    %v756 = vadd.f32 %v754, %v755
    %v757 = vsel %vm40, %v619, 0.0
    %v758 = vadd.f32 %v756, %v757
    %v759 = vsel %vm40, %v622, 0.0
    %v760 = vadd.f32 %v758, %v759
    %v761 = vsel %vm40, %v624, 0.0
    %v762 = vadd.f32 %v760, %v761
    %v763 = vsel %vm40, %v627, 0.0
    %v764 = vadd.f32 %v762, %v763
    %v765 = vsel %vm40, %v629, 0.0
    %v766 = vadd.f32 %v764, %v765
    %v767 = vsel %vm40, %v632, 0.0
    %v768 = vadd.f32 %v766, %v767
    %v769 = vsel %vm40, %v634, 0.0
    %v770 = vadd.f32 %v768, %v769
    %v771 = vsel %vm40, %v637, 0.0
    %v772 = vadd.f32 %v770, %v771
    %v773 = vsel %vm40, %v639, 0.0
    %v774 = vadd.f32 %v772, %v773
    %v775 = vsel %vm40, %v642, 0.0
    %v776 = vadd.f32 %v774, %v775
    %v777 = vsel %vm40, %v644, 0.0
    %v778 = vadd.f32 %v776, %v777
    %v779 = vsel %vm40, %v647, 0.0
    %v780 = vadd.f32 %v778, %v779
    %v781 = vsel %vm40, %v649, 0.0
    %v782 = vadd.f32 %v780, %v781
    %v783 = vsel %vm40, %v652, 0.0
    %v784 = vadd.f32 %v782, %v783
    %v785 = vsel %vm40, %v654, 0.0
    %v786 = vadd.f32 %v784, %v785
    %v787 = vsel %vm40, %v657, 0.0
    %v788 = vadd.f32 %v786, %v787
    %v789 = vsel %vm40, %v659, 0.0
    %v790 = vadd.f32 %v788, %v789
    %v791 = vsel %vm40, %v662, 0.0
    %v792 = vadd.f32 %v790, %v791
    %v793 = vsel %vm40, %v664, 0.0
    %v794 = vadd.f32 %v792, %v793
    %v795 = vrot.slane %v794, 4
    %v796 = vadd.f32 %v794, %v795
    %v797 = vrot.slane %v796, 2
    %v798 = vadd.f32 %v796, %v797
    %v799 = vrot.slane %v798, 1
    %v800 = vadd.f32 %v798, %v799
    %v801 = vrcp.pop 512.0
    %v802 = vmul.f32 512.0, %v801
    %v803 = vsub.f32 1.0, %v802
    %v804 = vmul.f32 %v801, %v803
    %v805 = vadd.f32 %v801, %v804
    %vm806 = vweird.f32 %v801
    %v807 = vsel %vm806, %v801, %v805
    %v808 = vmul.f32 %v800, %v807
    %v809 = vsub.f32 %v507, %v808
    %v810 = vsub.f32 %v509, %v808
    %v811 = vsub.f32 %v512, %v808
    %v812 = vsub.f32 %v514, %v808
    %v813 = vsub.f32 %v517, %v808
    %v814 = vsub.f32 %v519, %v808
    %v815 = vsub.f32 %v522, %v808
    %v816 = vsub.f32 %v524, %v808
    %v817 = vsub.f32 %v527, %v808
    %v818 = vsub.f32 %v529, %v808
    %v819 = vsub.f32 %v532, %v808
    %v820 = vsub.f32 %v534, %v808
    %v821 = vsub.f32 %v537, %v808
    %v822 = vsub.f32 %v539, %v808
    %v823 = vsub.f32 %v542, %v808
    %v824 = vsub.f32 %v544, %v808
    %v825 = vsub.f32 %v547, %v808
    %v826 = vsub.f32 %v549, %v808
    %v827 = vsub.f32 %v552, %v808
    %v828 = vsub.f32 %v554, %v808
    %v829 = vsub.f32 %v557, %v808
    %v830 = vsub.f32 %v559, %v808
    %v831 = vsub.f32 %v562, %v808
    %v832 = vsub.f32 %v564, %v808
    %v833 = vsub.f32 %v567, %v808
    %v834 = vsub.f32 %v569, %v808
    %v835 = vsub.f32 %v572, %v808
    %v836 = vsub.f32 %v574, %v808
    %v837 = vsub.f32 %v577, %v808
    %v838 = vsub.f32 %v579, %v808
    %v839 = vsub.f32 %v582, %v808
    %v840 = vsub.f32 %v584, %v808
    %v841 = vsub.f32 %v587, %v808
    %v842 = vsub.f32 %v589, %v808
    %v843 = vsub.f32 %v592, %v808
    %v844 = vsub.f32 %v594, %v808
    %v845 = vsub.f32 %v597, %v808
    %v846 = vsub.f32 %v599, %v808
    %v847 = vsub.f32 %v602, %v808
    %v848 = vsub.f32 %v604, %v808
    %v849 = vsub.f32 %v607, %v808
    %v850 = vsub.f32 %v609, %v808
    %v851 = vsub.f32 %v612, %v808
    %v852 = vsub.f32 %v614, %v808
    %v853 = vsub.f32 %v617, %v808
    %v854 = vsub.f32 %v619, %v808
    %v855 = vsub.f32 %v622, %v808
    %v856 = vsub.f32 %v624, %v808
    %v857 = vsub.f32 %v627, %v808
    %v858 = vsub.f32 %v629, %v808
    %v859 = vsub.f32 %v632, %v808
    %v860 = vsub.f32 %v634, %v808
    %v861 = vsub.f32 %v637, %v808
    %v862 = vsub.f32 %v639, %v808
    %v863 = vsub.f32 %v642, %v808
    %v864 = vsub.f32 %v644, %v808
    %v865 = vsub.f32 %v647, %v808
    %v866 = vsub.f32 %v649, %v808
    %v867 = vsub.f32 %v652, %v808
    %v868 = vsub.f32 %v654, %v808
    %v869 = vsub.f32 %v657, %v808
    %v870 = vsub.f32 %v659, %v808
    %v871 = vsub.f32 %v662, %v808
    %v872 = vsub.f32 %v664, %v808
    %v873 = vmul.f32 %v809, %v809
    %v874 = vmul.f32 %v810, %v810
    %v875 = vmul.f32 %v811, %v811
    %v876 = vmul.f32 %v812, %v812
    %v877 = vmul.f32 %v813, %v813
    %v878 = vmul.f32 %v814, %v814
    %v879 = vmul.f32 %v815, %v815
    %v880 = vmul.f32 %v816, %v816
    %v881 = vmul.f32 %v817, %v817
    %v882 = vmul.f32 %v818, %v818
    %v883 = vmul.f32 %v819, %v819
    %v884 = vmul.f32 %v820, %v820
    %v885 = vmul.f32 %v821, %v821
    %v886 = vmul.f32 %v822, %v822
    %v887 = vmul.f32 %v823, %v823
    %v888 = vmul.f32 %v824, %v824
    %v889 = vmul.f32 %v825, %v825
    %v890 = vmul.f32 %v826, %v826
    %v891 = vmul.f32 %v827, %v827
    %v892 = vmul.f32 %v828, %v828
    %v893 = vmul.f32 %v829, %v829
    %v894 = vmul.f32 %v830, %v830
    %v895 = vmul.f32 %v831, %v831
    %v896 = vmul.f32 %v832, %v832
    %v897 = vmul.f32 %v833, %v833
    %v898 = vmul.f32 %v834, %v834
    %v899 = vmul.f32 %v835, %v835
    %v900 = vmul.f32 %v836, %v836
    %v901 = vmul.f32 %v837, %v837
    %v902 = vmul.f32 %v838, %v838
    %v903 = vmul.f32 %v839, %v839
    %v904 = vmul.f32 %v840, %v840
    %v905 = vmul.f32 %v841, %v841
    %v906 = vmul.f32 %v842, %v842
    %v907 = vmul.f32 %v843, %v843
    %v908 = vmul.f32 %v844, %v844
    %v909 = vmul.f32 %v845, %v845
    %v910 = vmul.f32 %v846, %v846
    %v911 = vmul.f32 %v847, %v847
    %v912 = vmul.f32 %v848, %v848
    %v913 = vmul.f32 %v849, %v849
    %v914 = vmul.f32 %v850, %v850
    %v915 = vmul.f32 %v851, %v851
    %v916 = vmul.f32 %v852, %v852
    %v917 = vmul.f32 %v853, %v853
    %v918 = vmul.f32 %v854, %v854
    %v919 = vmul.f32 %v855, %v855
    %v920 = vmul.f32 %v856, %v856
    %v921 = vmul.f32 %v857, %v857
    %v922 = vmul.f32 %v858, %v858
    %v923 = vmul.f32 %v859, %v859
    %v924 = vmul.f32 %v860, %v860
    %v925 = vmul.f32 %v861, %v861
    %v926 = vmul.f32 %v862, %v862
    %v927 = vmul.f32 %v863, %v863
    %v928 = vmul.f32 %v864, %v864
    %v929 = vmul.f32 %v865, %v865
    %v930 = vmul.f32 %v866, %v866
    %v931 = vmul.f32 %v867, %v867
    %v932 = vmul.f32 %v868, %v868
    %v933 = vmul.f32 %v869, %v869
    %v934 = vmul.f32 %v870, %v870
    %v935 = vmul.f32 %v871, %v871
    %v936 = vmul.f32 %v872, %v872
    %v937 = vsel %vm40, %v873, 0.0
    %v938 = vsel %vm40, %v874, 0.0
    %v939 = vadd.f32 %v937, %v938
    %v940 = vsel %vm40, %v875, 0.0
    %v941 = vadd.f32 %v939, %v940
    %v942 = vsel %vm40, %v876, 0.0
    %v943 = vadd.f32 %v941, %v942
    %v944 = vsel %vm40, %v877, 0.0
    %v945 = vadd.f32 %v943, %v944
    %v946 = vsel %vm40, %v878, 0.0
    %v947 = vadd.f32 %v945, %v946
    %v948 = vsel %vm40, %v879, 0.0
    %v949 = vadd.f32 %v947, %v948
    %v950 = vsel %vm40, %v880, 0.0
    %v951 = vadd.f32 %v949, %v950
    %v952 = vsel %vm40, %v881, 0.0
    %v953 = vadd.f32 %v951, %v952
    %v954 = vsel %vm40, %v882, 0.0
    %v955 = vadd.f32 %v953, %v954
    %v956 = vsel %vm40, %v883, 0.0
    %v957 = vadd.f32 %v955, %v956
    %v958 = vsel %vm40, %v884, 0.0
    %v959 = vadd.f32 %v957, %v958
    %v960 = vsel %vm40, %v885, 0.0
    %v961 = vadd.f32 %v959, %v960
    %v962 = vsel %vm40, %v886, 0.0
    %v963 = vadd.f32 %v961, %v962
    %v964 = vsel %vm40, %v887, 0.0
    %v965 = vadd.f32 %v963, %v964
    %v966 = vsel %vm40, %v888, 0.0
    %v967 = vadd.f32 %v965, %v966
    %v968 = vsel %vm40, %v889, 0.0
    %v969 = vadd.f32 %v967, %v968
    %v970 = vsel %vm40, %v890, 0.0
    %v971 = vadd.f32 %v969, %v970
    %v972 = vsel %vm40, %v891, 0.0
    %v973 = vadd.f32 %v971, %v972
    %v974 = vsel %vm40, %v892, 0.0
    %v975 = vadd.f32 %v973, %v974
    %v976 = vsel %vm40, %v893, 0.0
    %v977 = vadd.f32 %v975, %v976
    %v978 = vsel %vm40, %v894, 0.0
    %v979 = vadd.f32 %v977, %v978
    %v980 = vsel %vm40, %v895, 0.0
    %v981 = vadd.f32 %v979, %v980
    %v982 = vsel %vm40, %v896, 0.0
    %v983 = vadd.f32 %v981, %v982
    %v984 = vsel %vm40, %v897, 0.0
    %v985 = vadd.f32 %v983, %v984
    %v986 = vsel %vm40, %v898, 0.0
    %v987 = vadd.f32 %v985, %v986
    %v988 = vsel %vm40, %v899, 0.0
    %v989 = vadd.f32 %v987, %v988
    %v990 = vsel %vm40, %v900, 0.0
    %v991 = vadd.f32 %v989, %v990
    %v992 = vsel %vm40, %v901, 0.0
    %v993 = vadd.f32 %v991, %v992
    %v994 = vsel %vm40, %v902, 0.0
    %v995 = vadd.f32 %v993, %v994
    %v996 = vsel %vm40, %v903, 0.0
    %v997 = vadd.f32 %v995, %v996
    %v998 = vsel %vm40, %v904, 0.0
    %v999 = vadd.f32 %v997, %v998
    %v1000 = vsel %vm40, %v905, 0.0
    %v1001 = vadd.f32 %v999, %v1000
    %v1002 = vsel %vm40, %v906, 0.0
    %v1003 = vadd.f32 %v1001, %v1002
    %v1004 = vsel %vm40, %v907, 0.0
    %v1005 = vadd.f32 %v1003, %v1004
    %v1006 = vsel %vm40, %v908, 0.0
    %v1007 = vadd.f32 %v1005, %v1006
    %v1008 = vsel %vm40, %v909, 0.0
    %v1009 = vadd.f32 %v1007, %v1008
    %v1010 = vsel %vm40, %v910, 0.0
    %v1011 = vadd.f32 %v1009, %v1010
    %v1012 = vsel %vm40, %v911, 0.0
    %v1013 = vadd.f32 %v1011, %v1012
    %v1014 = vsel %vm40, %v912, 0.0
    %v1015 = vadd.f32 %v1013, %v1014
    %v1016 = vsel %vm40, %v913, 0.0
    %v1017 = vadd.f32 %v1015, %v1016
    %v1018 = vsel %vm40, %v914, 0.0
    %v1019 = vadd.f32 %v1017, %v1018
    %v1020 = vsel %vm40, %v915, 0.0
    %v1021 = vadd.f32 %v1019, %v1020
    %v1022 = vsel %vm40, %v916, 0.0
    %v1023 = vadd.f32 %v1021, %v1022
    %v1024 = vsel %vm40, %v917, 0.0
    %v1025 = vadd.f32 %v1023, %v1024
    %v1026 = vsel %vm40, %v918, 0.0
    %v1027 = vadd.f32 %v1025, %v1026
    %v1028 = vsel %vm40, %v919, 0.0
    %v1029 = vadd.f32 %v1027, %v1028
    %v1030 = vsel %vm40, %v920, 0.0
    %v1031 = vadd.f32 %v1029, %v1030
    %v1032 = vsel %vm40, %v921, 0.0
    %v1033 = vadd.f32 %v1031, %v1032
    %v1034 = vsel %vm40, %v922, 0.0
    %v1035 = vadd.f32 %v1033, %v1034
    %v1036 = vsel %vm40, %v923, 0.0
    %v1037 = vadd.f32 %v1035, %v1036
    %v1038 = vsel %vm40, %v924, 0.0
    %v1039 = vadd.f32 %v1037, %v1038
    %v1040 = vsel %vm40, %v925, 0.0
    %v1041 = vadd.f32 %v1039, %v1040
    %v1042 = vsel %vm40, %v926, 0.0
    %v1043 = vadd.f32 %v1041, %v1042
    %v1044 = vsel %vm40, %v927, 0.0
    %v1045 = vadd.f32 %v1043, %v1044
    %v1046 = vsel %vm40, %v928, 0.0
    %v1047 = vadd.f32 %v1045, %v1046
    %v1048 = vsel %vm40, %v929, 0.0
    %v1049 = vadd.f32 %v1047, %v1048
    %v1050 = vsel %vm40, %v930, 0.0
    %v1051 = vadd.f32 %v1049, %v1050
    %v1052 = vsel %vm40, %v931, 0.0
    %v1053 = vadd.f32 %v1051, %v1052
    %v1054 = vsel %vm40, %v932, 0.0
    %v1055 = vadd.f32 %v1053, %v1054
    %v1056 = vsel %vm40, %v933, 0.0
    %v1057 = vadd.f32 %v1055, %v1056
    %v1058 = vsel %vm40, %v934, 0.0
    %v1059 = vadd.f32 %v1057, %v1058
    %v1060 = vsel %vm40, %v935, 0.0
    %v1061 = vadd.f32 %v1059, %v1060
    %v1062 = vsel %vm40, %v936, 0.0
    %v1063 = vadd.f32 %v1061, %v1062
    %v1064 = vrot.slane %v1063, 4
    %v1065 = vadd.f32 %v1063, %v1064
    %v1066 = vrot.slane %v1065, 2
    %v1067 = vadd.f32 %v1065, %v1066
    %v1068 = vrot.slane %v1067, 1
    %v1069 = vadd.f32 %v1067, %v1068
    %v1070 = vmul.f32 %v1069, %v807
    %v1071 = vadd.f32 %v1070, 1e-05
    %v1072 = vrsqrt.pop %v1071
    %v1073 = vmul.f32 %v1072, %v1071
    %v1074 = vmul.f32 %v1073, %v1072
    %v1075 = vmul.f32 0.5, %v1074
    %v1076 = vsub.f32 1.5, %v1075
    %v1077 = vmul.f32 %v1072, %v1076
    %vm1078 = vweird.f32 %v1071
    %vm1079 = vweird.f32 %v1072
    %vm1080 = vmor %vm1078, %vm1079
    %v1081 = vsel %vm1080, %v1072, %v1077
    %v1082 = vmul.f32 %v809, %v1081
    %v1083 = vmul.f32 %v810, %v1081
    %v1084 = vmul.f32 %v811, %v1081
    %v1085 = vmul.f32 %v812, %v1081
    %v1086 = vmul.f32 %v813, %v1081
    %v1087 = vmul.f32 %v814, %v1081
    %v1088 = vmul.f32 %v815, %v1081
    %v1089 = vmul.f32 %v816, %v1081
    %v1090 = vmul.f32 %v817, %v1081
    %v1091 = vmul.f32 %v818, %v1081
    %v1092 = vmul.f32 %v819, %v1081
    %v1093 = vmul.f32 %v820, %v1081
    %v1094 = vmul.f32 %v821, %v1081
    %v1095 = vmul.f32 %v822, %v1081
    %v1096 = vmul.f32 %v823, %v1081
    %v1097 = vmul.f32 %v824, %v1081
    %v1098 = vmul.f32 %v825, %v1081
    %v1099 = vmul.f32 %v826, %v1081
    %v1100 = vmul.f32 %v827, %v1081
    %v1101 = vmul.f32 %v828, %v1081
    %v1102 = vmul.f32 %v829, %v1081
    %v1103 = vmul.f32 %v830, %v1081
    %v1104 = vmul.f32 %v831, %v1081
    %v1105 = vmul.f32 %v832, %v1081
    %v1106 = vmul.f32 %v833, %v1081
    %v1107 = vmul.f32 %v834, %v1081
    %v1108 = vmul.f32 %v835, %v1081
    %v1109 = vmul.f32 %v836, %v1081
    %v1110 = vmul.f32 %v837, %v1081
    %v1111 = vmul.f32 %v838, %v1081
    %v1112 = vmul.f32 %v839, %v1081
    %v1113 = vmul.f32 %v840, %v1081
    %v1114 = vmul.f32 %v841, %v1081
    %v1115 = vmul.f32 %v842, %v1081
    %v1116 = vmul.f32 %v843, %v1081
    %v1117 = vmul.f32 %v844, %v1081
    %v1118 = vmul.f32 %v845, %v1081
    %v1119 = vmul.f32 %v846, %v1081
    %v1120 = vmul.f32 %v847, %v1081
    %v1121 = vmul.f32 %v848, %v1081
    %v1122 = vmul.f32 %v849, %v1081
    %v1123 = vmul.f32 %v850, %v1081
    %v1124 = vmul.f32 %v851, %v1081
    %v1125 = vmul.f32 %v852, %v1081
    %v1126 = vmul.f32 %v853, %v1081
    %v1127 = vmul.f32 %v854, %v1081
    %v1128 = vmul.f32 %v855, %v1081
    %v1129 = vmul.f32 %v856, %v1081
    %v1130 = vmul.f32 %v857, %v1081
    %v1131 = vmul.f32 %v858, %v1081
    %v1132 = vmul.f32 %v859, %v1081
    %v1133 = vmul.f32 %v860, %v1081
    %v1134 = vmul.f32 %v861, %v1081
    %v1135 = vmul.f32 %v862, %v1081
    %v1136 = vmul.f32 %v863, %v1081
    %v1137 = vmul.f32 %v864, %v1081
    %v1138 = vmul.f32 %v865, %v1081
    %v1139 = vmul.f32 %v866, %v1081
    %v1140 = vmul.f32 %v867, %v1081
    %v1141 = vmul.f32 %v868, %v1081
    %v1142 = vmul.f32 %v869, %v1081
    %v1143 = vmul.f32 %v870, %v1081
    %v1144 = vmul.f32 %v871, %v1081
    %v1145 = vmul.f32 %v872, %v1081
    %v1147 = vperm.slane %v666, 0
    %v1149 = vmul.f32 %v1082, %v1147
    %v1150 = vmul.f32 %v1083, %v1147
    %v1151 = vmul.f32 %v1084, %v1147
    %v1152 = vmul.f32 %v1085, %v1147
    %v1153 = vmul.f32 %v1086, %v1147
    %v1154 = vmul.f32 %v1087, %v1147
    %v1155 = vmul.f32 %v1088, %v1147
    %v1156 = vmul.f32 %v1089, %v1147
    %v1157 = vmul.f32 %v1090, %v1147
    %v1158 = vmul.f32 %v1091, %v1147
    %v1159 = vmul.f32 %v1092, %v1147
    %v1160 = vmul.f32 %v1093, %v1147
    %v1161 = vmul.f32 %v1094, %v1147
    %v1162 = vmul.f32 %v1095, %v1147
    %v1163 = vmul.f32 %v1096, %v1147
    %v1164 = vmul.f32 %v1097, %v1147
    %v1165 = vmul.f32 %v1098, %v1147
    %v1166 = vmul.f32 %v1099, %v1147
    %v1167 = vmul.f32 %v1100, %v1147
    %v1168 = vmul.f32 %v1101, %v1147
    %v1169 = vmul.f32 %v1102, %v1147
    %v1170 = vmul.f32 %v1103, %v1147
    %v1171 = vmul.f32 %v1104, %v1147
    %v1172 = vmul.f32 %v1105, %v1147
    %v1173 = vmul.f32 %v1106, %v1147
    %v1174 = vmul.f32 %v1107, %v1147
    %v1175 = vmul.f32 %v1108, %v1147
    %v1176 = vmul.f32 %v1109, %v1147
    %v1177 = vmul.f32 %v1110, %v1147
    %v1178 = vmul.f32 %v1111, %v1147
    %v1179 = vmul.f32 %v1112, %v1147
    %v1180 = vmul.f32 %v1113, %v1147
    %v1181 = vmul.f32 %v1114, %v1147
    %v1182 = vmul.f32 %v1115, %v1147
    %v1183 = vmul.f32 %v1116, %v1147
    %v1184 = vmul.f32 %v1117, %v1147
    %v1185 = vmul.f32 %v1118, %v1147
    %v1186 = vmul.f32 %v1119, %v1147
    %v1187 = vmul.f32 %v1120, %v1147
    %v1188 = vmul.f32 %v1121, %v1147
    %v1189 = vmul.f32 %v1122, %v1147
    %v1190 = vmul.f32 %v1123, %v1147
    %v1191 = vmul.f32 %v1124, %v1147
    %v1192 = vmul.f32 %v1125, %v1147
    %v1193 = vmul.f32 %v1126, %v1147
    %v1194 = vmul.f32 %v1127, %v1147
    %v1195 = vmul.f32 %v1128, %v1147
    %v1196 = vmul.f32 %v1129, %v1147
    %v1197 = vmul.f32 %v1130, %v1147
    %v1198 = vmul.f32 %v1131, %v1147
    %v1199 = vmul.f32 %v1132, %v1147
    %v1200 = vmul.f32 %v1133, %v1147
    %v1201 = vmul.f32 %v1134, %v1147
    %v1202 = vmul.f32 %v1135, %v1147
    %v1203 = vmul.f32 %v1136, %v1147
    %v1204 = vmul.f32 %v1137, %v1147
    %v1205 = vmul.f32 %v1138, %v1147
    %v1206 = vmul.f32 %v1139, %v1147
    %v1207 = vmul.f32 %v1140, %v1147
    %v1208 = vmul.f32 %v1141, %v1147
    %v1209 = vmul.f32 %v1142, %v1147
    %v1210 = vmul.f32 %v1143, %v1147
    %v1211 = vmul.f32 %v1144, %v1147
    %v1212 = vmul.f32 %v1145, %v1147
    %v1214 = vperm.slane %v667, 0
    %v1216 = vadd.f32 %v1149, %v1214
    %v1217 = vadd.f32 %v1150, %v1214
    %v1218 = vadd.f32 %v1151, %v1214
    %v1219 = vadd.f32 %v1152, %v1214
    %v1220 = vadd.f32 %v1153, %v1214
    %v1221 = vadd.f32 %v1154, %v1214
    %v1222 = vadd.f32 %v1155, %v1214
    %v1223 = vadd.f32 %v1156, %v1214
    %v1224 = vadd.f32 %v1157, %v1214
    %v1225 = vadd.f32 %v1158, %v1214
    %v1226 = vadd.f32 %v1159, %v1214
    %v1227 = vadd.f32 %v1160, %v1214
    %v1228 = vadd.f32 %v1161, %v1214
    %v1229 = vadd.f32 %v1162, %v1214
    %v1230 = vadd.f32 %v1163, %v1214
    %v1231 = vadd.f32 %v1164, %v1214
    %v1232 = vadd.f32 %v1165, %v1214
    %v1233 = vadd.f32 %v1166, %v1214
    %v1234 = vadd.f32 %v1167, %v1214
    %v1235 = vadd.f32 %v1168, %v1214
    %v1236 = vadd.f32 %v1169, %v1214
    %v1237 = vadd.f32 %v1170, %v1214
    %v1238 = vadd.f32 %v1171, %v1214
    %v1239 = vadd.f32 %v1172, %v1214
    %v1240 = vadd.f32 %v1173, %v1214
    %v1241 = vadd.f32 %v1174, %v1214
    %v1242 = vadd.f32 %v1175, %v1214
    %v1243 = vadd.f32 %v1176, %v1214
    %v1244 = vadd.f32 %v1177, %v1214
    %v1245 = vadd.f32 %v1178, %v1214
    %v1246 = vadd.f32 %v1179, %v1214
    %v1247 = vadd.f32 %v1180, %v1214
    %v1248 = vadd.f32 %v1181, %v1214
    %v1249 = vadd.f32 %v1182, %v1214
    %v1250 = vadd.f32 %v1183, %v1214
    %v1251 = vadd.f32 %v1184, %v1214
    %v1252 = vadd.f32 %v1185, %v1214
    %v1253 = vadd.f32 %v1186, %v1214
    %v1254 = vadd.f32 %v1187, %v1214
    %v1255 = vadd.f32 %v1188, %v1214
    %v1256 = vadd.f32 %v1189, %v1214
    %v1257 = vadd.f32 %v1190, %v1214
    %v1258 = vadd.f32 %v1191, %v1214
    %v1259 = vadd.f32 %v1192, %v1214
    %v1260 = vadd.f32 %v1193, %v1214
    %v1261 = vadd.f32 %v1194, %v1214
    %v1262 = vadd.f32 %v1195, %v1214
    %v1263 = vadd.f32 %v1196, %v1214
    %v1264 = vadd.f32 %v1197, %v1214
    %v1265 = vadd.f32 %v1198, %v1214
    %v1266 = vadd.f32 %v1199, %v1214
    %v1267 = vadd.f32 %v1200, %v1214
    %v1268 = vadd.f32 %v1201, %v1214
    %v1269 = vadd.f32 %v1202, %v1214
    %v1270 = vadd.f32 %v1203, %v1214
    %v1271 = vadd.f32 %v1204, %v1214
    %v1272 = vadd.f32 %v1205, %v1214
    %v1273 = vadd.f32 %v1206, %v1214
    %v1274 = vadd.f32 %v1207, %v1214
    %v1275 = vadd.f32 %v1208, %v1214
    %v1276 = vadd.f32 %v1209, %v1214
    %v1277 = vadd.f32 %v1210, %v1214
    %v1278 = vadd.f32 %v1211, %v1214
    %v1279 = vadd.f32 %v1212, %v1214
    %v1280 = vmax.f32 %v1216, 0.0
    %v1281 = vmax.f32 %v1217, 0.0
    %v1282 = vmax.f32 %v1218, 0.0
    %v1283 = vmax.f32 %v1219, 0.0
    %v1284 = vmax.f32 %v1220, 0.0
    %v1285 = vmax.f32 %v1221, 0.0
    %v1286 = vmax.f32 %v1222, 0.0
    %v1287 = vmax.f32 %v1223, 0.0
    %v1288 = vmax.f32 %v1224, 0.0
    %v1289 = vmax.f32 %v1225, 0.0
    %v1290 = vmax.f32 %v1226, 0.0
    %v1291 = vmax.f32 %v1227, 0.0
    %v1292 = vmax.f32 %v1228, 0.0
    %v1293 = vmax.f32 %v1229, 0.0
    %v1294 = vmax.f32 %v1230, 0.0
    %v1295 = vmax.f32 %v1231, 0.0
    %v1296 = vmax.f32 %v1232, 0.0
    %v1297 = vmax.f32 %v1233, 0.0
    %v1298 = vmax.f32 %v1234, 0.0
    %v1299 = vmax.f32 %v1235, 0.0
    %v1300 = vmax.f32 %v1236, 0.0
    %v1301 = vmax.f32 %v1237, 0.0
    %v1302 = vmax.f32 %v1238, 0.0
    %v1303 = vmax.f32 %v1239, 0.0
    %v1304 = vmax.f32 %v1240, 0.0
    %v1305 = vmax.f32 %v1241, 0.0
    %v1306 = vmax.f32 %v1242, 0.0
    %v1307 = vmax.f32 %v1243, 0.0
    %v1308 = vmax.f32 %v1244, 0.0
    %v1309 = vmax.f32 %v1245, 0.0
    %v1310 = vmax.f32 %v1246, 0.0
    %v1311 = vmax.f32 %v1247, 0.0
    %v1312 = vmax.f32 %v1248, 0.0
    %v1313 = vmax.f32 %v1249, 0.0
    %v1314 = vmax.f32 %v1250, 0.0
    %v1315 = vmax.f32 %v1251, 0.0
    %v1316 = vmax.f32 %v1252, 0.0
    %v1317 = vmax.f32 %v1253, 0.0
    %v1318 = vmax.f32 %v1254, 0.0
    %v1319 = vmax.f32 %v1255, 0.0
    %v1320 = vmax.f32 %v1256, 0.0
    %v1321 = vmax.f32 %v1257, 0.0
    %v1322 = vmax.f32 %v1258, 0.0
    %v1323 = vmax.f32 %v1259, 0.0
    %v1324 = vmax.f32 %v1260, 0.0
    %v1325 = vmax.f32 %v1261, 0.0
    %v1326 = vmax.f32 %v1262, 0.0
    %v1327 = vmax.f32 %v1263, 0.0
    %v1328 = vmax.f32 %v1264, 0.0
    %v1329 = vmax.f32 %v1265, 0.0
    %v1330 = vmax.f32 %v1266, 0.0
    %v1331 = vmax.f32 %v1267, 0.0
    %v1332 = vmax.f32 %v1268, 0.0
    %v1333 = vmax.f32 %v1269, 0.0
    %v1334 = vmax.f32 %v1270, 0.0
    %v1335 = vmax.f32 %v1271, 0.0
    %v1336 = vmax.f32 %v1272, 0.0
    %v1337 = vmax.f32 %v1273, 0.0
    %v1338 = vmax.f32 %v1274, 0.0
    %v1339 = vmax.f32 %v1275, 0.0
    %v1340 = vmax.f32 %v1276, 0.0
    %v1341 = vmax.f32 %v1277, 0.0
    %v1342 = vmax.f32 %v1278, 0.0
    %v1343 = vmax.f32 %v1279, 0.0
    %s1344 = scalar_lea.vmem [#allocation2], 24
    %1345 = vst.msk [vmem:[%s1344 + $0x1] sm:$0xff] %vm40, %v1280
    %1346 = vst.msk [vmem:[%s1344 + $0x9] sm:$0xff] %vm40, %v1281
    %1347 = vst.msk [vmem:[%s1344 + $0x19] sm:$0xff] %vm40, %v1282
    %1348 = vst.msk [vmem:[%s1344 + $0x21] sm:$0xff] %vm40, %v1283
    %1349 = vst.msk [vmem:[%s1344 + $0x31] sm:$0xff] %vm40, %v1284
    %1350 = vst.msk [vmem:[%s1344 + $0x39] sm:$0xff] %vm40, %v1285
    %1351 = vst.msk [vmem:[%s1344 + $0x49] sm:$0xff] %vm40, %v1286
    %1352 = vst.msk [vmem:[%s1344 + $0x51] sm:$0xff] %vm40, %v1287
    %1353 = vst.msk [vmem:[%s1344 + $0x61] sm:$0xff] %vm40, %v1288
    %1354 = vst.msk [vmem:[%s1344 + $0x69] sm:$0xff] %vm40, %v1289
    %1355 = vst.msk [vmem:[%s1344 + $0x79] sm:$0xff] %vm40, %v1290
    %1356 = vst.msk [vmem:[%s1344 + $0x81] sm:$0xff] %vm40, %v1291
    %1357 = vst.msk [vmem:[%s1344 + $0x91] sm:$0xff] %vm40, %v1292
    %1358 = vst.msk [vmem:[%s1344 + $0x99] sm:$0xff] %vm40, %v1293
    %1359 = vst.msk [vmem:[%s1344 + $0xa9] sm:$0xff] %vm40, %v1294
    %1360 = vst.msk [vmem:[%s1344 + $0xb1] sm:$0xff] %vm40, %v1295
    %1361 = vst.msk [vmem:[%s1344 + $0xc1] sm:$0xff] %vm40, %v1296
    %1362 = vst.msk [vmem:[%s1344 + $0xc9] sm:$0xff] %vm40, %v1297
    %1363 = vst.msk [vmem:[%s1344 + $0xd9] sm:$0xff] %vm40, %v1298
    %1364 = vst.msk [vmem:[%s1344 + $0xe1] sm:$0xff] %vm40, %v1299
    %1365 = vst.msk [vmem:[%s1344 + $0xf1] sm:$0xff] %vm40, %v1300
    %1366 = vst.msk [vmem:[%s1344 + $0xf9] sm:$0xff] %vm40, %v1301
    %1367 = vst.msk [vmem:[%s1344 + $0x109] sm:$0xff] %vm40, %v1302
    %1368 = vst.msk [vmem:[%s1344 + $0x111] sm:$0xff] %vm40, %v1303
    %1369 = vst.msk [vmem:[%s1344 + $0x121] sm:$0xff] %vm40, %v1304
    %1370 = vst.msk [vmem:[%s1344 + $0x129] sm:$0xff] %vm40, %v1305
    %1371 = vst.msk [vmem:[%s1344 + $0x139] sm:$0xff] %vm40, %v1306
    %1372 = vst.msk [vmem:[%s1344 + $0x141] sm:$0xff] %vm40, %v1307
    %1373 = vst.msk [vmem:[%s1344 + $0x151] sm:$0xff] %vm40, %v1308
    %1374 = vst.msk [vmem:[%s1344 + $0x159] sm:$0xff] %vm40, %v1309
    %1375 = vst.msk [vmem:[%s1344 + $0x169] sm:$0xff] %vm40, %v1310
    %1376 = vst.msk [vmem:[%s1344 + $0x171] sm:$0xff] %vm40, %v1311
    %1377 = vst.msk [vmem:[%s1344 + $0x1b1] sm:$0xff] %vm40, %v1312
    %1378 = vst.msk [vmem:[%s1344 + $0x1b9] sm:$0xff] %vm40, %v1313
    %1379 = vst.msk [vmem:[%s1344 + $0x1c9] sm:$0xff] %vm40, %v1314
    %1380 = vst.msk [vmem:[%s1344 + $0x1d1] sm:$0xff] %vm40, %v1315
    %1381 = vst.msk [vmem:[%s1344 + $0x1e1] sm:$0xff] %vm40, %v1316
    %1382 = vst.msk [vmem:[%s1344 + $0x1e9] sm:$0xff] %vm40, %v1317
    %1383 = vst.msk [vmem:[%s1344 + $0x1f9] sm:$0xff] %vm40, %v1318
    %1384 = vst.msk [vmem:[%s1344 + $0x201] sm:$0xff] %vm40, %v1319
    %1385 = vst.msk [vmem:[%s1344 + $0x211] sm:$0xff] %vm40, %v1320
    %1386 = vst.msk [vmem:[%s1344 + $0x219] sm:$0xff] %vm40, %v1321
    %1387 = vst.msk [vmem:[%s1344 + $0x229] sm:$0xff] %vm40, %v1322
    %1388 = vst.msk [vmem:[%s1344 + $0x231] sm:$0xff] %vm40, %v1323
    %1389 = vst.msk [vmem:[%s1344 + $0x241] sm:$0xff] %vm40, %v1324
    %1390 = vst.msk [vmem:[%s1344 + $0x249] sm:$0xff] %vm40, %v1325
    %1391 = vst.msk [vmem:[%s1344 + $0x259] sm:$0xff] %vm40, %v1326
    %1392 = vst.msk [vmem:[%s1344 + $0x261] sm:$0xff] %vm40, %v1327
    %1393 = vst.msk [vmem:[%s1344 + $0x271] sm:$0xff] %vm40, %v1328
    %1394 = vst.msk [vmem:[%s1344 + $0x279] sm:$0xff] %vm40, %v1329
    %1395 = vst.msk [vmem:[%s1344 + $0x289] sm:$0xff] %vm40, %v1330
    %1396 = vst.msk [vmem:[%s1344 + $0x291] sm:$0xff] %vm40, %v1331
    %1397 = vst.msk [vmem:[%s1344 + $0x2a1] sm:$0xff] %vm40, %v1332
    %1398 = vst.msk [vmem:[%s1344 + $0x2a9] sm:$0xff] %vm40, %v1333
    %1399 = vst.msk [vmem:[%s1344 + $0x2b9] sm:$0xff] %vm40, %v1334
    %1400 = vst.msk [vmem:[%s1344 + $0x2c1] sm:$0xff] %vm40, %v1335
    %1401 = vst.msk [vmem:[%s1344 + $0x2d1] sm:$0xff] %vm40, %v1336
    %1402 = vst.msk [vmem:[%s1344 + $0x2d9] sm:$0xff] %vm40, %v1337
    %1403 = vst.msk [vmem:[%s1344 + $0x2e9] sm:$0xff] %vm40, %v1338
    %1404 = vst.msk [vmem:[%s1344 + $0x2f1] sm:$0xff] %vm40, %v1339
    %1405 = vst.msk [vmem:[%s1344 + $0x301] sm:$0xff] %vm40, %v1340
    %1406 = vst.msk [vmem:[%s1344 + $0x309] sm:$0xff] %vm40, %v1341
    %1407 = vst.msk [vmem:[%s1344 + $0x319] sm:$0xff] %vm40, %v1342
    %1408 = vst.msk [vmem:[%s1344 + $0x321] sm:$0xff] %vm40, %v1343
    %v1409 = vld [vmem:[#allocation2] sm:$0xff]
    %v1410 = vld [vmem:[#allocation2 + $0x8] sm:$0xff]
    %v1411 = vld [vmem:[#allocation2 + $0x10] sm:$0x3]
    %v1412 = vld [vmem:[#allocation2 + $0x18] sm:$0xff]
    %v1413 = vld [vmem:[#allocation2 + $0x20] sm:$0xff]
    %v1414 = vld [vmem:[#allocation2 + $0x28] sm:$0x3]
    %v1415 = vld [vmem:[#allocation2 + $0x30] sm:$0xff]
    %v1416 = vld [vmem:[#allocation2 + $0x38] sm:$0xff]
    %v1417 = vld [vmem:[#allocation2 + $0x40] sm:$0x3]
    %v1418 = vld [vmem:[#allocation2 + $0x48] sm:$0xff]
    %v1419 = vld [vmem:[#allocation2 + $0x50] sm:$0xff]
    %v1420 = vld [vmem:[#allocation2 + $0x58] sm:$0x3]
    %v1421 = vld [vmem:[#allocation2 + $0x60] sm:$0xff]
    %v1422 = vld [vmem:[#allocation2 + $0x68] sm:$0xff]
    %v1423 = vld [vmem:[#allocation2 + $0x70] sm:$0x3]
    %v1424 = vld [vmem:[#allocation2 + $0x78] sm:$0xff]
    %v1425 = vld [vmem:[#allocation2 + $0x80] sm:$0xff]
    %v1426 = vld [vmem:[#allocation2 + $0x88] sm:$0x3]
    %v1427 = vld [vmem:[#allocation2 + $0x90] sm:$0xff]
    %v1428 = vld [vmem:[#allocation2 + $0x98] sm:$0xff]
    %v1429 = vld [vmem:[#allocation2 + $0xa0] sm:$0x3]
    %v1430 = vld [vmem:[#allocation2 + $0xa8] sm:$0xff]
    %v1431 = vld [vmem:[#allocation2 + $0xb0] sm:$0xff]
    %v1432 = vld [vmem:[#allocation2 + $0xb8] sm:$0x3]
    %v1433 = vld [vmem:[#allocation2 + $0xc0] sm:$0xff]
    %v1434 = vld [vmem:[#allocation2 + $0xc8] sm:$0xff]
    %v1435 = vld [vmem:[#allocation2 + $0xd0] sm:$0x3]
    %v1436 = vld [vmem:[#allocation2 + $0xd8] sm:$0xff]
    %v1437 = vld [vmem:[#allocation2 + $0xe0] sm:$0xff]
    %v1438 = vld [vmem:[#allocation2 + $0xe8] sm:$0x3]
    %v1439 = vld [vmem:[#allocation2 + $0xf0] sm:$0xff]
    %v1440 = vld [vmem:[#allocation2 + $0xf8] sm:$0xff]
    %v1441 = vld [vmem:[#allocation2 + $0x100] sm:$0x3]
    %v1442 = vld [vmem:[#allocation2 + $0x108] sm:$0xff]
    %v1443 = vld [vmem:[#allocation2 + $0x110] sm:$0xff]
    %v1444 = vld [vmem:[#allocation2 + $0x118] sm:$0x3]
    %v1445 = vld [vmem:[#allocation2 + $0x120] sm:$0xff]
    %v1446 = vld [vmem:[#allocation2 + $0x128] sm:$0xff]
    %v1447 = vld [vmem:[#allocation2 + $0x130] sm:$0x3]
    %v1448 = vld [vmem:[#allocation2 + $0x138] sm:$0xff]
    %v1449 = vld [vmem:[#allocation2 + $0x140] sm:$0xff]
    %v1450 = vld [vmem:[#allocation2 + $0x148] sm:$0x3]
    %v1451 = vld [vmem:[#allocation2 + $0x150] sm:$0xff]
    %v1452 = vld [vmem:[#allocation2 + $0x158] sm:$0xff]
    %v1453 = vld [vmem:[#allocation2 + $0x160] sm:$0x3]
    %v1454 = vld [vmem:[#allocation2 + $0x168] sm:$0xff]
    %v1455 = vld [vmem:[#allocation2 + $0x170] sm:$0xff]
    %v1456 = vld [vmem:[#allocation2 + $0x178] sm:$0x3]
    %v1457 = vld [vmem:[#allocation2 + $0x180] sm:$0xff]
    %v1458 = vld [vmem:[#allocation2 + $0x188] sm:$0xff]
    %v1459 = vld [vmem:[#allocation2 + $0x190] sm:$0x3]
    %v1460 = vld [vmem:[#allocation2 + $0x198] sm:$0xff]
    %v1461 = vld [vmem:[#allocation2 + $0x1a0] sm:$0xff]
    %v1462 = vld [vmem:[#allocation2 + $0x1a8] sm:$0x3]
    %v1463 = vld [vmem:[#allocation2 + $0x1b0] sm:$0xff]
    %v1464 = vld [vmem:[#allocation2 + $0x1b8] sm:$0xff]
    %v1465 = vld [vmem:[#allocation2 + $0x1c0] sm:$0x3]
    %v1466 = vld [vmem:[#allocation2 + $0x1c8] sm:$0xff]
    %v1467 = vld [vmem:[#allocation2 + $0x1d0] sm:$0xff]
    %v1468 = vld [vmem:[#allocation2 + $0x1d8] sm:$0x3]
    %v1469 = vld [vmem:[#allocation2 + $0x1e0] sm:$0xff]
    %v1470 = vld [vmem:[#allocation2 + $0x1e8] sm:$0xff]
    %v1471 = vld [vmem:[#allocation2 + $0x1f0] sm:$0x3]
    %v1472 = vld [vmem:[#allocation2 + $0x1f8] sm:$0xff]
    %v1473 = vld [vmem:[#allocation2 + $0x200] sm:$0xff]
    %v1474 = vld [vmem:[#allocation2 + $0x208] sm:$0x3]
    %v1475 = vld [vmem:[#allocation2 + $0x210] sm:$0xff]
    %v1476 = vld [vmem:[#allocation2 + $0x218] sm:$0xff]
    %v1477 = vld [vmem:[#allocation2 + $0x220] sm:$0x3]
    %v1478 = vld [vmem:[#allocation2 + $0x228] sm:$0xff]
    %v1479 = vld [vmem:[#allocation2 + $0x230] sm:$0xff]
    %v1480 = vld [vmem:[#allocation2 + $0x238] sm:$0x3]
    %v1481 = vld [vmem:[#allocation2 + $0x240] sm:$0xff]
    %v1482 = vld [vmem:[#allocation2 + $0x248] sm:$0xff]
    %v1483 = vld [vmem:[#allocation2 + $0x250] sm:$0x3]
    %v1484 = vld [vmem:[#allocation2 + $0x258] sm:$0xff]
    %v1485 = vld [vmem:[#allocation2 + $0x260] sm:$0xff]
    %v1486 = vld [vmem:[#allocation2 + $0x268] sm:$0x3]
    %v1487 = vld [vmem:[#allocation2 + $0x270] sm:$0xff]
    %v1488 = vld [vmem:[#allocation2 + $0x278] sm:$0xff]
    %v1489 = vld [vmem:[#allocation2 + $0x280] sm:$0x3]
    %v1490 = vld [vmem:[#allocation2 + $0x288] sm:$0xff]
    %v1491 = vld [vmem:[#allocation2 + $0x290] sm:$0xff]
    %v1492 = vld [vmem:[#allocation2 + $0x298] sm:$0x3]
    %v1493 = vld [vmem:[#allocation2 + $0x2a0] sm:$0xff]
    %v1494 = vld [vmem:[#allocation2 + $0x2a8] sm:$0xff]
    %v1495 = vld [vmem:[#allocation2 + $0x2b0] sm:$0x3]
    %v1496 = vld [vmem:[#allocation2 + $0x2b8] sm:$0xff]
    %v1497 = vld [vmem:[#allocation2 + $0x2c0] sm:$0xff]
    %v1498 = vld [vmem:[#allocation2 + $0x2c8] sm:$0x3]
    %v1499 = vld [vmem:[#allocation2 + $0x2d0] sm:$0xff]
    %v1500 = vld [vmem:[#allocation2 + $0x2d8] sm:$0xff]
    %v1501 = vld [vmem:[#allocation2 + $0x2e0] sm:$0x3]
    %v1502 = vld [vmem:[#allocation2 + $0x2e8] sm:$0xff]
    %v1503 = vld [vmem:[#allocation2 + $0x2f0] sm:$0xff]
    %v1504 = vld [vmem:[#allocation2 + $0x2f8] sm:$0x3]
    %v1505 = vld [vmem:[#allocation2 + $0x300] sm:$0xff]
    %v1506 = vld [vmem:[#allocation2 + $0x308] sm:$0xff]
    %v1507 = vld [vmem:[#allocation2 + $0x310] sm:$0x3]
    %v1508 = vld [vmem:[#allocation2 + $0x318] sm:$0xff]
    %v1509 = vld [vmem:[#allocation2 + $0x320] sm:$0xff]
    %v1510 = vld [vmem:[#allocation2 + $0x328] sm:$0x3]
    %v1511 = vld [vmem:[#allocation2 + $0x330] sm:$0xff]
    %v1512 = vld [vmem:[#allocation2 + $0x338] sm:$0xff]
    %v1513 = vld [vmem:[#allocation2 + $0x340] sm:$0x3]
    %v1514 = vld [vmem:[#allocation2 + $0x348] sm:$0xff]
    %v1515 = vld [vmem:[#allocation2 + $0x350] sm:$0xff]
    %v1516 = vld [vmem:[#allocation2 + $0x358] sm:$0x3]
    %vm1613 = vcmask 1046528
    %v1614 = vrot.slane %v1409, 1
    %v1615 = vrot.slane %v1410, 1
    %v1616 = vsel %vm1613, %v1614, %v1615
    %v1617 = vrot.slane %v1411, 1
    %v1618 = vsel %vm1613, %v1615, %v1617
    %v1619 = vrot.slane %v1412, 1
    %v1620 = vrot.slane %v1413, 1
    %v1621 = vsel %vm1613, %v1619, %v1620
    %v1622 = vrot.slane %v1414, 1
    %v1623 = vsel %vm1613, %v1620, %v1622
    %v1624 = vrot.slane %v1415, 1
    %v1625 = vrot.slane %v1416, 1
    %v1626 = vsel %vm1613, %v1624, %v1625
    %v1627 = vrot.slane %v1417, 1
    %v1628 = vsel %vm1613, %v1625, %v1627
    %v1629 = vrot.slane %v1418, 1
    %v1630 = vrot.slane %v1419, 1
    %v1631 = vsel %vm1613, %v1629, %v1630
    %v1632 = vrot.slane %v1420, 1
    %v1633 = vsel %vm1613, %v1630, %v1632
    %v1634 = vrot.slane %v1421, 1
    %v1635 = vrot.slane %v1422, 1
    %v1636 = vsel %vm1613, %v1634, %v1635
    %v1637 = vrot.slane %v1423, 1
    %v1638 = vsel %vm1613, %v1635, %v1637
    %v1639 = vrot.slane %v1424, 1
    %v1640 = vrot.slane %v1425, 1
    %v1641 = vsel %vm1613, %v1639, %v1640
    %v1642 = vrot.slane %v1426, 1
    %v1643 = vsel %vm1613, %v1640, %v1642
    %v1644 = vrot.slane %v1427, 1
    %v1645 = vrot.slane %v1428, 1
    %v1646 = vsel %vm1613, %v1644, %v1645
    %v1647 = vrot.slane %v1429, 1
    %v1648 = vsel %vm1613, %v1645, %v1647
    %v1649 = vrot.slane %v1430, 1
    %v1650 = vrot.slane %v1431, 1
    %v1651 = vsel %vm1613, %v1649, %v1650
    %v1652 = vrot.slane %v1432, 1
    %v1653 = vsel %vm1613, %v1650, %v1652
    %v1654 = vrot.slane %v1433, 1
    %v1655 = vrot.slane %v1434, 1
    %v1656 = vsel %vm1613, %v1654, %v1655
    %v1657 = vrot.slane %v1435, 1
    %v1658 = vsel %vm1613, %v1655, %v1657
    %v1659 = vrot.slane %v1436, 1
    %v1660 = vrot.slane %v1437, 1
    %v1661 = vsel %vm1613, %v1659, %v1660
    %v1662 = vrot.slane %v1438, 1
    %v1663 = vsel %vm1613, %v1660, %v1662
    %v1664 = vrot.slane %v1439, 1
    %v1665 = vrot.slane %v1440, 1
    %v1666 = vsel %vm1613, %v1664, %v1665
    %v1667 = vrot.slane %v1441, 1
    %v1668 = vsel %vm1613, %v1665, %v1667
    %v1669 = vrot.slane %v1442, 1
    %v1670 = vrot.slane %v1443, 1
    %v1671 = vsel %vm1613, %v1669, %v1670
    %v1672 = vrot.slane %v1444, 1
    %v1673 = vsel %vm1613, %v1670, %v1672
    %v1674 = vrot.slane %v1445, 1
    %v1675 = vrot.slane %v1446, 1
    %v1676 = vsel %vm1613, %v1674, %v1675
    %v1677 = vrot.slane %v1447, 1
    %v1678 = vsel %vm1613, %v1675, %v1677
    %v1679 = vrot.slane %v1448, 1
    %v1680 = vrot.slane %v1449, 1
    %v1681 = vsel %vm1613, %v1679, %v1680
    %v1682 = vrot.slane %v1450, 1
    %v1683 = vsel %vm1613, %v1680, %v1682
    %v1684 = vrot.slane %v1451, 1
    %v1685 = vrot.slane %v1452, 1
    %v1686 = vsel %vm1613, %v1684, %v1685
    %v1687 = vrot.slane %v1453, 1
    %v1688 = vsel %vm1613, %v1685, %v1687
    %v1689 = vrot.slane %v1454, 1
    %v1690 = vrot.slane %v1455, 1
    %v1691 = vsel %vm1613, %v1689, %v1690
    %v1692 = vrot.slane %v1456, 1
    %v1693 = vsel %vm1613, %v1690, %v1692
    %v1694 = vrot.slane %v1463, 1
    %v1695 = vrot.slane %v1464, 1
    %v1696 = vsel %vm1613, %v1694, %v1695
    %v1697 = vrot.slane %v1465, 1
    %v1698 = vsel %vm1613, %v1695, %v1697
    %v1699 = vrot.slane %v1466, 1
    %v1700 = vrot.slane %v1467, 1
    %v1701 = vsel %vm1613, %v1699, %v1700
    %v1702 = vrot.slane %v1468, 1
    %v1703 = vsel %vm1613, %v1700, %v1702
    %v1704 = vrot.slane %v1469, 1
    %v1705 = vrot.slane %v1470, 1
    %v1706 = vsel %vm1613, %v1704, %v1705
    %v1707 = vrot.slane %v1471, 1
    %v1708 = vsel %vm1613, %v1705, %v1707
    %v1709 = vrot.slane %v1472, 1
    %v1710 = vrot.slane %v1473, 1
    %v1711 = vsel %vm1613, %v1709, %v1710
    %v1712 = vrot.slane %v1474, 1
    %v1713 = vsel %vm1613, %v1710, %v1712
    %v1714 = vrot.slane %v1475, 1
    %v1715 = vrot.slane %v1476, 1
    %v1716 = vsel %vm1613, %v1714, %v1715
    %v1717 = vrot.slane %v1477, 1
    %v1718 = vsel %vm1613, %v1715, %v1717
    %v1719 = vrot.slane %v1478, 1
    %v1720 = vrot.slane %v1479, 1
    %v1721 = vsel %vm1613, %v1719, %v1720
    %v1722 = vrot.slane %v1480, 1
    %v1723 = vsel %vm1613, %v1720, %v1722
    %v1724 = vrot.slane %v1481, 1
    %v1725 = vrot.slane %v1482, 1
    %v1726 = vsel %vm1613, %v1724, %v1725
    %v1727 = vrot.slane %v1483, 1
    %v1728 = vsel %vm1613, %v1725, %v1727
    %v1729 = vrot.slane %v1484, 1
    %v1730 = vrot.slane %v1485, 1
    %v1731 = vsel %vm1613, %v1729, %v1730
    %v1732 = vrot.slane %v1486, 1
    %v1733 = vsel %vm1613, %v1730, %v1732
    %v1734 = vrot.slane %v1487, 1
    %v1735 = vrot.slane %v1488, 1
    %v1736 = vsel %vm1613, %v1734, %v1735
    %v1737 = vrot.slane %v1489, 1
    %v1738 = vsel %vm1613, %v1735, %v1737
    %v1739 = vrot.slane %v1490, 1
    %v1740 = vrot.slane %v1491, 1
    %v1741 = vsel %vm1613, %v1739, %v1740
    %v1742 = vrot.slane %v1492, 1
    %v1743 = vsel %vm1613, %v1740, %v1742
    %v1744 = vrot.slane %v1493, 1
    %v1745 = vrot.slane %v1494, 1
    %v1746 = vsel %vm1613, %v1744, %v1745
    %v1747 = vrot.slane %v1495, 1
    %v1748 = vsel %vm1613, %v1745, %v1747
    %v1749 = vrot.slane %v1496, 1
    %v1750 = vrot.slane %v1497, 1
    %v1751 = vsel %vm1613, %v1749, %v1750
    %v1752 = vrot.slane %v1498, 1
    %v1753 = vsel %vm1613, %v1750, %v1752
    %v1754 = vrot.slane %v1499, 1
    %v1755 = vrot.slane %v1500, 1
    %v1756 = vsel %vm1613, %v1754, %v1755
    %v1757 = vrot.slane %v1501, 1
    %v1758 = vsel %vm1613, %v1755, %v1757
    %v1759 = vrot.slane %v1502, 1
    %v1760 = vrot.slane %v1503, 1
    %v1761 = vsel %vm1613, %v1759, %v1760
    %v1762 = vrot.slane %v1504, 1
    %v1763 = vsel %vm1613, %v1760, %v1762
    %v1764 = vrot.slane %v1505, 1
    %v1765 = vrot.slane %v1506, 1
    %v1766 = vsel %vm1613, %v1764, %v1765
    %v1767 = vrot.slane %v1507, 1
    %v1768 = vsel %vm1613, %v1765, %v1767
    %v1769 = vrot.slane %v1508, 1
    %v1770 = vrot.slane %v1509, 1
    %v1771 = vsel %vm1613, %v1769, %v1770
    %v1772 = vrot.slane %v1510, 1
    %v1773 = vsel %vm1613, %v1770, %v1772
    %v1774 = vrot.slane %v1409, 2
    %v1775 = vrot.slane %v1410, 2
    %v1776 = vsel %vm491, %v1774, %v1775
    %v1777 = vrot.slane %v1411, 2
    %v1778 = vsel %vm491, %v1775, %v1777
    %v1779 = vrot.slane %v1412, 2
    %v1780 = vrot.slane %v1413, 2
    %v1781 = vsel %vm491, %v1779, %v1780
    %v1782 = vrot.slane %v1414, 2
    %v1783 = vsel %vm491, %v1780, %v1782
    %v1784 = vrot.slane %v1415, 2
    %v1785 = vrot.slane %v1416, 2
    %v1786 = vsel %vm491, %v1784, %v1785
    %v1787 = vrot.slane %v1417, 2
    %v1788 = vsel %vm491, %v1785, %v1787
    %v1789 = vrot.slane %v1418, 2
    %v1790 = vrot.slane %v1419, 2
    %v1791 = vsel %vm491, %v1789, %v1790
    %v1792 = vrot.slane %v1420, 2
    %v1793 = vsel %vm491, %v1790, %v1792
    %v1794 = vrot.slane %v1421, 2
    %v1795 = vrot.slane %v1422, 2
    %v1796 = vsel %vm491, %v1794, %v1795
    %v1797 = vrot.slane %v1423, 2
    %v1798 = vsel %vm491, %v1795, %v1797
    %v1799 = vrot.slane %v1424, 2
    %v1800 = vrot.slane %v1425, 2
    %v1801 = vsel %vm491, %v1799, %v1800
    %v1802 = vrot.slane %v1426, 2
    %v1803 = vsel %vm491, %v1800, %v1802
    %v1804 = vrot.slane %v1427, 2
    %v1805 = vrot.slane %v1428, 2
    %v1806 = vsel %vm491, %v1804, %v1805
    %v1807 = vrot.slane %v1429, 2
    %v1808 = vsel %vm491, %v1805, %v1807
    %v1809 = vrot.slane %v1430, 2
    %v1810 = vrot.slane %v1431, 2
    %v1811 = vsel %vm491, %v1809, %v1810
    %v1812 = vrot.slane %v1432, 2
    %v1813 = vsel %vm491, %v1810, %v1812
    %v1814 = vrot.slane %v1433, 2
    %v1815 = vrot.slane %v1434, 2
    %v1816 = vsel %vm491, %v1814, %v1815
    %v1817 = vrot.slane %v1435, 2
    %v1818 = vsel %vm491, %v1815, %v1817
    %v1819 = vrot.slane %v1436, 2
    %v1820 = vrot.slane %v1437, 2
    %v1821 = vsel %vm491, %v1819, %v1820
    %v1822 = vrot.slane %v1438, 2
    %v1823 = vsel %vm491, %v1820, %v1822
    %v1824 = vrot.slane %v1439, 2
    %v1825 = vrot.slane %v1440, 2
    %v1826 = vsel %vm491, %v1824, %v1825
    %v1827 = vrot.slane %v1441, 2
    %v1828 = vsel %vm491, %v1825, %v1827
    %v1829 = vrot.slane %v1442, 2
    %v1830 = vrot.slane %v1443, 2
    %v1831 = vsel %vm491, %v1829, %v1830
    %v1832 = vrot.slane %v1444, 2
    %v1833 = vsel %vm491, %v1830, %v1832
    %v1834 = vrot.slane %v1445, 2
    %v1835 = vrot.slane %v1446, 2
    %v1836 = vsel %vm491, %v1834, %v1835
    %v1837 = vrot.slane %v1447, 2
    %v1838 = vsel %vm491, %v1835, %v1837
    %v1839 = vrot.slane %v1448, 2
    %v1840 = vrot.slane %v1449, 2
    %v1841 = vsel %vm491, %v1839, %v1840
    %v1842 = vrot.slane %v1450, 2
    %v1843 = vsel %vm491, %v1840, %v1842
    %v1844 = vrot.slane %v1451, 2
    %v1845 = vrot.slane %v1452, 2
    %v1846 = vsel %vm491, %v1844, %v1845
    %v1847 = vrot.slane %v1453, 2
    %v1848 = vsel %vm491, %v1845, %v1847
    %v1849 = vrot.slane %v1454, 2
    %v1850 = vrot.slane %v1455, 2
    %v1851 = vsel %vm491, %v1849, %v1850
    %v1852 = vrot.slane %v1456, 2
    %v1853 = vsel %vm491, %v1850, %v1852
    %v1854 = vrot.slane %v1463, 2
    %v1855 = vrot.slane %v1464, 2
    %v1856 = vsel %vm491, %v1854, %v1855
    %v1857 = vrot.slane %v1465, 2
    %v1858 = vsel %vm491, %v1855, %v1857
    %v1859 = vrot.slane %v1466, 2
    %v1860 = vrot.slane %v1467, 2
    %v1861 = vsel %vm491, %v1859, %v1860
    %v1862 = vrot.slane %v1468, 2
    %v1863 = vsel %vm491, %v1860, %v1862
    %v1864 = vrot.slane %v1469, 2
    %v1865 = vrot.slane %v1470, 2
    %v1866 = vsel %vm491, %v1864, %v1865
    %v1867 = vrot.slane %v1471, 2
    %v1868 = vsel %vm491, %v1865, %v1867
    %v1869 = vrot.slane %v1472, 2
    %v1870 = vrot.slane %v1473, 2
    %v1871 = vsel %vm491, %v1869, %v1870
    %v1872 = vrot.slane %v1474, 2
    %v1873 = vsel %vm491, %v1870, %v1872
    %v1874 = vrot.slane %v1475, 2
    %v1875 = vrot.slane %v1476, 2
    %v1876 = vsel %vm491, %v1874, %v1875
    %v1877 = vrot.slane %v1477, 2
    %v1878 = vsel %vm491, %v1875, %v1877
    %v1879 = vrot.slane %v1478, 2
    %v1880 = vrot.slane %v1479, 2
    %v1881 = vsel %vm491, %v1879, %v1880
    %v1882 = vrot.slane %v1480, 2
    %v1883 = vsel %vm491, %v1880, %v1882
    %v1884 = vrot.slane %v1481, 2
    %v1885 = vrot.slane %v1482, 2
    %v1886 = vsel %vm491, %v1884, %v1885
    %v1887 = vrot.slane %v1483, 2
    %v1888 = vsel %vm491, %v1885, %v1887
    %v1889 = vrot.slane %v1484, 2
    %v1890 = vrot.slane %v1485, 2
    %v1891 = vsel %vm491, %v1889, %v1890
    %v1892 = vrot.slane %v1486, 2
    %v1893 = vsel %vm491, %v1890, %v1892
    %v1894 = vrot.slane %v1487, 2
    %v1895 = vrot.slane %v1488, 2
    %v1896 = vsel %vm491, %v1894, %v1895
    %v1897 = vrot.slane %v1489, 2
    %v1898 = vsel %vm491, %v1895, %v1897
    %v1899 = vrot.slane %v1490, 2
    %v1900 = vrot.slane %v1491, 2
    %v1901 = vsel %vm491, %v1899, %v1900
    %v1902 = vrot.slane %v1492, 2
    %v1903 = vsel %vm491, %v1900, %v1902
    %v1904 = vrot.slane %v1493, 2
    %v1905 = vrot.slane %v1494, 2
    %v1906 = vsel %vm491, %v1904, %v1905
    %v1907 = vrot.slane %v1495, 2
    %v1908 = vsel %vm491, %v1905, %v1907
    %v1909 = vrot.slane %v1496, 2
    %v1910 = vrot.slane %v1497, 2
    %v1911 = vsel %vm491, %v1909, %v1910
    %v1912 = vrot.slane %v1498, 2
    %v1913 = vsel %vm491, %v1910, %v1912
    %v1914 = vrot.slane %v1499, 2
    %v1915 = vrot.slane %v1500, 2
    %v1916 = vsel %vm491, %v1914, %v1915
    %v1917 = vrot.slane %v1501, 2
    %v1918 = vsel %vm491, %v1915, %v1917
    %v1919 = vrot.slane %v1502, 2
    %v1920 = vrot.slane %v1503, 2
    %v1921 = vsel %vm491, %v1919, %v1920
    %v1922 = vrot.slane %v1504, 2
    %v1923 = vsel %vm491, %v1920, %v1922
    %v1924 = vrot.slane %v1505, 2
    %v1925 = vrot.slane %v1506, 2
    %v1926 = vsel %vm491, %v1924, %v1925
    %v1927 = vrot.slane %v1507, 2
    %v1928 = vsel %vm491, %v1925, %v1927
    %v1929 = vrot.slane %v1508, 2
    %v1930 = vrot.slane %v1509, 2
    %v1931 = vsel %vm491, %v1929, %v1930
    %v1932 = vrot.slane %v1510, 2
    %v1933 = vsel %vm491, %v1930, %v1932
    %v2004 = vrot.slane %v1457, 1
    %v2005 = vrot.slane %v1458, 1
    %v2006 = vsel %vm1613, %v2004, %v2005
    %v2007 = vrot.slane %v1459, 1
    %v2008 = vsel %vm1613, %v2005, %v2007
    %v2009 = vrot.slane %v1511, 1
    %v2010 = vrot.slane %v1512, 1
    %v2011 = vsel %vm1613, %v2009, %v2010
    %v2012 = vrot.slane %v1513, 1
    %v2013 = vsel %vm1613, %v2010, %v2012
    %v2078 = vrot.slane %v1457, 2
    %v2079 = vrot.slane %v1458, 2
    %v2080 = vsel %vm491, %v2078, %v2079
    %v2081 = vrot.slane %v1459, 2
    %v2082 = vsel %vm491, %v2079, %v2081
    %v2083 = vrot.slane %v1511, 2
    %v2084 = vrot.slane %v1512, 2
    %v2085 = vsel %vm491, %v2083, %v2084
    %v2086 = vrot.slane %v1513, 2
    %v2087 = vsel %vm491, %v2084, %v2086
    %v2094 = vrot.slane %v1460, 1
    %v2095 = vrot.slane %v1461, 1
    %v2096 = vsel %vm1613, %v2094, %v2095
    %v2097 = vrot.slane %v1462, 1
    %v2098 = vsel %vm1613, %v2095, %v2097
    %v2099 = vrot.slane %v1514, 1
    %v2100 = vrot.slane %v1515, 1
    %v2101 = vsel %vm1613, %v2099, %v2100
    %v2102 = vrot.slane %v1516, 1
    %v2103 = vsel %vm1613, %v2100, %v2102
    %v2104 = vrot.slane %v1460, 2
    %v2105 = vrot.slane %v1461, 2
    %v2106 = vsel %vm491, %v2104, %v2105
    %v2107 = vrot.slane %v1462, 2
    %v2108 = vsel %vm491, %v2105, %v2107
    %v2109 = vrot.slane %v1514, 2
    %v2110 = vrot.slane %v1515, 2
    %v2111 = vsel %vm491, %v2109, %v2110
    %v2112 = vrot.slane %v1516, 2
    %v2113 = vsel %vm491, %v2110, %v2112
    %2122 = vrot.lane.b32.xlu0 %v1616, 64
    %v2123 = vpop.permute.xlu0 %2122
    %2124 = vrot.lane.b32.xlu0 %v1618, 64
    %v2125 = vpop.permute.xlu0 %2124
    %2126 = vrot.lane.b32.xlu0 %v1621, 64
    %v2127 = vpop.permute.xlu0 %2126
    %2128 = vrot.lane.b32.xlu0 %v1623, 64
    %v2129 = vpop.permute.xlu0 %2128
    %2130 = vrot.lane.b32.xlu0 %v1626, 64
    %v2131 = vpop.permute.xlu0 %2130
    %2132 = vrot.lane.b32.xlu0 %v1628, 64
    %v2133 = vpop.permute.xlu0 %2132
    %2134 = vrot.lane.b32.xlu0 %v1631, 64
    %v2135 = vpop.permute.xlu0 %2134
    %2136 = vrot.lane.b32.xlu0 %v1633, 64
    %v2137 = vpop.permute.xlu0 %2136
    %2138 = vrot.lane.b32.xlu0 %v1636, 64
    %v2139 = vpop.permute.xlu0 %2138
    %2140 = vrot.lane.b32.xlu0 %v1638, 64
    %v2141 = vpop.permute.xlu0 %2140
    %2142 = vrot.lane.b32.xlu0 %v1641, 64
    %v2143 = vpop.permute.xlu0 %2142
    %2144 = vrot.lane.b32.xlu0 %v1643, 64
    %v2145 = vpop.permute.xlu0 %2144
    %2146 = vrot.lane.b32.xlu0 %v1646, 64
    %v2147 = vpop.permute.xlu0 %2146
    %2148 = vrot.lane.b32.xlu0 %v1648, 64
    %v2149 = vpop.permute.xlu0 %2148
    %2150 = vrot.lane.b32.xlu0 %v1651, 64
    %v2151 = vpop.permute.xlu0 %2150
    %2152 = vrot.lane.b32.xlu0 %v1653, 64
    %v2153 = vpop.permute.xlu0 %2152
    %2154 = vrot.lane.b32.xlu0 %v1656, 64
    %v2155 = vpop.permute.xlu0 %2154
    %2156 = vrot.lane.b32.xlu0 %v1658, 64
    %v2157 = vpop.permute.xlu0 %2156
    %2158 = vrot.lane.b32.xlu0 %v1661, 64
    %v2159 = vpop.permute.xlu0 %2158
    %2160 = vrot.lane.b32.xlu0 %v1663, 64
    %v2161 = vpop.permute.xlu0 %2160
    %2162 = vrot.lane.b32.xlu0 %v1666, 64
    %v2163 = vpop.permute.xlu0 %2162
    %2164 = vrot.lane.b32.xlu0 %v1668, 64
    %v2165 = vpop.permute.xlu0 %2164
    %2166 = vrot.lane.b32.xlu0 %v1671, 64
    %v2167 = vpop.permute.xlu0 %2166
    %2168 = vrot.lane.b32.xlu0 %v1673, 64
    %v2169 = vpop.permute.xlu0 %2168
    %2170 = vrot.lane.b32.xlu0 %v1676, 64
    %v2171 = vpop.permute.xlu0 %2170
    %2172 = vrot.lane.b32.xlu0 %v1678, 64
    %v2173 = vpop.permute.xlu0 %2172
    %2174 = vrot.lane.b32.xlu0 %v1681, 64
    %v2175 = vpop.permute.xlu0 %2174
    %2176 = vrot.lane.b32.xlu0 %v1683, 64
    %v2177 = vpop.permute.xlu0 %2176
    %2178 = vrot.lane.b32.xlu0 %v1686, 64
    %v2179 = vpop.permute.xlu0 %2178
    %2180 = vrot.lane.b32.xlu0 %v1688, 64
    %v2181 = vpop.permute.xlu0 %2180
    %2182 = vrot.lane.b32.xlu0 %v1691, 64
    %v2183 = vpop.permute.xlu0 %2182
    %2184 = vrot.lane.b32.xlu0 %v1693, 64
    %v2185 = vpop.permute.xlu0 %2184
    %2186 = vrot.lane.b32.xlu0 %v1696, 64
    %v2187 = vpop.permute.xlu0 %2186
    %2188 = vrot.lane.b32.xlu0 %v1698, 64
    %v2189 = vpop.permute.xlu0 %2188
    %2190 = vrot.lane.b32.xlu0 %v1701, 64
    %v2191 = vpop.permute.xlu0 %2190
    %2192 = vrot.lane.b32.xlu0 %v1703, 64
    %v2193 = vpop.permute.xlu0 %2192
    %2194 = vrot.lane.b32.xlu0 %v1706, 64
    %v2195 = vpop.permute.xlu0 %2194
    %2196 = vrot.lane.b32.xlu0 %v1708, 64
    %v2197 = vpop.permute.xlu0 %2196
    %2198 = vrot.lane.b32.xlu0 %v1711, 64
    %v2199 = vpop.permute.xlu0 %2198
    %2200 = vrot.lane.b32.xlu0 %v1713, 64
    %v2201 = vpop.permute.xlu0 %2200
    %2202 = vrot.lane.b32.xlu0 %v1716, 64
    %v2203 = vpop.permute.xlu0 %2202
    %2204 = vrot.lane.b32.xlu0 %v1718, 64
    %v2205 = vpop.permute.xlu0 %2204
    %2206 = vrot.lane.b32.xlu0 %v1721, 64
    %v2207 = vpop.permute.xlu0 %2206
    %2208 = vrot.lane.b32.xlu0 %v1723, 64
    %v2209 = vpop.permute.xlu0 %2208
    %2210 = vrot.lane.b32.xlu0 %v1726, 64
    %v2211 = vpop.permute.xlu0 %2210
    %2212 = vrot.lane.b32.xlu0 %v1728, 64
    %v2213 = vpop.permute.xlu0 %2212
    %2214 = vrot.lane.b32.xlu0 %v1731, 64
    %v2215 = vpop.permute.xlu0 %2214
    %2216 = vrot.lane.b32.xlu0 %v1733, 64
    %v2217 = vpop.permute.xlu0 %2216
    %2218 = vrot.lane.b32.xlu0 %v1736, 64
    %v2219 = vpop.permute.xlu0 %2218
    %2220 = vrot.lane.b32.xlu0 %v1738, 64
    %v2221 = vpop.permute.xlu0 %2220
    %2222 = vrot.lane.b32.xlu0 %v1741, 64
    %v2223 = vpop.permute.xlu0 %2222
    %2224 = vrot.lane.b32.xlu0 %v1743, 64
    %v2225 = vpop.permute.xlu0 %2224
    %2226 = vrot.lane.b32.xlu0 %v1746, 64
    %v2227 = vpop.permute.xlu0 %2226
    %2228 = vrot.lane.b32.xlu0 %v1748, 64
    %v2229 = vpop.permute.xlu0 %2228
    %2230 = vrot.lane.b32.xlu0 %v1751, 64
    %v2231 = vpop.permute.xlu0 %2230
    %2232 = vrot.lane.b32.xlu0 %v1753, 64
    %v2233 = vpop.permute.xlu0 %2232
    %2234 = vrot.lane.b32.xlu0 %v1756, 64
    %v2235 = vpop.permute.xlu0 %2234
    %2236 = vrot.lane.b32.xlu0 %v1758, 64
    %v2237 = vpop.permute.xlu0 %2236
    %2238 = vrot.lane.b32.xlu0 %v1761, 64
    %v2239 = vpop.permute.xlu0 %2238
    %2240 = vrot.lane.b32.xlu0 %v1763, 64
    %v2241 = vpop.permute.xlu0 %2240
    %2242 = vrot.lane.b32.xlu0 %v1766, 64
    %v2243 = vpop.permute.xlu0 %2242
    %2244 = vrot.lane.b32.xlu0 %v1768, 64
    %v2245 = vpop.permute.xlu0 %2244
    %2246 = vrot.lane.b32.xlu0 %v1771, 64
    %v2247 = vpop.permute.xlu0 %2246
    %2248 = vrot.lane.b32.xlu0 %v1773, 64
    %v2249 = vpop.permute.xlu0 %2248
    %2314 = vrot.lane.b32.xlu0 %v1412, 64
    %v2315 = vpop.permute.xlu0 %2314
    %2316 = vrot.lane.b32.xlu0 %v1413, 64
    %v2317 = vpop.permute.xlu0 %2316
    %2318 = vrot.lane.b32.xlu0 %v1415, 64
    %v2319 = vpop.permute.xlu0 %2318
    %2320 = vrot.lane.b32.xlu0 %v1416, 64
    %v2321 = vpop.permute.xlu0 %2320
    %2322 = vrot.lane.b32.xlu0 %v1418, 64
    %v2323 = vpop.permute.xlu0 %2322
    %2324 = vrot.lane.b32.xlu0 %v1419, 64
    %v2325 = vpop.permute.xlu0 %2324
    %2326 = vrot.lane.b32.xlu0 %v1421, 64
    %v2327 = vpop.permute.xlu0 %2326
    %2328 = vrot.lane.b32.xlu0 %v1422, 64
    %v2329 = vpop.permute.xlu0 %2328
    %2330 = vrot.lane.b32.xlu0 %v1424, 64
    %v2331 = vpop.permute.xlu0 %2330
    %2332 = vrot.lane.b32.xlu0 %v1425, 64
    %v2333 = vpop.permute.xlu0 %2332
    %2334 = vrot.lane.b32.xlu0 %v1427, 64
    %v2335 = vpop.permute.xlu0 %2334
    %2336 = vrot.lane.b32.xlu0 %v1428, 64
    %v2337 = vpop.permute.xlu0 %2336
    %2338 = vrot.lane.b32.xlu0 %v1430, 64
    %v2339 = vpop.permute.xlu0 %2338
    %2340 = vrot.lane.b32.xlu0 %v1431, 64
    %v2341 = vpop.permute.xlu0 %2340
    %2342 = vrot.lane.b32.xlu0 %v1433, 64
    %v2343 = vpop.permute.xlu0 %2342
    %2344 = vrot.lane.b32.xlu0 %v1434, 64
    %v2345 = vpop.permute.xlu0 %2344
    %2346 = vrot.lane.b32.xlu0 %v1436, 64
    %v2347 = vpop.permute.xlu0 %2346
    %2348 = vrot.lane.b32.xlu0 %v1437, 64
    %v2349 = vpop.permute.xlu0 %2348
    %2350 = vrot.lane.b32.xlu0 %v1439, 64
    %v2351 = vpop.permute.xlu0 %2350
    %2352 = vrot.lane.b32.xlu0 %v1440, 64
    %v2353 = vpop.permute.xlu0 %2352
    %2354 = vrot.lane.b32.xlu0 %v1442, 64
    %v2355 = vpop.permute.xlu0 %2354
    %2356 = vrot.lane.b32.xlu0 %v1443, 64
    %v2357 = vpop.permute.xlu0 %2356
    %2358 = vrot.lane.b32.xlu0 %v1445, 64
    %v2359 = vpop.permute.xlu0 %2358
    %2360 = vrot.lane.b32.xlu0 %v1446, 64
    %v2361 = vpop.permute.xlu0 %2360
    %2362 = vrot.lane.b32.xlu0 %v1448, 64
    %v2363 = vpop.permute.xlu0 %2362
    %2364 = vrot.lane.b32.xlu0 %v1449, 64
    %v2365 = vpop.permute.xlu0 %2364
    %2366 = vrot.lane.b32.xlu0 %v1451, 64
    %v2367 = vpop.permute.xlu0 %2366
    %2368 = vrot.lane.b32.xlu0 %v1452, 64
    %v2369 = vpop.permute.xlu0 %2368
    %2370 = vrot.lane.b32.xlu0 %v1454, 64
    %v2371 = vpop.permute.xlu0 %2370
    %2372 = vrot.lane.b32.xlu0 %v1455, 64
    %v2373 = vpop.permute.xlu0 %2372
    %2374 = vrot.lane.b32.xlu0 %v1457, 64
    %v2375 = vpop.permute.xlu0 %2374
    %2376 = vrot.lane.b32.xlu0 %v1458, 64
    %v2377 = vpop.permute.xlu0 %2376
    %2378 = vrot.lane.b32.xlu0 %v1466, 64
    %v2379 = vpop.permute.xlu0 %2378
    %2380 = vrot.lane.b32.xlu0 %v1467, 64
    %v2381 = vpop.permute.xlu0 %2380
    %2382 = vrot.lane.b32.xlu0 %v1469, 64
    %v2383 = vpop.permute.xlu0 %2382
    %2384 = vrot.lane.b32.xlu0 %v1470, 64
    %v2385 = vpop.permute.xlu0 %2384
    %2386 = vrot.lane.b32.xlu0 %v1472, 64
    %v2387 = vpop.permute.xlu0 %2386
    %2388 = vrot.lane.b32.xlu0 %v1473, 64
    %v2389 = vpop.permute.xlu0 %2388
    %2390 = vrot.lane.b32.xlu0 %v1475, 64
    %v2391 = vpop.permute.xlu0 %2390
    %2392 = vrot.lane.b32.xlu0 %v1476, 64
    %v2393 = vpop.permute.xlu0 %2392
    %2394 = vrot.lane.b32.xlu0 %v1478, 64
    %v2395 = vpop.permute.xlu0 %2394
    %2396 = vrot.lane.b32.xlu0 %v1479, 64
    %v2397 = vpop.permute.xlu0 %2396
    %2398 = vrot.lane.b32.xlu0 %v1481, 64
    %v2399 = vpop.permute.xlu0 %2398
    %2400 = vrot.lane.b32.xlu0 %v1482, 64
    %v2401 = vpop.permute.xlu0 %2400
    %2402 = vrot.lane.b32.xlu0 %v1484, 64
    %v2403 = vpop.permute.xlu0 %2402
    %2404 = vrot.lane.b32.xlu0 %v1485, 64
    %v2405 = vpop.permute.xlu0 %2404
    %2406 = vrot.lane.b32.xlu0 %v1487, 64
    %v2407 = vpop.permute.xlu0 %2406
    %2408 = vrot.lane.b32.xlu0 %v1488, 64
    %v2409 = vpop.permute.xlu0 %2408
    %2410 = vrot.lane.b32.xlu0 %v1490, 64
    %v2411 = vpop.permute.xlu0 %2410
    %2412 = vrot.lane.b32.xlu0 %v1491, 64
    %v2413 = vpop.permute.xlu0 %2412
    %2414 = vrot.lane.b32.xlu0 %v1493, 64
    %v2415 = vpop.permute.xlu0 %2414
    %2416 = vrot.lane.b32.xlu0 %v1494, 64
    %v2417 = vpop.permute.xlu0 %2416
    %2418 = vrot.lane.b32.xlu0 %v1496, 64
    %v2419 = vpop.permute.xlu0 %2418
    %2420 = vrot.lane.b32.xlu0 %v1497, 64
    %v2421 = vpop.permute.xlu0 %2420
    %2422 = vrot.lane.b32.xlu0 %v1499, 64
    %v2423 = vpop.permute.xlu0 %2422
    %2424 = vrot.lane.b32.xlu0 %v1500, 64
    %v2425 = vpop.permute.xlu0 %2424
    %2426 = vrot.lane.b32.xlu0 %v1502, 64
    %v2427 = vpop.permute.xlu0 %2426
    %2428 = vrot.lane.b32.xlu0 %v1503, 64
    %v2429 = vpop.permute.xlu0 %2428
    %2430 = vrot.lane.b32.xlu0 %v1505, 64
    %v2431 = vpop.permute.xlu0 %2430
    %2432 = vrot.lane.b32.xlu0 %v1506, 64
    %v2433 = vpop.permute.xlu0 %2432
    %2434 = vrot.lane.b32.xlu0 %v1508, 64
    %v2435 = vpop.permute.xlu0 %2434
    %2436 = vrot.lane.b32.xlu0 %v1509, 64
    %v2437 = vpop.permute.xlu0 %2436
    %2438 = vrot.lane.b32.xlu0 %v1511, 64
    %v2439 = vpop.permute.xlu0 %2438
    %2440 = vrot.lane.b32.xlu0 %v1512, 64
    %v2441 = vpop.permute.xlu0 %2440
    %2506 = vrot.lane.b32.xlu0 %v1781, 64
    %v2507 = vpop.permute.xlu0 %2506
    %2508 = vrot.lane.b32.xlu0 %v1783, 64
    %v2509 = vpop.permute.xlu0 %2508
    %2510 = vrot.lane.b32.xlu0 %v1786, 64
    %v2511 = vpop.permute.xlu0 %2510
    %2512 = vrot.lane.b32.xlu0 %v1788, 64
    %v2513 = vpop.permute.xlu0 %2512
    %2514 = vrot.lane.b32.xlu0 %v1791, 64
    %v2515 = vpop.permute.xlu0 %2514
    %2516 = vrot.lane.b32.xlu0 %v1793, 64
    %v2517 = vpop.permute.xlu0 %2516
    %2518 = vrot.lane.b32.xlu0 %v1796, 64
    %v2519 = vpop.permute.xlu0 %2518
    %2520 = vrot.lane.b32.xlu0 %v1798, 64
    %v2521 = vpop.permute.xlu0 %2520
    %2522 = vrot.lane.b32.xlu0 %v1801, 64
    %v2523 = vpop.permute.xlu0 %2522
    %2524 = vrot.lane.b32.xlu0 %v1803, 64
    %v2525 = vpop.permute.xlu0 %2524
    %2526 = vrot.lane.b32.xlu0 %v1806, 64
    %v2527 = vpop.permute.xlu0 %2526
    %2528 = vrot.lane.b32.xlu0 %v1808, 64
    %v2529 = vpop.permute.xlu0 %2528
    %2530 = vrot.lane.b32.xlu0 %v1811, 64
    %v2531 = vpop.permute.xlu0 %2530
    %2532 = vrot.lane.b32.xlu0 %v1813, 64
    %v2533 = vpop.permute.xlu0 %2532
    %2534 = vrot.lane.b32.xlu0 %v1816, 64
    %v2535 = vpop.permute.xlu0 %2534
    %2536 = vrot.lane.b32.xlu0 %v1818, 64
    %v2537 = vpop.permute.xlu0 %2536
    %2538 = vrot.lane.b32.xlu0 %v1821, 64
    %v2539 = vpop.permute.xlu0 %2538
    %2540 = vrot.lane.b32.xlu0 %v1823, 64
    %v2541 = vpop.permute.xlu0 %2540
    %2542 = vrot.lane.b32.xlu0 %v1826, 64
    %v2543 = vpop.permute.xlu0 %2542
    %2544 = vrot.lane.b32.xlu0 %v1828, 64
    %v2545 = vpop.permute.xlu0 %2544
    %2546 = vrot.lane.b32.xlu0 %v1831, 64
    %v2547 = vpop.permute.xlu0 %2546
    %2548 = vrot.lane.b32.xlu0 %v1833, 64
    %v2549 = vpop.permute.xlu0 %2548
    %2550 = vrot.lane.b32.xlu0 %v1836, 64
    %v2551 = vpop.permute.xlu0 %2550
    %2552 = vrot.lane.b32.xlu0 %v1838, 64
    %v2553 = vpop.permute.xlu0 %2552
    %2554 = vrot.lane.b32.xlu0 %v1841, 64
    %v2555 = vpop.permute.xlu0 %2554
    %2556 = vrot.lane.b32.xlu0 %v1843, 64
    %v2557 = vpop.permute.xlu0 %2556
    %2558 = vrot.lane.b32.xlu0 %v1846, 64
    %v2559 = vpop.permute.xlu0 %2558
    %2560 = vrot.lane.b32.xlu0 %v1848, 64
    %v2561 = vpop.permute.xlu0 %2560
    %2562 = vrot.lane.b32.xlu0 %v1851, 64
    %v2563 = vpop.permute.xlu0 %2562
    %2564 = vrot.lane.b32.xlu0 %v1853, 64
    %v2565 = vpop.permute.xlu0 %2564
    %2566 = vrot.lane.b32.xlu0 %v2080, 64
    %v2567 = vpop.permute.xlu0 %2566
    %2568 = vrot.lane.b32.xlu0 %v2082, 64
    %v2569 = vpop.permute.xlu0 %2568
    %2570 = vrot.lane.b32.xlu0 %v1861, 64
    %v2571 = vpop.permute.xlu0 %2570
    %2572 = vrot.lane.b32.xlu0 %v1863, 64
    %v2573 = vpop.permute.xlu0 %2572
    %2574 = vrot.lane.b32.xlu0 %v1866, 64
    %v2575 = vpop.permute.xlu0 %2574
    %2576 = vrot.lane.b32.xlu0 %v1868, 64
    %v2577 = vpop.permute.xlu0 %2576
    %2578 = vrot.lane.b32.xlu0 %v1871, 64
    %v2579 = vpop.permute.xlu0 %2578
    %2580 = vrot.lane.b32.xlu0 %v1873, 64
    %v2581 = vpop.permute.xlu0 %2580
    %2582 = vrot.lane.b32.xlu0 %v1876, 64
    %v2583 = vpop.permute.xlu0 %2582
    %2584 = vrot.lane.b32.xlu0 %v1878, 64
    %v2585 = vpop.permute.xlu0 %2584
    %2586 = vrot.lane.b32.xlu0 %v1881, 64
    %v2587 = vpop.permute.xlu0 %2586
    %2588 = vrot.lane.b32.xlu0 %v1883, 64
    %v2589 = vpop.permute.xlu0 %2588
    %2590 = vrot.lane.b32.xlu0 %v1886, 64
    %v2591 = vpop.permute.xlu0 %2590
    %2592 = vrot.lane.b32.xlu0 %v1888, 64
    %v2593 = vpop.permute.xlu0 %2592
    %2594 = vrot.lane.b32.xlu0 %v1891, 64
    %v2595 = vpop.permute.xlu0 %2594
    %2596 = vrot.lane.b32.xlu0 %v1893, 64
    %v2597 = vpop.permute.xlu0 %2596
    %2598 = vrot.lane.b32.xlu0 %v1896, 64
    %v2599 = vpop.permute.xlu0 %2598
    %2600 = vrot.lane.b32.xlu0 %v1898, 64
    %v2601 = vpop.permute.xlu0 %2600
    %2602 = vrot.lane.b32.xlu0 %v1901, 64
    %v2603 = vpop.permute.xlu0 %2602
    %2604 = vrot.lane.b32.xlu0 %v1903, 64
    %v2605 = vpop.permute.xlu0 %2604
    %2606 = vrot.lane.b32.xlu0 %v1906, 64
    %v2607 = vpop.permute.xlu0 %2606
    %2608 = vrot.lane.b32.xlu0 %v1908, 64
    %v2609 = vpop.permute.xlu0 %2608
    %2610 = vrot.lane.b32.xlu0 %v1911, 64
    %v2611 = vpop.permute.xlu0 %2610
    %2612 = vrot.lane.b32.xlu0 %v1913, 64
    %v2613 = vpop.permute.xlu0 %2612
    %2614 = vrot.lane.b32.xlu0 %v1916, 64
    %v2615 = vpop.permute.xlu0 %2614
    %2616 = vrot.lane.b32.xlu0 %v1918, 64
    %v2617 = vpop.permute.xlu0 %2616
    %2618 = vrot.lane.b32.xlu0 %v1921, 64
    %v2619 = vpop.permute.xlu0 %2618
    %2620 = vrot.lane.b32.xlu0 %v1923, 64
    %v2621 = vpop.permute.xlu0 %2620
    %2622 = vrot.lane.b32.xlu0 %v1926, 64
    %v2623 = vpop.permute.xlu0 %2622
    %2624 = vrot.lane.b32.xlu0 %v1928, 64
    %v2625 = vpop.permute.xlu0 %2624
    %2626 = vrot.lane.b32.xlu0 %v1931, 64
    %v2627 = vpop.permute.xlu0 %2626
    %2628 = vrot.lane.b32.xlu0 %v1933, 64
    %v2629 = vpop.permute.xlu0 %2628
    %2630 = vrot.lane.b32.xlu0 %v2085, 64
    %v2631 = vpop.permute.xlu0 %2630
    %2632 = vrot.lane.b32.xlu0 %v2087, 64
    %v2633 = vpop.permute.xlu0 %2632
    %2698 = vrot.lane.b32.xlu0 %v2006, 64
    %v2699 = vpop.permute.xlu0 %2698
    %2700 = vrot.lane.b32.xlu0 %v2008, 64
    %v2701 = vpop.permute.xlu0 %2700
    %2702 = vrot.lane.b32.xlu0 %v2096, 64
    %v2703 = vpop.permute.xlu0 %2702
    %2704 = vrot.lane.b32.xlu0 %v2098, 64
    %v2705 = vpop.permute.xlu0 %2704
    %2706 = vrot.lane.b32.xlu0 %v2011, 64
    %v2707 = vpop.permute.xlu0 %2706
    %2708 = vrot.lane.b32.xlu0 %v2013, 64
    %v2709 = vpop.permute.xlu0 %2708
    %2710 = vrot.lane.b32.xlu0 %v2101, 64
    %v2711 = vpop.permute.xlu0 %2710
    %2712 = vrot.lane.b32.xlu0 %v2103, 64
    %v2713 = vpop.permute.xlu0 %2712
    %v2722 = vsel %vm40, %v1409, %v2123
    %v2723 = vsel %vm40, %v1410, %v2125
    %v2724 = vsel %vm40, %v1412, %v2127
    %v2725 = vsel %vm40, %v1413, %v2129
    %v2726 = vsel %vm40, %v1415, %v2131
    %v2727 = vsel %vm40, %v1416, %v2133
    %v2728 = vsel %vm40, %v1418, %v2135
    %v2729 = vsel %vm40, %v1419, %v2137
    %v2730 = vsel %vm40, %v1421, %v2139
    %v2731 = vsel %vm40, %v1422, %v2141
    %v2732 = vsel %vm40, %v1424, %v2143
    %v2733 = vsel %vm40, %v1425, %v2145
    %v2734 = vsel %vm40, %v1427, %v2147
    %v2735 = vsel %vm40, %v1428, %v2149
    %v2736 = vsel %vm40, %v1430, %v2151
    %v2737 = vsel %vm40, %v1431, %v2153
    %v2738 = vsel %vm40, %v1433, %v2155
    %v2739 = vsel %vm40, %v1434, %v2157
    %v2740 = vsel %vm40, %v1436, %v2159
    %v2741 = vsel %vm40, %v1437, %v2161
    %v2742 = vsel %vm40, %v1439, %v2163
    %v2743 = vsel %vm40, %v1440, %v2165
    %v2744 = vsel %vm40, %v1442, %v2167
    %v2745 = vsel %vm40, %v1443, %v2169
    %v2746 = vsel %vm40, %v1445, %v2171
    %v2747 = vsel %vm40, %v1446, %v2173
    %v2748 = vsel %vm40, %v1448, %v2175
    %v2749 = vsel %vm40, %v1449, %v2177
    %v2750 = vsel %vm40, %v1451, %v2179
    %v2751 = vsel %vm40, %v1452, %v2181
    %v2752 = vsel %vm40, %v1454, %v2183
    %v2753 = vsel %vm40, %v1455, %v2185
    %v2754 = vsel %vm40, %v1463, %v2187
    %v2755 = vsel %vm40, %v1464, %v2189
    %v2756 = vsel %vm40, %v1466, %v2191
    %v2757 = vsel %vm40, %v1467, %v2193
    %v2758 = vsel %vm40, %v1469, %v2195
    %v2759 = vsel %vm40, %v1470, %v2197
    %v2760 = vsel %vm40, %v1472, %v2199
    %v2761 = vsel %vm40, %v1473, %v2201
    %v2762 = vsel %vm40, %v1475, %v2203
    %v2763 = vsel %vm40, %v1476, %v2205
    %v2764 = vsel %vm40, %v1478, %v2207
    %v2765 = vsel %vm40, %v1479, %v2209
    %v2766 = vsel %vm40, %v1481, %v2211
    %v2767 = vsel %vm40, %v1482, %v2213
    %v2768 = vsel %vm40, %v1484, %v2215
    %v2769 = vsel %vm40, %v1485, %v2217
    %v2770 = vsel %vm40, %v1487, %v2219
    %v2771 = vsel %vm40, %v1488, %v2221
    %v2772 = vsel %vm40, %v1490, %v2223
    %v2773 = vsel %vm40, %v1491, %v2225
    %v2774 = vsel %vm40, %v1493, %v2227
    %v2775 = vsel %vm40, %v1494, %v2229
    %v2776 = vsel %vm40, %v1496, %v2231
    %v2777 = vsel %vm40, %v1497, %v2233
    %v2778 = vsel %vm40, %v1499, %v2235
    %v2779 = vsel %vm40, %v1500, %v2237
    %v2780 = vsel %vm40, %v1502, %v2239
    %v2781 = vsel %vm40, %v1503, %v2241
    %v2782 = vsel %vm40, %v1505, %v2243
    %v2783 = vsel %vm40, %v1506, %v2245
    %v2784 = vsel %vm40, %v1508, %v2247
    %v2785 = vsel %vm40, %v1509, %v2249
    %v2786 = vsel %vm40, %v1776, %v2315
    %v2787 = vsel %vm40, %v1778, %v2317
    %v2788 = vsel %vm40, %v1781, %v2319
    %v2789 = vsel %vm40, %v1783, %v2321
    %v2790 = vsel %vm40, %v1786, %v2323
    %v2791 = vsel %vm40, %v1788, %v2325
    %v2792 = vsel %vm40, %v1791, %v2327
    %v2793 = vsel %vm40, %v1793, %v2329
    %v2794 = vsel %vm40, %v1796, %v2331
    %v2795 = vsel %vm40, %v1798, %v2333
    %v2796 = vsel %vm40, %v1801, %v2335
    %v2797 = vsel %vm40, %v1803, %v2337
    %v2798 = vsel %vm40, %v1806, %v2339
    %v2799 = vsel %vm40, %v1808, %v2341
    %v2800 = vsel %vm40, %v1811, %v2343
    %v2801 = vsel %vm40, %v1813, %v2345
    %v2802 = vsel %vm40, %v1816, %v2347
    %v2803 = vsel %vm40, %v1818, %v2349
    %v2804 = vsel %vm40, %v1821, %v2351
    %v2805 = vsel %vm40, %v1823, %v2353
    %v2806 = vsel %vm40, %v1826, %v2355
    %v2807 = vsel %vm40, %v1828, %v2357
    %v2808 = vsel %vm40, %v1831, %v2359
    %v2809 = vsel %vm40, %v1833, %v2361
    %v2810 = vsel %vm40, %v1836, %v2363
    %v2811 = vsel %vm40, %v1838, %v2365
    %v2812 = vsel %vm40, %v1841, %v2367
    %v2813 = vsel %vm40, %v1843, %v2369
    %v2814 = vsel %vm40, %v1846, %v2371
    %v2815 = vsel %vm40, %v1848, %v2373
    %v2816 = vsel %vm40, %v1851, %v2375
    %v2817 = vsel %vm40, %v1853, %v2377
    %v2818 = vsel %vm40, %v1856, %v2379
    %v2819 = vsel %vm40, %v1858, %v2381
    %v2820 = vsel %vm40, %v1861, %v2383
    %v2821 = vsel %vm40, %v1863, %v2385
    %v2822 = vsel %vm40, %v1866, %v2387
    %v2823 = vsel %vm40, %v1868, %v2389
    %v2824 = vsel %vm40, %v1871, %v2391
    %v2825 = vsel %vm40, %v1873, %v2393
    %v2826 = vsel %vm40, %v1876, %v2395
    %v2827 = vsel %vm40, %v1878, %v2397
    %v2828 = vsel %vm40, %v1881, %v2399
    %v2829 = vsel %vm40, %v1883, %v2401
    %v2830 = vsel %vm40, %v1886, %v2403
    %v2831 = vsel %vm40, %v1888, %v2405
    %v2832 = vsel %vm40, %v1891, %v2407
    %v2833 = vsel %vm40, %v1893, %v2409
    %v2834 = vsel %vm40, %v1896, %v2411
    %v2835 = vsel %vm40, %v1898, %v2413
    %v2836 = vsel %vm40, %v1901, %v2415
    %v2837 = vsel %vm40, %v1903, %v2417
    %v2838 = vsel %vm40, %v1906, %v2419
    %v2839 = vsel %vm40, %v1908, %v2421
    %v2840 = vsel %vm40, %v1911, %v2423
    %v2841 = vsel %vm40, %v1913, %v2425
    %v2842 = vsel %vm40, %v1916, %v2427
    %v2843 = vsel %vm40, %v1918, %v2429
    %v2844 = vsel %vm40, %v1921, %v2431
    %v2845 = vsel %vm40, %v1923, %v2433
    %v2846 = vsel %vm40, %v1926, %v2435
    %v2847 = vsel %vm40, %v1928, %v2437
    %v2848 = vsel %vm40, %v1931, %v2439
    %v2849 = vsel %vm40, %v1933, %v2441
    %v2850 = vsel %vm40, %v1621, %v2507
    %v2851 = vsel %vm40, %v1623, %v2509
    %v2852 = vsel %vm40, %v1626, %v2511
    %v2853 = vsel %vm40, %v1628, %v2513
    %v2854 = vsel %vm40, %v1631, %v2515
    %v2855 = vsel %vm40, %v1633, %v2517
    %v2856 = vsel %vm40, %v1636, %v2519
    %v2857 = vsel %vm40, %v1638, %v2521
    %v2858 = vsel %vm40, %v1641, %v2523
    %v2859 = vsel %vm40, %v1643, %v2525
    %v2860 = vsel %vm40, %v1646, %v2527
    %v2861 = vsel %vm40, %v1648, %v2529
    %v2862 = vsel %vm40, %v1651, %v2531
    %v2863 = vsel %vm40, %v1653, %v2533
    %v2864 = vsel %vm40, %v1656, %v2535
    %v2865 = vsel %vm40, %v1658, %v2537
    %v2866 = vsel %vm40, %v1661, %v2539
    %v2867 = vsel %vm40, %v1663, %v2541
    %v2868 = vsel %vm40, %v1666, %v2543
    %v2869 = vsel %vm40, %v1668, %v2545
    %v2870 = vsel %vm40, %v1671, %v2547
    %v2871 = vsel %vm40, %v1673, %v2549
    %v2872 = vsel %vm40, %v1676, %v2551
    %v2873 = vsel %vm40, %v1678, %v2553
    %v2874 = vsel %vm40, %v1681, %v2555
    %v2875 = vsel %vm40, %v1683, %v2557
    %v2876 = vsel %vm40, %v1686, %v2559
    %v2877 = vsel %vm40, %v1688, %v2561
    %v2878 = vsel %vm40, %v1691, %v2563
    %v2879 = vsel %vm40, %v1693, %v2565
    %v2880 = vsel %vm40, %v2006, %v2567
    %v2881 = vsel %vm40, %v2008, %v2569
    %v2882 = vsel %vm40, %v1701, %v2571
    %v2883 = vsel %vm40, %v1703, %v2573
    %v2884 = vsel %vm40, %v1706, %v2575
    %v2885 = vsel %vm40, %v1708, %v2577
    %v2886 = vsel %vm40, %v1711, %v2579
    %v2887 = vsel %vm40, %v1713, %v2581
    %v2888 = vsel %vm40, %v1716, %v2583
    %v2889 = vsel %vm40, %v1718, %v2585
    %v2890 = vsel %vm40, %v1721, %v2587
    %v2891 = vsel %vm40, %v1723, %v2589
    %v2892 = vsel %vm40, %v1726, %v2591
    %v2893 = vsel %vm40, %v1728, %v2593
    %v2894 = vsel %vm40, %v1731, %v2595
    %v2895 = vsel %vm40, %v1733, %v2597
    %v2896 = vsel %vm40, %v1736, %v2599
    %v2897 = vsel %vm40, %v1738, %v2601
    %v2898 = vsel %vm40, %v1741, %v2603
    %v2899 = vsel %vm40, %v1743, %v2605
    %v2900 = vsel %vm40, %v1746, %v2607
    %v2901 = vsel %vm40, %v1748, %v2609
    %v2902 = vsel %vm40, %v1751, %v2611
    %v2903 = vsel %vm40, %v1753, %v2613
    %v2904 = vsel %vm40, %v1756, %v2615
    %v2905 = vsel %vm40, %v1758, %v2617
    %v2906 = vsel %vm40, %v1761, %v2619
    %v2907 = vsel %vm40, %v1763, %v2621
    %v2908 = vsel %vm40, %v1766, %v2623
    %v2909 = vsel %vm40, %v1768, %v2625
    %v2910 = vsel %vm40, %v1771, %v2627
    %v2911 = vsel %vm40, %v1773, %v2629
    %v2912 = vsel %vm40, %v2011, %v2631
    %v2913 = vsel %vm40, %v2013, %v2633
    %v2914 = vsel %vm40, %v1457, %v2699
    %v2915 = vsel %vm40, %v1458, %v2701
    %v2916 = vsel %vm40, %v1460, %v2703
    %v2917 = vsel %vm40, %v1461, %v2705
    %v2918 = vsel %vm40, %v1511, %v2707
    %v2919 = vsel %vm40, %v1512, %v2709
    %v2920 = vsel %vm40, %v1514, %v2711
    %v2921 = vsel %vm40, %v1515, %v2713
    %v2922 = vpack.c.bf16 %v2723, %v2722
    %v2923 = vpack.c.bf16 %v2787, %v2786
    %v2924 = vpack.c.bf16 %v2851, %v2850
    %v2925 = vpack.c.bf16 %v2727, %v2726
    %v2926 = vpack.c.bf16 %v1788, %v1786
    %v2927 = vpack.c.bf16 %v2725, %v2724
    %v2928 = vpack.c.bf16 %v2789, %v2788
    %v2929 = vpack.c.bf16 %v2853, %v2852
    %v2930 = vpack.c.bf16 %v2729, %v2728
    %v2931 = vpack.c.bf16 %v1793, %v1791
    %v2932 = vpack.c.bf16 %v2791, %v2790
    %v2933 = vpack.c.bf16 %v2855, %v2854
    %v2934 = vpack.c.bf16 %v2731, %v2730
    %v2935 = vpack.c.bf16 %v1798, %v1796
    %v2936 = vpack.c.bf16 %v2793, %v2792
    %v2937 = vpack.c.bf16 %v2857, %v2856
    %v2938 = vpack.c.bf16 %v2733, %v2732
    %v2939 = vpack.c.bf16 %v1803, %v1801
    %v2940 = vpack.c.bf16 %v2795, %v2794
    %v2941 = vpack.c.bf16 %v2859, %v2858
    %v2942 = vpack.c.bf16 %v2735, %v2734
    %v2943 = vpack.c.bf16 %v1808, %v1806
    %v2944 = vpack.c.bf16 %v2797, %v2796
    %v2945 = vpack.c.bf16 %v2861, %v2860
    %v2946 = vpack.c.bf16 %v2737, %v2736
    %v2947 = vpack.c.bf16 %v1813, %v1811
    %v2948 = vpack.c.bf16 %v2799, %v2798
    %v2949 = vpack.c.bf16 %v2863, %v2862
    %v2950 = vpack.c.bf16 %v2739, %v2738
    %v2951 = vpack.c.bf16 %v1818, %v1816
    %v2952 = vpack.c.bf16 %v2801, %v2800
    %v2953 = vpack.c.bf16 %v2865, %v2864
    %v2954 = vpack.c.bf16 %v2741, %v2740
    %v2955 = vpack.c.bf16 %v1823, %v1821
    %v2956 = vpack.c.bf16 %v2803, %v2802
    %v2957 = vpack.c.bf16 %v2867, %v2866
    %v2958 = vpack.c.bf16 %v2743, %v2742
    %v2959 = vpack.c.bf16 %v1828, %v1826
    %v2960 = vpack.c.bf16 %v2805, %v2804
    %v2961 = vpack.c.bf16 %v2869, %v2868
    %v2962 = vpack.c.bf16 %v2745, %v2744
    %v2963 = vpack.c.bf16 %v1833, %v1831
    %v2964 = vpack.c.bf16 %v2807, %v2806
    %v2965 = vpack.c.bf16 %v2871, %v2870
    %v2966 = vpack.c.bf16 %v2747, %v2746
    %v2967 = vpack.c.bf16 %v1838, %v1836
    %v2968 = vpack.c.bf16 %v2809, %v2808
    %v2969 = vpack.c.bf16 %v2873, %v2872
    %v2970 = vpack.c.bf16 %v2749, %v2748
    %v2971 = vpack.c.bf16 %v1843, %v1841
    %v2972 = vpack.c.bf16 %v2811, %v2810
    %v2973 = vpack.c.bf16 %v2875, %v2874
    %v2974 = vpack.c.bf16 %v2751, %v2750
    %v2975 = vpack.c.bf16 %v1848, %v1846
    %v2976 = vpack.c.bf16 %v2813, %v2812
    %v2977 = vpack.c.bf16 %v2877, %v2876
    %v2978 = vpack.c.bf16 %v2753, %v2752
    %v2979 = vpack.c.bf16 %v1853, %v1851
    %v2980 = vpack.c.bf16 %v2815, %v2814
    %v2981 = vpack.c.bf16 %v2879, %v2878
    %v2982 = vpack.c.bf16 %v2915, %v2914
    %v2983 = vpack.c.bf16 %v2082, %v2080
    %v2984 = vpack.c.bf16 %v2817, %v2816
    %v2985 = vpack.c.bf16 %v2881, %v2880
    %v2986 = vpack.c.bf16 %v2917, %v2916
    %v2987 = vpack.c.bf16 %v2108, %v2106
    %v2988 = vpack.c.bf16 %v2755, %v2754
    %v2989 = vpack.c.bf16 %v2819, %v2818
    %v2990 = vpack.c.bf16 %v2883, %v2882
    %v2991 = vpack.c.bf16 %v2759, %v2758
    %v2992 = vpack.c.bf16 %v1868, %v1866
    %v2993 = vpack.c.bf16 %v2757, %v2756
    %v2994 = vpack.c.bf16 %v2821, %v2820
    %v2995 = vpack.c.bf16 %v2885, %v2884
    %v2996 = vpack.c.bf16 %v2761, %v2760
    %v2997 = vpack.c.bf16 %v1873, %v1871
    %v2998 = vpack.c.bf16 %v2823, %v2822
    %v2999 = vpack.c.bf16 %v2887, %v2886
    %v3000 = vpack.c.bf16 %v2763, %v2762
    %v3001 = vpack.c.bf16 %v1878, %v1876
    %v3002 = vpack.c.bf16 %v2825, %v2824
    %v3003 = vpack.c.bf16 %v2889, %v2888
    %v3004 = vpack.c.bf16 %v2765, %v2764
    %v3005 = vpack.c.bf16 %v1883, %v1881
    %v3006 = vpack.c.bf16 %v2827, %v2826
    %v3007 = vpack.c.bf16 %v2891, %v2890
    %v3008 = vpack.c.bf16 %v2767, %v2766
    %v3009 = vpack.c.bf16 %v1888, %v1886
    %v3010 = vpack.c.bf16 %v2829, %v2828
    %v3011 = vpack.c.bf16 %v2893, %v2892
    %v3012 = vpack.c.bf16 %v2769, %v2768
    %v3013 = vpack.c.bf16 %v1893, %v1891
    %v3014 = vpack.c.bf16 %v2831, %v2830
    %v3015 = vpack.c.bf16 %v2895, %v2894
    %v3016 = vpack.c.bf16 %v2771, %v2770
    %v3017 = vpack.c.bf16 %v1898, %v1896
    %v3018 = vpack.c.bf16 %v2833, %v2832
    %v3019 = vpack.c.bf16 %v2897, %v2896
    %v3020 = vpack.c.bf16 %v2773, %v2772
    %v3021 = vpack.c.bf16 %v1903, %v1901
    %v3022 = vpack.c.bf16 %v2835, %v2834
    %v3023 = vpack.c.bf16 %v2899, %v2898
    %v3024 = vpack.c.bf16 %v2775, %v2774
    %v3025 = vpack.c.bf16 %v1908, %v1906
    %v3026 = vpack.c.bf16 %v2837, %v2836
    %v3027 = vpack.c.bf16 %v2901, %v2900
    %v3028 = vpack.c.bf16 %v2777, %v2776
    %v3029 = vpack.c.bf16 %v1913, %v1911
    %v3030 = vpack.c.bf16 %v2839, %v2838
    %v3031 = vpack.c.bf16 %v2903, %v2902
    %v3032 = vpack.c.bf16 %v2779, %v2778
    %v3033 = vpack.c.bf16 %v1918, %v1916
    %v3034 = vpack.c.bf16 %v2841, %v2840
    %v3035 = vpack.c.bf16 %v2905, %v2904
    %v3036 = vpack.c.bf16 %v2781, %v2780
    %v3037 = vpack.c.bf16 %v1923, %v1921
    %v3038 = vpack.c.bf16 %v2843, %v2842
    %v3039 = vpack.c.bf16 %v2907, %v2906
    %v3040 = vpack.c.bf16 %v2783, %v2782
    %v3041 = vpack.c.bf16 %v1928, %v1926
    %v3042 = vpack.c.bf16 %v2845, %v2844
    %v3043 = vpack.c.bf16 %v2909, %v2908
    %v3044 = vpack.c.bf16 %v2785, %v2784
    %v3045 = vpack.c.bf16 %v1933, %v1931
    %v3046 = vpack.c.bf16 %v2847, %v2846
    %v3047 = vpack.c.bf16 %v2911, %v2910
    %v3048 = vpack.c.bf16 %v2919, %v2918
    %v3049 = vpack.c.bf16 %v2087, %v2085
    %v3050 = vpack.c.bf16 %v2849, %v2848
    %v3051 = vpack.c.bf16 %v2913, %v2912
    %v3052 = vpack.c.bf16 %v2921, %v2920
    %v3053 = vpack.c.bf16 %v2113, %v2111
    %v3054 = vld [vmem:[%s5] sm:$0xf]
    %v3055 = vld [vmem:[%s5 + $0x4] sm:$0xf]
    %v3056 = vld [vmem:[%s5 + $0x8] sm:$0xf]
    %v3057 = vld [vmem:[%s5 + $0xc] sm:$0xf]
    %v3058 = vld [vmem:[%s5 + $0x10] sm:$0xf]
    %v3059 = vld [vmem:[%s5 + $0x14] sm:$0xf]
    %v3060 = vld [vmem:[%s5 + $0x18] sm:$0xf]
    %v3061 = vld [vmem:[%s5 + $0x1c] sm:$0xf]
    %v3062 = vld [vmem:[%s5 + $0x20] sm:$0xf]
    %v3063 = vld [vmem:[%s5 + $0x24] sm:$0xf]
    %v3064 = vld [vmem:[%s5 + $0x28] sm:$0xf]
    %v3065 = vld [vmem:[%s5 + $0x2c] sm:$0xf]
    %v3066 = vld [vmem:[%s5 + $0x30] sm:$0xf]
    %v3067 = vld [vmem:[%s5 + $0x34] sm:$0xf]
    %v3068 = vld [vmem:[%s5 + $0x38] sm:$0xf]
    %v3069 = vld [vmem:[%s5 + $0x3c] sm:$0xf]
    %v3070 = vld [vmem:[%s5 + $0x40] sm:$0xf]
    %v3071 = vld [vmem:[%s5 + $0x44] sm:$0xf]
    %v3072 = vld [vmem:[%s5 + $0x48] sm:$0xf]
    %v3073 = vld [vmem:[%s5 + $0x4c] sm:$0xf]
    %v3074 = vld [vmem:[%s5 + $0x50] sm:$0xf]
    %v3075 = vld [vmem:[%s5 + $0x54] sm:$0xf]
    %v3076 = vld [vmem:[%s5 + $0x58] sm:$0xf]
    %v3077 = vld [vmem:[%s5 + $0x5c] sm:$0xf]
    %v3078 = vld [vmem:[%s5 + $0x60] sm:$0xf]
    %v3079 = vld [vmem:[%s5 + $0x64] sm:$0xf]
    %v3080 = vld [vmem:[%s5 + $0x68] sm:$0xf]
    %v3081 = vld [vmem:[%s5 + $0x6c] sm:$0xf]
    %v3082 = vld [vmem:[%s5 + $0x70] sm:$0xf]
    %v3083 = vld [vmem:[%s5 + $0x74] sm:$0xf]
    %v3084 = vld [vmem:[%s5 + $0x78] sm:$0xf]
    %v3085 = vld [vmem:[%s5 + $0x7c] sm:$0xf]
    %v3086 = vld [vmem:[%s5 + $0x80] sm:$0xf]
    %v3087 = vld [vmem:[%s5 + $0x84] sm:$0xf]
    %v3088 = vld [vmem:[%s5 + $0x88] sm:$0xf]
    %v3089 = vld [vmem:[%s5 + $0x8c] sm:$0xf]
    %v3090 = vld [vmem:[%s5 + $0x90] sm:$0xf]
    %v3091 = vld [vmem:[%s5 + $0x94] sm:$0xf]
    %v3092 = vld [vmem:[%s5 + $0x98] sm:$0xf]
    %v3093 = vld [vmem:[%s5 + $0x9c] sm:$0xf]
    %v3094 = vld [vmem:[%s5 + $0xa0] sm:$0xf]
    %v3095 = vld [vmem:[%s5 + $0xa4] sm:$0xf]
    %v3096 = vld [vmem:[%s5 + $0xa8] sm:$0xf]
    %v3097 = vld [vmem:[%s5 + $0xac] sm:$0xf]
    %v3098 = vld [vmem:[%s5 + $0xb0] sm:$0xf]
    %v3099 = vld [vmem:[%s5 + $0xb4] sm:$0xf]
    %v3100 = vld [vmem:[%s5 + $0xb8] sm:$0xf]
    %v3101 = vld [vmem:[%s5 + $0xbc] sm:$0xf]
    %v3102 = vld [vmem:[%s5 + $0xc0] sm:$0xf]
    %v3103 = vld [vmem:[%s5 + $0xc4] sm:$0xf]
    %v3104 = vld [vmem:[%s5 + $0xc8] sm:$0xf]
    %v3105 = vld [vmem:[%s5 + $0xcc] sm:$0xf]
    %v3106 = vld [vmem:[%s5 + $0xd0] sm:$0xf]
    %v3107 = vld [vmem:[%s5 + $0xd4] sm:$0xf]
    %v3108 = vld [vmem:[%s5 + $0xd8] sm:$0xf]
    %v3109 = vld [vmem:[%s5 + $0xdc] sm:$0xf]
    %v3110 = vld [vmem:[%s5 + $0xe0] sm:$0xf]
    %v3111 = vld [vmem:[%s5 + $0xe4] sm:$0xf]
    %v3112 = vld [vmem:[%s5 + $0xe8] sm:$0xf]
    %v3113 = vld [vmem:[%s5 + $0xec] sm:$0xf]
    %v3114 = vld [vmem:[%s5 + $0xf0] sm:$0xf]
    %v3115 = vld [vmem:[%s5 + $0xf4] sm:$0xf]
    %v3116 = vld [vmem:[%s5 + $0xf8] sm:$0xf]
    %v3117 = vld [vmem:[%s5 + $0xfc] sm:$0xf]
    %v3118 = vld [vmem:[%s5 + $0x100] sm:$0xf]
    %v3119 = vld [vmem:[%s5 + $0x104] sm:$0xf]
    %v3120 = vld [vmem:[%s5 + $0x108] sm:$0xf]
    %v3121 = vld [vmem:[%s5 + $0x10c] sm:$0xf]
    %v3122 = vld [vmem:[%s5 + $0x110] sm:$0xf]
    %v3123 = vld [vmem:[%s5 + $0x114] sm:$0xf]
    %v3124 = vld [vmem:[%s5 + $0x118] sm:$0xf]
    %v3125 = vld [vmem:[%s5 + $0x11c] sm:$0xf]
    %v3126 = vld [vmem:[%s6] sm:$0x1]
    %v3128 = vperm.slane %v3126, 0
    %v3202 = vunpack.c.l.b16 %v3054
    %v3203 = vunpack.c.l.b16 %v3055
    %v3204 = vunpack.c.l.b16 %v3056
    %v3205 = vunpack.c.l.b16 %v3057
    %v3206 = vunpack.c.l.b16 %v3058
    %v3207 = vunpack.c.l.b16 %v3059
    %v3208 = vunpack.c.l.b16 %v3060
    %v3209 = vunpack.c.l.b16 %v3061
    %v3210 = vunpack.c.l.b16 %v3062
    %v3211 = vunpack.c.l.b16 %v3063
    %v3212 = vunpack.c.l.b16 %v3064
    %v3213 = vunpack.c.l.b16 %v3065
    %v3214 = vunpack.c.l.b16 %v3066
    %v3215 = vunpack.c.l.b16 %v3067
    %v3216 = vunpack.c.l.b16 %v3068
    %v3217 = vunpack.c.l.b16 %v3069
    %v3218 = vunpack.c.l.b16 %v3070
    %v3219 = vunpack.c.l.b16 %v3071
    %v3220 = vunpack.c.l.b16 %v3072
    %v3221 = vunpack.c.l.b16 %v3073
    %v3222 = vunpack.c.l.b16 %v3074
    %v3223 = vunpack.c.l.b16 %v3075
    %v3224 = vunpack.c.l.b16 %v3076
    %v3225 = vunpack.c.l.b16 %v3077
    %v3226 = vunpack.c.l.b16 %v3078
    %v3227 = vunpack.c.l.b16 %v3079
    %v3228 = vunpack.c.l.b16 %v3080
    %v3229 = vunpack.c.l.b16 %v3081
    %v3230 = vunpack.c.l.b16 %v3082
    %v3231 = vunpack.c.l.b16 %v3083
    %v3232 = vunpack.c.l.b16 %v3084
    %v3233 = vunpack.c.l.b16 %v3085
    %v3234 = vunpack.c.l.b16 %v3086
    %v3235 = vunpack.c.l.b16 %v3087
    %v3236 = vunpack.c.l.b16 %v3088
    %v3237 = vunpack.c.l.b16 %v3089
    %v3238 = vunpack.c.l.b16 %v3090
    %v3239 = vunpack.c.l.b16 %v3091
    %v3240 = vunpack.c.l.b16 %v3092
    %v3241 = vunpack.c.l.b16 %v3093
    %v3242 = vunpack.c.l.b16 %v3094
    %v3243 = vunpack.c.l.b16 %v3095
    %v3244 = vunpack.c.l.b16 %v3096
    %v3245 = vunpack.c.l.b16 %v3097
    %v3246 = vunpack.c.l.b16 %v3098
    %v3247 = vunpack.c.l.b16 %v3099
    %v3248 = vunpack.c.l.b16 %v3100
    %v3249 = vunpack.c.l.b16 %v3101
    %v3250 = vunpack.c.l.b16 %v3102
    %v3251 = vunpack.c.l.b16 %v3103
    %v3252 = vunpack.c.l.b16 %v3104
    %v3253 = vunpack.c.l.b16 %v3105
    %v3254 = vunpack.c.l.b16 %v3106
    %v3255 = vunpack.c.l.b16 %v3107
    %v3256 = vunpack.c.l.b16 %v3108
    %v3257 = vunpack.c.l.b16 %v3109
    %v3258 = vunpack.c.l.b16 %v3110
    %v3259 = vunpack.c.l.b16 %v3111
    %v3260 = vunpack.c.l.b16 %v3112
    %v3261 = vunpack.c.l.b16 %v3113
    %v3262 = vunpack.c.l.b16 %v3114
    %v3263 = vunpack.c.l.b16 %v3115
    %v3264 = vunpack.c.l.b16 %v3116
    %v3265 = vunpack.c.l.b16 %v3117
    %v3266 = vunpack.c.l.b16 %v3118
    %v3267 = vunpack.c.l.b16 %v3119
    %v3268 = vunpack.c.l.b16 %v3120
    %v3269 = vunpack.c.l.b16 %v3121
    %v3270 = vunpack.c.l.b16 %v3122
    %v3271 = vunpack.c.l.b16 %v3123
    %v3272 = vunpack.c.l.b16 %v3124
    %v3273 = vunpack.c.l.b16 %v3125
    %v3274 = vpack.c.b16 %v3203, %v3202
    %v3275 = vpack.c.b16 %v3205, %v3204
    %v3276 = vpack.c.b16 %v3207, %v3206
    %v3277 = vpack.c.b16 %v3209, %v3208
    %v3278 = vpack.c.b16 %v3211, %v3210
    %v3279 = vpack.c.b16 %v3213, %v3212
    %v3280 = vpack.c.b16 %v3215, %v3214
    %v3281 = vpack.c.b16 %v3217, %v3216
    %v3282 = vpack.c.b16 %v3219, %v3218
    %v3283 = vpack.c.b16 %v3221, %v3220
    %v3284 = vpack.c.b16 %v3223, %v3222
    %v3285 = vpack.c.b16 %v3225, %v3224
    %v3286 = vpack.c.b16 %v3227, %v3226
    %v3287 = vpack.c.b16 %v3229, %v3228
    %v3288 = vpack.c.b16 %v3231, %v3230
    %v3289 = vpack.c.b16 %v3233, %v3232
    %v3290 = vpack.c.b16 %v3235, %v3234
    %v3291 = vpack.c.b16 %v3237, %v3236
    %v3292 = vpack.c.b16 %v3239, %v3238
    %v3293 = vpack.c.b16 %v3241, %v3240
    %v3294 = vpack.c.b16 %v3243, %v3242
    %v3295 = vpack.c.b16 %v3245, %v3244
    %v3296 = vpack.c.b16 %v3247, %v3246
    %v3297 = vpack.c.b16 %v3249, %v3248
    %v3298 = vpack.c.b16 %v3251, %v3250
    %v3299 = vpack.c.b16 %v3253, %v3252
    %v3300 = vpack.c.b16 %v3255, %v3254
    %v3301 = vpack.c.b16 %v3257, %v3256
    %v3302 = vpack.c.b16 %v3259, %v3258
    %v3303 = vpack.c.b16 %v3261, %v3260
    %v3304 = vpack.c.b16 %v3263, %v3262
    %v3305 = vpack.c.b16 %v3265, %v3264
    %v3306 = vpack.c.b16 %v3267, %v3266
    %v3307 = vpack.c.b16 %v3269, %v3268
    %v3308 = vpack.c.b16 %v3271, %v3270
    %v3309 = vpack.c.b16 %v3273, %v3272
    %v3347 = vsel %vm40, %v2926, 0
    %v3350 = vsel %vm40, %v2931, 0
    %v3353 = vsel %vm40, %v2935, 0
    %v3356 = vsel %vm40, %v2939, 0
    %v3359 = vsel %vm40, %v2943, 0
    %v3362 = vsel %vm40, %v2947, 0
    %v3365 = vsel %vm40, %v2951, 0
    %v3368 = vsel %vm40, %v2955, 0
    %v3371 = vsel %vm40, %v2959, 0
    %v3374 = vsel %vm40, %v2963, 0
    %v3377 = vsel %vm40, %v2967, 0
    %v3380 = vsel %vm40, %v2971, 0
    %v3383 = vsel %vm40, %v2975, 0
    %v3386 = vsel %vm40, %v2979, 0
    %v3389 = vsel %vm40, %v2983, 0
    %v3392 = vsel %vm40, %v2987, 0
    %v3395 = vsel %vm40, %v2992, 0
    %v3398 = vsel %vm40, %v2997, 0
    %v3401 = vsel %vm40, %v3001, 0
    %v3404 = vsel %vm40, %v3005, 0
    %v3407 = vsel %vm40, %v3009, 0
    %v3410 = vsel %vm40, %v3013, 0
    %v3413 = vsel %vm40, %v3017, 0
    %v3416 = vsel %vm40, %v3021, 0
    %v3419 = vsel %vm40, %v3025, 0
    %v3422 = vsel %vm40, %v3029, 0
    %v3425 = vsel %vm40, %v3033, 0
    %v3428 = vsel %vm40, %v3037, 0
    %v3431 = vsel %vm40, %v3041, 0
    %v3434 = vsel %vm40, %v3045, 0
    %v3437 = vsel %vm40, %v3049, 0
    %v3440 = vsel %vm40, %v3053, 0
    %3442 = vmatpush.bf16.msra.mxu0 %v3281
    %3443 = vmatpush.bf16.msra.mxu0 %v3280
    %3444 = vmatpush.bf16.msra.mxu0 %v3279
    %3445 = vmatpush.bf16.msra.mxu0 %v3278
    %3446 = vmatpush.bf16.msra.mxu0 %v3277
    %3447 = vmatpush.bf16.msra.mxu0 %v3276
    %3448 = vmatpush.bf16.msra.mxu0 %v3275
    %3449 = vmatpush.bf16.msra.mxu0 %v3274
    %3450 = vmatmul.bf16.gmra.mxu0 %v2922
    %v3451 = vpop.f32.mrf.mxu0
    %v3452 = vadd.f32 %v3128, %v3451
    %v3453 = vpop.f32.mrf.mxu0
    %v3454 = vadd.f32 %v3128, %v3453
    %3455 = vmatmul.bf16.gmra.mxu0 %v2927
    %v3456 = vpop.f32.mrf.mxu0
    %v3457 = vadd.f32 %v3128, %v3456
    %v3458 = vpop.f32.mrf.mxu0
    %v3459 = vadd.f32 %v3128, %v3458
    %3460 = vmatmul.bf16.gmra.mxu0 %v2925
    %v3461 = vpop.f32.mrf.mxu0
    %v3462 = vadd.f32 %v3128, %v3461
    %v3463 = vpop.f32.mrf.mxu0
    %v3464 = vadd.f32 %v3128, %v3463
    %3465 = vmatmul.bf16.gmra.mxu0 %v2930
    %v3466 = vpop.f32.mrf.mxu0
    %v3467 = vadd.f32 %v3128, %v3466
    %v3468 = vpop.f32.mrf.mxu0
    %v3469 = vadd.f32 %v3128, %v3468
    %3470 = vmatmul.bf16.gmra.mxu0 %v2934
    %v3471 = vpop.f32.mrf.mxu0
    %v3472 = vadd.f32 %v3128, %v3471
    %v3473 = vpop.f32.mrf.mxu0
    %v3474 = vadd.f32 %v3128, %v3473
    %3475 = vmatmul.bf16.gmra.mxu0 %v2938
    %v3476 = vpop.f32.mrf.mxu0
    %v3477 = vadd.f32 %v3128, %v3476
    %v3478 = vpop.f32.mrf.mxu0
    %v3479 = vadd.f32 %v3128, %v3478
    %3480 = vmatmul.bf16.gmra.mxu0 %v2942
    %v3481 = vpop.f32.mrf.mxu0
    %v3482 = vadd.f32 %v3128, %v3481
    %v3483 = vpop.f32.mrf.mxu0
    %v3484 = vadd.f32 %v3128, %v3483
    %3485 = vmatmul.bf16.gmra.mxu0 %v2946
    %v3486 = vpop.f32.mrf.mxu0
    %v3487 = vadd.f32 %v3128, %v3486
    %v3488 = vpop.f32.mrf.mxu0
    %v3489 = vadd.f32 %v3128, %v3488
    %3490 = vmatmul.bf16.gmra.mxu0 %v2950
    %v3491 = vpop.f32.mrf.mxu0
    %v3492 = vadd.f32 %v3128, %v3491
    %v3493 = vpop.f32.mrf.mxu0
    %v3494 = vadd.f32 %v3128, %v3493
    %3495 = vmatmul.bf16.gmra.mxu0 %v2954
    %v3496 = vpop.f32.mrf.mxu0
    %v3497 = vadd.f32 %v3128, %v3496
    %v3498 = vpop.f32.mrf.mxu0
    %v3499 = vadd.f32 %v3128, %v3498
    %3500 = vmatmul.bf16.gmra.mxu0 %v2958
    %v3501 = vpop.f32.mrf.mxu0
    %v3502 = vadd.f32 %v3128, %v3501
    %v3503 = vpop.f32.mrf.mxu0
    %v3504 = vadd.f32 %v3128, %v3503
    %3505 = vmatmul.bf16.gmra.mxu0 %v2962
    %v3506 = vpop.f32.mrf.mxu0
    %v3507 = vadd.f32 %v3128, %v3506
    %v3508 = vpop.f32.mrf.mxu0
    %v3509 = vadd.f32 %v3128, %v3508
    %3510 = vmatmul.bf16.gmra.mxu0 %v2966
    %v3511 = vpop.f32.mrf.mxu0
    %v3512 = vadd.f32 %v3128, %v3511
    %v3513 = vpop.f32.mrf.mxu0
    %v3514 = vadd.f32 %v3128, %v3513
    %3515 = vmatmul.bf16.gmra.mxu0 %v2970
    %v3516 = vpop.f32.mrf.mxu0
    %v3517 = vadd.f32 %v3128, %v3516
    %v3518 = vpop.f32.mrf.mxu0
    %v3519 = vadd.f32 %v3128, %v3518
    %3520 = vmatmul.bf16.gmra.mxu0 %v2974
    %v3521 = vpop.f32.mrf.mxu0
    %v3522 = vadd.f32 %v3128, %v3521
    %v3523 = vpop.f32.mrf.mxu0
    %v3524 = vadd.f32 %v3128, %v3523
    %3525 = vmatmul.bf16.gmra.mxu0 %v2978
    %v3526 = vpop.f32.mrf.mxu0
    %v3527 = vadd.f32 %v3128, %v3526
    %v3528 = vpop.f32.mrf.mxu0
    %v3529 = vadd.f32 %v3128, %v3528
    %3530 = vmatmul.bf16.gmra.mxu0 %v2988
    %v3531 = vpop.f32.mrf.mxu0
    %v3532 = vadd.f32 %v3128, %v3531
    %v3533 = vpop.f32.mrf.mxu0
    %v3534 = vadd.f32 %v3128, %v3533
    %3535 = vmatmul.bf16.gmra.mxu0 %v2993
    %v3536 = vpop.f32.mrf.mxu0
    %v3537 = vadd.f32 %v3128, %v3536
    %v3538 = vpop.f32.mrf.mxu0
    %v3539 = vadd.f32 %v3128, %v3538
    %3540 = vmatmul.bf16.gmra.mxu0 %v2991
    %v3541 = vpop.f32.mrf.mxu0
    %v3542 = vadd.f32 %v3128, %v3541
    %v3543 = vpop.f32.mrf.mxu0
    %v3544 = vadd.f32 %v3128, %v3543
    %3545 = vmatmul.bf16.gmra.mxu0 %v2996
    %v3546 = vpop.f32.mrf.mxu0
    %v3547 = vadd.f32 %v3128, %v3546
    %v3548 = vpop.f32.mrf.mxu0
    %v3549 = vadd.f32 %v3128, %v3548
    %3550 = vmatmul.bf16.gmra.mxu0 %v3000
    %v3551 = vpop.f32.mrf.mxu0
    %v3552 = vadd.f32 %v3128, %v3551
    %v3553 = vpop.f32.mrf.mxu0
    %v3554 = vadd.f32 %v3128, %v3553
    %3555 = vmatmul.bf16.gmra.mxu0 %v3004
    %v3556 = vpop.f32.mrf.mxu0
    %v3557 = vadd.f32 %v3128, %v3556
    %v3558 = vpop.f32.mrf.mxu0
    %v3559 = vadd.f32 %v3128, %v3558
    %3560 = vmatmul.bf16.gmra.mxu0 %v3008
    %v3561 = vpop.f32.mrf.mxu0
    %v3562 = vadd.f32 %v3128, %v3561
    %v3563 = vpop.f32.mrf.mxu0
    %v3564 = vadd.f32 %v3128, %v3563
    %3565 = vmatmul.bf16.gmra.mxu0 %v3012
    %v3566 = vpop.f32.mrf.mxu0
    %v3567 = vadd.f32 %v3128, %v3566
    %v3568 = vpop.f32.mrf.mxu0
    %v3569 = vadd.f32 %v3128, %v3568
    %3570 = vmatmul.bf16.gmra.mxu0 %v3016
    %v3571 = vpop.f32.mrf.mxu0
    %v3572 = vadd.f32 %v3128, %v3571
    %v3573 = vpop.f32.mrf.mxu0
    %v3574 = vadd.f32 %v3128, %v3573
    %3575 = vmatmul.bf16.gmra.mxu0 %v3020
    %v3576 = vpop.f32.mrf.mxu0
    %v3577 = vadd.f32 %v3128, %v3576
    %v3578 = vpop.f32.mrf.mxu0
    %v3579 = vadd.f32 %v3128, %v3578
    %3580 = vmatmul.bf16.gmra.mxu0 %v3024
    %v3581 = vpop.f32.mrf.mxu0
    %v3582 = vadd.f32 %v3128, %v3581
    %v3583 = vpop.f32.mrf.mxu0
    %v3584 = vadd.f32 %v3128, %v3583
    %3585 = vmatmul.bf16.gmra.mxu0 %v3028
    %v3586 = vpop.f32.mrf.mxu0
    %v3587 = vadd.f32 %v3128, %v3586
    %v3588 = vpop.f32.mrf.mxu0
    %v3589 = vadd.f32 %v3128, %v3588
    %3590 = vmatmul.bf16.gmra.mxu0 %v3032
    %v3591 = vpop.f32.mrf.mxu0
    %v3592 = vadd.f32 %v3128, %v3591
    %v3593 = vpop.f32.mrf.mxu0
    %v3594 = vadd.f32 %v3128, %v3593
    %3595 = vmatmul.bf16.gmra.mxu0 %v3036
    %v3596 = vpop.f32.mrf.mxu0
    %v3597 = vadd.f32 %v3128, %v3596
    %v3598 = vpop.f32.mrf.mxu0
    %v3599 = vadd.f32 %v3128, %v3598
    %3600 = vmatmul.bf16.gmra.mxu0 %v3040
    %v3601 = vpop.f32.mrf.mxu0
    %v3602 = vadd.f32 %v3128, %v3601
    %v3603 = vpop.f32.mrf.mxu0
    %v3604 = vadd.f32 %v3128, %v3603
    %3605 = vmatmul.bf16.gmra.mxu0 %v3044
    %v3606 = vpop.f32.mrf.mxu0
    %v3607 = vadd.f32 %v3128, %v3606
    %v3608 = vpop.f32.mrf.mxu0
    %v3609 = vadd.f32 %v3128, %v3608
    %3610 = vdwg.mxu0
    %3611 = vmatpush.bf16.msra.mxu0 %v3289
    %3612 = vmatpush.bf16.msra.mxu0 %v3288
    %3613 = vmatpush.bf16.msra.mxu0 %v3287
    %3614 = vmatpush.bf16.msra.mxu0 %v3286
    %3615 = vmatpush.bf16.msra.mxu0 %v3285
    %3616 = vmatpush.bf16.msra.mxu0 %v3284
    %3617 = vmatpush.bf16.msra.mxu0 %v3283
    %3618 = vmatpush.bf16.msra.mxu0 %v3282
    %3619 = vmatmul.bf16.gmra.mxu0 %v2923
    %v3620 = vpop.f32.mrf.mxu0
    %v3621 = vadd.f32 %v3452, %v3620
    %v3622 = vpop.f32.mrf.mxu0
    %v3623 = vadd.f32 %v3454, %v3622
    %3624 = vmatmul.bf16.gmra.mxu0 %v2928
    %v3625 = vpop.f32.mrf.mxu0
    %v3626 = vadd.f32 %v3457, %v3625
    %v3627 = vpop.f32.mrf.mxu0
    %v3628 = vadd.f32 %v3459, %v3627
    %3629 = vmatmul.bf16.gmra.mxu0 %v2932
    %v3630 = vpop.f32.mrf.mxu0
    %v3631 = vadd.f32 %v3462, %v3630
    %v3632 = vpop.f32.mrf.mxu0
    %v3633 = vadd.f32 %v3464, %v3632
    %3634 = vmatmul.bf16.gmra.mxu0 %v2936
    %v3635 = vpop.f32.mrf.mxu0
    %v3636 = vadd.f32 %v3467, %v3635
    %v3637 = vpop.f32.mrf.mxu0
    %v3638 = vadd.f32 %v3469, %v3637
    %3639 = vmatmul.bf16.gmra.mxu0 %v2940
    %v3640 = vpop.f32.mrf.mxu0
    %v3641 = vadd.f32 %v3472, %v3640
    %v3642 = vpop.f32.mrf.mxu0
    %v3643 = vadd.f32 %v3474, %v3642
    %3644 = vmatmul.bf16.gmra.mxu0 %v2944
    %v3645 = vpop.f32.mrf.mxu0
    %v3646 = vadd.f32 %v3477, %v3645
    %v3647 = vpop.f32.mrf.mxu0
    %v3648 = vadd.f32 %v3479, %v3647
    %3649 = vmatmul.bf16.gmra.mxu0 %v2948
    %v3650 = vpop.f32.mrf.mxu0
    %v3651 = vadd.f32 %v3482, %v3650
    %v3652 = vpop.f32.mrf.mxu0
    %v3653 = vadd.f32 %v3484, %v3652
    %3654 = vmatmul.bf16.gmra.mxu0 %v2952
    %v3655 = vpop.f32.mrf.mxu0
    %v3656 = vadd.f32 %v3487, %v3655
    %v3657 = vpop.f32.mrf.mxu0
    %v3658 = vadd.f32 %v3489, %v3657
    %3659 = vmatmul.bf16.gmra.mxu0 %v2956
    %v3660 = vpop.f32.mrf.mxu0
    %v3661 = vadd.f32 %v3492, %v3660
    %v3662 = vpop.f32.mrf.mxu0
    %v3663 = vadd.f32 %v3494, %v3662
    %3664 = vmatmul.bf16.gmra.mxu0 %v2960
    %v3665 = vpop.f32.mrf.mxu0
    %v3666 = vadd.f32 %v3497, %v3665
    %v3667 = vpop.f32.mrf.mxu0
    %v3668 = vadd.f32 %v3499, %v3667
    %3669 = vmatmul.bf16.gmra.mxu0 %v2964
    %v3670 = vpop.f32.mrf.mxu0
    %v3671 = vadd.f32 %v3502, %v3670
    %v3672 = vpop.f32.mrf.mxu0
    %v3673 = vadd.f32 %v3504, %v3672
    %3674 = vmatmul.bf16.gmra.mxu0 %v2968
    %v3675 = vpop.f32.mrf.mxu0
    %v3676 = vadd.f32 %v3507, %v3675
    %v3677 = vpop.f32.mrf.mxu0
    %v3678 = vadd.f32 %v3509, %v3677
    %3679 = vmatmul.bf16.gmra.mxu0 %v2972
    %v3680 = vpop.f32.mrf.mxu0
    %v3681 = vadd.f32 %v3512, %v3680
    %v3682 = vpop.f32.mrf.mxu0
    %v3683 = vadd.f32 %v3514, %v3682
    %3684 = vmatmul.bf16.gmra.mxu0 %v2976
    %v3685 = vpop.f32.mrf.mxu0
    %v3686 = vadd.f32 %v3517, %v3685
    %v3687 = vpop.f32.mrf.mxu0
    %v3688 = vadd.f32 %v3519, %v3687
    %3689 = vmatmul.bf16.gmra.mxu0 %v2980
    %v3690 = vpop.f32.mrf.mxu0
    %v3691 = vadd.f32 %v3522, %v3690
    %v3692 = vpop.f32.mrf.mxu0
    %v3693 = vadd.f32 %v3524, %v3692
    %3694 = vmatmul.bf16.gmra.mxu0 %v2984
    %v3695 = vpop.f32.mrf.mxu0
    %v3696 = vadd.f32 %v3527, %v3695
    %v3697 = vpop.f32.mrf.mxu0
    %v3698 = vadd.f32 %v3529, %v3697
    %3699 = vmatmul.bf16.gmra.mxu0 %v2989
    %v3700 = vpop.f32.mrf.mxu0
    %v3701 = vadd.f32 %v3532, %v3700
    %v3702 = vpop.f32.mrf.mxu0
    %v3703 = vadd.f32 %v3534, %v3702
    %3704 = vmatmul.bf16.gmra.mxu0 %v2994
    %v3705 = vpop.f32.mrf.mxu0
    %v3706 = vadd.f32 %v3537, %v3705
    %v3707 = vpop.f32.mrf.mxu0
    %v3708 = vadd.f32 %v3539, %v3707
    %3709 = vmatmul.bf16.gmra.mxu0 %v2998
    %v3710 = vpop.f32.mrf.mxu0
    %v3711 = vadd.f32 %v3542, %v3710
    %v3712 = vpop.f32.mrf.mxu0
    %v3713 = vadd.f32 %v3544, %v3712
    %3714 = vmatmul.bf16.gmra.mxu0 %v3002
    %v3715 = vpop.f32.mrf.mxu0
    %v3716 = vadd.f32 %v3547, %v3715
    %v3717 = vpop.f32.mrf.mxu0
    %v3718 = vadd.f32 %v3549, %v3717
    %3719 = vmatmul.bf16.gmra.mxu0 %v3006
    %v3720 = vpop.f32.mrf.mxu0
    %v3721 = vadd.f32 %v3552, %v3720
    %v3722 = vpop.f32.mrf.mxu0
    %v3723 = vadd.f32 %v3554, %v3722
    %3724 = vmatmul.bf16.gmra.mxu0 %v3010
    %v3725 = vpop.f32.mrf.mxu0
    %v3726 = vadd.f32 %v3557, %v3725
    %v3727 = vpop.f32.mrf.mxu0
    %v3728 = vadd.f32 %v3559, %v3727
    %3729 = vmatmul.bf16.gmra.mxu0 %v3014
    %v3730 = vpop.f32.mrf.mxu0
    %v3731 = vadd.f32 %v3562, %v3730
    %v3732 = vpop.f32.mrf.mxu0
    %v3733 = vadd.f32 %v3564, %v3732
    %3734 = vmatmul.bf16.gmra.mxu0 %v3018
    %v3735 = vpop.f32.mrf.mxu0
    %v3736 = vadd.f32 %v3567, %v3735
    %v3737 = vpop.f32.mrf.mxu0
    %v3738 = vadd.f32 %v3569, %v3737
    %3739 = vmatmul.bf16.gmra.mxu0 %v3022
    %v3740 = vpop.f32.mrf.mxu0
    %v3741 = vadd.f32 %v3572, %v3740
    %v3742 = vpop.f32.mrf.mxu0
    %v3743 = vadd.f32 %v3574, %v3742
    %3744 = vmatmul.bf16.gmra.mxu0 %v3026
    %v3745 = vpop.f32.mrf.mxu0
    %v3746 = vadd.f32 %v3577, %v3745
    %v3747 = vpop.f32.mrf.mxu0
    %v3748 = vadd.f32 %v3579, %v3747
    %3749 = vmatmul.bf16.gmra.mxu0 %v3030
    %v3750 = vpop.f32.mrf.mxu0
    %v3751 = vadd.f32 %v3582, %v3750
    %v3752 = vpop.f32.mrf.mxu0
    %v3753 = vadd.f32 %v3584, %v3752
    %3754 = vmatmul.bf16.gmra.mxu0 %v3034
    %v3755 = vpop.f32.mrf.mxu0
    %v3756 = vadd.f32 %v3587, %v3755
    %v3757 = vpop.f32.mrf.mxu0
    %v3758 = vadd.f32 %v3589, %v3757
    %3759 = vmatmul.bf16.gmra.mxu0 %v3038
    %v3760 = vpop.f32.mrf.mxu0
    %v3761 = vadd.f32 %v3592, %v3760
    %v3762 = vpop.f32.mrf.mxu0
    %v3763 = vadd.f32 %v3594, %v3762
    %3764 = vmatmul.bf16.gmra.mxu0 %v3042
    %v3765 = vpop.f32.mrf.mxu0
    %v3766 = vadd.f32 %v3597, %v3765
    %v3767 = vpop.f32.mrf.mxu0
    %v3768 = vadd.f32 %v3599, %v3767
    %3769 = vmatmul.bf16.gmra.mxu0 %v3046
    %v3770 = vpop.f32.mrf.mxu0
    %v3771 = vadd.f32 %v3602, %v3770
    %v3772 = vpop.f32.mrf.mxu0
    %v3773 = vadd.f32 %v3604, %v3772
    %3774 = vmatmul.bf16.gmra.mxu0 %v3050
    %v3775 = vpop.f32.mrf.mxu0
    %v3776 = vadd.f32 %v3607, %v3775
    %v3777 = vpop.f32.mrf.mxu0
    %v3778 = vadd.f32 %v3609, %v3777
    %3779 = vdwg.mxu0
    %3780 = vmatpush.bf16.msra.mxu0 %v3297
    %3781 = vmatpush.bf16.msra.mxu0 %v3296
    %3782 = vmatpush.bf16.msra.mxu0 %v3295
    %3783 = vmatpush.bf16.msra.mxu0 %v3294
    %3784 = vmatpush.bf16.msra.mxu0 %v3293
    %3785 = vmatpush.bf16.msra.mxu0 %v3292
    %3786 = vmatpush.bf16.msra.mxu0 %v3291
    %3787 = vmatpush.bf16.msra.mxu0 %v3290
    %3788 = vmatmul.bf16.gmra.mxu0 %v2924
    %v3789 = vpop.f32.mrf.mxu0
    %v3790 = vadd.f32 %v3621, %v3789
    %v3791 = vpop.f32.mrf.mxu0
    %v3792 = vadd.f32 %v3623, %v3791
    %3793 = vmatmul.bf16.gmra.mxu0 %v2929
    %v3794 = vpop.f32.mrf.mxu0
    %v3795 = vadd.f32 %v3626, %v3794
    %v3796 = vpop.f32.mrf.mxu0
    %v3797 = vadd.f32 %v3628, %v3796
    %3798 = vmatmul.bf16.gmra.mxu0 %v2933
    %v3799 = vpop.f32.mrf.mxu0
    %v3800 = vadd.f32 %v3631, %v3799
    %v3801 = vpop.f32.mrf.mxu0
    %v3802 = vadd.f32 %v3633, %v3801
    %3803 = vmatmul.bf16.gmra.mxu0 %v2937
    %v3804 = vpop.f32.mrf.mxu0
    %v3805 = vadd.f32 %v3636, %v3804
    %v3806 = vpop.f32.mrf.mxu0
    %v3807 = vadd.f32 %v3638, %v3806
    %3808 = vmatmul.bf16.gmra.mxu0 %v2941
    %v3809 = vpop.f32.mrf.mxu0
    %v3810 = vadd.f32 %v3641, %v3809
    %v3811 = vpop.f32.mrf.mxu0
    %v3812 = vadd.f32 %v3643, %v3811
    %3813 = vmatmul.bf16.gmra.mxu0 %v2945
    %v3814 = vpop.f32.mrf.mxu0
    %v3815 = vadd.f32 %v3646, %v3814
    %v3816 = vpop.f32.mrf.mxu0
    %v3817 = vadd.f32 %v3648, %v3816
    %3818 = vmatmul.bf16.gmra.mxu0 %v2949
    %v3819 = vpop.f32.mrf.mxu0
    %v3820 = vadd.f32 %v3651, %v3819
    %v3821 = vpop.f32.mrf.mxu0
    %v3822 = vadd.f32 %v3653, %v3821
    %3823 = vmatmul.bf16.gmra.mxu0 %v2953
    %v3824 = vpop.f32.mrf.mxu0
    %v3825 = vadd.f32 %v3656, %v3824
    %v3826 = vpop.f32.mrf.mxu0
    %v3827 = vadd.f32 %v3658, %v3826
    %3828 = vmatmul.bf16.gmra.mxu0 %v2957
    %v3829 = vpop.f32.mrf.mxu0
    %v3830 = vadd.f32 %v3661, %v3829
    %v3831 = vpop.f32.mrf.mxu0
    %v3832 = vadd.f32 %v3663, %v3831
    %3833 = vmatmul.bf16.gmra.mxu0 %v2961
    %v3834 = vpop.f32.mrf.mxu0
    %v3835 = vadd.f32 %v3666, %v3834
    %v3836 = vpop.f32.mrf.mxu0
    %v3837 = vadd.f32 %v3668, %v3836
    %3838 = vmatmul.bf16.gmra.mxu0 %v2965
    %v3839 = vpop.f32.mrf.mxu0
    %v3840 = vadd.f32 %v3671, %v3839
    %v3841 = vpop.f32.mrf.mxu0
    %v3842 = vadd.f32 %v3673, %v3841
    %3843 = vmatmul.bf16.gmra.mxu0 %v2969
    %v3844 = vpop.f32.mrf.mxu0
    %v3845 = vadd.f32 %v3676, %v3844
    %v3846 = vpop.f32.mrf.mxu0
    %v3847 = vadd.f32 %v3678, %v3846
    %3848 = vmatmul.bf16.gmra.mxu0 %v2973
    %v3849 = vpop.f32.mrf.mxu0
    %v3850 = vadd.f32 %v3681, %v3849
    %v3851 = vpop.f32.mrf.mxu0
    %v3852 = vadd.f32 %v3683, %v3851
    %3853 = vmatmul.bf16.gmra.mxu0 %v2977
    %v3854 = vpop.f32.mrf.mxu0
    %v3855 = vadd.f32 %v3686, %v3854
    %v3856 = vpop.f32.mrf.mxu0
    %v3857 = vadd.f32 %v3688, %v3856
    %3858 = vmatmul.bf16.gmra.mxu0 %v2981
    %v3859 = vpop.f32.mrf.mxu0
    %v3860 = vadd.f32 %v3691, %v3859
    %v3861 = vpop.f32.mrf.mxu0
    %v3862 = vadd.f32 %v3693, %v3861
    %3863 = vmatmul.bf16.gmra.mxu0 %v2985
    %v3864 = vpop.f32.mrf.mxu0
    %v3865 = vadd.f32 %v3696, %v3864
    %v3866 = vpop.f32.mrf.mxu0
    %v3867 = vadd.f32 %v3698, %v3866
    %3868 = vmatmul.bf16.gmra.mxu0 %v2990
    %v3869 = vpop.f32.mrf.mxu0
    %v3870 = vadd.f32 %v3701, %v3869
    %v3871 = vpop.f32.mrf.mxu0
    %v3872 = vadd.f32 %v3703, %v3871
    %3873 = vmatmul.bf16.gmra.mxu0 %v2995
    %v3874 = vpop.f32.mrf.mxu0
    %v3875 = vadd.f32 %v3706, %v3874
    %v3876 = vpop.f32.mrf.mxu0
    %v3877 = vadd.f32 %v3708, %v3876
    %3878 = vmatmul.bf16.gmra.mxu0 %v2999
    %v3879 = vpop.f32.mrf.mxu0
    %v3880 = vadd.f32 %v3711, %v3879
    %v3881 = vpop.f32.mrf.mxu0
    %v3882 = vadd.f32 %v3713, %v3881
    %3883 = vmatmul.bf16.gmra.mxu0 %v3003
    %v3884 = vpop.f32.mrf.mxu0
    %v3885 = vadd.f32 %v3716, %v3884
    %v3886 = vpop.f32.mrf.mxu0
    %v3887 = vadd.f32 %v3718, %v3886
    %3888 = vmatmul.bf16.gmra.mxu0 %v3007
    %v3889 = vpop.f32.mrf.mxu0
    %v3890 = vadd.f32 %v3721, %v3889
    %v3891 = vpop.f32.mrf.mxu0
    %v3892 = vadd.f32 %v3723, %v3891
    %3893 = vmatmul.bf16.gmra.mxu0 %v3011
    %v3894 = vpop.f32.mrf.mxu0
    %v3895 = vadd.f32 %v3726, %v3894
    %v3896 = vpop.f32.mrf.mxu0
    %v3897 = vadd.f32 %v3728, %v3896
    %3898 = vmatmul.bf16.gmra.mxu0 %v3015
    %v3899 = vpop.f32.mrf.mxu0
    %v3900 = vadd.f32 %v3731, %v3899
    %v3901 = vpop.f32.mrf.mxu0
    %v3902 = vadd.f32 %v3733, %v3901
    %3903 = vmatmul.bf16.gmra.mxu0 %v3019
    %v3904 = vpop.f32.mrf.mxu0
    %v3905 = vadd.f32 %v3736, %v3904
    %v3906 = vpop.f32.mrf.mxu0
    %v3907 = vadd.f32 %v3738, %v3906
    %3908 = vmatmul.bf16.gmra.mxu0 %v3023
    %v3909 = vpop.f32.mrf.mxu0
    %v3910 = vadd.f32 %v3741, %v3909
    %v3911 = vpop.f32.mrf.mxu0
    %v3912 = vadd.f32 %v3743, %v3911
    %3913 = vmatmul.bf16.gmra.mxu0 %v3027
    %v3914 = vpop.f32.mrf.mxu0
    %v3915 = vadd.f32 %v3746, %v3914
    %v3916 = vpop.f32.mrf.mxu0
    %v3917 = vadd.f32 %v3748, %v3916
    %3918 = vmatmul.bf16.gmra.mxu0 %v3031
    %v3919 = vpop.f32.mrf.mxu0
    %v3920 = vadd.f32 %v3751, %v3919
    %v3921 = vpop.f32.mrf.mxu0
    %v3922 = vadd.f32 %v3753, %v3921
    %3923 = vmatmul.bf16.gmra.mxu0 %v3035
    %v3924 = vpop.f32.mrf.mxu0
    %v3925 = vadd.f32 %v3756, %v3924
    %v3926 = vpop.f32.mrf.mxu0
    %v3927 = vadd.f32 %v3758, %v3926
    %3928 = vmatmul.bf16.gmra.mxu0 %v3039
    %v3929 = vpop.f32.mrf.mxu0
    %v3930 = vadd.f32 %v3761, %v3929
    %v3931 = vpop.f32.mrf.mxu0
    %v3932 = vadd.f32 %v3763, %v3931
    %3933 = vmatmul.bf16.gmra.mxu0 %v3043
    %v3934 = vpop.f32.mrf.mxu0
    %v3935 = vadd.f32 %v3766, %v3934
    %v3936 = vpop.f32.mrf.mxu0
    %v3937 = vadd.f32 %v3768, %v3936
    %3938 = vmatmul.bf16.gmra.mxu0 %v3047
    %v3939 = vpop.f32.mrf.mxu0
    %v3940 = vadd.f32 %v3771, %v3939
    %v3941 = vpop.f32.mrf.mxu0
    %v3942 = vadd.f32 %v3773, %v3941
    %3943 = vmatmul.bf16.gmra.mxu0 %v3051
    %v3944 = vpop.f32.mrf.mxu0
    %v3945 = vadd.f32 %v3776, %v3944
    %v3946 = vpop.f32.mrf.mxu0
    %v3947 = vadd.f32 %v3778, %v3946
    %3948 = vdwg.mxu0
    %3949 = vmatpush.bf16.msra.mxu0 %v3305
    %3950 = vmatpush.bf16.msra.mxu0 %v3304
    %3951 = vmatpush.bf16.msra.mxu0 %v3303
    %3952 = vmatpush.bf16.msra.mxu0 %v3302
    %3953 = vmatpush.bf16.msra.mxu0 %v3301
    %3954 = vmatpush.bf16.msra.mxu0 %v3300
    %3955 = vmatpush.bf16.msra.mxu0 %v3299
    %3956 = vmatpush.bf16.msra.mxu0 %v3298
    %3957 = vmatmul.bf16.gmra.mxu0 %v2925
    %v3958 = vpop.f32.mrf.mxu0
    %v3959 = vadd.f32 %v3790, %v3958
    %v3960 = vpop.f32.mrf.mxu0
    %v3961 = vadd.f32 %v3792, %v3960
    %3962 = vmatmul.bf16.gmra.mxu0 %v2930
    %v3963 = vpop.f32.mrf.mxu0
    %v3964 = vadd.f32 %v3795, %v3963
    %v3965 = vpop.f32.mrf.mxu0
    %v3966 = vadd.f32 %v3797, %v3965
    %3967 = vmatmul.bf16.gmra.mxu0 %v2934
    %v3968 = vpop.f32.mrf.mxu0
    %v3969 = vadd.f32 %v3800, %v3968
    %v3970 = vpop.f32.mrf.mxu0
    %v3971 = vadd.f32 %v3802, %v3970
    %3972 = vmatmul.bf16.gmra.mxu0 %v2938
    %v3973 = vpop.f32.mrf.mxu0
    %v3974 = vadd.f32 %v3805, %v3973
    %v3975 = vpop.f32.mrf.mxu0
    %v3976 = vadd.f32 %v3807, %v3975
    %3977 = vmatmul.bf16.gmra.mxu0 %v2942
    %v3978 = vpop.f32.mrf.mxu0
    %v3979 = vadd.f32 %v3810, %v3978
    %v3980 = vpop.f32.mrf.mxu0
    %v3981 = vadd.f32 %v3812, %v3980
    %3982 = vmatmul.bf16.gmra.mxu0 %v2946
    %v3983 = vpop.f32.mrf.mxu0
    %v3984 = vadd.f32 %v3815, %v3983
    %v3985 = vpop.f32.mrf.mxu0
    %v3986 = vadd.f32 %v3817, %v3985
    %3987 = vmatmul.bf16.gmra.mxu0 %v2950
    %v3988 = vpop.f32.mrf.mxu0
    %v3989 = vadd.f32 %v3820, %v3988
    %v3990 = vpop.f32.mrf.mxu0
    %v3991 = vadd.f32 %v3822, %v3990
    %3992 = vmatmul.bf16.gmra.mxu0 %v2954
    %v3993 = vpop.f32.mrf.mxu0
    %v3994 = vadd.f32 %v3825, %v3993
    %v3995 = vpop.f32.mrf.mxu0
    %v3996 = vadd.f32 %v3827, %v3995
    %3997 = vmatmul.bf16.gmra.mxu0 %v2958
    %v3998 = vpop.f32.mrf.mxu0
    %v3999 = vadd.f32 %v3830, %v3998
    %v4000 = vpop.f32.mrf.mxu0
    %v4001 = vadd.f32 %v3832, %v4000
    %4002 = vmatmul.bf16.gmra.mxu0 %v2962
    %v4003 = vpop.f32.mrf.mxu0
    %v4004 = vadd.f32 %v3835, %v4003
    %v4005 = vpop.f32.mrf.mxu0
    %v4006 = vadd.f32 %v3837, %v4005
    %4007 = vmatmul.bf16.gmra.mxu0 %v2966
    %v4008 = vpop.f32.mrf.mxu0
    %v4009 = vadd.f32 %v3840, %v4008
    %v4010 = vpop.f32.mrf.mxu0
    %v4011 = vadd.f32 %v3842, %v4010
    %4012 = vmatmul.bf16.gmra.mxu0 %v2970
    %v4013 = vpop.f32.mrf.mxu0
    %v4014 = vadd.f32 %v3845, %v4013
    %v4015 = vpop.f32.mrf.mxu0
    %v4016 = vadd.f32 %v3847, %v4015
    %4017 = vmatmul.bf16.gmra.mxu0 %v2974
    %v4018 = vpop.f32.mrf.mxu0
    %v4019 = vadd.f32 %v3850, %v4018
    %v4020 = vpop.f32.mrf.mxu0
    %v4021 = vadd.f32 %v3852, %v4020
    %4022 = vmatmul.bf16.gmra.mxu0 %v2978
    %v4023 = vpop.f32.mrf.mxu0
    %v4024 = vadd.f32 %v3855, %v4023
    %v4025 = vpop.f32.mrf.mxu0
    %v4026 = vadd.f32 %v3857, %v4025
    %4027 = vmatmul.bf16.gmra.mxu0 %v2982
    %v4028 = vpop.f32.mrf.mxu0
    %v4029 = vadd.f32 %v3860, %v4028
    %v4030 = vpop.f32.mrf.mxu0
    %v4031 = vadd.f32 %v3862, %v4030
    %4032 = vmatmul.bf16.gmra.mxu0 %v2986
    %v4033 = vpop.f32.mrf.mxu0
    %v4034 = vadd.f32 %v3865, %v4033
    %v4035 = vpop.f32.mrf.mxu0
    %v4036 = vadd.f32 %v3867, %v4035
    %4037 = vmatmul.bf16.gmra.mxu0 %v2991
    %v4038 = vpop.f32.mrf.mxu0
    %v4039 = vadd.f32 %v3870, %v4038
    %v4040 = vpop.f32.mrf.mxu0
    %v4041 = vadd.f32 %v3872, %v4040
    %4042 = vmatmul.bf16.gmra.mxu0 %v2996
    %v4043 = vpop.f32.mrf.mxu0
    %v4044 = vadd.f32 %v3875, %v4043
    %v4045 = vpop.f32.mrf.mxu0
    %v4046 = vadd.f32 %v3877, %v4045
    %4047 = vmatmul.bf16.gmra.mxu0 %v3000
    %v4048 = vpop.f32.mrf.mxu0
    %v4049 = vadd.f32 %v3880, %v4048
    %v4050 = vpop.f32.mrf.mxu0
    %v4051 = vadd.f32 %v3882, %v4050
    %4052 = vmatmul.bf16.gmra.mxu0 %v3004
    %v4053 = vpop.f32.mrf.mxu0
    %v4054 = vadd.f32 %v3885, %v4053
    %v4055 = vpop.f32.mrf.mxu0
    %v4056 = vadd.f32 %v3887, %v4055
    %4057 = vmatmul.bf16.gmra.mxu0 %v3008
    %v4058 = vpop.f32.mrf.mxu0
    %v4059 = vadd.f32 %v3890, %v4058
    %v4060 = vpop.f32.mrf.mxu0
    %v4061 = vadd.f32 %v3892, %v4060
    %4062 = vmatmul.bf16.gmra.mxu0 %v3012
    %v4063 = vpop.f32.mrf.mxu0
    %v4064 = vadd.f32 %v3895, %v4063
    %v4065 = vpop.f32.mrf.mxu0
    %v4066 = vadd.f32 %v3897, %v4065
    %4067 = vmatmul.bf16.gmra.mxu0 %v3016
    %v4068 = vpop.f32.mrf.mxu0
    %v4069 = vadd.f32 %v3900, %v4068
    %v4070 = vpop.f32.mrf.mxu0
    %v4071 = vadd.f32 %v3902, %v4070
    %4072 = vmatmul.bf16.gmra.mxu0 %v3020
    %v4073 = vpop.f32.mrf.mxu0
    %v4074 = vadd.f32 %v3905, %v4073
    %v4075 = vpop.f32.mrf.mxu0
    %v4076 = vadd.f32 %v3907, %v4075
    %4077 = vmatmul.bf16.gmra.mxu0 %v3024
    %v4078 = vpop.f32.mrf.mxu0
    %v4079 = vadd.f32 %v3910, %v4078
    %v4080 = vpop.f32.mrf.mxu0
    %v4081 = vadd.f32 %v3912, %v4080
    %4082 = vmatmul.bf16.gmra.mxu0 %v3028
    %v4083 = vpop.f32.mrf.mxu0
    %v4084 = vadd.f32 %v3915, %v4083
    %v4085 = vpop.f32.mrf.mxu0
    %v4086 = vadd.f32 %v3917, %v4085
    %4087 = vmatmul.bf16.gmra.mxu0 %v3032
    %v4088 = vpop.f32.mrf.mxu0
    %v4089 = vadd.f32 %v3920, %v4088
    %v4090 = vpop.f32.mrf.mxu0
    %v4091 = vadd.f32 %v3922, %v4090
    %4092 = vmatmul.bf16.gmra.mxu0 %v3036
    %v4093 = vpop.f32.mrf.mxu0
    %v4094 = vadd.f32 %v3925, %v4093
    %v4095 = vpop.f32.mrf.mxu0
    %v4096 = vadd.f32 %v3927, %v4095
    %4097 = vmatmul.bf16.gmra.mxu0 %v3040
    %v4098 = vpop.f32.mrf.mxu0
    %v4099 = vadd.f32 %v3930, %v4098
    %v4100 = vpop.f32.mrf.mxu0
    %v4101 = vadd.f32 %v3932, %v4100
    %4102 = vmatmul.bf16.gmra.mxu0 %v3044
    %v4103 = vpop.f32.mrf.mxu0
    %v4104 = vadd.f32 %v3935, %v4103
    %v4105 = vpop.f32.mrf.mxu0
    %v4106 = vadd.f32 %v3937, %v4105
    %4107 = vmatmul.bf16.gmra.mxu0 %v3048
    %v4108 = vpop.f32.mrf.mxu0
    %v4109 = vadd.f32 %v3940, %v4108
    %v4110 = vpop.f32.mrf.mxu0
    %v4111 = vadd.f32 %v3942, %v4110
    %4112 = vmatmul.bf16.gmra.mxu0 %v3052
    %v4113 = vpop.f32.mrf.mxu0
    %v4114 = vadd.f32 %v3945, %v4113
    %v4115 = vpop.f32.mrf.mxu0
    %v4116 = vadd.f32 %v3947, %v4115
    %4117 = vdwg.mxu0
    %4118 = vmatpush.bf16.msra.mxu0 0
    %4119 = vmatpush.bf16.msra.mxu0 0
    %4120 = vmatpush.bf16.msra.mxu0 0
    %4121 = vmatpush.bf16.msra.mxu0 0
    %4122 = vmatpush.bf16.msra.mxu0 %v3309
    %4123 = vmatpush.bf16.msra.mxu0 %v3308
    %4124 = vmatpush.bf16.msra.mxu0 %v3307
    %4125 = vmatpush.bf16.msra.mxu0 %v3306
    %4126 = vmatmul.bf16.gmra.mxu0 %v3347
    %v4127 = vpop.f32.mrf.mxu0
    %v4128 = vadd.f32 %v3959, %v4127
    %v4129 = vpop.f32.mrf.mxu0
    %v4130 = vadd.f32 %v3961, %v4129
    %4131 = vmatmul.bf16.gmra.mxu0 %v3350
    %v4132 = vpop.f32.mrf.mxu0
    %v4133 = vadd.f32 %v3964, %v4132
    %v4134 = vpop.f32.mrf.mxu0
    %v4135 = vadd.f32 %v3966, %v4134
    %4136 = vmatmul.bf16.gmra.mxu0 %v3353
    %v4137 = vpop.f32.mrf.mxu0
    %v4138 = vadd.f32 %v3969, %v4137
    %v4139 = vpop.f32.mrf.mxu0
    %v4140 = vadd.f32 %v3971, %v4139
    %4141 = vmatmul.bf16.gmra.mxu0 %v3356
    %v4142 = vpop.f32.mrf.mxu0
    %v4143 = vadd.f32 %v3974, %v4142
    %v4144 = vpop.f32.mrf.mxu0
    %v4145 = vadd.f32 %v3976, %v4144
    %4146 = vmatmul.bf16.gmra.mxu0 %v3359
    %v4147 = vpop.f32.mrf.mxu0
    %v4148 = vadd.f32 %v3979, %v4147
    %v4149 = vpop.f32.mrf.mxu0
    %v4150 = vadd.f32 %v3981, %v4149
    %4151 = vmatmul.bf16.gmra.mxu0 %v3362
    %v4152 = vpop.f32.mrf.mxu0
    %v4153 = vadd.f32 %v3984, %v4152
    %v4154 = vpop.f32.mrf.mxu0
    %v4155 = vadd.f32 %v3986, %v4154
    %4156 = vmatmul.bf16.gmra.mxu0 %v3365
    %v4157 = vpop.f32.mrf.mxu0
    %v4158 = vadd.f32 %v3989, %v4157
    %v4159 = vpop.f32.mrf.mxu0
    %v4160 = vadd.f32 %v3991, %v4159
    %4161 = vmatmul.bf16.gmra.mxu0 %v3368
    %v4162 = vpop.f32.mrf.mxu0
    %v4163 = vadd.f32 %v3994, %v4162
    %v4164 = vpop.f32.mrf.mxu0
    %v4165 = vadd.f32 %v3996, %v4164
    %4166 = vmatmul.bf16.gmra.mxu0 %v3371
    %v4167 = vpop.f32.mrf.mxu0
    %v4168 = vadd.f32 %v3999, %v4167
    %v4169 = vpop.f32.mrf.mxu0
    %v4170 = vadd.f32 %v4001, %v4169
    %4171 = vmatmul.bf16.gmra.mxu0 %v3374
    %v4172 = vpop.f32.mrf.mxu0
    %v4173 = vadd.f32 %v4004, %v4172
    %v4174 = vpop.f32.mrf.mxu0
    %v4175 = vadd.f32 %v4006, %v4174
    %4176 = vmatmul.bf16.gmra.mxu0 %v3377
    %v4177 = vpop.f32.mrf.mxu0
    %v4178 = vadd.f32 %v4009, %v4177
    %v4179 = vpop.f32.mrf.mxu0
    %v4180 = vadd.f32 %v4011, %v4179
    %4181 = vmatmul.bf16.gmra.mxu0 %v3380
    %v4182 = vpop.f32.mrf.mxu0
    %v4183 = vadd.f32 %v4014, %v4182
    %v4184 = vpop.f32.mrf.mxu0
    %v4185 = vadd.f32 %v4016, %v4184
    %4186 = vmatmul.bf16.gmra.mxu0 %v3383
    %v4187 = vpop.f32.mrf.mxu0
    %v4188 = vadd.f32 %v4019, %v4187
    %v4189 = vpop.f32.mrf.mxu0
    %v4190 = vadd.f32 %v4021, %v4189
    %4191 = vmatmul.bf16.gmra.mxu0 %v3386
    %v4192 = vpop.f32.mrf.mxu0
    %v4193 = vadd.f32 %v4024, %v4192
    %v4194 = vpop.f32.mrf.mxu0
    %v4195 = vadd.f32 %v4026, %v4194
    %4196 = vmatmul.bf16.gmra.mxu0 %v3389
    %v4197 = vpop.f32.mrf.mxu0
    %v4198 = vadd.f32 %v4029, %v4197
    %v4199 = vpop.f32.mrf.mxu0
    %v4200 = vadd.f32 %v4031, %v4199
    %4201 = vmatmul.bf16.gmra.mxu0 %v3392
    %v4202 = vpop.f32.mrf.mxu0
    %v4203 = vadd.f32 %v4034, %v4202
    %v4204 = vpop.f32.mrf.mxu0
    %v4205 = vadd.f32 %v4036, %v4204
    %4206 = vmatmul.bf16.gmra.mxu0 %v3395
    %v4207 = vpop.f32.mrf.mxu0
    %v4208 = vadd.f32 %v4039, %v4207
    %v4209 = vpop.f32.mrf.mxu0
    %v4210 = vadd.f32 %v4041, %v4209
    %4211 = vmatmul.bf16.gmra.mxu0 %v3398
    %v4212 = vpop.f32.mrf.mxu0
    %v4213 = vadd.f32 %v4044, %v4212
    %v4214 = vpop.f32.mrf.mxu0
    %v4215 = vadd.f32 %v4046, %v4214
    %4216 = vmatmul.bf16.gmra.mxu0 %v3401
    %v4217 = vpop.f32.mrf.mxu0
    %v4218 = vadd.f32 %v4049, %v4217
    %v4219 = vpop.f32.mrf.mxu0
    %v4220 = vadd.f32 %v4051, %v4219
    %4221 = vmatmul.bf16.gmra.mxu0 %v3404
    %v4222 = vpop.f32.mrf.mxu0
    %v4223 = vadd.f32 %v4054, %v4222
    %v4224 = vpop.f32.mrf.mxu0
    %v4225 = vadd.f32 %v4056, %v4224
    %4226 = vmatmul.bf16.gmra.mxu0 %v3407
    %v4227 = vpop.f32.mrf.mxu0
    %v4228 = vadd.f32 %v4059, %v4227
    %v4229 = vpop.f32.mrf.mxu0
    %v4230 = vadd.f32 %v4061, %v4229
    %4231 = vmatmul.bf16.gmra.mxu0 %v3410
    %v4232 = vpop.f32.mrf.mxu0
    %v4233 = vadd.f32 %v4064, %v4232
    %v4234 = vpop.f32.mrf.mxu0
    %v4235 = vadd.f32 %v4066, %v4234
    %4236 = vmatmul.bf16.gmra.mxu0 %v3413
    %v4237 = vpop.f32.mrf.mxu0
    %v4238 = vadd.f32 %v4069, %v4237
    %v4239 = vpop.f32.mrf.mxu0
    %v4240 = vadd.f32 %v4071, %v4239
    %4241 = vmatmul.bf16.gmra.mxu0 %v3416
    %v4242 = vpop.f32.mrf.mxu0
    %v4243 = vadd.f32 %v4074, %v4242
    %v4244 = vpop.f32.mrf.mxu0
    %v4245 = vadd.f32 %v4076, %v4244
    %4246 = vmatmul.bf16.gmra.mxu0 %v3419
    %v4247 = vpop.f32.mrf.mxu0
    %v4248 = vadd.f32 %v4079, %v4247
    %v4249 = vpop.f32.mrf.mxu0
    %v4250 = vadd.f32 %v4081, %v4249
    %4251 = vmatmul.bf16.gmra.mxu0 %v3422
    %v4252 = vpop.f32.mrf.mxu0
    %v4253 = vadd.f32 %v4084, %v4252
    %v4254 = vpop.f32.mrf.mxu0
    %v4255 = vadd.f32 %v4086, %v4254
    %4256 = vmatmul.bf16.gmra.mxu0 %v3425
    %v4257 = vpop.f32.mrf.mxu0
    %v4258 = vadd.f32 %v4089, %v4257
    %v4259 = vpop.f32.mrf.mxu0
    %v4260 = vadd.f32 %v4091, %v4259
    %4261 = vmatmul.bf16.gmra.mxu0 %v3428
    %v4262 = vpop.f32.mrf.mxu0
    %v4263 = vadd.f32 %v4094, %v4262
    %v4264 = vpop.f32.mrf.mxu0
    %v4265 = vadd.f32 %v4096, %v4264
    %4266 = vmatmul.bf16.gmra.mxu0 %v3431
    %v4267 = vpop.f32.mrf.mxu0
    %v4268 = vadd.f32 %v4099, %v4267
    %v4269 = vpop.f32.mrf.mxu0
    %v4270 = vadd.f32 %v4101, %v4269
    %4271 = vmatmul.bf16.gmra.mxu0 %v3434
    %v4272 = vpop.f32.mrf.mxu0
    %v4273 = vadd.f32 %v4104, %v4272
    %v4274 = vpop.f32.mrf.mxu0
    %v4275 = vadd.f32 %v4106, %v4274
    %4276 = vmatmul.bf16.gmra.mxu0 %v3437
    %v4277 = vpop.f32.mrf.mxu0
    %v4278 = vadd.f32 %v4109, %v4277
    %v4279 = vpop.f32.mrf.mxu0
    %v4280 = vadd.f32 %v4111, %v4279
    %4281 = vmatmul.bf16.gmra.mxu0 %v3440
    %v4282 = vpop.f32.mrf.mxu0
    %v4283 = vadd.f32 %v4114, %v4282
    %v4284 = vpop.f32.mrf.mxu0
    %v4285 = vadd.f32 %v4116, %v4284
    %4286 = vdwg.mxu0
    %v4287 = vld [vmem:[%s7] sm:$0x1]
    %v4288 = vld [vmem:[%s8] sm:$0x1]
    %v4289 = vsel %vm40, %v4128, 0.0
    %v4290 = vsel %vm40, %v4130, 0.0
    %v4291 = vadd.f32 %v4289, %v4290
    %v4292 = vsel %vm40, %v4133, 0.0
    %v4293 = vadd.f32 %v4291, %v4292
    %v4294 = vsel %vm40, %v4135, 0.0
    %v4295 = vadd.f32 %v4293, %v4294
    %v4296 = vsel %vm40, %v4138, 0.0
    %v4297 = vadd.f32 %v4295, %v4296
    %v4298 = vsel %vm40, %v4140, 0.0
    %v4299 = vadd.f32 %v4297, %v4298
    %v4300 = vsel %vm40, %v4143, 0.0
    %v4301 = vadd.f32 %v4299, %v4300
    %v4302 = vsel %vm40, %v4145, 0.0
    %v4303 = vadd.f32 %v4301, %v4302
    %v4304 = vsel %vm40, %v4148, 0.0
    %v4305 = vadd.f32 %v4303, %v4304
    %v4306 = vsel %vm40, %v4150, 0.0
    %v4307 = vadd.f32 %v4305, %v4306
    %v4308 = vsel %vm40, %v4153, 0.0
    %v4309 = vadd.f32 %v4307, %v4308
    %v4310 = vsel %vm40, %v4155, 0.0
    %v4311 = vadd.f32 %v4309, %v4310
    %v4312 = vsel %vm40, %v4158, 0.0
    %v4313 = vadd.f32 %v4311, %v4312
    %v4314 = vsel %vm40, %v4160, 0.0
    %v4315 = vadd.f32 %v4313, %v4314
    %v4316 = vsel %vm40, %v4163, 0.0
    %v4317 = vadd.f32 %v4315, %v4316
    %v4318 = vsel %vm40, %v4165, 0.0
    %v4319 = vadd.f32 %v4317, %v4318
    %v4320 = vsel %vm40, %v4168, 0.0
    %v4321 = vadd.f32 %v4319, %v4320
    %v4322 = vsel %vm40, %v4170, 0.0
    %v4323 = vadd.f32 %v4321, %v4322
    %v4324 = vsel %vm40, %v4173, 0.0
    %v4325 = vadd.f32 %v4323, %v4324
    %v4326 = vsel %vm40, %v4175, 0.0
    %v4327 = vadd.f32 %v4325, %v4326
    %v4328 = vsel %vm40, %v4178, 0.0
    %v4329 = vadd.f32 %v4327, %v4328
    %v4330 = vsel %vm40, %v4180, 0.0
    %v4331 = vadd.f32 %v4329, %v4330
    %v4332 = vsel %vm40, %v4183, 0.0
    %v4333 = vadd.f32 %v4331, %v4332
    %v4334 = vsel %vm40, %v4185, 0.0
    %v4335 = vadd.f32 %v4333, %v4334
    %v4336 = vsel %vm40, %v4188, 0.0
    %v4337 = vadd.f32 %v4335, %v4336
    %v4338 = vsel %vm40, %v4190, 0.0
    %v4339 = vadd.f32 %v4337, %v4338
    %v4340 = vsel %vm40, %v4193, 0.0
    %v4341 = vadd.f32 %v4339, %v4340
    %v4342 = vsel %vm40, %v4195, 0.0
    %v4343 = vadd.f32 %v4341, %v4342
    %v4344 = vsel %vm40, %v4198, 0.0
    %v4345 = vadd.f32 %v4343, %v4344
    %v4346 = vsel %vm40, %v4200, 0.0
    %v4347 = vadd.f32 %v4345, %v4346
    %v4348 = vsel %vm40, %v4203, 0.0
    %v4349 = vadd.f32 %v4347, %v4348
    %v4350 = vsel %vm40, %v4205, 0.0
    %v4351 = vadd.f32 %v4349, %v4350
    %v4352 = vsel %vm40, %v4208, 0.0
    %v4353 = vadd.f32 %v4351, %v4352
    %v4354 = vsel %vm40, %v4210, 0.0
    %v4355 = vadd.f32 %v4353, %v4354
    %v4356 = vsel %vm40, %v4213, 0.0
    %v4357 = vadd.f32 %v4355, %v4356
    %v4358 = vsel %vm40, %v4215, 0.0
    %v4359 = vadd.f32 %v4357, %v4358
    %v4360 = vsel %vm40, %v4218, 0.0
    %v4361 = vadd.f32 %v4359, %v4360
    %v4362 = vsel %vm40, %v4220, 0.0
    %v4363 = vadd.f32 %v4361, %v4362
    %v4364 = vsel %vm40, %v4223, 0.0
    %v4365 = vadd.f32 %v4363, %v4364
    %v4366 = vsel %vm40, %v4225, 0.0
    %v4367 = vadd.f32 %v4365, %v4366
    %v4368 = vsel %vm40, %v4228, 0.0
    %v4369 = vadd.f32 %v4367, %v4368
    %v4370 = vsel %vm40, %v4230, 0.0
    %v4371 = vadd.f32 %v4369, %v4370
    %v4372 = vsel %vm40, %v4233, 0.0
    %v4373 = vadd.f32 %v4371, %v4372
    %v4374 = vsel %vm40, %v4235, 0.0
    %v4375 = vadd.f32 %v4373, %v4374
    %v4376 = vsel %vm40, %v4238, 0.0
    %v4377 = vadd.f32 %v4375, %v4376
    %v4378 = vsel %vm40, %v4240, 0.0
    %v4379 = vadd.f32 %v4377, %v4378
    %v4380 = vsel %vm40, %v4243, 0.0
    %v4381 = vadd.f32 %v4379, %v4380
    %v4382 = vsel %vm40, %v4245, 0.0
    %v4383 = vadd.f32 %v4381, %v4382
    %v4384 = vsel %vm40, %v4248, 0.0
    %v4385 = vadd.f32 %v4383, %v4384
    %v4386 = vsel %vm40, %v4250, 0.0
    %v4387 = vadd.f32 %v4385, %v4386
    %v4388 = vsel %vm40, %v4253, 0.0
    %v4389 = vadd.f32 %v4387, %v4388
    %v4390 = vsel %vm40, %v4255, 0.0
    %v4391 = vadd.f32 %v4389, %v4390
    %v4392 = vsel %vm40, %v4258, 0.0
    %v4393 = vadd.f32 %v4391, %v4392
    %v4394 = vsel %vm40, %v4260, 0.0
    %v4395 = vadd.f32 %v4393, %v4394
    %v4396 = vsel %vm40, %v4263, 0.0
    %v4397 = vadd.f32 %v4395, %v4396
    %v4398 = vsel %vm40, %v4265, 0.0
    %v4399 = vadd.f32 %v4397, %v4398
    %v4400 = vsel %vm40, %v4268, 0.0
    %v4401 = vadd.f32 %v4399, %v4400
    %v4402 = vsel %vm40, %v4270, 0.0
    %v4403 = vadd.f32 %v4401, %v4402
    %v4404 = vsel %vm40, %v4273, 0.0
    %v4405 = vadd.f32 %v4403, %v4404
    %v4406 = vsel %vm40, %v4275, 0.0
    %v4407 = vadd.f32 %v4405, %v4406
    %v4408 = vsel %vm40, %v4278, 0.0
    %v4409 = vadd.f32 %v4407, %v4408
    %v4410 = vsel %vm40, %v4280, 0.0
    %v4411 = vadd.f32 %v4409, %v4410
    %v4412 = vsel %vm40, %v4283, 0.0
    %v4413 = vadd.f32 %v4411, %v4412
    %v4414 = vsel %vm40, %v4285, 0.0
    %v4415 = vadd.f32 %v4413, %v4414
    %v4416 = vrot.slane %v4415, 4
    %v4417 = vadd.f32 %v4415, %v4416
    %v4418 = vrot.slane %v4417, 2
    %v4419 = vadd.f32 %v4417, %v4418
    %v4420 = vrot.slane %v4419, 1
    %v4421 = vadd.f32 %v4419, %v4420
    %v4422 = vmul.f32 %v4421, %v807
    %v4423 = vsub.f32 %v4128, %v4422
    %v4424 = vsub.f32 %v4130, %v4422
    %v4425 = vsub.f32 %v4133, %v4422
    %v4426 = vsub.f32 %v4135, %v4422
    %v4427 = vsub.f32 %v4138, %v4422
    %v4428 = vsub.f32 %v4140, %v4422
    %v4429 = vsub.f32 %v4143, %v4422
    %v4430 = vsub.f32 %v4145, %v4422
    %v4431 = vsub.f32 %v4148, %v4422
    %v4432 = vsub.f32 %v4150, %v4422
    %v4433 = vsub.f32 %v4153, %v4422
    %v4434 = vsub.f32 %v4155, %v4422
    %v4435 = vsub.f32 %v4158, %v4422
    %v4436 = vsub.f32 %v4160, %v4422
    %v4437 = vsub.f32 %v4163, %v4422
    %v4438 = vsub.f32 %v4165, %v4422
    %v4439 = vsub.f32 %v4168, %v4422
    %v4440 = vsub.f32 %v4170, %v4422
    %v4441 = vsub.f32 %v4173, %v4422
    %v4442 = vsub.f32 %v4175, %v4422
    %v4443 = vsub.f32 %v4178, %v4422
    %v4444 = vsub.f32 %v4180, %v4422
    %v4445 = vsub.f32 %v4183, %v4422
    %v4446 = vsub.f32 %v4185, %v4422
    %v4447 = vsub.f32 %v4188, %v4422
    %v4448 = vsub.f32 %v4190, %v4422
    %v4449 = vsub.f32 %v4193, %v4422
    %v4450 = vsub.f32 %v4195, %v4422
    %v4451 = vsub.f32 %v4198, %v4422
    %v4452 = vsub.f32 %v4200, %v4422
    %v4453 = vsub.f32 %v4203, %v4422
    %v4454 = vsub.f32 %v4205, %v4422
    %v4455 = vsub.f32 %v4208, %v4422
    %v4456 = vsub.f32 %v4210, %v4422
    %v4457 = vsub.f32 %v4213, %v4422
    %v4458 = vsub.f32 %v4215, %v4422
    %v4459 = vsub.f32 %v4218, %v4422
    %v4460 = vsub.f32 %v4220, %v4422
    %v4461 = vsub.f32 %v4223, %v4422
    %v4462 = vsub.f32 %v4225, %v4422
    %v4463 = vsub.f32 %v4228, %v4422
    %v4464 = vsub.f32 %v4230, %v4422
    %v4465 = vsub.f32 %v4233, %v4422
    %v4466 = vsub.f32 %v4235, %v4422
    %v4467 = vsub.f32 %v4238, %v4422
    %v4468 = vsub.f32 %v4240, %v4422
    %v4469 = vsub.f32 %v4243, %v4422
    %v4470 = vsub.f32 %v4245, %v4422
    %v4471 = vsub.f32 %v4248, %v4422
    %v4472 = vsub.f32 %v4250, %v4422
    %v4473 = vsub.f32 %v4253, %v4422
    %v4474 = vsub.f32 %v4255, %v4422
    %v4475 = vsub.f32 %v4258, %v4422
    %v4476 = vsub.f32 %v4260, %v4422
    %v4477 = vsub.f32 %v4263, %v4422
    %v4478 = vsub.f32 %v4265, %v4422
    %v4479 = vsub.f32 %v4268, %v4422
    %v4480 = vsub.f32 %v4270, %v4422
    %v4481 = vsub.f32 %v4273, %v4422
    %v4482 = vsub.f32 %v4275, %v4422
    %v4483 = vsub.f32 %v4278, %v4422
    %v4484 = vsub.f32 %v4280, %v4422
    %v4485 = vsub.f32 %v4283, %v4422
    %v4486 = vsub.f32 %v4285, %v4422
    %v4487 = vmul.f32 %v4423, %v4423
    %v4488 = vmul.f32 %v4424, %v4424
    %v4489 = vmul.f32 %v4425, %v4425
    %v4490 = vmul.f32 %v4426, %v4426
    %v4491 = vmul.f32 %v4427, %v4427
    %v4492 = vmul.f32 %v4428, %v4428
    %v4493 = vmul.f32 %v4429, %v4429
    %v4494 = vmul.f32 %v4430, %v4430
    %v4495 = vmul.f32 %v4431, %v4431
    %v4496 = vmul.f32 %v4432, %v4432
    %v4497 = vmul.f32 %v4433, %v4433
    %v4498 = vmul.f32 %v4434, %v4434
    %v4499 = vmul.f32 %v4435, %v4435
    %v4500 = vmul.f32 %v4436, %v4436
    %v4501 = vmul.f32 %v4437, %v4437
    %v4502 = vmul.f32 %v4438, %v4438
    %v4503 = vmul.f32 %v4439, %v4439
    %v4504 = vmul.f32 %v4440, %v4440
    %v4505 = vmul.f32 %v4441, %v4441
    %v4506 = vmul.f32 %v4442, %v4442
    %v4507 = vmul.f32 %v4443, %v4443
    %v4508 = vmul.f32 %v4444, %v4444
    %v4509 = vmul.f32 %v4445, %v4445
    %v4510 = vmul.f32 %v4446, %v4446
    %v4511 = vmul.f32 %v4447, %v4447
    %v4512 = vmul.f32 %v4448, %v4448
    %v4513 = vmul.f32 %v4449, %v4449
    %v4514 = vmul.f32 %v4450, %v4450
    %v4515 = vmul.f32 %v4451, %v4451
    %v4516 = vmul.f32 %v4452, %v4452
    %v4517 = vmul.f32 %v4453, %v4453
    %v4518 = vmul.f32 %v4454, %v4454
    %v4519 = vmul.f32 %v4455, %v4455
    %v4520 = vmul.f32 %v4456, %v4456
    %v4521 = vmul.f32 %v4457, %v4457
    %v4522 = vmul.f32 %v4458, %v4458
    %v4523 = vmul.f32 %v4459, %v4459
    %v4524 = vmul.f32 %v4460, %v4460
    %v4525 = vmul.f32 %v4461, %v4461
    %v4526 = vmul.f32 %v4462, %v4462
    %v4527 = vmul.f32 %v4463, %v4463
    %v4528 = vmul.f32 %v4464, %v4464
    %v4529 = vmul.f32 %v4465, %v4465
    %v4530 = vmul.f32 %v4466, %v4466
    %v4531 = vmul.f32 %v4467, %v4467
    %v4532 = vmul.f32 %v4468, %v4468
    %v4533 = vmul.f32 %v4469, %v4469
    %v4534 = vmul.f32 %v4470, %v4470
    %v4535 = vmul.f32 %v4471, %v4471
    %v4536 = vmul.f32 %v4472, %v4472
    %v4537 = vmul.f32 %v4473, %v4473
    %v4538 = vmul.f32 %v4474, %v4474
    %v4539 = vmul.f32 %v4475, %v4475
    %v4540 = vmul.f32 %v4476, %v4476
    %v4541 = vmul.f32 %v4477, %v4477
    %v4542 = vmul.f32 %v4478, %v4478
    %v4543 = vmul.f32 %v4479, %v4479
    %v4544 = vmul.f32 %v4480, %v4480
    %v4545 = vmul.f32 %v4481, %v4481
    %v4546 = vmul.f32 %v4482, %v4482
    %v4547 = vmul.f32 %v4483, %v4483
    %v4548 = vmul.f32 %v4484, %v4484
    %v4549 = vmul.f32 %v4485, %v4485
    %v4550 = vmul.f32 %v4486, %v4486
    %v4551 = vsel %vm40, %v4487, 0.0
    %v4552 = vsel %vm40, %v4488, 0.0
    %v4553 = vadd.f32 %v4551, %v4552
    %v4554 = vsel %vm40, %v4489, 0.0
    %v4555 = vadd.f32 %v4553, %v4554
    %v4556 = vsel %vm40, %v4490, 0.0
    %v4557 = vadd.f32 %v4555, %v4556
    %v4558 = vsel %vm40, %v4491, 0.0
    %v4559 = vadd.f32 %v4557, %v4558
    %v4560 = vsel %vm40, %v4492, 0.0
    %v4561 = vadd.f32 %v4559, %v4560
    %v4562 = vsel %vm40, %v4493, 0.0
    %v4563 = vadd.f32 %v4561, %v4562
    %v4564 = vsel %vm40, %v4494, 0.0
    %v4565 = vadd.f32 %v4563, %v4564
    %v4566 = vsel %vm40, %v4495, 0.0
    %v4567 = vadd.f32 %v4565, %v4566
    %v4568 = vsel %vm40, %v4496, 0.0
    %v4569 = vadd.f32 %v4567, %v4568
    %v4570 = vsel %vm40, %v4497, 0.0
    %v4571 = vadd.f32 %v4569, %v4570
    %v4572 = vsel %vm40, %v4498, 0.0
    %v4573 = vadd.f32 %v4571, %v4572
    %v4574 = vsel %vm40, %v4499, 0.0
    %v4575 = vadd.f32 %v4573, %v4574
    %v4576 = vsel %vm40, %v4500, 0.0
    %v4577 = vadd.f32 %v4575, %v4576
    %v4578 = vsel %vm40, %v4501, 0.0
    %v4579 = vadd.f32 %v4577, %v4578
    %v4580 = vsel %vm40, %v4502, 0.0
    %v4581 = vadd.f32 %v4579, %v4580
    %v4582 = vsel %vm40, %v4503, 0.0
    %v4583 = vadd.f32 %v4581, %v4582
    %v4584 = vsel %vm40, %v4504, 0.0
    %v4585 = vadd.f32 %v4583, %v4584
    %v4586 = vsel %vm40, %v4505, 0.0
    %v4587 = vadd.f32 %v4585, %v4586
    %v4588 = vsel %vm40, %v4506, 0.0
    %v4589 = vadd.f32 %v4587, %v4588
    %v4590 = vsel %vm40, %v4507, 0.0
    %v4591 = vadd.f32 %v4589, %v4590
    %v4592 = vsel %vm40, %v4508, 0.0
    %v4593 = vadd.f32 %v4591, %v4592
    %v4594 = vsel %vm40, %v4509, 0.0
    %v4595 = vadd.f32 %v4593, %v4594
    %v4596 = vsel %vm40, %v4510, 0.0
    %v4597 = vadd.f32 %v4595, %v4596
    %v4598 = vsel %vm40, %v4511, 0.0
    %v4599 = vadd.f32 %v4597, %v4598
    %v4600 = vsel %vm40, %v4512, 0.0
    %v4601 = vadd.f32 %v4599, %v4600
    %v4602 = vsel %vm40, %v4513, 0.0
    %v4603 = vadd.f32 %v4601, %v4602
    %v4604 = vsel %vm40, %v4514, 0.0
    %v4605 = vadd.f32 %v4603, %v4604
    %v4606 = vsel %vm40, %v4515, 0.0
    %v4607 = vadd.f32 %v4605, %v4606
    %v4608 = vsel %vm40, %v4516, 0.0
    %v4609 = vadd.f32 %v4607, %v4608
    %v4610 = vsel %vm40, %v4517, 0.0
    %v4611 = vadd.f32 %v4609, %v4610
    %v4612 = vsel %vm40, %v4518, 0.0
    %v4613 = vadd.f32 %v4611, %v4612
    %v4614 = vsel %vm40, %v4519, 0.0
    %v4615 = vadd.f32 %v4613, %v4614
    %v4616 = vsel %vm40, %v4520, 0.0
    %v4617 = vadd.f32 %v4615, %v4616
    %v4618 = vsel %vm40, %v4521, 0.0
    %v4619 = vadd.f32 %v4617, %v4618
    %v4620 = vsel %vm40, %v4522, 0.0
    %v4621 = vadd.f32 %v4619, %v4620
    %v4622 = vsel %vm40, %v4523, 0.0
    %v4623 = vadd.f32 %v4621, %v4622
    %v4624 = vsel %vm40, %v4524, 0.0
    %v4625 = vadd.f32 %v4623, %v4624
    %v4626 = vsel %vm40, %v4525, 0.0
    %v4627 = vadd.f32 %v4625, %v4626
    %v4628 = vsel %vm40, %v4526, 0.0
    %v4629 = vadd.f32 %v4627, %v4628
    %v4630 = vsel %vm40, %v4527, 0.0
    %v4631 = vadd.f32 %v4629, %v4630
    %v4632 = vsel %vm40, %v4528, 0.0
    %v4633 = vadd.f32 %v4631, %v4632
    %v4634 = vsel %vm40, %v4529, 0.0
    %v4635 = vadd.f32 %v4633, %v4634
    %v4636 = vsel %vm40, %v4530, 0.0
    %v4637 = vadd.f32 %v4635, %v4636
    %v4638 = vsel %vm40, %v4531, 0.0
    %v4639 = vadd.f32 %v4637, %v4638
    %v4640 = vsel %vm40, %v4532, 0.0
    %v4641 = vadd.f32 %v4639, %v4640
    %v4642 = vsel %vm40, %v4533, 0.0
    %v4643 = vadd.f32 %v4641, %v4642
    %v4644 = vsel %vm40, %v4534, 0.0
    %v4645 = vadd.f32 %v4643, %v4644
    %v4646 = vsel %vm40, %v4535, 0.0
    %v4647 = vadd.f32 %v4645, %v4646
    %v4648 = vsel %vm40, %v4536, 0.0
    %v4649 = vadd.f32 %v4647, %v4648
    %v4650 = vsel %vm40, %v4537, 0.0
    %v4651 = vadd.f32 %v4649, %v4650
    %v4652 = vsel %vm40, %v4538, 0.0
    %v4653 = vadd.f32 %v4651, %v4652
    %v4654 = vsel %vm40, %v4539, 0.0
    %v4655 = vadd.f32 %v4653, %v4654
    %v4656 = vsel %vm40, %v4540, 0.0
    %v4657 = vadd.f32 %v4655, %v4656
    %v4658 = vsel %vm40, %v4541, 0.0
    %v4659 = vadd.f32 %v4657, %v4658
    %v4660 = vsel %vm40, %v4542, 0.0
    %v4661 = vadd.f32 %v4659, %v4660
    %v4662 = vsel %vm40, %v4543, 0.0
    %v4663 = vadd.f32 %v4661, %v4662
    %v4664 = vsel %vm40, %v4544, 0.0
    %v4665 = vadd.f32 %v4663, %v4664
    %v4666 = vsel %vm40, %v4545, 0.0
    %v4667 = vadd.f32 %v4665, %v4666
    %v4668 = vsel %vm40, %v4546, 0.0
    %v4669 = vadd.f32 %v4667, %v4668
    %v4670 = vsel %vm40, %v4547, 0.0
    %v4671 = vadd.f32 %v4669, %v4670
    %v4672 = vsel %vm40, %v4548, 0.0
    %v4673 = vadd.f32 %v4671, %v4672
    %v4674 = vsel %vm40, %v4549, 0.0
    %v4675 = vadd.f32 %v4673, %v4674
    %v4676 = vsel %vm40, %v4550, 0.0
    %v4677 = vadd.f32 %v4675, %v4676
    %v4678 = vrot.slane %v4677, 4
    %v4679 = vadd.f32 %v4677, %v4678
    %v4680 = vrot.slane %v4679, 2
    %v4681 = vadd.f32 %v4679, %v4680
    %v4682 = vrot.slane %v4681, 1
    %v4683 = vadd.f32 %v4681, %v4682
    %v4684 = vmul.f32 %v4683, %v807
    %v4685 = vadd.f32 %v4684, 1e-05
    %v4686 = vrsqrt.pop %v4685
    %v4687 = vmul.f32 %v4686, %v4685
    %v4688 = vmul.f32 %v4687, %v4686
    %v4689 = vmul.f32 0.5, %v4688
    %v4690 = vsub.f32 1.5, %v4689
    %v4691 = vmul.f32 %v4686, %v4690
    %vm4692 = vweird.f32 %v4685
    %vm4693 = vweird.f32 %v4686
    %vm4694 = vmor %vm4692, %vm4693
    %v4695 = vsel %vm4694, %v4686, %v4691
    %v4696 = vmul.f32 %v4423, %v4695
    %v4697 = vmul.f32 %v4424, %v4695
    %v4698 = vmul.f32 %v4425, %v4695
    %v4699 = vmul.f32 %v4426, %v4695
    %v4700 = vmul.f32 %v4427, %v4695
    %v4701 = vmul.f32 %v4428, %v4695
    %v4702 = vmul.f32 %v4429, %v4695
    %v4703 = vmul.f32 %v4430, %v4695
    %v4704 = vmul.f32 %v4431, %v4695
    %v4705 = vmul.f32 %v4432, %v4695
    %v4706 = vmul.f32 %v4433, %v4695
    %v4707 = vmul.f32 %v4434, %v4695
    %v4708 = vmul.f32 %v4435, %v4695
    %v4709 = vmul.f32 %v4436, %v4695
    %v4710 = vmul.f32 %v4437, %v4695
    %v4711 = vmul.f32 %v4438, %v4695
    %v4712 = vmul.f32 %v4439, %v4695
    %v4713 = vmul.f32 %v4440, %v4695
    %v4714 = vmul.f32 %v4441, %v4695
    %v4715 = vmul.f32 %v4442, %v4695
    %v4716 = vmul.f32 %v4443, %v4695
    %v4717 = vmul.f32 %v4444, %v4695
    %v4718 = vmul.f32 %v4445, %v4695
    %v4719 = vmul.f32 %v4446, %v4695
    %v4720 = vmul.f32 %v4447, %v4695
    %v4721 = vmul.f32 %v4448, %v4695
    %v4722 = vmul.f32 %v4449, %v4695
    %v4723 = vmul.f32 %v4450, %v4695
    %v4724 = vmul.f32 %v4451, %v4695
    %v4725 = vmul.f32 %v4452, %v4695
    %v4726 = vmul.f32 %v4453, %v4695
    %v4727 = vmul.f32 %v4454, %v4695
    %v4728 = vmul.f32 %v4455, %v4695
    %v4729 = vmul.f32 %v4456, %v4695
    %v4730 = vmul.f32 %v4457, %v4695
    %v4731 = vmul.f32 %v4458, %v4695
    %v4732 = vmul.f32 %v4459, %v4695
    %v4733 = vmul.f32 %v4460, %v4695
    %v4734 = vmul.f32 %v4461, %v4695
    %v4735 = vmul.f32 %v4462, %v4695
    %v4736 = vmul.f32 %v4463, %v4695
    %v4737 = vmul.f32 %v4464, %v4695
    %v4738 = vmul.f32 %v4465, %v4695
    %v4739 = vmul.f32 %v4466, %v4695
    %v4740 = vmul.f32 %v4467, %v4695
    %v4741 = vmul.f32 %v4468, %v4695
    %v4742 = vmul.f32 %v4469, %v4695
    %v4743 = vmul.f32 %v4470, %v4695
    %v4744 = vmul.f32 %v4471, %v4695
    %v4745 = vmul.f32 %v4472, %v4695
    %v4746 = vmul.f32 %v4473, %v4695
    %v4747 = vmul.f32 %v4474, %v4695
    %v4748 = vmul.f32 %v4475, %v4695
    %v4749 = vmul.f32 %v4476, %v4695
    %v4750 = vmul.f32 %v4477, %v4695
    %v4751 = vmul.f32 %v4478, %v4695
    %v4752 = vmul.f32 %v4479, %v4695
    %v4753 = vmul.f32 %v4480, %v4695
    %v4754 = vmul.f32 %v4481, %v4695
    %v4755 = vmul.f32 %v4482, %v4695
    %v4756 = vmul.f32 %v4483, %v4695
    %v4757 = vmul.f32 %v4484, %v4695
    %v4758 = vmul.f32 %v4485, %v4695
    %v4759 = vmul.f32 %v4486, %v4695
    %v4761 = vperm.slane %v4287, 0
    %v4763 = vmul.f32 %v4696, %v4761
    %v4764 = vmul.f32 %v4697, %v4761
    %v4765 = vmul.f32 %v4698, %v4761
    %v4766 = vmul.f32 %v4699, %v4761
    %v4767 = vmul.f32 %v4700, %v4761
    %v4768 = vmul.f32 %v4701, %v4761
    %v4769 = vmul.f32 %v4702, %v4761
    %v4770 = vmul.f32 %v4703, %v4761
    %v4771 = vmul.f32 %v4704, %v4761
    %v4772 = vmul.f32 %v4705, %v4761
    %v4773 = vmul.f32 %v4706, %v4761
    %v4774 = vmul.f32 %v4707, %v4761
    %v4775 = vmul.f32 %v4708, %v4761
    %v4776 = vmul.f32 %v4709, %v4761
    %v4777 = vmul.f32 %v4710, %v4761
    %v4778 = vmul.f32 %v4711, %v4761
    %v4779 = vmul.f32 %v4712, %v4761
    %v4780 = vmul.f32 %v4713, %v4761
    %v4781 = vmul.f32 %v4714, %v4761
    %v4782 = vmul.f32 %v4715, %v4761
    %v4783 = vmul.f32 %v4716, %v4761
    %v4784 = vmul.f32 %v4717, %v4761
    %v4785 = vmul.f32 %v4718, %v4761
    %v4786 = vmul.f32 %v4719, %v4761
    %v4787 = vmul.f32 %v4720, %v4761
    %v4788 = vmul.f32 %v4721, %v4761
    %v4789 = vmul.f32 %v4722, %v4761
    %v4790 = vmul.f32 %v4723, %v4761
    %v4791 = vmul.f32 %v4724, %v4761
    %v4792 = vmul.f32 %v4725, %v4761
    %v4793 = vmul.f32 %v4726, %v4761
    %v4794 = vmul.f32 %v4727, %v4761
    %v4795 = vmul.f32 %v4728, %v4761
    %v4796 = vmul.f32 %v4729, %v4761
    %v4797 = vmul.f32 %v4730, %v4761
    %v4798 = vmul.f32 %v4731, %v4761
    %v4799 = vmul.f32 %v4732, %v4761
    %v4800 = vmul.f32 %v4733, %v4761
    %v4801 = vmul.f32 %v4734, %v4761
    %v4802 = vmul.f32 %v4735, %v4761
    %v4803 = vmul.f32 %v4736, %v4761
    %v4804 = vmul.f32 %v4737, %v4761
    %v4805 = vmul.f32 %v4738, %v4761
    %v4806 = vmul.f32 %v4739, %v4761
    %v4807 = vmul.f32 %v4740, %v4761
    %v4808 = vmul.f32 %v4741, %v4761
    %v4809 = vmul.f32 %v4742, %v4761
    %v4810 = vmul.f32 %v4743, %v4761
    %v4811 = vmul.f32 %v4744, %v4761
    %v4812 = vmul.f32 %v4745, %v4761
    %v4813 = vmul.f32 %v4746, %v4761
    %v4814 = vmul.f32 %v4747, %v4761
    %v4815 = vmul.f32 %v4748, %v4761
    %v4816 = vmul.f32 %v4749, %v4761
    %v4817 = vmul.f32 %v4750, %v4761
    %v4818 = vmul.f32 %v4751, %v4761
    %v4819 = vmul.f32 %v4752, %v4761
    %v4820 = vmul.f32 %v4753, %v4761
    %v4821 = vmul.f32 %v4754, %v4761
    %v4822 = vmul.f32 %v4755, %v4761
    %v4823 = vmul.f32 %v4756, %v4761
    %v4824 = vmul.f32 %v4757, %v4761
    %v4825 = vmul.f32 %v4758, %v4761
    %v4826 = vmul.f32 %v4759, %v4761
    %v4828 = vperm.slane %v4288, 0
    %v4830 = vadd.f32 %v4763, %v4828
    %v4831 = vadd.f32 %v4764, %v4828
    %v4832 = vadd.f32 %v4765, %v4828
    %v4833 = vadd.f32 %v4766, %v4828
    %v4834 = vadd.f32 %v4767, %v4828
    %v4835 = vadd.f32 %v4768, %v4828
    %v4836 = vadd.f32 %v4769, %v4828
    %v4837 = vadd.f32 %v4770, %v4828
    %v4838 = vadd.f32 %v4771, %v4828
    %v4839 = vadd.f32 %v4772, %v4828
    %v4840 = vadd.f32 %v4773, %v4828
    %v4841 = vadd.f32 %v4774, %v4828
    %v4842 = vadd.f32 %v4775, %v4828
    %v4843 = vadd.f32 %v4776, %v4828
    %v4844 = vadd.f32 %v4777, %v4828
    %v4845 = vadd.f32 %v4778, %v4828
    %v4846 = vadd.f32 %v4779, %v4828
    %v4847 = vadd.f32 %v4780, %v4828
    %v4848 = vadd.f32 %v4781, %v4828
    %v4849 = vadd.f32 %v4782, %v4828
    %v4850 = vadd.f32 %v4783, %v4828
    %v4851 = vadd.f32 %v4784, %v4828
    %v4852 = vadd.f32 %v4785, %v4828
    %v4853 = vadd.f32 %v4786, %v4828
    %v4854 = vadd.f32 %v4787, %v4828
    %v4855 = vadd.f32 %v4788, %v4828
    %v4856 = vadd.f32 %v4789, %v4828
    %v4857 = vadd.f32 %v4790, %v4828
    %v4858 = vadd.f32 %v4791, %v4828
    %v4859 = vadd.f32 %v4792, %v4828
    %v4860 = vadd.f32 %v4793, %v4828
    %v4861 = vadd.f32 %v4794, %v4828
    %v4862 = vadd.f32 %v4795, %v4828
    %v4863 = vadd.f32 %v4796, %v4828
    %v4864 = vadd.f32 %v4797, %v4828
    %v4865 = vadd.f32 %v4798, %v4828
    %v4866 = vadd.f32 %v4799, %v4828
    %v4867 = vadd.f32 %v4800, %v4828
    %v4868 = vadd.f32 %v4801, %v4828
    %v4869 = vadd.f32 %v4802, %v4828
    %v4870 = vadd.f32 %v4803, %v4828
    %v4871 = vadd.f32 %v4804, %v4828
    %v4872 = vadd.f32 %v4805, %v4828
    %v4873 = vadd.f32 %v4806, %v4828
    %v4874 = vadd.f32 %v4807, %v4828
    %v4875 = vadd.f32 %v4808, %v4828
    %v4876 = vadd.f32 %v4809, %v4828
    %v4877 = vadd.f32 %v4810, %v4828
    %v4878 = vadd.f32 %v4811, %v4828
    %v4879 = vadd.f32 %v4812, %v4828
    %v4880 = vadd.f32 %v4813, %v4828
    %v4881 = vadd.f32 %v4814, %v4828
    %v4882 = vadd.f32 %v4815, %v4828
    %v4883 = vadd.f32 %v4816, %v4828
    %v4884 = vadd.f32 %v4817, %v4828
    %v4885 = vadd.f32 %v4818, %v4828
    %v4886 = vadd.f32 %v4819, %v4828
    %v4887 = vadd.f32 %v4820, %v4828
    %v4888 = vadd.f32 %v4821, %v4828
    %v4889 = vadd.f32 %v4822, %v4828
    %v4890 = vadd.f32 %v4823, %v4828
    %v4891 = vadd.f32 %v4824, %v4828
    %v4892 = vadd.f32 %v4825, %v4828
    %v4893 = vadd.f32 %v4826, %v4828
    %v4894 = vmax.f32 %v4830, 0.0
    %v4895 = vmax.f32 %v4831, 0.0
    %v4896 = vmax.f32 %v4832, 0.0
    %v4897 = vmax.f32 %v4833, 0.0
    %v4898 = vmax.f32 %v4834, 0.0
    %v4899 = vmax.f32 %v4835, 0.0
    %v4900 = vmax.f32 %v4836, 0.0
    %v4901 = vmax.f32 %v4837, 0.0
    %v4902 = vmax.f32 %v4838, 0.0
    %v4903 = vmax.f32 %v4839, 0.0
    %v4904 = vmax.f32 %v4840, 0.0
    %v4905 = vmax.f32 %v4841, 0.0
    %v4906 = vmax.f32 %v4842, 0.0
    %v4907 = vmax.f32 %v4843, 0.0
    %v4908 = vmax.f32 %v4844, 0.0
    %v4909 = vmax.f32 %v4845, 0.0
    %v4910 = vmax.f32 %v4846, 0.0
    %v4911 = vmax.f32 %v4847, 0.0
    %v4912 = vmax.f32 %v4848, 0.0
    %v4913 = vmax.f32 %v4849, 0.0
    %v4914 = vmax.f32 %v4850, 0.0
    %v4915 = vmax.f32 %v4851, 0.0
    %v4916 = vmax.f32 %v4852, 0.0
    %v4917 = vmax.f32 %v4853, 0.0
    %v4918 = vmax.f32 %v4854, 0.0
    %v4919 = vmax.f32 %v4855, 0.0
    %v4920 = vmax.f32 %v4856, 0.0
    %v4921 = vmax.f32 %v4857, 0.0
    %v4922 = vmax.f32 %v4858, 0.0
    %v4923 = vmax.f32 %v4859, 0.0
    %v4924 = vmax.f32 %v4860, 0.0
    %v4925 = vmax.f32 %v4861, 0.0
    %v4926 = vmax.f32 %v4862, 0.0
    %v4927 = vmax.f32 %v4863, 0.0
    %v4928 = vmax.f32 %v4864, 0.0
    %v4929 = vmax.f32 %v4865, 0.0
    %v4930 = vmax.f32 %v4866, 0.0
    %v4931 = vmax.f32 %v4867, 0.0
    %v4932 = vmax.f32 %v4868, 0.0
    %v4933 = vmax.f32 %v4869, 0.0
    %v4934 = vmax.f32 %v4870, 0.0
    %v4935 = vmax.f32 %v4871, 0.0
    %v4936 = vmax.f32 %v4872, 0.0
    %v4937 = vmax.f32 %v4873, 0.0
    %v4938 = vmax.f32 %v4874, 0.0
    %v4939 = vmax.f32 %v4875, 0.0
    %v4940 = vmax.f32 %v4876, 0.0
    %v4941 = vmax.f32 %v4877, 0.0
    %v4942 = vmax.f32 %v4878, 0.0
    %v4943 = vmax.f32 %v4879, 0.0
    %v4944 = vmax.f32 %v4880, 0.0
    %v4945 = vmax.f32 %v4881, 0.0
    %v4946 = vmax.f32 %v4882, 0.0
    %v4947 = vmax.f32 %v4883, 0.0
    %v4948 = vmax.f32 %v4884, 0.0
    %v4949 = vmax.f32 %v4885, 0.0
    %v4950 = vmax.f32 %v4886, 0.0
    %v4951 = vmax.f32 %v4887, 0.0
    %v4952 = vmax.f32 %v4888, 0.0
    %v4953 = vmax.f32 %v4889, 0.0
    %v4954 = vmax.f32 %v4890, 0.0
    %v4955 = vmax.f32 %v4891, 0.0
    %v4956 = vmax.f32 %v4892, 0.0
    %v4957 = vmax.f32 %v4893, 0.0
    %4958 = vst.msk [vmem:[%s1344 + $0x1] sm:$0xff] %vm40, %v4894
    %4959 = vst.msk [vmem:[%s1344 + $0x9] sm:$0xff] %vm40, %v4895
    %4960 = vst.msk [vmem:[%s1344 + $0x19] sm:$0xff] %vm40, %v4896
    %4961 = vst.msk [vmem:[%s1344 + $0x21] sm:$0xff] %vm40, %v4897
    %4962 = vst.msk [vmem:[%s1344 + $0x31] sm:$0xff] %vm40, %v4898
    %4963 = vst.msk [vmem:[%s1344 + $0x39] sm:$0xff] %vm40, %v4899
    %4964 = vst.msk [vmem:[%s1344 + $0x49] sm:$0xff] %vm40, %v4900
    %4965 = vst.msk [vmem:[%s1344 + $0x51] sm:$0xff] %vm40, %v4901
    %4966 = vst.msk [vmem:[%s1344 + $0x61] sm:$0xff] %vm40, %v4902
    %4967 = vst.msk [vmem:[%s1344 + $0x69] sm:$0xff] %vm40, %v4903
    %4968 = vst.msk [vmem:[%s1344 + $0x79] sm:$0xff] %vm40, %v4904
    %4969 = vst.msk [vmem:[%s1344 + $0x81] sm:$0xff] %vm40, %v4905
    %4970 = vst.msk [vmem:[%s1344 + $0x91] sm:$0xff] %vm40, %v4906
    %4971 = vst.msk [vmem:[%s1344 + $0x99] sm:$0xff] %vm40, %v4907
    %4972 = vst.msk [vmem:[%s1344 + $0xa9] sm:$0xff] %vm40, %v4908
    %4973 = vst.msk [vmem:[%s1344 + $0xb1] sm:$0xff] %vm40, %v4909
    %4974 = vst.msk [vmem:[%s1344 + $0xc1] sm:$0xff] %vm40, %v4910
    %4975 = vst.msk [vmem:[%s1344 + $0xc9] sm:$0xff] %vm40, %v4911
    %4976 = vst.msk [vmem:[%s1344 + $0xd9] sm:$0xff] %vm40, %v4912
    %4977 = vst.msk [vmem:[%s1344 + $0xe1] sm:$0xff] %vm40, %v4913
    %4978 = vst.msk [vmem:[%s1344 + $0xf1] sm:$0xff] %vm40, %v4914
    %4979 = vst.msk [vmem:[%s1344 + $0xf9] sm:$0xff] %vm40, %v4915
    %4980 = vst.msk [vmem:[%s1344 + $0x109] sm:$0xff] %vm40, %v4916
    %4981 = vst.msk [vmem:[%s1344 + $0x111] sm:$0xff] %vm40, %v4917
    %4982 = vst.msk [vmem:[%s1344 + $0x121] sm:$0xff] %vm40, %v4918
    %4983 = vst.msk [vmem:[%s1344 + $0x129] sm:$0xff] %vm40, %v4919
    %4984 = vst.msk [vmem:[%s1344 + $0x139] sm:$0xff] %vm40, %v4920
    %4985 = vst.msk [vmem:[%s1344 + $0x141] sm:$0xff] %vm40, %v4921
    %4986 = vst.msk [vmem:[%s1344 + $0x151] sm:$0xff] %vm40, %v4922
    %4987 = vst.msk [vmem:[%s1344 + $0x159] sm:$0xff] %vm40, %v4923
    %4988 = vst.msk [vmem:[%s1344 + $0x169] sm:$0xff] %vm40, %v4924
    %4989 = vst.msk [vmem:[%s1344 + $0x171] sm:$0xff] %vm40, %v4925
    %4990 = vst.msk [vmem:[%s1344 + $0x1b1] sm:$0xff] %vm40, %v4926
    %4991 = vst.msk [vmem:[%s1344 + $0x1b9] sm:$0xff] %vm40, %v4927
    %4992 = vst.msk [vmem:[%s1344 + $0x1c9] sm:$0xff] %vm40, %v4928
    %4993 = vst.msk [vmem:[%s1344 + $0x1d1] sm:$0xff] %vm40, %v4929
    %4994 = vst.msk [vmem:[%s1344 + $0x1e1] sm:$0xff] %vm40, %v4930
    %4995 = vst.msk [vmem:[%s1344 + $0x1e9] sm:$0xff] %vm40, %v4931
    %4996 = vst.msk [vmem:[%s1344 + $0x1f9] sm:$0xff] %vm40, %v4932
    %4997 = vst.msk [vmem:[%s1344 + $0x201] sm:$0xff] %vm40, %v4933
    %4998 = vst.msk [vmem:[%s1344 + $0x211] sm:$0xff] %vm40, %v4934
    %4999 = vst.msk [vmem:[%s1344 + $0x219] sm:$0xff] %vm40, %v4935
    %5000 = vst.msk [vmem:[%s1344 + $0x229] sm:$0xff] %vm40, %v4936
    %5001 = vst.msk [vmem:[%s1344 + $0x231] sm:$0xff] %vm40, %v4937
    %5002 = vst.msk [vmem:[%s1344 + $0x241] sm:$0xff] %vm40, %v4938
    %5003 = vst.msk [vmem:[%s1344 + $0x249] sm:$0xff] %vm40, %v4939
    %5004 = vst.msk [vmem:[%s1344 + $0x259] sm:$0xff] %vm40, %v4940
    %5005 = vst.msk [vmem:[%s1344 + $0x261] sm:$0xff] %vm40, %v4941
    %5006 = vst.msk [vmem:[%s1344 + $0x271] sm:$0xff] %vm40, %v4942
    %5007 = vst.msk [vmem:[%s1344 + $0x279] sm:$0xff] %vm40, %v4943
    %5008 = vst.msk [vmem:[%s1344 + $0x289] sm:$0xff] %vm40, %v4944
    %5009 = vst.msk [vmem:[%s1344 + $0x291] sm:$0xff] %vm40, %v4945
    %5010 = vst.msk [vmem:[%s1344 + $0x2a1] sm:$0xff] %vm40, %v4946
    %5011 = vst.msk [vmem:[%s1344 + $0x2a9] sm:$0xff] %vm40, %v4947
    %5012 = vst.msk [vmem:[%s1344 + $0x2b9] sm:$0xff] %vm40, %v4948
    %5013 = vst.msk [vmem:[%s1344 + $0x2c1] sm:$0xff] %vm40, %v4949
    %5014 = vst.msk [vmem:[%s1344 + $0x2d1] sm:$0xff] %vm40, %v4950
    %5015 = vst.msk [vmem:[%s1344 + $0x2d9] sm:$0xff] %vm40, %v4951
    %5016 = vst.msk [vmem:[%s1344 + $0x2e9] sm:$0xff] %vm40, %v4952
    %5017 = vst.msk [vmem:[%s1344 + $0x2f1] sm:$0xff] %vm40, %v4953
    %5018 = vst.msk [vmem:[%s1344 + $0x301] sm:$0xff] %vm40, %v4954
    %5019 = vst.msk [vmem:[%s1344 + $0x309] sm:$0xff] %vm40, %v4955
    %5020 = vst.msk [vmem:[%s1344 + $0x319] sm:$0xff] %vm40, %v4956
    %5021 = vst.msk [vmem:[%s1344 + $0x321] sm:$0xff] %vm40, %v4957
    %v5022 = vld [vmem:[#allocation2] sm:$0xff]
    %v5023 = vld [vmem:[#allocation2 + $0x8] sm:$0xff]
    %v5024 = vld [vmem:[#allocation2 + $0x10] sm:$0x3]
    %v5025 = vld [vmem:[#allocation2 + $0x18] sm:$0xff]
    %v5026 = vld [vmem:[#allocation2 + $0x20] sm:$0xff]
    %v5027 = vld [vmem:[#allocation2 + $0x28] sm:$0x3]
    %v5028 = vld [vmem:[#allocation2 + $0x30] sm:$0xff]
    %v5029 = vld [vmem:[#allocation2 + $0x38] sm:$0xff]
    %v5030 = vld [vmem:[#allocation2 + $0x40] sm:$0x3]
    %v5031 = vld [vmem:[#allocation2 + $0x48] sm:$0xff]
    %v5032 = vld [vmem:[#allocation2 + $0x50] sm:$0xff]
    %v5033 = vld [vmem:[#allocation2 + $0x58] sm:$0x3]
    %v5034 = vld [vmem:[#allocation2 + $0x60] sm:$0xff]
    %v5035 = vld [vmem:[#allocation2 + $0x68] sm:$0xff]
    %v5036 = vld [vmem:[#allocation2 + $0x70] sm:$0x3]
    %v5037 = vld [vmem:[#allocation2 + $0x78] sm:$0xff]
    %v5038 = vld [vmem:[#allocation2 + $0x80] sm:$0xff]
    %v5039 = vld [vmem:[#allocation2 + $0x88] sm:$0x3]
    %v5040 = vld [vmem:[#allocation2 + $0x90] sm:$0xff]
    %v5041 = vld [vmem:[#allocation2 + $0x98] sm:$0xff]
    %v5042 = vld [vmem:[#allocation2 + $0xa0] sm:$0x3]
    %v5043 = vld [vmem:[#allocation2 + $0xa8] sm:$0xff]
    %v5044 = vld [vmem:[#allocation2 + $0xb0] sm:$0xff]
    %v5045 = vld [vmem:[#allocation2 + $0xb8] sm:$0x3]
    %v5046 = vld [vmem:[#allocation2 + $0xc0] sm:$0xff]
    %v5047 = vld [vmem:[#allocation2 + $0xc8] sm:$0xff]
    %v5048 = vld [vmem:[#allocation2 + $0xd0] sm:$0x3]
    %v5049 = vld [vmem:[#allocation2 + $0xd8] sm:$0xff]
    %v5050 = vld [vmem:[#allocation2 + $0xe0] sm:$0xff]
    %v5051 = vld [vmem:[#allocation2 + $0xe8] sm:$0x3]
    %v5052 = vld [vmem:[#allocation2 + $0xf0] sm:$0xff]
    %v5053 = vld [vmem:[#allocation2 + $0xf8] sm:$0xff]
    %v5054 = vld [vmem:[#allocation2 + $0x100] sm:$0x3]
    %v5055 = vld [vmem:[#allocation2 + $0x108] sm:$0xff]
    %v5056 = vld [vmem:[#allocation2 + $0x110] sm:$0xff]
    %v5057 = vld [vmem:[#allocation2 + $0x118] sm:$0x3]
    %v5058 = vld [vmem:[#allocation2 + $0x120] sm:$0xff]
    %v5059 = vld [vmem:[#allocation2 + $0x128] sm:$0xff]
    %v5060 = vld [vmem:[#allocation2 + $0x130] sm:$0x3]
    %v5061 = vld [vmem:[#allocation2 + $0x138] sm:$0xff]
    %v5062 = vld [vmem:[#allocation2 + $0x140] sm:$0xff]
    %v5063 = vld [vmem:[#allocation2 + $0x148] sm:$0x3]
    %v5064 = vld [vmem:[#allocation2 + $0x150] sm:$0xff]
    %v5065 = vld [vmem:[#allocation2 + $0x158] sm:$0xff]
    %v5066 = vld [vmem:[#allocation2 + $0x160] sm:$0x3]
    %v5067 = vld [vmem:[#allocation2 + $0x168] sm:$0xff]
    %v5068 = vld [vmem:[#allocation2 + $0x170] sm:$0xff]
    %v5069 = vld [vmem:[#allocation2 + $0x178] sm:$0x3]
    %v5070 = vld [vmem:[#allocation2 + $0x180] sm:$0xff]
    %v5071 = vld [vmem:[#allocation2 + $0x188] sm:$0xff]
    %v5072 = vld [vmem:[#allocation2 + $0x190] sm:$0x3]
    %v5073 = vld [vmem:[#allocation2 + $0x198] sm:$0xff]
    %v5074 = vld [vmem:[#allocation2 + $0x1a0] sm:$0xff]
    %v5075 = vld [vmem:[#allocation2 + $0x1a8] sm:$0x3]
    %v5076 = vld [vmem:[#allocation2 + $0x1b0] sm:$0xff]
    %v5077 = vld [vmem:[#allocation2 + $0x1b8] sm:$0xff]
    %v5078 = vld [vmem:[#allocation2 + $0x1c0] sm:$0x3]
    %v5079 = vld [vmem:[#allocation2 + $0x1c8] sm:$0xff]
    %v5080 = vld [vmem:[#allocation2 + $0x1d0] sm:$0xff]
    %v5081 = vld [vmem:[#allocation2 + $0x1d8] sm:$0x3]
    %v5082 = vld [vmem:[#allocation2 + $0x1e0] sm:$0xff]
    %v5083 = vld [vmem:[#allocation2 + $0x1e8] sm:$0xff]
    %v5084 = vld [vmem:[#allocation2 + $0x1f0] sm:$0x3]
    %v5085 = vld [vmem:[#allocation2 + $0x1f8] sm:$0xff]
    %v5086 = vld [vmem:[#allocation2 + $0x200] sm:$0xff]
    %v5087 = vld [vmem:[#allocation2 + $0x208] sm:$0x3]
    %v5088 = vld [vmem:[#allocation2 + $0x210] sm:$0xff]
    %v5089 = vld [vmem:[#allocation2 + $0x218] sm:$0xff]
    %v5090 = vld [vmem:[#allocation2 + $0x220] sm:$0x3]
    %v5091 = vld [vmem:[#allocation2 + $0x228] sm:$0xff]
    %v5092 = vld [vmem:[#allocation2 + $0x230] sm:$0xff]
    %v5093 = vld [vmem:[#allocation2 + $0x238] sm:$0x3]
    %v5094 = vld [vmem:[#allocation2 + $0x240] sm:$0xff]
    %v5095 = vld [vmem:[#allocation2 + $0x248] sm:$0xff]
    %v5096 = vld [vmem:[#allocation2 + $0x250] sm:$0x3]
    %v5097 = vld [vmem:[#allocation2 + $0x258] sm:$0xff]
    %v5098 = vld [vmem:[#allocation2 + $0x260] sm:$0xff]
    %v5099 = vld [vmem:[#allocation2 + $0x268] sm:$0x3]
    %v5100 = vld [vmem:[#allocation2 + $0x270] sm:$0xff]
    %v5101 = vld [vmem:[#allocation2 + $0x278] sm:$0xff]
    %v5102 = vld [vmem:[#allocation2 + $0x280] sm:$0x3]
    %v5103 = vld [vmem:[#allocation2 + $0x288] sm:$0xff]
    %v5104 = vld [vmem:[#allocation2 + $0x290] sm:$0xff]
    %v5105 = vld [vmem:[#allocation2 + $0x298] sm:$0x3]
    %v5106 = vld [vmem:[#allocation2 + $0x2a0] sm:$0xff]
    %v5107 = vld [vmem:[#allocation2 + $0x2a8] sm:$0xff]
    %v5108 = vld [vmem:[#allocation2 + $0x2b0] sm:$0x3]
    %v5109 = vld [vmem:[#allocation2 + $0x2b8] sm:$0xff]
    %v5110 = vld [vmem:[#allocation2 + $0x2c0] sm:$0xff]
    %v5111 = vld [vmem:[#allocation2 + $0x2c8] sm:$0x3]
    %v5112 = vld [vmem:[#allocation2 + $0x2d0] sm:$0xff]
    %v5113 = vld [vmem:[#allocation2 + $0x2d8] sm:$0xff]
    %v5114 = vld [vmem:[#allocation2 + $0x2e0] sm:$0x3]
    %v5115 = vld [vmem:[#allocation2 + $0x2e8] sm:$0xff]
    %v5116 = vld [vmem:[#allocation2 + $0x2f0] sm:$0xff]
    %v5117 = vld [vmem:[#allocation2 + $0x2f8] sm:$0x3]
    %v5118 = vld [vmem:[#allocation2 + $0x300] sm:$0xff]
    %v5119 = vld [vmem:[#allocation2 + $0x308] sm:$0xff]
    %v5120 = vld [vmem:[#allocation2 + $0x310] sm:$0x3]
    %v5121 = vld [vmem:[#allocation2 + $0x318] sm:$0xff]
    %v5122 = vld [vmem:[#allocation2 + $0x320] sm:$0xff]
    %v5123 = vld [vmem:[#allocation2 + $0x328] sm:$0x3]
    %v5124 = vld [vmem:[#allocation2 + $0x330] sm:$0xff]
    %v5125 = vld [vmem:[#allocation2 + $0x338] sm:$0xff]
    %v5126 = vld [vmem:[#allocation2 + $0x340] sm:$0x3]
    %v5127 = vld [vmem:[#allocation2 + $0x348] sm:$0xff]
    %v5128 = vld [vmem:[#allocation2 + $0x350] sm:$0xff]
    %v5129 = vld [vmem:[#allocation2 + $0x358] sm:$0x3]
    %v5226 = vrot.slane %v5022, 1
    %v5227 = vrot.slane %v5023, 1
    %v5228 = vsel %vm1613, %v5226, %v5227
    %v5229 = vrot.slane %v5024, 1
    %v5230 = vsel %vm1613, %v5227, %v5229
    %v5231 = vrot.slane %v5025, 1
    %v5232 = vrot.slane %v5026, 1
    %v5233 = vsel %vm1613, %v5231, %v5232
    %v5234 = vrot.slane %v5027, 1
    %v5235 = vsel %vm1613, %v5232, %v5234
    %v5236 = vrot.slane %v5028, 1
    %v5237 = vrot.slane %v5029, 1
    %v5238 = vsel %vm1613, %v5236, %v5237
    %v5239 = vrot.slane %v5030, 1
    %v5240 = vsel %vm1613, %v5237, %v5239
    %v5241 = vrot.slane %v5031, 1
    %v5242 = vrot.slane %v5032, 1
    %v5243 = vsel %vm1613, %v5241, %v5242
    %v5244 = vrot.slane %v5033, 1
    %v5245 = vsel %vm1613, %v5242, %v5244
    %v5246 = vrot.slane %v5034, 1
    %v5247 = vrot.slane %v5035, 1
    %v5248 = vsel %vm1613, %v5246, %v5247
    %v5249 = vrot.slane %v5036, 1
    %v5250 = vsel %vm1613, %v5247, %v5249
    %v5251 = vrot.slane %v5037, 1
    %v5252 = vrot.slane %v5038, 1
    %v5253 = vsel %vm1613, %v5251, %v5252
    %v5254 = vrot.slane %v5039, 1
    %v5255 = vsel %vm1613, %v5252, %v5254
    %v5256 = vrot.slane %v5040, 1
    %v5257 = vrot.slane %v5041, 1
    %v5258 = vsel %vm1613, %v5256, %v5257
    %v5259 = vrot.slane %v5042, 1
    %v5260 = vsel %vm1613, %v5257, %v5259
    %v5261 = vrot.slane %v5043, 1
    %v5262 = vrot.slane %v5044, 1
    %v5263 = vsel %vm1613, %v5261, %v5262
    %v5264 = vrot.slane %v5045, 1
    %v5265 = vsel %vm1613, %v5262, %v5264
    %v5266 = vrot.slane %v5046, 1
    %v5267 = vrot.slane %v5047, 1
    %v5268 = vsel %vm1613, %v5266, %v5267
    %v5269 = vrot.slane %v5048, 1
    %v5270 = vsel %vm1613, %v5267, %v5269
    %v5271 = vrot.slane %v5049, 1
    %v5272 = vrot.slane %v5050, 1
    %v5273 = vsel %vm1613, %v5271, %v5272
    %v5274 = vrot.slane %v5051, 1
    %v5275 = vsel %vm1613, %v5272, %v5274
    %v5276 = vrot.slane %v5052, 1
    %v5277 = vrot.slane %v5053, 1
    %v5278 = vsel %vm1613, %v5276, %v5277
    %v5279 = vrot.slane %v5054, 1
    %v5280 = vsel %vm1613, %v5277, %v5279
    %v5281 = vrot.slane %v5055, 1
    %v5282 = vrot.slane %v5056, 1
    %v5283 = vsel %vm1613, %v5281, %v5282
    %v5284 = vrot.slane %v5057, 1
    %v5285 = vsel %vm1613, %v5282, %v5284
    %v5286 = vrot.slane %v5058, 1
    %v5287 = vrot.slane %v5059, 1
    %v5288 = vsel %vm1613, %v5286, %v5287
    %v5289 = vrot.slane %v5060, 1
    %v5290 = vsel %vm1613, %v5287, %v5289
    %v5291 = vrot.slane %v5061, 1
    %v5292 = vrot.slane %v5062, 1
    %v5293 = vsel %vm1613, %v5291, %v5292
    %v5294 = vrot.slane %v5063, 1
    %v5295 = vsel %vm1613, %v5292, %v5294
    %v5296 = vrot.slane %v5064, 1
    %v5297 = vrot.slane %v5065, 1
    %v5298 = vsel %vm1613, %v5296, %v5297
    %v5299 = vrot.slane %v5066, 1
    %v5300 = vsel %vm1613, %v5297, %v5299
    %v5301 = vrot.slane %v5067, 1
    %v5302 = vrot.slane %v5068, 1
    %v5303 = vsel %vm1613, %v5301, %v5302
    %v5304 = vrot.slane %v5069, 1
    %v5305 = vsel %vm1613, %v5302, %v5304
    %v5306 = vrot.slane %v5076, 1
    %v5307 = vrot.slane %v5077, 1
    %v5308 = vsel %vm1613, %v5306, %v5307
    %v5309 = vrot.slane %v5078, 1
    %v5310 = vsel %vm1613, %v5307, %v5309
    %v5311 = vrot.slane %v5079, 1
    %v5312 = vrot.slane %v5080, 1
    %v5313 = vsel %vm1613, %v5311, %v5312
    %v5314 = vrot.slane %v5081, 1
    %v5315 = vsel %vm1613, %v5312, %v5314
    %v5316 = vrot.slane %v5082, 1
    %v5317 = vrot.slane %v5083, 1
    %v5318 = vsel %vm1613, %v5316, %v5317
    %v5319 = vrot.slane %v5084, 1
    %v5320 = vsel %vm1613, %v5317, %v5319
    %v5321 = vrot.slane %v5085, 1
    %v5322 = vrot.slane %v5086, 1
    %v5323 = vsel %vm1613, %v5321, %v5322
    %v5324 = vrot.slane %v5087, 1
    %v5325 = vsel %vm1613, %v5322, %v5324
    %v5326 = vrot.slane %v5088, 1
    %v5327 = vrot.slane %v5089, 1
    %v5328 = vsel %vm1613, %v5326, %v5327
    %v5329 = vrot.slane %v5090, 1
    %v5330 = vsel %vm1613, %v5327, %v5329
    %v5331 = vrot.slane %v5091, 1
    %v5332 = vrot.slane %v5092, 1
    %v5333 = vsel %vm1613, %v5331, %v5332
    %v5334 = vrot.slane %v5093, 1
    %v5335 = vsel %vm1613, %v5332, %v5334
    %v5336 = vrot.slane %v5094, 1
    %v5337 = vrot.slane %v5095, 1
    %v5338 = vsel %vm1613, %v5336, %v5337
    %v5339 = vrot.slane %v5096, 1
    %v5340 = vsel %vm1613, %v5337, %v5339
    %v5341 = vrot.slane %v5097, 1
    %v5342 = vrot.slane %v5098, 1
    %v5343 = vsel %vm1613, %v5341, %v5342
    %v5344 = vrot.slane %v5099, 1
    %v5345 = vsel %vm1613, %v5342, %v5344
    %v5346 = vrot.slane %v5100, 1
    %v5347 = vrot.slane %v5101, 1
    %v5348 = vsel %vm1613, %v5346, %v5347
    %v5349 = vrot.slane %v5102, 1
    %v5350 = vsel %vm1613, %v5347, %v5349
    %v5351 = vrot.slane %v5103, 1
    %v5352 = vrot.slane %v5104, 1
    %v5353 = vsel %vm1613, %v5351, %v5352
    %v5354 = vrot.slane %v5105, 1
    %v5355 = vsel %vm1613, %v5352, %v5354
    %v5356 = vrot.slane %v5106, 1
    %v5357 = vrot.slane %v5107, 1
    %v5358 = vsel %vm1613, %v5356, %v5357
    %v5359 = vrot.slane %v5108, 1
    %v5360 = vsel %vm1613, %v5357, %v5359
    %v5361 = vrot.slane %v5109, 1
    %v5362 = vrot.slane %v5110, 1
    %v5363 = vsel %vm1613, %v5361, %v5362
    %v5364 = vrot.slane %v5111, 1
    %v5365 = vsel %vm1613, %v5362, %v5364
    %v5366 = vrot.slane %v5112, 1
    %v5367 = vrot.slane %v5113, 1
    %v5368 = vsel %vm1613, %v5366, %v5367
    %v5369 = vrot.slane %v5114, 1
    %v5370 = vsel %vm1613, %v5367, %v5369
    %v5371 = vrot.slane %v5115, 1
    %v5372 = vrot.slane %v5116, 1
    %v5373 = vsel %vm1613, %v5371, %v5372
    %v5374 = vrot.slane %v5117, 1
    %v5375 = vsel %vm1613, %v5372, %v5374
    %v5376 = vrot.slane %v5118, 1
    %v5377 = vrot.slane %v5119, 1
    %v5378 = vsel %vm1613, %v5376, %v5377
    %v5379 = vrot.slane %v5120, 1
    %v5380 = vsel %vm1613, %v5377, %v5379
    %v5381 = vrot.slane %v5121, 1
    %v5382 = vrot.slane %v5122, 1
    %v5383 = vsel %vm1613, %v5381, %v5382
    %v5384 = vrot.slane %v5123, 1
    %v5385 = vsel %vm1613, %v5382, %v5384
    %v5386 = vrot.slane %v5022, 2
    %v5387 = vrot.slane %v5023, 2
    %v5388 = vsel %vm491, %v5386, %v5387
    %v5389 = vrot.slane %v5024, 2
    %v5390 = vsel %vm491, %v5387, %v5389
    %v5391 = vrot.slane %v5025, 2
    %v5392 = vrot.slane %v5026, 2
    %v5393 = vsel %vm491, %v5391, %v5392
    %v5394 = vrot.slane %v5027, 2
    %v5395 = vsel %vm491, %v5392, %v5394
    %v5396 = vrot.slane %v5028, 2
    %v5397 = vrot.slane %v5029, 2
    %v5398 = vsel %vm491, %v5396, %v5397
    %v5399 = vrot.slane %v5030, 2
    %v5400 = vsel %vm491, %v5397, %v5399
    %v5401 = vrot.slane %v5031, 2
    %v5402 = vrot.slane %v5032, 2
    %v5403 = vsel %vm491, %v5401, %v5402
    %v5404 = vrot.slane %v5033, 2
    %v5405 = vsel %vm491, %v5402, %v5404
    %v5406 = vrot.slane %v5034, 2
    %v5407 = vrot.slane %v5035, 2
    %v5408 = vsel %vm491, %v5406, %v5407
    %v5409 = vrot.slane %v5036, 2
    %v5410 = vsel %vm491, %v5407, %v5409
    %v5411 = vrot.slane %v5037, 2
    %v5412 = vrot.slane %v5038, 2
    %v5413 = vsel %vm491, %v5411, %v5412
    %v5414 = vrot.slane %v5039, 2
    %v5415 = vsel %vm491, %v5412, %v5414
    %v5416 = vrot.slane %v5040, 2
    %v5417 = vrot.slane %v5041, 2
    %v5418 = vsel %vm491, %v5416, %v5417
    %v5419 = vrot.slane %v5042, 2
    %v5420 = vsel %vm491, %v5417, %v5419
    %v5421 = vrot.slane %v5043, 2
    %v5422 = vrot.slane %v5044, 2
    %v5423 = vsel %vm491, %v5421, %v5422
    %v5424 = vrot.slane %v5045, 2
    %v5425 = vsel %vm491, %v5422, %v5424
    %v5426 = vrot.slane %v5046, 2
    %v5427 = vrot.slane %v5047, 2
    %v5428 = vsel %vm491, %v5426, %v5427
    %v5429 = vrot.slane %v5048, 2
    %v5430 = vsel %vm491, %v5427, %v5429
    %v5431 = vrot.slane %v5049, 2
    %v5432 = vrot.slane %v5050, 2
    %v5433 = vsel %vm491, %v5431, %v5432
    %v5434 = vrot.slane %v5051, 2
    %v5435 = vsel %vm491, %v5432, %v5434
    %v5436 = vrot.slane %v5052, 2
    %v5437 = vrot.slane %v5053, 2
    %v5438 = vsel %vm491, %v5436, %v5437
    %v5439 = vrot.slane %v5054, 2
    %v5440 = vsel %vm491, %v5437, %v5439
    %v5441 = vrot.slane %v5055, 2
    %v5442 = vrot.slane %v5056, 2
    %v5443 = vsel %vm491, %v5441, %v5442
    %v5444 = vrot.slane %v5057, 2
    %v5445 = vsel %vm491, %v5442, %v5444
    %v5446 = vrot.slane %v5058, 2
    %v5447 = vrot.slane %v5059, 2
    %v5448 = vsel %vm491, %v5446, %v5447
    %v5449 = vrot.slane %v5060, 2
    %v5450 = vsel %vm491, %v5447, %v5449
    %v5451 = vrot.slane %v5061, 2
    %v5452 = vrot.slane %v5062, 2
    %v5453 = vsel %vm491, %v5451, %v5452
    %v5454 = vrot.slane %v5063, 2
    %v5455 = vsel %vm491, %v5452, %v5454
    %v5456 = vrot.slane %v5064, 2
    %v5457 = vrot.slane %v5065, 2
    %v5458 = vsel %vm491, %v5456, %v5457
    %v5459 = vrot.slane %v5066, 2
    %v5460 = vsel %vm491, %v5457, %v5459
    %v5461 = vrot.slane %v5067, 2
    %v5462 = vrot.slane %v5068, 2
    %v5463 = vsel %vm491, %v5461, %v5462
    %v5464 = vrot.slane %v5069, 2
    %v5465 = vsel %vm491, %v5462, %v5464
    %v5466 = vrot.slane %v5076, 2
    %v5467 = vrot.slane %v5077, 2
    %v5468 = vsel %vm491, %v5466, %v5467
    %v5469 = vrot.slane %v5078, 2
    %v5470 = vsel %vm491, %v5467, %v5469
    %v5471 = vrot.slane %v5079, 2
    %v5472 = vrot.slane %v5080, 2
    %v5473 = vsel %vm491, %v5471, %v5472
    %v5474 = vrot.slane %v5081, 2
    %v5475 = vsel %vm491, %v5472, %v5474
    %v5476 = vrot.slane %v5082, 2
    %v5477 = vrot.slane %v5083, 2
    %v5478 = vsel %vm491, %v5476, %v5477
    %v5479 = vrot.slane %v5084, 2
    %v5480 = vsel %vm491, %v5477, %v5479
    %v5481 = vrot.slane %v5085, 2
    %v5482 = vrot.slane %v5086, 2
    %v5483 = vsel %vm491, %v5481, %v5482
    %v5484 = vrot.slane %v5087, 2
    %v5485 = vsel %vm491, %v5482, %v5484
    %v5486 = vrot.slane %v5088, 2
    %v5487 = vrot.slane %v5089, 2
    %v5488 = vsel %vm491, %v5486, %v5487
    %v5489 = vrot.slane %v5090, 2
    %v5490 = vsel %vm491, %v5487, %v5489
    %v5491 = vrot.slane %v5091, 2
    %v5492 = vrot.slane %v5092, 2
    %v5493 = vsel %vm491, %v5491, %v5492
    %v5494 = vrot.slane %v5093, 2
    %v5495 = vsel %vm491, %v5492, %v5494
    %v5496 = vrot.slane %v5094, 2
    %v5497 = vrot.slane %v5095, 2
    %v5498 = vsel %vm491, %v5496, %v5497
    %v5499 = vrot.slane %v5096, 2
    %v5500 = vsel %vm491, %v5497, %v5499
    %v5501 = vrot.slane %v5097, 2
    %v5502 = vrot.slane %v5098, 2
    %v5503 = vsel %vm491, %v5501, %v5502
    %v5504 = vrot.slane %v5099, 2
    %v5505 = vsel %vm491, %v5502, %v5504
    %v5506 = vrot.slane %v5100, 2
    %v5507 = vrot.slane %v5101, 2
    %v5508 = vsel %vm491, %v5506, %v5507
    %v5509 = vrot.slane %v5102, 2
    %v5510 = vsel %vm491, %v5507, %v5509
    %v5511 = vrot.slane %v5103, 2
    %v5512 = vrot.slane %v5104, 2
    %v5513 = vsel %vm491, %v5511, %v5512
    %v5514 = vrot.slane %v5105, 2
    %v5515 = vsel %vm491, %v5512, %v5514
    %v5516 = vrot.slane %v5106, 2
    %v5517 = vrot.slane %v5107, 2
    %v5518 = vsel %vm491, %v5516, %v5517
    %v5519 = vrot.slane %v5108, 2
    %v5520 = vsel %vm491, %v5517, %v5519
    %v5521 = vrot.slane %v5109, 2
    %v5522 = vrot.slane %v5110, 2
    %v5523 = vsel %vm491, %v5521, %v5522
    %v5524 = vrot.slane %v5111, 2
    %v5525 = vsel %vm491, %v5522, %v5524
    %v5526 = vrot.slane %v5112, 2
    %v5527 = vrot.slane %v5113, 2
    %v5528 = vsel %vm491, %v5526, %v5527
    %v5529 = vrot.slane %v5114, 2
    %v5530 = vsel %vm491, %v5527, %v5529
    %v5531 = vrot.slane %v5115, 2
    %v5532 = vrot.slane %v5116, 2
    %v5533 = vsel %vm491, %v5531, %v5532
    %v5534 = vrot.slane %v5117, 2
    %v5535 = vsel %vm491, %v5532, %v5534
    %v5536 = vrot.slane %v5118, 2
    %v5537 = vrot.slane %v5119, 2
    %v5538 = vsel %vm491, %v5536, %v5537
    %v5539 = vrot.slane %v5120, 2
    %v5540 = vsel %vm491, %v5537, %v5539
    %v5541 = vrot.slane %v5121, 2
    %v5542 = vrot.slane %v5122, 2
    %v5543 = vsel %vm491, %v5541, %v5542
    %v5544 = vrot.slane %v5123, 2
    %v5545 = vsel %vm491, %v5542, %v5544
    %v5616 = vrot.slane %v5070, 1
    %v5617 = vrot.slane %v5071, 1
    %v5618 = vsel %vm1613, %v5616, %v5617
    %v5619 = vrot.slane %v5072, 1
    %v5620 = vsel %vm1613, %v5617, %v5619
    %v5621 = vrot.slane %v5124, 1
    %v5622 = vrot.slane %v5125, 1
    %v5623 = vsel %vm1613, %v5621, %v5622
    %v5624 = vrot.slane %v5126, 1
    %v5625 = vsel %vm1613, %v5622, %v5624
    %v5690 = vrot.slane %v5070, 2
    %v5691 = vrot.slane %v5071, 2
    %v5692 = vsel %vm491, %v5690, %v5691
    %v5693 = vrot.slane %v5072, 2
    %v5694 = vsel %vm491, %v5691, %v5693
    %v5695 = vrot.slane %v5124, 2
    %v5696 = vrot.slane %v5125, 2
    %v5697 = vsel %vm491, %v5695, %v5696
    %v5698 = vrot.slane %v5126, 2
    %v5699 = vsel %vm491, %v5696, %v5698
    %v5706 = vrot.slane %v5073, 1
    %v5707 = vrot.slane %v5074, 1
    %v5708 = vsel %vm1613, %v5706, %v5707
    %v5709 = vrot.slane %v5075, 1
    %v5710 = vsel %vm1613, %v5707, %v5709
    %v5711 = vrot.slane %v5127, 1
    %v5712 = vrot.slane %v5128, 1
    %v5713 = vsel %vm1613, %v5711, %v5712
    %v5714 = vrot.slane %v5129, 1
    %v5715 = vsel %vm1613, %v5712, %v5714
    %v5716 = vrot.slane %v5073, 2
    %v5717 = vrot.slane %v5074, 2
    %v5718 = vsel %vm491, %v5716, %v5717
    %v5719 = vrot.slane %v5075, 2
    %v5720 = vsel %vm491, %v5717, %v5719
    %v5721 = vrot.slane %v5127, 2
    %v5722 = vrot.slane %v5128, 2
    %v5723 = vsel %vm491, %v5721, %v5722
    %v5724 = vrot.slane %v5129, 2
    %v5725 = vsel %vm491, %v5722, %v5724
    %5734 = vrot.lane.b32.xlu0 %v5228, 64
    %v5735 = vpop.permute.xlu0 %5734
    %5736 = vrot.lane.b32.xlu0 %v5230, 64
    %v5737 = vpop.permute.xlu0 %5736
    %5738 = vrot.lane.b32.xlu0 %v5233, 64
    %v5739 = vpop.permute.xlu0 %5738
    %5740 = vrot.lane.b32.xlu0 %v5235, 64
    %v5741 = vpop.permute.xlu0 %5740
    %5742 = vrot.lane.b32.xlu0 %v5238, 64
    %v5743 = vpop.permute.xlu0 %5742
    %5744 = vrot.lane.b32.xlu0 %v5240, 64
    %v5745 = vpop.permute.xlu0 %5744
    %5746 = vrot.lane.b32.xlu0 %v5243, 64
    %v5747 = vpop.permute.xlu0 %5746
    %5748 = vrot.lane.b32.xlu0 %v5245, 64
    %v5749 = vpop.permute.xlu0 %5748
    %5750 = vrot.lane.b32.xlu0 %v5248, 64
    %v5751 = vpop.permute.xlu0 %5750
    %5752 = vrot.lane.b32.xlu0 %v5250, 64
    %v5753 = vpop.permute.xlu0 %5752
    %5754 = vrot.lane.b32.xlu0 %v5253, 64
    %v5755 = vpop.permute.xlu0 %5754
    %5756 = vrot.lane.b32.xlu0 %v5255, 64
    %v5757 = vpop.permute.xlu0 %5756
    %5758 = vrot.lane.b32.xlu0 %v5258, 64
    %v5759 = vpop.permute.xlu0 %5758
    %5760 = vrot.lane.b32.xlu0 %v5260, 64
    %v5761 = vpop.permute.xlu0 %5760
    %5762 = vrot.lane.b32.xlu0 %v5263, 64
    %v5763 = vpop.permute.xlu0 %5762
    %5764 = vrot.lane.b32.xlu0 %v5265, 64
    %v5765 = vpop.permute.xlu0 %5764
    %5766 = vrot.lane.b32.xlu0 %v5268, 64
    %v5767 = vpop.permute.xlu0 %5766
    %5768 = vrot.lane.b32.xlu0 %v5270, 64
    %v5769 = vpop.permute.xlu0 %5768
    %5770 = vrot.lane.b32.xlu0 %v5273, 64
    %v5771 = vpop.permute.xlu0 %5770
    %5772 = vrot.lane.b32.xlu0 %v5275, 64
    %v5773 = vpop.permute.xlu0 %5772
    %5774 = vrot.lane.b32.xlu0 %v5278, 64
    %v5775 = vpop.permute.xlu0 %5774
    %5776 = vrot.lane.b32.xlu0 %v5280, 64
    %v5777 = vpop.permute.xlu0 %5776
    %5778 = vrot.lane.b32.xlu0 %v5283, 64
    %v5779 = vpop.permute.xlu0 %5778
    %5780 = vrot.lane.b32.xlu0 %v5285, 64
    %v5781 = vpop.permute.xlu0 %5780
    %5782 = vrot.lane.b32.xlu0 %v5288, 64
    %v5783 = vpop.permute.xlu0 %5782
    %5784 = vrot.lane.b32.xlu0 %v5290, 64
    %v5785 = vpop.permute.xlu0 %5784
    %5786 = vrot.lane.b32.xlu0 %v5293, 64
    %v5787 = vpop.permute.xlu0 %5786
    %5788 = vrot.lane.b32.xlu0 %v5295, 64
    %v5789 = vpop.permute.xlu0 %5788
    %5790 = vrot.lane.b32.xlu0 %v5298, 64
    %v5791 = vpop.permute.xlu0 %5790
    %5792 = vrot.lane.b32.xlu0 %v5300, 64
    %v5793 = vpop.permute.xlu0 %5792
    %5794 = vrot.lane.b32.xlu0 %v5303, 64
    %v5795 = vpop.permute.xlu0 %5794
    %5796 = vrot.lane.b32.xlu0 %v5305, 64
    %v5797 = vpop.permute.xlu0 %5796
    %5798 = vrot.lane.b32.xlu0 %v5308, 64
    %v5799 = vpop.permute.xlu0 %5798
    %5800 = vrot.lane.b32.xlu0 %v5310, 64
    %v5801 = vpop.permute.xlu0 %5800
    %5802 = vrot.lane.b32.xlu0 %v5313, 64
    %v5803 = vpop.permute.xlu0 %5802
    %5804 = vrot.lane.b32.xlu0 %v5315, 64
    %v5805 = vpop.permute.xlu0 %5804
    %5806 = vrot.lane.b32.xlu0 %v5318, 64
    %v5807 = vpop.permute.xlu0 %5806
    %5808 = vrot.lane.b32.xlu0 %v5320, 64
    %v5809 = vpop.permute.xlu0 %5808
    %5810 = vrot.lane.b32.xlu0 %v5323, 64
    %v5811 = vpop.permute.xlu0 %5810
    %5812 = vrot.lane.b32.xlu0 %v5325, 64
    %v5813 = vpop.permute.xlu0 %5812
    %5814 = vrot.lane.b32.xlu0 %v5328, 64
    %v5815 = vpop.permute.xlu0 %5814
    %5816 = vrot.lane.b32.xlu0 %v5330, 64
    %v5817 = vpop.permute.xlu0 %5816
    %5818 = vrot.lane.b32.xlu0 %v5333, 64
    %v5819 = vpop.permute.xlu0 %5818
    %5820 = vrot.lane.b32.xlu0 %v5335, 64
    %v5821 = vpop.permute.xlu0 %5820
    %5822 = vrot.lane.b32.xlu0 %v5338, 64
    %v5823 = vpop.permute.xlu0 %5822
    %5824 = vrot.lane.b32.xlu0 %v5340, 64
    %v5825 = vpop.permute.xlu0 %5824
    %5826 = vrot.lane.b32.xlu0 %v5343, 64
    %v5827 = vpop.permute.xlu0 %5826
    %5828 = vrot.lane.b32.xlu0 %v5345, 64
    %v5829 = vpop.permute.xlu0 %5828
    %5830 = vrot.lane.b32.xlu0 %v5348, 64
    %v5831 = vpop.permute.xlu0 %5830
    %5832 = vrot.lane.b32.xlu0 %v5350, 64
    %v5833 = vpop.permute.xlu0 %5832
    %5834 = vrot.lane.b32.xlu0 %v5353, 64
    %v5835 = vpop.permute.xlu0 %5834
    %5836 = vrot.lane.b32.xlu0 %v5355, 64
    %v5837 = vpop.permute.xlu0 %5836
    %5838 = vrot.lane.b32.xlu0 %v5358, 64
    %v5839 = vpop.permute.xlu0 %5838
    %5840 = vrot.lane.b32.xlu0 %v5360, 64
    %v5841 = vpop.permute.xlu0 %5840
    %5842 = vrot.lane.b32.xlu0 %v5363, 64
    %v5843 = vpop.permute.xlu0 %5842
    %5844 = vrot.lane.b32.xlu0 %v5365, 64
    %v5845 = vpop.permute.xlu0 %5844
    %5846 = vrot.lane.b32.xlu0 %v5368, 64
    %v5847 = vpop.permute.xlu0 %5846
    %5848 = vrot.lane.b32.xlu0 %v5370, 64
    %v5849 = vpop.permute.xlu0 %5848
    %5850 = vrot.lane.b32.xlu0 %v5373, 64
    %v5851 = vpop.permute.xlu0 %5850
    %5852 = vrot.lane.b32.xlu0 %v5375, 64
    %v5853 = vpop.permute.xlu0 %5852
    %5854 = vrot.lane.b32.xlu0 %v5378, 64
    %v5855 = vpop.permute.xlu0 %5854
    %5856 = vrot.lane.b32.xlu0 %v5380, 64
    %v5857 = vpop.permute.xlu0 %5856
    %5858 = vrot.lane.b32.xlu0 %v5383, 64
    %v5859 = vpop.permute.xlu0 %5858
    %5860 = vrot.lane.b32.xlu0 %v5385, 64
    %v5861 = vpop.permute.xlu0 %5860
    %5926 = vrot.lane.b32.xlu0 %v5025, 64
    %v5927 = vpop.permute.xlu0 %5926
    %5928 = vrot.lane.b32.xlu0 %v5026, 64
    %v5929 = vpop.permute.xlu0 %5928
    %5930 = vrot.lane.b32.xlu0 %v5028, 64
    %v5931 = vpop.permute.xlu0 %5930
    %5932 = vrot.lane.b32.xlu0 %v5029, 64
    %v5933 = vpop.permute.xlu0 %5932
    %5934 = vrot.lane.b32.xlu0 %v5031, 64
    %v5935 = vpop.permute.xlu0 %5934
    %5936 = vrot.lane.b32.xlu0 %v5032, 64
    %v5937 = vpop.permute.xlu0 %5936
    %5938 = vrot.lane.b32.xlu0 %v5034, 64
    %v5939 = vpop.permute.xlu0 %5938
    %5940 = vrot.lane.b32.xlu0 %v5035, 64
    %v5941 = vpop.permute.xlu0 %5940
    %5942 = vrot.lane.b32.xlu0 %v5037, 64
    %v5943 = vpop.permute.xlu0 %5942
    %5944 = vrot.lane.b32.xlu0 %v5038, 64
    %v5945 = vpop.permute.xlu0 %5944
    %5946 = vrot.lane.b32.xlu0 %v5040, 64
    %v5947 = vpop.permute.xlu0 %5946
    %5948 = vrot.lane.b32.xlu0 %v5041, 64
    %v5949 = vpop.permute.xlu0 %5948
    %5950 = vrot.lane.b32.xlu0 %v5043, 64
    %v5951 = vpop.permute.xlu0 %5950
    %5952 = vrot.lane.b32.xlu0 %v5044, 64
    %v5953 = vpop.permute.xlu0 %5952
    %5954 = vrot.lane.b32.xlu0 %v5046, 64
    %v5955 = vpop.permute.xlu0 %5954
    %5956 = vrot.lane.b32.xlu0 %v5047, 64
    %v5957 = vpop.permute.xlu0 %5956
    %5958 = vrot.lane.b32.xlu0 %v5049, 64
    %v5959 = vpop.permute.xlu0 %5958
    %5960 = vrot.lane.b32.xlu0 %v5050, 64
    %v5961 = vpop.permute.xlu0 %5960
    %5962 = vrot.lane.b32.xlu0 %v5052, 64
    %v5963 = vpop.permute.xlu0 %5962
    %5964 = vrot.lane.b32.xlu0 %v5053, 64
    %v5965 = vpop.permute.xlu0 %5964
    %5966 = vrot.lane.b32.xlu0 %v5055, 64
    %v5967 = vpop.permute.xlu0 %5966
    %5968 = vrot.lane.b32.xlu0 %v5056, 64
    %v5969 = vpop.permute.xlu0 %5968
    %5970 = vrot.lane.b32.xlu0 %v5058, 64
    %v5971 = vpop.permute.xlu0 %5970
    %5972 = vrot.lane.b32.xlu0 %v5059, 64
    %v5973 = vpop.permute.xlu0 %5972
    %5974 = vrot.lane.b32.xlu0 %v5061, 64
    %v5975 = vpop.permute.xlu0 %5974
    %5976 = vrot.lane.b32.xlu0 %v5062, 64
    %v5977 = vpop.permute.xlu0 %5976
    %5978 = vrot.lane.b32.xlu0 %v5064, 64
    %v5979 = vpop.permute.xlu0 %5978
    %5980 = vrot.lane.b32.xlu0 %v5065, 64
    %v5981 = vpop.permute.xlu0 %5980
    %5982 = vrot.lane.b32.xlu0 %v5067, 64
    %v5983 = vpop.permute.xlu0 %5982
    %5984 = vrot.lane.b32.xlu0 %v5068, 64
    %v5985 = vpop.permute.xlu0 %5984
    %5986 = vrot.lane.b32.xlu0 %v5070, 64
    %v5987 = vpop.permute.xlu0 %5986
    %5988 = vrot.lane.b32.xlu0 %v5071, 64
    %v5989 = vpop.permute.xlu0 %5988
    %5990 = vrot.lane.b32.xlu0 %v5079, 64
    %v5991 = vpop.permute.xlu0 %5990
    %5992 = vrot.lane.b32.xlu0 %v5080, 64
    %v5993 = vpop.permute.xlu0 %5992
    %5994 = vrot.lane.b32.xlu0 %v5082, 64
    %v5995 = vpop.permute.xlu0 %5994
    %5996 = vrot.lane.b32.xlu0 %v5083, 64
    %v5997 = vpop.permute.xlu0 %5996
    %5998 = vrot.lane.b32.xlu0 %v5085, 64
    %v5999 = vpop.permute.xlu0 %5998
    %6000 = vrot.lane.b32.xlu0 %v5086, 64
    %v6001 = vpop.permute.xlu0 %6000
    %6002 = vrot.lane.b32.xlu0 %v5088, 64
    %v6003 = vpop.permute.xlu0 %6002
    %6004 = vrot.lane.b32.xlu0 %v5089, 64
    %v6005 = vpop.permute.xlu0 %6004
    %6006 = vrot.lane.b32.xlu0 %v5091, 64
    %v6007 = vpop.permute.xlu0 %6006
    %6008 = vrot.lane.b32.xlu0 %v5092, 64
    %v6009 = vpop.permute.xlu0 %6008
    %6010 = vrot.lane.b32.xlu0 %v5094, 64
    %v6011 = vpop.permute.xlu0 %6010
    %6012 = vrot.lane.b32.xlu0 %v5095, 64
    %v6013 = vpop.permute.xlu0 %6012
    %6014 = vrot.lane.b32.xlu0 %v5097, 64
    %v6015 = vpop.permute.xlu0 %6014
    %6016 = vrot.lane.b32.xlu0 %v5098, 64
    %v6017 = vpop.permute.xlu0 %6016
    %6018 = vrot.lane.b32.xlu0 %v5100, 64
    %v6019 = vpop.permute.xlu0 %6018
    %6020 = vrot.lane.b32.xlu0 %v5101, 64
    %v6021 = vpop.permute.xlu0 %6020
    %6022 = vrot.lane.b32.xlu0 %v5103, 64
    %v6023 = vpop.permute.xlu0 %6022
    %6024 = vrot.lane.b32.xlu0 %v5104, 64
    %v6025 = vpop.permute.xlu0 %6024
    %6026 = vrot.lane.b32.xlu0 %v5106, 64
    %v6027 = vpop.permute.xlu0 %6026
    %6028 = vrot.lane.b32.xlu0 %v5107, 64
    %v6029 = vpop.permute.xlu0 %6028
    %6030 = vrot.lane.b32.xlu0 %v5109, 64
    %v6031 = vpop.permute.xlu0 %6030
    %6032 = vrot.lane.b32.xlu0 %v5110, 64
    %v6033 = vpop.permute.xlu0 %6032
    %6034 = vrot.lane.b32.xlu0 %v5112, 64
    %v6035 = vpop.permute.xlu0 %6034
    %6036 = vrot.lane.b32.xlu0 %v5113, 64
    %v6037 = vpop.permute.xlu0 %6036
    %6038 = vrot.lane.b32.xlu0 %v5115, 64
    %v6039 = vpop.permute.xlu0 %6038
    %6040 = vrot.lane.b32.xlu0 %v5116, 64
    %v6041 = vpop.permute.xlu0 %6040
    %6042 = vrot.lane.b32.xlu0 %v5118, 64
    %v6043 = vpop.permute.xlu0 %6042
    %6044 = vrot.lane.b32.xlu0 %v5119, 64
    %v6045 = vpop.permute.xlu0 %6044
    %6046 = vrot.lane.b32.xlu0 %v5121, 64
    %v6047 = vpop.permute.xlu0 %6046
    %6048 = vrot.lane.b32.xlu0 %v5122, 64
    %v6049 = vpop.permute.xlu0 %6048
    %6050 = vrot.lane.b32.xlu0 %v5124, 64
    %v6051 = vpop.permute.xlu0 %6050
    %6052 = vrot.lane.b32.xlu0 %v5125, 64
    %v6053 = vpop.permute.xlu0 %6052
    %6118 = vrot.lane.b32.xlu0 %v5393, 64
    %v6119 = vpop.permute.xlu0 %6118
    %6120 = vrot.lane.b32.xlu0 %v5395, 64
    %v6121 = vpop.permute.xlu0 %6120
    %6122 = vrot.lane.b32.xlu0 %v5398, 64
    %v6123 = vpop.permute.xlu0 %6122
    %6124 = vrot.lane.b32.xlu0 %v5400, 64
    %v6125 = vpop.permute.xlu0 %6124
    %6126 = vrot.lane.b32.xlu0 %v5403, 64
    %v6127 = vpop.permute.xlu0 %6126
    %6128 = vrot.lane.b32.xlu0 %v5405, 64
    %v6129 = vpop.permute.xlu0 %6128
    %6130 = vrot.lane.b32.xlu0 %v5408, 64
    %v6131 = vpop.permute.xlu0 %6130
    %6132 = vrot.lane.b32.xlu0 %v5410, 64
    %v6133 = vpop.permute.xlu0 %6132
    %6134 = vrot.lane.b32.xlu0 %v5413, 64
    %v6135 = vpop.permute.xlu0 %6134
    %6136 = vrot.lane.b32.xlu0 %v5415, 64
    %v6137 = vpop.permute.xlu0 %6136
    %6138 = vrot.lane.b32.xlu0 %v5418, 64
    %v6139 = vpop.permute.xlu0 %6138
    %6140 = vrot.lane.b32.xlu0 %v5420, 64
    %v6141 = vpop.permute.xlu0 %6140
    %6142 = vrot.lane.b32.xlu0 %v5423, 64
    %v6143 = vpop.permute.xlu0 %6142
    %6144 = vrot.lane.b32.xlu0 %v5425, 64
    %v6145 = vpop.permute.xlu0 %6144
    %6146 = vrot.lane.b32.xlu0 %v5428, 64
    %v6147 = vpop.permute.xlu0 %6146
    %6148 = vrot.lane.b32.xlu0 %v5430, 64
    %v6149 = vpop.permute.xlu0 %6148
    %6150 = vrot.lane.b32.xlu0 %v5433, 64
    %v6151 = vpop.permute.xlu0 %6150
    %6152 = vrot.lane.b32.xlu0 %v5435, 64
    %v6153 = vpop.permute.xlu0 %6152
    %6154 = vrot.lane.b32.xlu0 %v5438, 64
    %v6155 = vpop.permute.xlu0 %6154
    %6156 = vrot.lane.b32.xlu0 %v5440, 64
    %v6157 = vpop.permute.xlu0 %6156
    %6158 = vrot.lane.b32.xlu0 %v5443, 64
    %v6159 = vpop.permute.xlu0 %6158
    %6160 = vrot.lane.b32.xlu0 %v5445, 64
    %v6161 = vpop.permute.xlu0 %6160
    %6162 = vrot.lane.b32.xlu0 %v5448, 64
    %v6163 = vpop.permute.xlu0 %6162
    %6164 = vrot.lane.b32.xlu0 %v5450, 64
    %v6165 = vpop.permute.xlu0 %6164
    %6166 = vrot.lane.b32.xlu0 %v5453, 64
    %v6167 = vpop.permute.xlu0 %6166
    %6168 = vrot.lane.b32.xlu0 %v5455, 64
    %v6169 = vpop.permute.xlu0 %6168
    %6170 = vrot.lane.b32.xlu0 %v5458, 64
    %v6171 = vpop.permute.xlu0 %6170
    %6172 = vrot.lane.b32.xlu0 %v5460, 64
    %v6173 = vpop.permute.xlu0 %6172
    %6174 = vrot.lane.b32.xlu0 %v5463, 64
    %v6175 = vpop.permute.xlu0 %6174
    %6176 = vrot.lane.b32.xlu0 %v5465, 64
    %v6177 = vpop.permute.xlu0 %6176
    %6178 = vrot.lane.b32.xlu0 %v5692, 64
    %v6179 = vpop.permute.xlu0 %6178
    %6180 = vrot.lane.b32.xlu0 %v5694, 64
    %v6181 = vpop.permute.xlu0 %6180
    %6182 = vrot.lane.b32.xlu0 %v5473, 64
    %v6183 = vpop.permute.xlu0 %6182
    %6184 = vrot.lane.b32.xlu0 %v5475, 64
    %v6185 = vpop.permute.xlu0 %6184
    %6186 = vrot.lane.b32.xlu0 %v5478, 64
    %v6187 = vpop.permute.xlu0 %6186
    %6188 = vrot.lane.b32.xlu0 %v5480, 64
    %v6189 = vpop.permute.xlu0 %6188
    %6190 = vrot.lane.b32.xlu0 %v5483, 64
    %v6191 = vpop.permute.xlu0 %6190
    %6192 = vrot.lane.b32.xlu0 %v5485, 64
    %v6193 = vpop.permute.xlu0 %6192
    %6194 = vrot.lane.b32.xlu0 %v5488, 64
    %v6195 = vpop.permute.xlu0 %6194
    %6196 = vrot.lane.b32.xlu0 %v5490, 64
    %v6197 = vpop.permute.xlu0 %6196
    %6198 = vrot.lane.b32.xlu0 %v5493, 64
    %v6199 = vpop.permute.xlu0 %6198
    %6200 = vrot.lane.b32.xlu0 %v5495, 64
    %v6201 = vpop.permute.xlu0 %6200
    %6202 = vrot.lane.b32.xlu0 %v5498, 64
    %v6203 = vpop.permute.xlu0 %6202
    %6204 = vrot.lane.b32.xlu0 %v5500, 64
    %v6205 = vpop.permute.xlu0 %6204
    %6206 = vrot.lane.b32.xlu0 %v5503, 64
    %v6207 = vpop.permute.xlu0 %6206
    %6208 = vrot.lane.b32.xlu0 %v5505, 64
    %v6209 = vpop.permute.xlu0 %6208
    %6210 = vrot.lane.b32.xlu0 %v5508, 64
    %v6211 = vpop.permute.xlu0 %6210
    %6212 = vrot.lane.b32.xlu0 %v5510, 64
    %v6213 = vpop.permute.xlu0 %6212
    %6214 = vrot.lane.b32.xlu0 %v5513, 64
    %v6215 = vpop.permute.xlu0 %6214
    %6216 = vrot.lane.b32.xlu0 %v5515, 64
    %v6217 = vpop.permute.xlu0 %6216
    %6218 = vrot.lane.b32.xlu0 %v5518, 64
    %v6219 = vpop.permute.xlu0 %6218
    %6220 = vrot.lane.b32.xlu0 %v5520, 64
    %v6221 = vpop.permute.xlu0 %6220
    %6222 = vrot.lane.b32.xlu0 %v5523, 64
    %v6223 = vpop.permute.xlu0 %6222
    %6224 = vrot.lane.b32.xlu0 %v5525, 64
    %v6225 = vpop.permute.xlu0 %6224
    %6226 = vrot.lane.b32.xlu0 %v5528, 64
    %v6227 = vpop.permute.xlu0 %6226
    %6228 = vrot.lane.b32.xlu0 %v5530, 64
    %v6229 = vpop.permute.xlu0 %6228
    %6230 = vrot.lane.b32.xlu0 %v5533, 64
    %v6231 = vpop.permute.xlu0 %6230
    %6232 = vrot.lane.b32.xlu0 %v5535, 64
    %v6233 = vpop.permute.xlu0 %6232
    %6234 = vrot.lane.b32.xlu0 %v5538, 64
    %v6235 = vpop.permute.xlu0 %6234
    %6236 = vrot.lane.b32.xlu0 %v5540, 64
    %v6237 = vpop.permute.xlu0 %6236
    %6238 = vrot.lane.b32.xlu0 %v5543, 64
    %v6239 = vpop.permute.xlu0 %6238
    %6240 = vrot.lane.b32.xlu0 %v5545, 64
    %v6241 = vpop.permute.xlu0 %6240
    %6242 = vrot.lane.b32.xlu0 %v5697, 64
    %v6243 = vpop.permute.xlu0 %6242
    %6244 = vrot.lane.b32.xlu0 %v5699, 64
    %v6245 = vpop.permute.xlu0 %6244
    %6310 = vrot.lane.b32.xlu0 %v5618, 64
    %v6311 = vpop.permute.xlu0 %6310
    %6312 = vrot.lane.b32.xlu0 %v5620, 64
    %v6313 = vpop.permute.xlu0 %6312
    %6314 = vrot.lane.b32.xlu0 %v5708, 64
    %v6315 = vpop.permute.xlu0 %6314
    %6316 = vrot.lane.b32.xlu0 %v5710, 64
    %v6317 = vpop.permute.xlu0 %6316
    %6318 = vrot.lane.b32.xlu0 %v5623, 64
    %v6319 = vpop.permute.xlu0 %6318
    %6320 = vrot.lane.b32.xlu0 %v5625, 64
    %v6321 = vpop.permute.xlu0 %6320
    %6322 = vrot.lane.b32.xlu0 %v5713, 64
    %v6323 = vpop.permute.xlu0 %6322
    %6324 = vrot.lane.b32.xlu0 %v5715, 64
    %v6325 = vpop.permute.xlu0 %6324
    %v6334 = vsel %vm40, %v5022, %v5735
    %v6335 = vsel %vm40, %v5023, %v5737
    %v6336 = vsel %vm40, %v5025, %v5739
    %v6337 = vsel %vm40, %v5026, %v5741
    %v6338 = vsel %vm40, %v5028, %v5743
    %v6339 = vsel %vm40, %v5029, %v5745
    %v6340 = vsel %vm40, %v5031, %v5747
    %v6341 = vsel %vm40, %v5032, %v5749
    %v6342 = vsel %vm40, %v5034, %v5751
    %v6343 = vsel %vm40, %v5035, %v5753
    %v6344 = vsel %vm40, %v5037, %v5755
    %v6345 = vsel %vm40, %v5038, %v5757
    %v6346 = vsel %vm40, %v5040, %v5759
    %v6347 = vsel %vm40, %v5041, %v5761
    %v6348 = vsel %vm40, %v5043, %v5763
    %v6349 = vsel %vm40, %v5044, %v5765
    %v6350 = vsel %vm40, %v5046, %v5767
    %v6351 = vsel %vm40, %v5047, %v5769
    %v6352 = vsel %vm40, %v5049, %v5771
    %v6353 = vsel %vm40, %v5050, %v5773
    %v6354 = vsel %vm40, %v5052, %v5775
    %v6355 = vsel %vm40, %v5053, %v5777
    %v6356 = vsel %vm40, %v5055, %v5779
    %v6357 = vsel %vm40, %v5056, %v5781
    %v6358 = vsel %vm40, %v5058, %v5783
    %v6359 = vsel %vm40, %v5059, %v5785
    %v6360 = vsel %vm40, %v5061, %v5787
    %v6361 = vsel %vm40, %v5062, %v5789
    %v6362 = vsel %vm40, %v5064, %v5791
    %v6363 = vsel %vm40, %v5065, %v5793
    %v6364 = vsel %vm40, %v5067, %v5795
    %v6365 = vsel %vm40, %v5068, %v5797
    %v6366 = vsel %vm40, %v5076, %v5799
    %v6367 = vsel %vm40, %v5077, %v5801
    %v6368 = vsel %vm40, %v5079, %v5803
    %v6369 = vsel %vm40, %v5080, %v5805
    %v6370 = vsel %vm40, %v5082, %v5807
    %v6371 = vsel %vm40, %v5083, %v5809
    %v6372 = vsel %vm40, %v5085, %v5811
    %v6373 = vsel %vm40, %v5086, %v5813
    %v6374 = vsel %vm40, %v5088, %v5815
    %v6375 = vsel %vm40, %v5089, %v5817
    %v6376 = vsel %vm40, %v5091, %v5819
    %v6377 = vsel %vm40, %v5092, %v5821
    %v6378 = vsel %vm40, %v5094, %v5823
    %v6379 = vsel %vm40, %v5095, %v5825
    %v6380 = vsel %vm40, %v5097, %v5827
    %v6381 = vsel %vm40, %v5098, %v5829
    %v6382 = vsel %vm40, %v5100, %v5831
    %v6383 = vsel %vm40, %v5101, %v5833
    %v6384 = vsel %vm40, %v5103, %v5835
    %v6385 = vsel %vm40, %v5104, %v5837
    %v6386 = vsel %vm40, %v5106, %v5839
    %v6387 = vsel %vm40, %v5107, %v5841
    %v6388 = vsel %vm40, %v5109, %v5843
    %v6389 = vsel %vm40, %v5110, %v5845
    %v6390 = vsel %vm40, %v5112, %v5847
    %v6391 = vsel %vm40, %v5113, %v5849
    %v6392 = vsel %vm40, %v5115, %v5851
    %v6393 = vsel %vm40, %v5116, %v5853
    %v6394 = vsel %vm40, %v5118, %v5855
    %v6395 = vsel %vm40, %v5119, %v5857
    %v6396 = vsel %vm40, %v5121, %v5859
    %v6397 = vsel %vm40, %v5122, %v5861
    %v6398 = vsel %vm40, %v5388, %v5927
    %v6399 = vsel %vm40, %v5390, %v5929
    %v6400 = vsel %vm40, %v5393, %v5931
    %v6401 = vsel %vm40, %v5395, %v5933
    %v6402 = vsel %vm40, %v5398, %v5935
    %v6403 = vsel %vm40, %v5400, %v5937
    %v6404 = vsel %vm40, %v5403, %v5939
    %v6405 = vsel %vm40, %v5405, %v5941
    %v6406 = vsel %vm40, %v5408, %v5943
    %v6407 = vsel %vm40, %v5410, %v5945
    %v6408 = vsel %vm40, %v5413, %v5947
    %v6409 = vsel %vm40, %v5415, %v5949
    %v6410 = vsel %vm40, %v5418, %v5951
    %v6411 = vsel %vm40, %v5420, %v5953
    %v6412 = vsel %vm40, %v5423, %v5955
    %v6413 = vsel %vm40, %v5425, %v5957
    %v6414 = vsel %vm40, %v5428, %v5959
    %v6415 = vsel %vm40, %v5430, %v5961
    %v6416 = vsel %vm40, %v5433, %v5963
    %v6417 = vsel %vm40, %v5435, %v5965
    %v6418 = vsel %vm40, %v5438, %v5967
    %v6419 = vsel %vm40, %v5440, %v5969
    %v6420 = vsel %vm40, %v5443, %v5971
    %v6421 = vsel %vm40, %v5445, %v5973
    %v6422 = vsel %vm40, %v5448, %v5975
    %v6423 = vsel %vm40, %v5450, %v5977
    %v6424 = vsel %vm40, %v5453, %v5979
    %v6425 = vsel %vm40, %v5455, %v5981
    %v6426 = vsel %vm40, %v5458, %v5983
    %v6427 = vsel %vm40, %v5460, %v5985
    %v6428 = vsel %vm40, %v5463, %v5987
    %v6429 = vsel %vm40, %v5465, %v5989
    %v6430 = vsel %vm40, %v5468, %v5991
    %v6431 = vsel %vm40, %v5470, %v5993
    %v6432 = vsel %vm40, %v5473, %v5995
    %v6433 = vsel %vm40, %v5475, %v5997
    %v6434 = vsel %vm40, %v5478, %v5999
    %v6435 = vsel %vm40, %v5480, %v6001
    %v6436 = vsel %vm40, %v5483, %v6003
    %v6437 = vsel %vm40, %v5485, %v6005
    %v6438 = vsel %vm40, %v5488, %v6007
    %v6439 = vsel %vm40, %v5490, %v6009
    %v6440 = vsel %vm40, %v5493, %v6011
    %v6441 = vsel %vm40, %v5495, %v6013
    %v6442 = vsel %vm40, %v5498, %v6015
    %v6443 = vsel %vm40, %v5500, %v6017
    %v6444 = vsel %vm40, %v5503, %v6019
    %v6445 = vsel %vm40, %v5505, %v6021
    %v6446 = vsel %vm40, %v5508, %v6023
    %v6447 = vsel %vm40, %v5510, %v6025
    %v6448 = vsel %vm40, %v5513, %v6027
    %v6449 = vsel %vm40, %v5515, %v6029
    %v6450 = vsel %vm40, %v5518, %v6031
    %v6451 = vsel %vm40, %v5520, %v6033
    %v6452 = vsel %vm40, %v5523, %v6035
    %v6453 = vsel %vm40, %v5525, %v6037
    %v6454 = vsel %vm40, %v5528, %v6039
    %v6455 = vsel %vm40, %v5530, %v6041
    %v6456 = vsel %vm40, %v5533, %v6043
    %v6457 = vsel %vm40, %v5535, %v6045
    %v6458 = vsel %vm40, %v5538, %v6047
    %v6459 = vsel %vm40, %v5540, %v6049
    %v6460 = vsel %vm40, %v5543, %v6051
    %v6461 = vsel %vm40, %v5545, %v6053
    %v6462 = vsel %vm40, %v5233, %v6119
    %v6463 = vsel %vm40, %v5235, %v6121
    %v6464 = vsel %vm40, %v5238, %v6123
    %v6465 = vsel %vm40, %v5240, %v6125
    %v6466 = vsel %vm40, %v5243, %v6127
    %v6467 = vsel %vm40, %v5245, %v6129
    %v6468 = vsel %vm40, %v5248, %v6131
    %v6469 = vsel %vm40, %v5250, %v6133
    %v6470 = vsel %vm40, %v5253, %v6135
    %v6471 = vsel %vm40, %v5255, %v6137
    %v6472 = vsel %vm40, %v5258, %v6139
    %v6473 = vsel %vm40, %v5260, %v6141
    %v6474 = vsel %vm40, %v5263, %v6143
    %v6475 = vsel %vm40, %v5265, %v6145
    %v6476 = vsel %vm40, %v5268, %v6147
    %v6477 = vsel %vm40, %v5270, %v6149
    %v6478 = vsel %vm40, %v5273, %v6151
    %v6479 = vsel %vm40, %v5275, %v6153
    %v6480 = vsel %vm40, %v5278, %v6155
    %v6481 = vsel %vm40, %v5280, %v6157
    %v6482 = vsel %vm40, %v5283, %v6159
    %v6483 = vsel %vm40, %v5285, %v6161
    %v6484 = vsel %vm40, %v5288, %v6163
    %v6485 = vsel %vm40, %v5290, %v6165
    %v6486 = vsel %vm40, %v5293, %v6167
    %v6487 = vsel %vm40, %v5295, %v6169
    %v6488 = vsel %vm40, %v5298, %v6171
    %v6489 = vsel %vm40, %v5300, %v6173
    %v6490 = vsel %vm40, %v5303, %v6175
    %v6491 = vsel %vm40, %v5305, %v6177
    %v6492 = vsel %vm40, %v5618, %v6179
    %v6493 = vsel %vm40, %v5620, %v6181
    %v6494 = vsel %vm40, %v5313, %v6183
    %v6495 = vsel %vm40, %v5315, %v6185
    %v6496 = vsel %vm40, %v5318, %v6187
    %v6497 = vsel %vm40, %v5320, %v6189
    %v6498 = vsel %vm40, %v5323, %v6191
    %v6499 = vsel %vm40, %v5325, %v6193
    %v6500 = vsel %vm40, %v5328, %v6195
    %v6501 = vsel %vm40, %v5330, %v6197
    %v6502 = vsel %vm40, %v5333, %v6199
    %v6503 = vsel %vm40, %v5335, %v6201
    %v6504 = vsel %vm40, %v5338, %v6203
    %v6505 = vsel %vm40, %v5340, %v6205
    %v6506 = vsel %vm40, %v5343, %v6207
    %v6507 = vsel %vm40, %v5345, %v6209
    %v6508 = vsel %vm40, %v5348, %v6211
    %v6509 = vsel %vm40, %v5350, %v6213
    %v6510 = vsel %vm40, %v5353, %v6215
    %v6511 = vsel %vm40, %v5355, %v6217
    %v6512 = vsel %vm40, %v5358, %v6219
    %v6513 = vsel %vm40, %v5360, %v6221
    %v6514 = vsel %vm40, %v5363, %v6223
    %v6515 = vsel %vm40, %v5365, %v6225
    %v6516 = vsel %vm40, %v5368, %v6227
    %v6517 = vsel %vm40, %v5370, %v6229
    %v6518 = vsel %vm40, %v5373, %v6231
    %v6519 = vsel %vm40, %v5375, %v6233
    %v6520 = vsel %vm40, %v5378, %v6235
    %v6521 = vsel %vm40, %v5380, %v6237
    %v6522 = vsel %vm40, %v5383, %v6239
    %v6523 = vsel %vm40, %v5385, %v6241
    %v6524 = vsel %vm40, %v5623, %v6243
    %v6525 = vsel %vm40, %v5625, %v6245
    %v6526 = vsel %vm40, %v5070, %v6311
    %v6527 = vsel %vm40, %v5071, %v6313
    %v6528 = vsel %vm40, %v5073, %v6315
    %v6529 = vsel %vm40, %v5074, %v6317
    %v6530 = vsel %vm40, %v5124, %v6319
    %v6531 = vsel %vm40, %v5125, %v6321
    %v6532 = vsel %vm40, %v5127, %v6323
    %v6533 = vsel %vm40, %v5128, %v6325
    %v6534 = vpack.c.bf16 %v6335, %v6334
    %v6535 = vpack.c.bf16 %v6399, %v6398
    %v6536 = vpack.c.bf16 %v6463, %v6462
    %v6537 = vpack.c.bf16 %v6339, %v6338
    %v6538 = vpack.c.bf16 %v5400, %v5398
    %v6539 = vpack.c.bf16 %v6337, %v6336
    %v6540 = vpack.c.bf16 %v6401, %v6400
    %v6541 = vpack.c.bf16 %v6465, %v6464
    %v6542 = vpack.c.bf16 %v6341, %v6340
    %v6543 = vpack.c.bf16 %v5405, %v5403
    %v6544 = vpack.c.bf16 %v6403, %v6402
    %v6545 = vpack.c.bf16 %v6467, %v6466
    %v6546 = vpack.c.bf16 %v6343, %v6342
    %v6547 = vpack.c.bf16 %v5410, %v5408
    %v6548 = vpack.c.bf16 %v6405, %v6404
    %v6549 = vpack.c.bf16 %v6469, %v6468
    %v6550 = vpack.c.bf16 %v6345, %v6344
    %v6551 = vpack.c.bf16 %v5415, %v5413
    %v6552 = vpack.c.bf16 %v6407, %v6406
    %v6553 = vpack.c.bf16 %v6471, %v6470
    %v6554 = vpack.c.bf16 %v6347, %v6346
    %v6555 = vpack.c.bf16 %v5420, %v5418
    %v6556 = vpack.c.bf16 %v6409, %v6408
    %v6557 = vpack.c.bf16 %v6473, %v6472
    %v6558 = vpack.c.bf16 %v6349, %v6348
    %v6559 = vpack.c.bf16 %v5425, %v5423
    %v6560 = vpack.c.bf16 %v6411, %v6410
    %v6561 = vpack.c.bf16 %v6475, %v6474
    %v6562 = vpack.c.bf16 %v6351, %v6350
    %v6563 = vpack.c.bf16 %v5430, %v5428
    %v6564 = vpack.c.bf16 %v6413, %v6412
    %v6565 = vpack.c.bf16 %v6477, %v6476
    %v6566 = vpack.c.bf16 %v6353, %v6352
    %v6567 = vpack.c.bf16 %v5435, %v5433
    %v6568 = vpack.c.bf16 %v6415, %v6414
    %v6569 = vpack.c.bf16 %v6479, %v6478
    %v6570 = vpack.c.bf16 %v6355, %v6354
    %v6571 = vpack.c.bf16 %v5440, %v5438
    %v6572 = vpack.c.bf16 %v6417, %v6416
    %v6573 = vpack.c.bf16 %v6481, %v6480
    %v6574 = vpack.c.bf16 %v6357, %v6356
    %v6575 = vpack.c.bf16 %v5445, %v5443
    %v6576 = vpack.c.bf16 %v6419, %v6418
    %v6577 = vpack.c.bf16 %v6483, %v6482
    %v6578 = vpack.c.bf16 %v6359, %v6358
    %v6579 = vpack.c.bf16 %v5450, %v5448
    %v6580 = vpack.c.bf16 %v6421, %v6420
    %v6581 = vpack.c.bf16 %v6485, %v6484
    %v6582 = vpack.c.bf16 %v6361, %v6360
    %v6583 = vpack.c.bf16 %v5455, %v5453
    %v6584 = vpack.c.bf16 %v6423, %v6422
    %v6585 = vpack.c.bf16 %v6487, %v6486
    %v6586 = vpack.c.bf16 %v6363, %v6362
    %v6587 = vpack.c.bf16 %v5460, %v5458
    %v6588 = vpack.c.bf16 %v6425, %v6424
    %v6589 = vpack.c.bf16 %v6489, %v6488
    %v6590 = vpack.c.bf16 %v6365, %v6364
    %v6591 = vpack.c.bf16 %v5465, %v5463
    %v6592 = vpack.c.bf16 %v6427, %v6426
    %v6593 = vpack.c.bf16 %v6491, %v6490
    %v6594 = vpack.c.bf16 %v6527, %v6526
    %v6595 = vpack.c.bf16 %v5694, %v5692
    %v6596 = vpack.c.bf16 %v6429, %v6428
    %v6597 = vpack.c.bf16 %v6493, %v6492
    %v6598 = vpack.c.bf16 %v6529, %v6528
    %v6599 = vpack.c.bf16 %v5720, %v5718
    %v6600 = vpack.c.bf16 %v6367, %v6366
    %v6601 = vpack.c.bf16 %v6431, %v6430
    %v6602 = vpack.c.bf16 %v6495, %v6494
    %v6603 = vpack.c.bf16 %v6371, %v6370
    %v6604 = vpack.c.bf16 %v5480, %v5478
    %v6605 = vpack.c.bf16 %v6369, %v6368
    %v6606 = vpack.c.bf16 %v6433, %v6432
    %v6607 = vpack.c.bf16 %v6497, %v6496
    %v6608 = vpack.c.bf16 %v6373, %v6372
    %v6609 = vpack.c.bf16 %v5485, %v5483
    %v6610 = vpack.c.bf16 %v6435, %v6434
    %v6611 = vpack.c.bf16 %v6499, %v6498
    %v6612 = vpack.c.bf16 %v6375, %v6374
    %v6613 = vpack.c.bf16 %v5490, %v5488
    %v6614 = vpack.c.bf16 %v6437, %v6436
    %v6615 = vpack.c.bf16 %v6501, %v6500
    %v6616 = vpack.c.bf16 %v6377, %v6376
    %v6617 = vpack.c.bf16 %v5495, %v5493
    %v6618 = vpack.c.bf16 %v6439, %v6438
    %v6619 = vpack.c.bf16 %v6503, %v6502
    %v6620 = vpack.c.bf16 %v6379, %v6378
    %v6621 = vpack.c.bf16 %v5500, %v5498
    %v6622 = vpack.c.bf16 %v6441, %v6440
    %v6623 = vpack.c.bf16 %v6505, %v6504
    %v6624 = vpack.c.bf16 %v6381, %v6380
    %v6625 = vpack.c.bf16 %v5505, %v5503
    %v6626 = vpack.c.bf16 %v6443, %v6442
    %v6627 = vpack.c.bf16 %v6507, %v6506
    %v6628 = vpack.c.bf16 %v6383, %v6382
    %v6629 = vpack.c.bf16 %v5510, %v5508
    %v6630 = vpack.c.bf16 %v6445, %v6444
    %v6631 = vpack.c.bf16 %v6509, %v6508
    %v6632 = vpack.c.bf16 %v6385, %v6384
    %v6633 = vpack.c.bf16 %v5515, %v5513
    %v6634 = vpack.c.bf16 %v6447, %v6446
    %v6635 = vpack.c.bf16 %v6511, %v6510
    %v6636 = vpack.c.bf16 %v6387, %v6386
    %v6637 = vpack.c.bf16 %v5520, %v5518
    %v6638 = vpack.c.bf16 %v6449, %v6448
    %v6639 = vpack.c.bf16 %v6513, %v6512
    %v6640 = vpack.c.bf16 %v6389, %v6388
    %v6641 = vpack.c.bf16 %v5525, %v5523
    %v6642 = vpack.c.bf16 %v6451, %v6450
    %v6643 = vpack.c.bf16 %v6515, %v6514
    %v6644 = vpack.c.bf16 %v6391, %v6390
    %v6645 = vpack.c.bf16 %v5530, %v5528
    %v6646 = vpack.c.bf16 %v6453, %v6452
    %v6647 = vpack.c.bf16 %v6517, %v6516
    %v6648 = vpack.c.bf16 %v6393, %v6392
    %v6649 = vpack.c.bf16 %v5535, %v5533
    %v6650 = vpack.c.bf16 %v6455, %v6454
    %v6651 = vpack.c.bf16 %v6519, %v6518
    %v6652 = vpack.c.bf16 %v6395, %v6394
    %v6653 = vpack.c.bf16 %v5540, %v5538
    %v6654 = vpack.c.bf16 %v6457, %v6456
    %v6655 = vpack.c.bf16 %v6521, %v6520
    %v6656 = vpack.c.bf16 %v6397, %v6396
    %v6657 = vpack.c.bf16 %v5545, %v5543
    %v6658 = vpack.c.bf16 %v6459, %v6458
    %v6659 = vpack.c.bf16 %v6523, %v6522
    %v6660 = vpack.c.bf16 %v6531, %v6530
    %v6661 = vpack.c.bf16 %v5699, %v5697
    %v6662 = vpack.c.bf16 %v6461, %v6460
    %v6663 = vpack.c.bf16 %v6525, %v6524
    %v6664 = vpack.c.bf16 %v6533, %v6532
    %v6665 = vpack.c.bf16 %v5725, %v5723
    %v6666 = vld [vmem:[%s9] sm:$0xf]
    %v6667 = vld [vmem:[%s9 + $0x4] sm:$0xf]
    %v6668 = vld [vmem:[%s9 + $0x8] sm:$0xf]
    %v6669 = vld [vmem:[%s9 + $0xc] sm:$0xf]
    %v6670 = vld [vmem:[%s9 + $0x10] sm:$0xf]
    %v6671 = vld [vmem:[%s9 + $0x14] sm:$0xf]
    %v6672 = vld [vmem:[%s9 + $0x18] sm:$0xf]
    %v6673 = vld [vmem:[%s9 + $0x1c] sm:$0xf]
    %v6674 = vld [vmem:[%s9 + $0x20] sm:$0xf]
    %v6675 = vld [vmem:[%s9 + $0x24] sm:$0xf]
    %v6676 = vld [vmem:[%s9 + $0x28] sm:$0xf]
    %v6677 = vld [vmem:[%s9 + $0x2c] sm:$0xf]
    %v6678 = vld [vmem:[%s9 + $0x30] sm:$0xf]
    %v6679 = vld [vmem:[%s9 + $0x34] sm:$0xf]
    %v6680 = vld [vmem:[%s9 + $0x38] sm:$0xf]
    %v6681 = vld [vmem:[%s9 + $0x3c] sm:$0xf]
    %v6682 = vld [vmem:[%s9 + $0x40] sm:$0xf]
    %v6683 = vld [vmem:[%s9 + $0x44] sm:$0xf]
    %v6684 = vld [vmem:[%s9 + $0x48] sm:$0xf]
    %v6685 = vld [vmem:[%s9 + $0x4c] sm:$0xf]
    %v6686 = vld [vmem:[%s9 + $0x50] sm:$0xf]
    %v6687 = vld [vmem:[%s9 + $0x54] sm:$0xf]
    %v6688 = vld [vmem:[%s9 + $0x58] sm:$0xf]
    %v6689 = vld [vmem:[%s9 + $0x5c] sm:$0xf]
    %v6690 = vld [vmem:[%s9 + $0x60] sm:$0xf]
    %v6691 = vld [vmem:[%s9 + $0x64] sm:$0xf]
    %v6692 = vld [vmem:[%s9 + $0x68] sm:$0xf]
    %v6693 = vld [vmem:[%s9 + $0x6c] sm:$0xf]
    %v6694 = vld [vmem:[%s9 + $0x70] sm:$0xf]
    %v6695 = vld [vmem:[%s9 + $0x74] sm:$0xf]
    %v6696 = vld [vmem:[%s9 + $0x78] sm:$0xf]
    %v6697 = vld [vmem:[%s9 + $0x7c] sm:$0xf]
    %v6698 = vld [vmem:[%s9 + $0x80] sm:$0xf]
    %v6699 = vld [vmem:[%s9 + $0x84] sm:$0xf]
    %v6700 = vld [vmem:[%s9 + $0x88] sm:$0xf]
    %v6701 = vld [vmem:[%s9 + $0x8c] sm:$0xf]
    %v6702 = vld [vmem:[%s9 + $0x90] sm:$0xf]
    %v6703 = vld [vmem:[%s9 + $0x94] sm:$0xf]
    %v6704 = vld [vmem:[%s9 + $0x98] sm:$0xf]
    %v6705 = vld [vmem:[%s9 + $0x9c] sm:$0xf]
    %v6706 = vld [vmem:[%s9 + $0xa0] sm:$0xf]
    %v6707 = vld [vmem:[%s9 + $0xa4] sm:$0xf]
    %v6708 = vld [vmem:[%s9 + $0xa8] sm:$0xf]
    %v6709 = vld [vmem:[%s9 + $0xac] sm:$0xf]
    %v6710 = vld [vmem:[%s9 + $0xb0] sm:$0xf]
    %v6711 = vld [vmem:[%s9 + $0xb4] sm:$0xf]
    %v6712 = vld [vmem:[%s9 + $0xb8] sm:$0xf]
    %v6713 = vld [vmem:[%s9 + $0xbc] sm:$0xf]
    %v6714 = vld [vmem:[%s9 + $0xc0] sm:$0xf]
    %v6715 = vld [vmem:[%s9 + $0xc4] sm:$0xf]
    %v6716 = vld [vmem:[%s9 + $0xc8] sm:$0xf]
    %v6717 = vld [vmem:[%s9 + $0xcc] sm:$0xf]
    %v6718 = vld [vmem:[%s9 + $0xd0] sm:$0xf]
    %v6719 = vld [vmem:[%s9 + $0xd4] sm:$0xf]
    %v6720 = vld [vmem:[%s9 + $0xd8] sm:$0xf]
    %v6721 = vld [vmem:[%s9 + $0xdc] sm:$0xf]
    %v6722 = vld [vmem:[%s9 + $0xe0] sm:$0xf]
    %v6723 = vld [vmem:[%s9 + $0xe4] sm:$0xf]
    %v6724 = vld [vmem:[%s9 + $0xe8] sm:$0xf]
    %v6725 = vld [vmem:[%s9 + $0xec] sm:$0xf]
    %v6726 = vld [vmem:[%s9 + $0xf0] sm:$0xf]
    %v6727 = vld [vmem:[%s9 + $0xf4] sm:$0xf]
    %v6728 = vld [vmem:[%s9 + $0xf8] sm:$0xf]
    %v6729 = vld [vmem:[%s9 + $0xfc] sm:$0xf]
    %v6730 = vld [vmem:[%s9 + $0x100] sm:$0xf]
    %v6731 = vld [vmem:[%s9 + $0x104] sm:$0xf]
    %v6732 = vld [vmem:[%s9 + $0x108] sm:$0xf]
    %v6733 = vld [vmem:[%s9 + $0x10c] sm:$0xf]
    %v6734 = vld [vmem:[%s9 + $0x110] sm:$0xf]
    %v6735 = vld [vmem:[%s9 + $0x114] sm:$0xf]
    %v6736 = vld [vmem:[%s9 + $0x118] sm:$0xf]
    %v6737 = vld [vmem:[%s9 + $0x11c] sm:$0xf]
    %v6738 = vld [vmem:[%s10] sm:$0x1]
    %v6740 = vperm.slane %v6738, 0
    %v6814 = vunpack.c.l.b16 %v6666
    %v6815 = vunpack.c.l.b16 %v6667
    %v6816 = vunpack.c.l.b16 %v6668
    %v6817 = vunpack.c.l.b16 %v6669
    %v6818 = vunpack.c.l.b16 %v6670
    %v6819 = vunpack.c.l.b16 %v6671
    %v6820 = vunpack.c.l.b16 %v6672
    %v6821 = vunpack.c.l.b16 %v6673
    %v6822 = vunpack.c.l.b16 %v6674
    %v6823 = vunpack.c.l.b16 %v6675
    %v6824 = vunpack.c.l.b16 %v6676
    %v6825 = vunpack.c.l.b16 %v6677
    %v6826 = vunpack.c.l.b16 %v6678
    %v6827 = vunpack.c.l.b16 %v6679
    %v6828 = vunpack.c.l.b16 %v6680
    %v6829 = vunpack.c.l.b16 %v6681
    %v6830 = vunpack.c.l.b16 %v6682
    %v6831 = vunpack.c.l.b16 %v6683
    %v6832 = vunpack.c.l.b16 %v6684
    %v6833 = vunpack.c.l.b16 %v6685
    %v6834 = vunpack.c.l.b16 %v6686
    %v6835 = vunpack.c.l.b16 %v6687
    %v6836 = vunpack.c.l.b16 %v6688
    %v6837 = vunpack.c.l.b16 %v6689
    %v6838 = vunpack.c.l.b16 %v6690
    %v6839 = vunpack.c.l.b16 %v6691
    %v6840 = vunpack.c.l.b16 %v6692
    %v6841 = vunpack.c.l.b16 %v6693
    %v6842 = vunpack.c.l.b16 %v6694
    %v6843 = vunpack.c.l.b16 %v6695
    %v6844 = vunpack.c.l.b16 %v6696
    %v6845 = vunpack.c.l.b16 %v6697
    %v6846 = vunpack.c.l.b16 %v6698
    %v6847 = vunpack.c.l.b16 %v6699
    %v6848 = vunpack.c.l.b16 %v6700
    %v6849 = vunpack.c.l.b16 %v6701
    %v6850 = vunpack.c.l.b16 %v6702
    %v6851 = vunpack.c.l.b16 %v6703
    %v6852 = vunpack.c.l.b16 %v6704
    %v6853 = vunpack.c.l.b16 %v6705
    %v6854 = vunpack.c.l.b16 %v6706
    %v6855 = vunpack.c.l.b16 %v6707
    %v6856 = vunpack.c.l.b16 %v6708
    %v6857 = vunpack.c.l.b16 %v6709
    %v6858 = vunpack.c.l.b16 %v6710
    %v6859 = vunpack.c.l.b16 %v6711
    %v6860 = vunpack.c.l.b16 %v6712
    %v6861 = vunpack.c.l.b16 %v6713
    %v6862 = vunpack.c.l.b16 %v6714
    %v6863 = vunpack.c.l.b16 %v6715
    %v6864 = vunpack.c.l.b16 %v6716
    %v6865 = vunpack.c.l.b16 %v6717
    %v6866 = vunpack.c.l.b16 %v6718
    %v6867 = vunpack.c.l.b16 %v6719
    %v6868 = vunpack.c.l.b16 %v6720
    %v6869 = vunpack.c.l.b16 %v6721
    %v6870 = vunpack.c.l.b16 %v6722
    %v6871 = vunpack.c.l.b16 %v6723
    %v6872 = vunpack.c.l.b16 %v6724
    %v6873 = vunpack.c.l.b16 %v6725
    %v6874 = vunpack.c.l.b16 %v6726
    %v6875 = vunpack.c.l.b16 %v6727
    %v6876 = vunpack.c.l.b16 %v6728
    %v6877 = vunpack.c.l.b16 %v6729
    %v6878 = vunpack.c.l.b16 %v6730
    %v6879 = vunpack.c.l.b16 %v6731
    %v6880 = vunpack.c.l.b16 %v6732
    %v6881 = vunpack.c.l.b16 %v6733
    %v6882 = vunpack.c.l.b16 %v6734
    %v6883 = vunpack.c.l.b16 %v6735
    %v6884 = vunpack.c.l.b16 %v6736
    %v6885 = vunpack.c.l.b16 %v6737
    %v6886 = vpack.c.b16 %v6815, %v6814
    %v6887 = vpack.c.b16 %v6817, %v6816
    %v6888 = vpack.c.b16 %v6819, %v6818
    %v6889 = vpack.c.b16 %v6821, %v6820
    %v6890 = vpack.c.b16 %v6823, %v6822
    %v6891 = vpack.c.b16 %v6825, %v6824
    %v6892 = vpack.c.b16 %v6827, %v6826
    %v6893 = vpack.c.b16 %v6829, %v6828
    %v6894 = vpack.c.b16 %v6831, %v6830
    %v6895 = vpack.c.b16 %v6833, %v6832
    %v6896 = vpack.c.b16 %v6835, %v6834
    %v6897 = vpack.c.b16 %v6837, %v6836
    %v6898 = vpack.c.b16 %v6839, %v6838
    %v6899 = vpack.c.b16 %v6841, %v6840
    %v6900 = vpack.c.b16 %v6843, %v6842
    %v6901 = vpack.c.b16 %v6845, %v6844
    %v6902 = vpack.c.b16 %v6847, %v6846
    %v6903 = vpack.c.b16 %v6849, %v6848
    %v6904 = vpack.c.b16 %v6851, %v6850
    %v6905 = vpack.c.b16 %v6853, %v6852
    %v6906 = vpack.c.b16 %v6855, %v6854
    %v6907 = vpack.c.b16 %v6857, %v6856
    %v6908 = vpack.c.b16 %v6859, %v6858
    %v6909 = vpack.c.b16 %v6861, %v6860
    %v6910 = vpack.c.b16 %v6863, %v6862
    %v6911 = vpack.c.b16 %v6865, %v6864
    %v6912 = vpack.c.b16 %v6867, %v6866
    %v6913 = vpack.c.b16 %v6869, %v6868
    %v6914 = vpack.c.b16 %v6871, %v6870
    %v6915 = vpack.c.b16 %v6873, %v6872
    %v6916 = vpack.c.b16 %v6875, %v6874
    %v6917 = vpack.c.b16 %v6877, %v6876
    %v6918 = vpack.c.b16 %v6879, %v6878
    %v6919 = vpack.c.b16 %v6881, %v6880
    %v6920 = vpack.c.b16 %v6883, %v6882
    %v6921 = vpack.c.b16 %v6885, %v6884
    %v6959 = vsel %vm40, %v6538, 0
    %v6962 = vsel %vm40, %v6543, 0
    %v6965 = vsel %vm40, %v6547, 0
    %v6968 = vsel %vm40, %v6551, 0
    %v6971 = vsel %vm40, %v6555, 0
    %v6974 = vsel %vm40, %v6559, 0
    %v6977 = vsel %vm40, %v6563, 0
    %v6980 = vsel %vm40, %v6567, 0
    %v6983 = vsel %vm40, %v6571, 0
    %v6986 = vsel %vm40, %v6575, 0
    %v6989 = vsel %vm40, %v6579, 0
    %v6992 = vsel %vm40, %v6583, 0
    %v6995 = vsel %vm40, %v6587, 0
    %v6998 = vsel %vm40, %v6591, 0
    %v7001 = vsel %vm40, %v6595, 0
    %v7004 = vsel %vm40, %v6599, 0
    %v7007 = vsel %vm40, %v6604, 0
    %v7010 = vsel %vm40, %v6609, 0
    %v7013 = vsel %vm40, %v6613, 0
    %v7016 = vsel %vm40, %v6617, 0
    %v7019 = vsel %vm40, %v6621, 0
    %v7022 = vsel %vm40, %v6625, 0
    %v7025 = vsel %vm40, %v6629, 0
    %v7028 = vsel %vm40, %v6633, 0
    %v7031 = vsel %vm40, %v6637, 0
    %v7034 = vsel %vm40, %v6641, 0
    %v7037 = vsel %vm40, %v6645, 0
    %v7040 = vsel %vm40, %v6649, 0
    %v7043 = vsel %vm40, %v6653, 0
    %v7046 = vsel %vm40, %v6657, 0
    %v7049 = vsel %vm40, %v6661, 0
    %v7052 = vsel %vm40, %v6665, 0
    %7054 = vmatpush.bf16.msra.mxu0 %v6893
    %7055 = vmatpush.bf16.msra.mxu0 %v6892
    %7056 = vmatpush.bf16.msra.mxu0 %v6891
    %7057 = vmatpush.bf16.msra.mxu0 %v6890
    %7058 = vmatpush.bf16.msra.mxu0 %v6889
    %7059 = vmatpush.bf16.msra.mxu0 %v6888
    %7060 = vmatpush.bf16.msra.mxu0 %v6887
    %7061 = vmatpush.bf16.msra.mxu0 %v6886
    %7062 = vmatmul.bf16.gmra.mxu0 %v6534
    %v7063 = vpop.f32.mrf.mxu0
    %v7064 = vadd.f32 %v6740, %v7063
    %v7065 = vpop.f32.mrf.mxu0
    %v7066 = vadd.f32 %v6740, %v7065
    %7067 = vmatmul.bf16.gmra.mxu0 %v6539
    %v7068 = vpop.f32.mrf.mxu0
    %v7069 = vadd.f32 %v6740, %v7068
    %v7070 = vpop.f32.mrf.mxu0
    %v7071 = vadd.f32 %v6740, %v7070
    %7072 = vmatmul.bf16.gmra.mxu0 %v6537
    %v7073 = vpop.f32.mrf.mxu0
    %v7074 = vadd.f32 %v6740, %v7073
    %v7075 = vpop.f32.mrf.mxu0
    %v7076 = vadd.f32 %v6740, %v7075
    %7077 = vmatmul.bf16.gmra.mxu0 %v6542
    %v7078 = vpop.f32.mrf.mxu0
    %v7079 = vadd.f32 %v6740, %v7078
    %v7080 = vpop.f32.mrf.mxu0
    %v7081 = vadd.f32 %v6740, %v7080
    %7082 = vmatmul.bf16.gmra.mxu0 %v6546
    %v7083 = vpop.f32.mrf.mxu0
    %v7084 = vadd.f32 %v6740, %v7083
    %v7085 = vpop.f32.mrf.mxu0
    %v7086 = vadd.f32 %v6740, %v7085
    %7087 = vmatmul.bf16.gmra.mxu0 %v6550
    %v7088 = vpop.f32.mrf.mxu0
    %v7089 = vadd.f32 %v6740, %v7088
    %v7090 = vpop.f32.mrf.mxu0
    %v7091 = vadd.f32 %v6740, %v7090
    %7092 = vmatmul.bf16.gmra.mxu0 %v6554
    %v7093 = vpop.f32.mrf.mxu0
    %v7094 = vadd.f32 %v6740, %v7093
    %v7095 = vpop.f32.mrf.mxu0
    %v7096 = vadd.f32 %v6740, %v7095
    %7097 = vmatmul.bf16.gmra.mxu0 %v6558
    %v7098 = vpop.f32.mrf.mxu0
    %v7099 = vadd.f32 %v6740, %v7098
    %v7100 = vpop.f32.mrf.mxu0
    %v7101 = vadd.f32 %v6740, %v7100
    %7102 = vmatmul.bf16.gmra.mxu0 %v6562
    %v7103 = vpop.f32.mrf.mxu0
    %v7104 = vadd.f32 %v6740, %v7103
    %v7105 = vpop.f32.mrf.mxu0
    %v7106 = vadd.f32 %v6740, %v7105
    %7107 = vmatmul.bf16.gmra.mxu0 %v6566
    %v7108 = vpop.f32.mrf.mxu0
    %v7109 = vadd.f32 %v6740, %v7108
    %v7110 = vpop.f32.mrf.mxu0
    %v7111 = vadd.f32 %v6740, %v7110
    %7112 = vmatmul.bf16.gmra.mxu0 %v6570
    %v7113 = vpop.f32.mrf.mxu0
    %v7114 = vadd.f32 %v6740, %v7113
    %v7115 = vpop.f32.mrf.mxu0
    %v7116 = vadd.f32 %v6740, %v7115
    %7117 = vmatmul.bf16.gmra.mxu0 %v6574
    %v7118 = vpop.f32.mrf.mxu0
    %v7119 = vadd.f32 %v6740, %v7118
    %v7120 = vpop.f32.mrf.mxu0
    %v7121 = vadd.f32 %v6740, %v7120
    %7122 = vmatmul.bf16.gmra.mxu0 %v6578
    %v7123 = vpop.f32.mrf.mxu0
    %v7124 = vadd.f32 %v6740, %v7123
    %v7125 = vpop.f32.mrf.mxu0
    %v7126 = vadd.f32 %v6740, %v7125
    %7127 = vmatmul.bf16.gmra.mxu0 %v6582
    %v7128 = vpop.f32.mrf.mxu0
    %v7129 = vadd.f32 %v6740, %v7128
    %v7130 = vpop.f32.mrf.mxu0
    %v7131 = vadd.f32 %v6740, %v7130
    %7132 = vmatmul.bf16.gmra.mxu0 %v6586
    %v7133 = vpop.f32.mrf.mxu0
    %v7134 = vadd.f32 %v6740, %v7133
    %v7135 = vpop.f32.mrf.mxu0
    %v7136 = vadd.f32 %v6740, %v7135
    %7137 = vmatmul.bf16.gmra.mxu0 %v6590
    %v7138 = vpop.f32.mrf.mxu0
    %v7139 = vadd.f32 %v6740, %v7138
    %v7140 = vpop.f32.mrf.mxu0
    %v7141 = vadd.f32 %v6740, %v7140
    %7142 = vmatmul.bf16.gmra.mxu0 %v6600
    %v7143 = vpop.f32.mrf.mxu0
    %v7144 = vadd.f32 %v6740, %v7143
    %v7145 = vpop.f32.mrf.mxu0
    %v7146 = vadd.f32 %v6740, %v7145
    %7147 = vmatmul.bf16.gmra.mxu0 %v6605
    %v7148 = vpop.f32.mrf.mxu0
    %v7149 = vadd.f32 %v6740, %v7148
    %v7150 = vpop.f32.mrf.mxu0
    %v7151 = vadd.f32 %v6740, %v7150
    %7152 = vmatmul.bf16.gmra.mxu0 %v6603
    %v7153 = vpop.f32.mrf.mxu0
    %v7154 = vadd.f32 %v6740, %v7153
    %v7155 = vpop.f32.mrf.mxu0
    %v7156 = vadd.f32 %v6740, %v7155
    %7157 = vmatmul.bf16.gmra.mxu0 %v6608
    %v7158 = vpop.f32.mrf.mxu0
    %v7159 = vadd.f32 %v6740, %v7158
    %v7160 = vpop.f32.mrf.mxu0
    %v7161 = vadd.f32 %v6740, %v7160
    %7162 = vmatmul.bf16.gmra.mxu0 %v6612
    %v7163 = vpop.f32.mrf.mxu0
    %v7164 = vadd.f32 %v6740, %v7163
    %v7165 = vpop.f32.mrf.mxu0
    %v7166 = vadd.f32 %v6740, %v7165
    %7167 = vmatmul.bf16.gmra.mxu0 %v6616
    %v7168 = vpop.f32.mrf.mxu0
    %v7169 = vadd.f32 %v6740, %v7168
    %v7170 = vpop.f32.mrf.mxu0
    %v7171 = vadd.f32 %v6740, %v7170
    %7172 = vmatmul.bf16.gmra.mxu0 %v6620
    %v7173 = vpop.f32.mrf.mxu0
    %v7174 = vadd.f32 %v6740, %v7173
    %v7175 = vpop.f32.mrf.mxu0
    %v7176 = vadd.f32 %v6740, %v7175
    %7177 = vmatmul.bf16.gmra.mxu0 %v6624
    %v7178 = vpop.f32.mrf.mxu0
    %v7179 = vadd.f32 %v6740, %v7178
    %v7180 = vpop.f32.mrf.mxu0
    %v7181 = vadd.f32 %v6740, %v7180
    %7182 = vmatmul.bf16.gmra.mxu0 %v6628
    %v7183 = vpop.f32.mrf.mxu0
    %v7184 = vadd.f32 %v6740, %v7183
    %v7185 = vpop.f32.mrf.mxu0
    %v7186 = vadd.f32 %v6740, %v7185
    %7187 = vmatmul.bf16.gmra.mxu0 %v6632
    %v7188 = vpop.f32.mrf.mxu0
    %v7189 = vadd.f32 %v6740, %v7188
    %v7190 = vpop.f32.mrf.mxu0
    %v7191 = vadd.f32 %v6740, %v7190
    %7192 = vmatmul.bf16.gmra.mxu0 %v6636
    %v7193 = vpop.f32.mrf.mxu0
    %v7194 = vadd.f32 %v6740, %v7193
    %v7195 = vpop.f32.mrf.mxu0
    %v7196 = vadd.f32 %v6740, %v7195
    %7197 = vmatmul.bf16.gmra.mxu0 %v6640
    %v7198 = vpop.f32.mrf.mxu0
    %v7199 = vadd.f32 %v6740, %v7198
    %v7200 = vpop.f32.mrf.mxu0
    %v7201 = vadd.f32 %v6740, %v7200
    %7202 = vmatmul.bf16.gmra.mxu0 %v6644
    %v7203 = vpop.f32.mrf.mxu0
    %v7204 = vadd.f32 %v6740, %v7203
    %v7205 = vpop.f32.mrf.mxu0
    %v7206 = vadd.f32 %v6740, %v7205
    %7207 = vmatmul.bf16.gmra.mxu0 %v6648
    %v7208 = vpop.f32.mrf.mxu0
    %v7209 = vadd.f32 %v6740, %v7208
    %v7210 = vpop.f32.mrf.mxu0
    %v7211 = vadd.f32 %v6740, %v7210
    %7212 = vmatmul.bf16.gmra.mxu0 %v6652
    %v7213 = vpop.f32.mrf.mxu0
    %v7214 = vadd.f32 %v6740, %v7213
    %v7215 = vpop.f32.mrf.mxu0
    %v7216 = vadd.f32 %v6740, %v7215
    %7217 = vmatmul.bf16.gmra.mxu0 %v6656
    %v7218 = vpop.f32.mrf.mxu0
    %v7219 = vadd.f32 %v6740, %v7218
    %v7220 = vpop.f32.mrf.mxu0
    %v7221 = vadd.f32 %v6740, %v7220
    %7222 = vdwg.mxu0
    %7223 = vmatpush.bf16.msra.mxu0 %v6901
    %7224 = vmatpush.bf16.msra.mxu0 %v6900
    %7225 = vmatpush.bf16.msra.mxu0 %v6899
    %7226 = vmatpush.bf16.msra.mxu0 %v6898
    %7227 = vmatpush.bf16.msra.mxu0 %v6897
    %7228 = vmatpush.bf16.msra.mxu0 %v6896
    %7229 = vmatpush.bf16.msra.mxu0 %v6895
    %7230 = vmatpush.bf16.msra.mxu0 %v6894
    %7231 = vmatmul.bf16.gmra.mxu0 %v6535
    %v7232 = vpop.f32.mrf.mxu0
    %v7233 = vadd.f32 %v7064, %v7232
    %v7234 = vpop.f32.mrf.mxu0
    %v7235 = vadd.f32 %v7066, %v7234
    %7236 = vmatmul.bf16.gmra.mxu0 %v6540
    %v7237 = vpop.f32.mrf.mxu0
    %v7238 = vadd.f32 %v7069, %v7237
    %v7239 = vpop.f32.mrf.mxu0
    %v7240 = vadd.f32 %v7071, %v7239
    %7241 = vmatmul.bf16.gmra.mxu0 %v6544
    %v7242 = vpop.f32.mrf.mxu0
    %v7243 = vadd.f32 %v7074, %v7242
    %v7244 = vpop.f32.mrf.mxu0
    %v7245 = vadd.f32 %v7076, %v7244
    %7246 = vmatmul.bf16.gmra.mxu0 %v6548
    %v7247 = vpop.f32.mrf.mxu0
    %v7248 = vadd.f32 %v7079, %v7247
    %v7249 = vpop.f32.mrf.mxu0
    %v7250 = vadd.f32 %v7081, %v7249
    %7251 = vmatmul.bf16.gmra.mxu0 %v6552
    %v7252 = vpop.f32.mrf.mxu0
    %v7253 = vadd.f32 %v7084, %v7252
    %v7254 = vpop.f32.mrf.mxu0
    %v7255 = vadd.f32 %v7086, %v7254
    %7256 = vmatmul.bf16.gmra.mxu0 %v6556
    %v7257 = vpop.f32.mrf.mxu0
    %v7258 = vadd.f32 %v7089, %v7257
    %v7259 = vpop.f32.mrf.mxu0
    %v7260 = vadd.f32 %v7091, %v7259
    %7261 = vmatmul.bf16.gmra.mxu0 %v6560
    %v7262 = vpop.f32.mrf.mxu0
    %v7263 = vadd.f32 %v7094, %v7262
    %v7264 = vpop.f32.mrf.mxu0
    %v7265 = vadd.f32 %v7096, %v7264
    %7266 = vmatmul.bf16.gmra.mxu0 %v6564
    %v7267 = vpop.f32.mrf.mxu0
    %v7268 = vadd.f32 %v7099, %v7267
    %v7269 = vpop.f32.mrf.mxu0
    %v7270 = vadd.f32 %v7101, %v7269
    %7271 = vmatmul.bf16.gmra.mxu0 %v6568
    %v7272 = vpop.f32.mrf.mxu0
    %v7273 = vadd.f32 %v7104, %v7272
    %v7274 = vpop.f32.mrf.mxu0
    %v7275 = vadd.f32 %v7106, %v7274
    %7276 = vmatmul.bf16.gmra.mxu0 %v6572
    %v7277 = vpop.f32.mrf.mxu0
    %v7278 = vadd.f32 %v7109, %v7277
    %v7279 = vpop.f32.mrf.mxu0
    %v7280 = vadd.f32 %v7111, %v7279
    %7281 = vmatmul.bf16.gmra.mxu0 %v6576
    %v7282 = vpop.f32.mrf.mxu0
    %v7283 = vadd.f32 %v7114, %v7282
    %v7284 = vpop.f32.mrf.mxu0
    %v7285 = vadd.f32 %v7116, %v7284
    %7286 = vmatmul.bf16.gmra.mxu0 %v6580
    %v7287 = vpop.f32.mrf.mxu0
    %v7288 = vadd.f32 %v7119, %v7287
    %v7289 = vpop.f32.mrf.mxu0
    %v7290 = vadd.f32 %v7121, %v7289
    %7291 = vmatmul.bf16.gmra.mxu0 %v6584
    %v7292 = vpop.f32.mrf.mxu0
    %v7293 = vadd.f32 %v7124, %v7292
    %v7294 = vpop.f32.mrf.mxu0
    %v7295 = vadd.f32 %v7126, %v7294
    %7296 = vmatmul.bf16.gmra.mxu0 %v6588
    %v7297 = vpop.f32.mrf.mxu0
    %v7298 = vadd.f32 %v7129, %v7297
    %v7299 = vpop.f32.mrf.mxu0
    %v7300 = vadd.f32 %v7131, %v7299
    %7301 = vmatmul.bf16.gmra.mxu0 %v6592
    %v7302 = vpop.f32.mrf.mxu0
    %v7303 = vadd.f32 %v7134, %v7302
    %v7304 = vpop.f32.mrf.mxu0
    %v7305 = vadd.f32 %v7136, %v7304
    %7306 = vmatmul.bf16.gmra.mxu0 %v6596
    %v7307 = vpop.f32.mrf.mxu0
    %v7308 = vadd.f32 %v7139, %v7307
    %v7309 = vpop.f32.mrf.mxu0
    %v7310 = vadd.f32 %v7141, %v7309
    %7311 = vmatmul.bf16.gmra.mxu0 %v6601
    %v7312 = vpop.f32.mrf.mxu0
    %v7313 = vadd.f32 %v7144, %v7312
    %v7314 = vpop.f32.mrf.mxu0
    %v7315 = vadd.f32 %v7146, %v7314
    %7316 = vmatmul.bf16.gmra.mxu0 %v6606
    %v7317 = vpop.f32.mrf.mxu0
    %v7318 = vadd.f32 %v7149, %v7317
    %v7319 = vpop.f32.mrf.mxu0
    %v7320 = vadd.f32 %v7151, %v7319
    %7321 = vmatmul.bf16.gmra.mxu0 %v6610
    %v7322 = vpop.f32.mrf.mxu0
    %v7323 = vadd.f32 %v7154, %v7322
    %v7324 = vpop.f32.mrf.mxu0
    %v7325 = vadd.f32 %v7156, %v7324
    %7326 = vmatmul.bf16.gmra.mxu0 %v6614
    %v7327 = vpop.f32.mrf.mxu0
    %v7328 = vadd.f32 %v7159, %v7327
    %v7329 = vpop.f32.mrf.mxu0
    %v7330 = vadd.f32 %v7161, %v7329
    %7331 = vmatmul.bf16.gmra.mxu0 %v6618
    %v7332 = vpop.f32.mrf.mxu0
    %v7333 = vadd.f32 %v7164, %v7332
    %v7334 = vpop.f32.mrf.mxu0
    %v7335 = vadd.f32 %v7166, %v7334
    %7336 = vmatmul.bf16.gmra.mxu0 %v6622
    %v7337 = vpop.f32.mrf.mxu0
    %v7338 = vadd.f32 %v7169, %v7337
    %v7339 = vpop.f32.mrf.mxu0
    %v7340 = vadd.f32 %v7171, %v7339
    %7341 = vmatmul.bf16.gmra.mxu0 %v6626
    %v7342 = vpop.f32.mrf.mxu0
    %v7343 = vadd.f32 %v7174, %v7342
    %v7344 = vpop.f32.mrf.mxu0
    %v7345 = vadd.f32 %v7176, %v7344
    %7346 = vmatmul.bf16.gmra.mxu0 %v6630
    %v7347 = vpop.f32.mrf.mxu0
    %v7348 = vadd.f32 %v7179, %v7347
    %v7349 = vpop.f32.mrf.mxu0
    %v7350 = vadd.f32 %v7181, %v7349
    %7351 = vmatmul.bf16.gmra.mxu0 %v6634
    %v7352 = vpop.f32.mrf.mxu0
    %v7353 = vadd.f32 %v7184, %v7352
    %v7354 = vpop.f32.mrf.mxu0
    %v7355 = vadd.f32 %v7186, %v7354
    %7356 = vmatmul.bf16.gmra.mxu0 %v6638
    %v7357 = vpop.f32.mrf.mxu0
    %v7358 = vadd.f32 %v7189, %v7357
    %v7359 = vpop.f32.mrf.mxu0
    %v7360 = vadd.f32 %v7191, %v7359
    %7361 = vmatmul.bf16.gmra.mxu0 %v6642
    %v7362 = vpop.f32.mrf.mxu0
    %v7363 = vadd.f32 %v7194, %v7362
    %v7364 = vpop.f32.mrf.mxu0
    %v7365 = vadd.f32 %v7196, %v7364
    %7366 = vmatmul.bf16.gmra.mxu0 %v6646
    %v7367 = vpop.f32.mrf.mxu0
    %v7368 = vadd.f32 %v7199, %v7367
    %v7369 = vpop.f32.mrf.mxu0
    %v7370 = vadd.f32 %v7201, %v7369
    %7371 = vmatmul.bf16.gmra.mxu0 %v6650
    %v7372 = vpop.f32.mrf.mxu0
    %v7373 = vadd.f32 %v7204, %v7372
    %v7374 = vpop.f32.mrf.mxu0
    %v7375 = vadd.f32 %v7206, %v7374
    %7376 = vmatmul.bf16.gmra.mxu0 %v6654
    %v7377 = vpop.f32.mrf.mxu0
    %v7378 = vadd.f32 %v7209, %v7377
    %v7379 = vpop.f32.mrf.mxu0
    %v7380 = vadd.f32 %v7211, %v7379
    %7381 = vmatmul.bf16.gmra.mxu0 %v6658
    %v7382 = vpop.f32.mrf.mxu0
    %v7383 = vadd.f32 %v7214, %v7382
    %v7384 = vpop.f32.mrf.mxu0
    %v7385 = vadd.f32 %v7216, %v7384
    %7386 = vmatmul.bf16.gmra.mxu0 %v6662
    %v7387 = vpop.f32.mrf.mxu0
    %v7388 = vadd.f32 %v7219, %v7387
    %v7389 = vpop.f32.mrf.mxu0
    %v7390 = vadd.f32 %v7221, %v7389
    %7391 = vdwg.mxu0
    %7392 = vmatpush.bf16.msra.mxu0 %v6909
    %7393 = vmatpush.bf16.msra.mxu0 %v6908
    %7394 = vmatpush.bf16.msra.mxu0 %v6907
    %7395 = vmatpush.bf16.msra.mxu0 %v6906
    %7396 = vmatpush.bf16.msra.mxu0 %v6905
    %7397 = vmatpush.bf16.msra.mxu0 %v6904
    %7398 = vmatpush.bf16.msra.mxu0 %v6903
    %7399 = vmatpush.bf16.msra.mxu0 %v6902
    %7400 = vmatmul.bf16.gmra.mxu0 %v6536
    %v7401 = vpop.f32.mrf.mxu0
    %v7402 = vadd.f32 %v7233, %v7401
    %v7403 = vpop.f32.mrf.mxu0
    %v7404 = vadd.f32 %v7235, %v7403
    %7405 = vmatmul.bf16.gmra.mxu0 %v6541
    %v7406 = vpop.f32.mrf.mxu0
    %v7407 = vadd.f32 %v7238, %v7406
    %v7408 = vpop.f32.mrf.mxu0
    %v7409 = vadd.f32 %v7240, %v7408
    %7410 = vmatmul.bf16.gmra.mxu0 %v6545
    %v7411 = vpop.f32.mrf.mxu0
    %v7412 = vadd.f32 %v7243, %v7411
    %v7413 = vpop.f32.mrf.mxu0
    %v7414 = vadd.f32 %v7245, %v7413
    %7415 = vmatmul.bf16.gmra.mxu0 %v6549
    %v7416 = vpop.f32.mrf.mxu0
    %v7417 = vadd.f32 %v7248, %v7416
    %v7418 = vpop.f32.mrf.mxu0
    %v7419 = vadd.f32 %v7250, %v7418
    %7420 = vmatmul.bf16.gmra.mxu0 %v6553
    %v7421 = vpop.f32.mrf.mxu0
    %v7422 = vadd.f32 %v7253, %v7421
    %v7423 = vpop.f32.mrf.mxu0
    %v7424 = vadd.f32 %v7255, %v7423
    %7425 = vmatmul.bf16.gmra.mxu0 %v6557
    %v7426 = vpop.f32.mrf.mxu0
    %v7427 = vadd.f32 %v7258, %v7426
    %v7428 = vpop.f32.mrf.mxu0
    %v7429 = vadd.f32 %v7260, %v7428
    %7430 = vmatmul.bf16.gmra.mxu0 %v6561
    %v7431 = vpop.f32.mrf.mxu0
    %v7432 = vadd.f32 %v7263, %v7431
    %v7433 = vpop.f32.mrf.mxu0
    %v7434 = vadd.f32 %v7265, %v7433
    %7435 = vmatmul.bf16.gmra.mxu0 %v6565
    %v7436 = vpop.f32.mrf.mxu0
    %v7437 = vadd.f32 %v7268, %v7436
    %v7438 = vpop.f32.mrf.mxu0
    %v7439 = vadd.f32 %v7270, %v7438
    %7440 = vmatmul.bf16.gmra.mxu0 %v6569
    %v7441 = vpop.f32.mrf.mxu0
    %v7442 = vadd.f32 %v7273, %v7441
    %v7443 = vpop.f32.mrf.mxu0
    %v7444 = vadd.f32 %v7275, %v7443
    %7445 = vmatmul.bf16.gmra.mxu0 %v6573
    %v7446 = vpop.f32.mrf.mxu0
    %v7447 = vadd.f32 %v7278, %v7446
    %v7448 = vpop.f32.mrf.mxu0
    %v7449 = vadd.f32 %v7280, %v7448
    %7450 = vmatmul.bf16.gmra.mxu0 %v6577
    %v7451 = vpop.f32.mrf.mxu0
    %v7452 = vadd.f32 %v7283, %v7451
    %v7453 = vpop.f32.mrf.mxu0
    %v7454 = vadd.f32 %v7285, %v7453
    %7455 = vmatmul.bf16.gmra.mxu0 %v6581
    %v7456 = vpop.f32.mrf.mxu0
    %v7457 = vadd.f32 %v7288, %v7456
    %v7458 = vpop.f32.mrf.mxu0
    %v7459 = vadd.f32 %v7290, %v7458
    %7460 = vmatmul.bf16.gmra.mxu0 %v6585
    %v7461 = vpop.f32.mrf.mxu0
    %v7462 = vadd.f32 %v7293, %v7461
    %v7463 = vpop.f32.mrf.mxu0
    %v7464 = vadd.f32 %v7295, %v7463
    %7465 = vmatmul.bf16.gmra.mxu0 %v6589
    %v7466 = vpop.f32.mrf.mxu0
    %v7467 = vadd.f32 %v7298, %v7466
    %v7468 = vpop.f32.mrf.mxu0
    %v7469 = vadd.f32 %v7300, %v7468
    %7470 = vmatmul.bf16.gmra.mxu0 %v6593
    %v7471 = vpop.f32.mrf.mxu0
    %v7472 = vadd.f32 %v7303, %v7471
    %v7473 = vpop.f32.mrf.mxu0
    %v7474 = vadd.f32 %v7305, %v7473
    %7475 = vmatmul.bf16.gmra.mxu0 %v6597
    %v7476 = vpop.f32.mrf.mxu0
    %v7477 = vadd.f32 %v7308, %v7476
    %v7478 = vpop.f32.mrf.mxu0
    %v7479 = vadd.f32 %v7310, %v7478
    %7480 = vmatmul.bf16.gmra.mxu0 %v6602
    %v7481 = vpop.f32.mrf.mxu0
    %v7482 = vadd.f32 %v7313, %v7481
    %v7483 = vpop.f32.mrf.mxu0
    %v7484 = vadd.f32 %v7315, %v7483
    %7485 = vmatmul.bf16.gmra.mxu0 %v6607
    %v7486 = vpop.f32.mrf.mxu0
    %v7487 = vadd.f32 %v7318, %v7486
    %v7488 = vpop.f32.mrf.mxu0
    %v7489 = vadd.f32 %v7320, %v7488
    %7490 = vmatmul.bf16.gmra.mxu0 %v6611
    %v7491 = vpop.f32.mrf.mxu0
    %v7492 = vadd.f32 %v7323, %v7491
    %v7493 = vpop.f32.mrf.mxu0
    %v7494 = vadd.f32 %v7325, %v7493
    %7495 = vmatmul.bf16.gmra.mxu0 %v6615
    %v7496 = vpop.f32.mrf.mxu0
    %v7497 = vadd.f32 %v7328, %v7496
    %v7498 = vpop.f32.mrf.mxu0
    %v7499 = vadd.f32 %v7330, %v7498
    %7500 = vmatmul.bf16.gmra.mxu0 %v6619
    %v7501 = vpop.f32.mrf.mxu0
    %v7502 = vadd.f32 %v7333, %v7501
    %v7503 = vpop.f32.mrf.mxu0
    %v7504 = vadd.f32 %v7335, %v7503
    %7505 = vmatmul.bf16.gmra.mxu0 %v6623
    %v7506 = vpop.f32.mrf.mxu0
    %v7507 = vadd.f32 %v7338, %v7506
    %v7508 = vpop.f32.mrf.mxu0
    %v7509 = vadd.f32 %v7340, %v7508
    %7510 = vmatmul.bf16.gmra.mxu0 %v6627
    %v7511 = vpop.f32.mrf.mxu0
    %v7512 = vadd.f32 %v7343, %v7511
    %v7513 = vpop.f32.mrf.mxu0
    %v7514 = vadd.f32 %v7345, %v7513
    %7515 = vmatmul.bf16.gmra.mxu0 %v6631
    %v7516 = vpop.f32.mrf.mxu0
    %v7517 = vadd.f32 %v7348, %v7516
    %v7518 = vpop.f32.mrf.mxu0
    %v7519 = vadd.f32 %v7350, %v7518
    %7520 = vmatmul.bf16.gmra.mxu0 %v6635
    %v7521 = vpop.f32.mrf.mxu0
    %v7522 = vadd.f32 %v7353, %v7521
    %v7523 = vpop.f32.mrf.mxu0
    %v7524 = vadd.f32 %v7355, %v7523
    %7525 = vmatmul.bf16.gmra.mxu0 %v6639
    %v7526 = vpop.f32.mrf.mxu0
    %v7527 = vadd.f32 %v7358, %v7526
    %v7528 = vpop.f32.mrf.mxu0
    %v7529 = vadd.f32 %v7360, %v7528
    %7530 = vmatmul.bf16.gmra.mxu0 %v6643
    %v7531 = vpop.f32.mrf.mxu0
    %v7532 = vadd.f32 %v7363, %v7531
    %v7533 = vpop.f32.mrf.mxu0
    %v7534 = vadd.f32 %v7365, %v7533
    %7535 = vmatmul.bf16.gmra.mxu0 %v6647
    %v7536 = vpop.f32.mrf.mxu0
    %v7537 = vadd.f32 %v7368, %v7536
    %v7538 = vpop.f32.mrf.mxu0
    %v7539 = vadd.f32 %v7370, %v7538
    %7540 = vmatmul.bf16.gmra.mxu0 %v6651
    %v7541 = vpop.f32.mrf.mxu0
    %v7542 = vadd.f32 %v7373, %v7541
    %v7543 = vpop.f32.mrf.mxu0
    %v7544 = vadd.f32 %v7375, %v7543
    %7545 = vmatmul.bf16.gmra.mxu0 %v6655
    %v7546 = vpop.f32.mrf.mxu0
    %v7547 = vadd.f32 %v7378, %v7546
    %v7548 = vpop.f32.mrf.mxu0
    %v7549 = vadd.f32 %v7380, %v7548
    %7550 = vmatmul.bf16.gmra.mxu0 %v6659
    %v7551 = vpop.f32.mrf.mxu0
    %v7552 = vadd.f32 %v7383, %v7551
    %v7553 = vpop.f32.mrf.mxu0
    %v7554 = vadd.f32 %v7385, %v7553
    %7555 = vmatmul.bf16.gmra.mxu0 %v6663
    %v7556 = vpop.f32.mrf.mxu0
    %v7557 = vadd.f32 %v7388, %v7556
    %v7558 = vpop.f32.mrf.mxu0
    %v7559 = vadd.f32 %v7390, %v7558
    %7560 = vdwg.mxu0
    %7561 = vmatpush.bf16.msra.mxu0 %v6917
    %7562 = vmatpush.bf16.msra.mxu0 %v6916
    %7563 = vmatpush.bf16.msra.mxu0 %v6915
    %7564 = vmatpush.bf16.msra.mxu0 %v6914
    %7565 = vmatpush.bf16.msra.mxu0 %v6913
    %7566 = vmatpush.bf16.msra.mxu0 %v6912
    %7567 = vmatpush.bf16.msra.mxu0 %v6911
    %7568 = vmatpush.bf16.msra.mxu0 %v6910
    %7569 = vmatmul.bf16.gmra.mxu0 %v6537
    %v7570 = vpop.f32.mrf.mxu0
    %v7571 = vadd.f32 %v7402, %v7570
    %v7572 = vpop.f32.mrf.mxu0
    %v7573 = vadd.f32 %v7404, %v7572
    %7574 = vmatmul.bf16.gmra.mxu0 %v6542
    %v7575 = vpop.f32.mrf.mxu0
    %v7576 = vadd.f32 %v7407, %v7575
    %v7577 = vpop.f32.mrf.mxu0
    %v7578 = vadd.f32 %v7409, %v7577
    %7579 = vmatmul.bf16.gmra.mxu0 %v6546
    %v7580 = vpop.f32.mrf.mxu0
    %v7581 = vadd.f32 %v7412, %v7580
    %v7582 = vpop.f32.mrf.mxu0
    %v7583 = vadd.f32 %v7414, %v7582
    %7584 = vmatmul.bf16.gmra.mxu0 %v6550
    %v7585 = vpop.f32.mrf.mxu0
    %v7586 = vadd.f32 %v7417, %v7585
    %v7587 = vpop.f32.mrf.mxu0
    %v7588 = vadd.f32 %v7419, %v7587
    %7589 = vmatmul.bf16.gmra.mxu0 %v6554
    %v7590 = vpop.f32.mrf.mxu0
    %v7591 = vadd.f32 %v7422, %v7590
    %v7592 = vpop.f32.mrf.mxu0
    %v7593 = vadd.f32 %v7424, %v7592
    %7594 = vmatmul.bf16.gmra.mxu0 %v6558
    %v7595 = vpop.f32.mrf.mxu0
    %v7596 = vadd.f32 %v7427, %v7595
    %v7597 = vpop.f32.mrf.mxu0
    %v7598 = vadd.f32 %v7429, %v7597
    %7599 = vmatmul.bf16.gmra.mxu0 %v6562
    %v7600 = vpop.f32.mrf.mxu0
    %v7601 = vadd.f32 %v7432, %v7600
    %v7602 = vpop.f32.mrf.mxu0
    %v7603 = vadd.f32 %v7434, %v7602
    %7604 = vmatmul.bf16.gmra.mxu0 %v6566
    %v7605 = vpop.f32.mrf.mxu0
    %v7606 = vadd.f32 %v7437, %v7605
    %v7607 = vpop.f32.mrf.mxu0
    %v7608 = vadd.f32 %v7439, %v7607
    %7609 = vmatmul.bf16.gmra.mxu0 %v6570
    %v7610 = vpop.f32.mrf.mxu0
    %v7611 = vadd.f32 %v7442, %v7610
    %v7612 = vpop.f32.mrf.mxu0
    %v7613 = vadd.f32 %v7444, %v7612
    %7614 = vmatmul.bf16.gmra.mxu0 %v6574
    %v7615 = vpop.f32.mrf.mxu0
    %v7616 = vadd.f32 %v7447, %v7615
    %v7617 = vpop.f32.mrf.mxu0
    %v7618 = vadd.f32 %v7449, %v7617
    %7619 = vmatmul.bf16.gmra.mxu0 %v6578
    %v7620 = vpop.f32.mrf.mxu0
    %v7621 = vadd.f32 %v7452, %v7620
    %v7622 = vpop.f32.mrf.mxu0
    %v7623 = vadd.f32 %v7454, %v7622
    %7624 = vmatmul.bf16.gmra.mxu0 %v6582
    %v7625 = vpop.f32.mrf.mxu0
    %v7626 = vadd.f32 %v7457, %v7625
    %v7627 = vpop.f32.mrf.mxu0
    %v7628 = vadd.f32 %v7459, %v7627
    %7629 = vmatmul.bf16.gmra.mxu0 %v6586
    %v7630 = vpop.f32.mrf.mxu0
    %v7631 = vadd.f32 %v7462, %v7630
    %v7632 = vpop.f32.mrf.mxu0
    %v7633 = vadd.f32 %v7464, %v7632
    %7634 = vmatmul.bf16.gmra.mxu0 %v6590
    %v7635 = vpop.f32.mrf.mxu0
    %v7636 = vadd.f32 %v7467, %v7635
    %v7637 = vpop.f32.mrf.mxu0
    %v7638 = vadd.f32 %v7469, %v7637
    %7639 = vmatmul.bf16.gmra.mxu0 %v6594
    %v7640 = vpop.f32.mrf.mxu0
    %v7641 = vadd.f32 %v7472, %v7640
    %v7642 = vpop.f32.mrf.mxu0
    %v7643 = vadd.f32 %v7474, %v7642
    %7644 = vmatmul.bf16.gmra.mxu0 %v6598
    %v7645 = vpop.f32.mrf.mxu0
    %v7646 = vadd.f32 %v7477, %v7645
    %v7647 = vpop.f32.mrf.mxu0
    %v7648 = vadd.f32 %v7479, %v7647
    %7649 = vmatmul.bf16.gmra.mxu0 %v6603
    %v7650 = vpop.f32.mrf.mxu0
    %v7651 = vadd.f32 %v7482, %v7650
    %v7652 = vpop.f32.mrf.mxu0
    %v7653 = vadd.f32 %v7484, %v7652
    %7654 = vmatmul.bf16.gmra.mxu0 %v6608
    %v7655 = vpop.f32.mrf.mxu0
    %v7656 = vadd.f32 %v7487, %v7655
    %v7657 = vpop.f32.mrf.mxu0
    %v7658 = vadd.f32 %v7489, %v7657
    %7659 = vmatmul.bf16.gmra.mxu0 %v6612
    %v7660 = vpop.f32.mrf.mxu0
    %v7661 = vadd.f32 %v7492, %v7660
    %v7662 = vpop.f32.mrf.mxu0
    %v7663 = vadd.f32 %v7494, %v7662
    %7664 = vmatmul.bf16.gmra.mxu0 %v6616
    %v7665 = vpop.f32.mrf.mxu0
    %v7666 = vadd.f32 %v7497, %v7665
    %v7667 = vpop.f32.mrf.mxu0
    %v7668 = vadd.f32 %v7499, %v7667
    %7669 = vmatmul.bf16.gmra.mxu0 %v6620
    %v7670 = vpop.f32.mrf.mxu0
    %v7671 = vadd.f32 %v7502, %v7670
    %v7672 = vpop.f32.mrf.mxu0
    %v7673 = vadd.f32 %v7504, %v7672
    %7674 = vmatmul.bf16.gmra.mxu0 %v6624
    %v7675 = vpop.f32.mrf.mxu0
    %v7676 = vadd.f32 %v7507, %v7675
    %v7677 = vpop.f32.mrf.mxu0
    %v7678 = vadd.f32 %v7509, %v7677
    %7679 = vmatmul.bf16.gmra.mxu0 %v6628
    %v7680 = vpop.f32.mrf.mxu0
    %v7681 = vadd.f32 %v7512, %v7680
    %v7682 = vpop.f32.mrf.mxu0
    %v7683 = vadd.f32 %v7514, %v7682
    %7684 = vmatmul.bf16.gmra.mxu0 %v6632
    %v7685 = vpop.f32.mrf.mxu0
    %v7686 = vadd.f32 %v7517, %v7685
    %v7687 = vpop.f32.mrf.mxu0
    %v7688 = vadd.f32 %v7519, %v7687
    %7689 = vmatmul.bf16.gmra.mxu0 %v6636
    %v7690 = vpop.f32.mrf.mxu0
    %v7691 = vadd.f32 %v7522, %v7690
    %v7692 = vpop.f32.mrf.mxu0
    %v7693 = vadd.f32 %v7524, %v7692
    %7694 = vmatmul.bf16.gmra.mxu0 %v6640
    %v7695 = vpop.f32.mrf.mxu0
    %v7696 = vadd.f32 %v7527, %v7695
    %v7697 = vpop.f32.mrf.mxu0
    %v7698 = vadd.f32 %v7529, %v7697
    %7699 = vmatmul.bf16.gmra.mxu0 %v6644
    %v7700 = vpop.f32.mrf.mxu0
    %v7701 = vadd.f32 %v7532, %v7700
    %v7702 = vpop.f32.mrf.mxu0
    %v7703 = vadd.f32 %v7534, %v7702
    %7704 = vmatmul.bf16.gmra.mxu0 %v6648
    %v7705 = vpop.f32.mrf.mxu0
    %v7706 = vadd.f32 %v7537, %v7705
    %v7707 = vpop.f32.mrf.mxu0
    %v7708 = vadd.f32 %v7539, %v7707
    %7709 = vmatmul.bf16.gmra.mxu0 %v6652
    %v7710 = vpop.f32.mrf.mxu0
    %v7711 = vadd.f32 %v7542, %v7710
    %v7712 = vpop.f32.mrf.mxu0
    %v7713 = vadd.f32 %v7544, %v7712
    %7714 = vmatmul.bf16.gmra.mxu0 %v6656
    %v7715 = vpop.f32.mrf.mxu0
    %v7716 = vadd.f32 %v7547, %v7715
    %v7717 = vpop.f32.mrf.mxu0
    %v7718 = vadd.f32 %v7549, %v7717
    %7719 = vmatmul.bf16.gmra.mxu0 %v6660
    %v7720 = vpop.f32.mrf.mxu0
    %v7721 = vadd.f32 %v7552, %v7720
    %v7722 = vpop.f32.mrf.mxu0
    %v7723 = vadd.f32 %v7554, %v7722
    %7724 = vmatmul.bf16.gmra.mxu0 %v6664
    %v7725 = vpop.f32.mrf.mxu0
    %v7726 = vadd.f32 %v7557, %v7725
    %v7727 = vpop.f32.mrf.mxu0
    %v7728 = vadd.f32 %v7559, %v7727
    %7729 = vdwg.mxu0
    %7730 = vmatpush.bf16.msra.mxu0 0
    %7731 = vmatpush.bf16.msra.mxu0 0
    %7732 = vmatpush.bf16.msra.mxu0 0
    %7733 = vmatpush.bf16.msra.mxu0 0
    %7734 = vmatpush.bf16.msra.mxu0 %v6921
    %7735 = vmatpush.bf16.msra.mxu0 %v6920
    %7736 = vmatpush.bf16.msra.mxu0 %v6919
    %7737 = vmatpush.bf16.msra.mxu0 %v6918
    %7738 = vmatmul.bf16.gmra.mxu0 %v6959
    %v7739 = vpop.f32.mrf.mxu0
    %v7740 = vadd.f32 %v7571, %v7739
    %v7741 = vpop.f32.mrf.mxu0
    %v7742 = vadd.f32 %v7573, %v7741
    %7743 = vmatmul.bf16.gmra.mxu0 %v6962
    %v7744 = vpop.f32.mrf.mxu0
    %v7745 = vadd.f32 %v7576, %v7744
    %v7746 = vpop.f32.mrf.mxu0
    %v7747 = vadd.f32 %v7578, %v7746
    %7748 = vmatmul.bf16.gmra.mxu0 %v6965
    %v7749 = vpop.f32.mrf.mxu0
    %v7750 = vadd.f32 %v7581, %v7749
    %v7751 = vpop.f32.mrf.mxu0
    %v7752 = vadd.f32 %v7583, %v7751
    %7753 = vmatmul.bf16.gmra.mxu0 %v6968
    %v7754 = vpop.f32.mrf.mxu0
    %v7755 = vadd.f32 %v7586, %v7754
    %v7756 = vpop.f32.mrf.mxu0
    %v7757 = vadd.f32 %v7588, %v7756
    %7758 = vmatmul.bf16.gmra.mxu0 %v6971
    %v7759 = vpop.f32.mrf.mxu0
    %v7760 = vadd.f32 %v7591, %v7759
    %v7761 = vpop.f32.mrf.mxu0
    %v7762 = vadd.f32 %v7593, %v7761
    %7763 = vmatmul.bf16.gmra.mxu0 %v6974
    %v7764 = vpop.f32.mrf.mxu0
    %v7765 = vadd.f32 %v7596, %v7764
    %v7766 = vpop.f32.mrf.mxu0
    %v7767 = vadd.f32 %v7598, %v7766
    %7768 = vmatmul.bf16.gmra.mxu0 %v6977
    %v7769 = vpop.f32.mrf.mxu0
    %v7770 = vadd.f32 %v7601, %v7769
    %v7771 = vpop.f32.mrf.mxu0
    %v7772 = vadd.f32 %v7603, %v7771
    %7773 = vmatmul.bf16.gmra.mxu0 %v6980
    %v7774 = vpop.f32.mrf.mxu0
    %v7775 = vadd.f32 %v7606, %v7774
    %v7776 = vpop.f32.mrf.mxu0
    %v7777 = vadd.f32 %v7608, %v7776
    %7778 = vmatmul.bf16.gmra.mxu0 %v6983
    %v7779 = vpop.f32.mrf.mxu0
    %v7780 = vadd.f32 %v7611, %v7779
    %v7781 = vpop.f32.mrf.mxu0
    %v7782 = vadd.f32 %v7613, %v7781
    %7783 = vmatmul.bf16.gmra.mxu0 %v6986
    %v7784 = vpop.f32.mrf.mxu0
    %v7785 = vadd.f32 %v7616, %v7784
    %v7786 = vpop.f32.mrf.mxu0
    %v7787 = vadd.f32 %v7618, %v7786
    %7788 = vmatmul.bf16.gmra.mxu0 %v6989
    %v7789 = vpop.f32.mrf.mxu0
    %v7790 = vadd.f32 %v7621, %v7789
    %v7791 = vpop.f32.mrf.mxu0
    %v7792 = vadd.f32 %v7623, %v7791
    %7793 = vmatmul.bf16.gmra.mxu0 %v6992
    %v7794 = vpop.f32.mrf.mxu0
    %v7795 = vadd.f32 %v7626, %v7794
    %v7796 = vpop.f32.mrf.mxu0
    %v7797 = vadd.f32 %v7628, %v7796
    %7798 = vmatmul.bf16.gmra.mxu0 %v6995
    %v7799 = vpop.f32.mrf.mxu0
    %v7800 = vadd.f32 %v7631, %v7799
    %v7801 = vpop.f32.mrf.mxu0
    %v7802 = vadd.f32 %v7633, %v7801
    %7803 = vmatmul.bf16.gmra.mxu0 %v6998
    %v7804 = vpop.f32.mrf.mxu0
    %v7805 = vadd.f32 %v7636, %v7804
    %v7806 = vpop.f32.mrf.mxu0
    %v7807 = vadd.f32 %v7638, %v7806
    %7808 = vmatmul.bf16.gmra.mxu0 %v7001
    %v7809 = vpop.f32.mrf.mxu0
    %v7810 = vadd.f32 %v7641, %v7809
    %v7811 = vpop.f32.mrf.mxu0
    %v7812 = vadd.f32 %v7643, %v7811
    %7813 = vmatmul.bf16.gmra.mxu0 %v7004
    %v7814 = vpop.f32.mrf.mxu0
    %v7815 = vadd.f32 %v7646, %v7814
    %v7816 = vpop.f32.mrf.mxu0
    %v7817 = vadd.f32 %v7648, %v7816
    %7818 = vmatmul.bf16.gmra.mxu0 %v7007
    %v7819 = vpop.f32.mrf.mxu0
    %v7820 = vadd.f32 %v7651, %v7819
    %v7821 = vpop.f32.mrf.mxu0
    %v7822 = vadd.f32 %v7653, %v7821
    %7823 = vmatmul.bf16.gmra.mxu0 %v7010
    %v7824 = vpop.f32.mrf.mxu0
    %v7825 = vadd.f32 %v7656, %v7824
    %v7826 = vpop.f32.mrf.mxu0
    %v7827 = vadd.f32 %v7658, %v7826
    %7828 = vmatmul.bf16.gmra.mxu0 %v7013
    %v7829 = vpop.f32.mrf.mxu0
    %v7830 = vadd.f32 %v7661, %v7829
    %v7831 = vpop.f32.mrf.mxu0
    %v7832 = vadd.f32 %v7663, %v7831
    %7833 = vmatmul.bf16.gmra.mxu0 %v7016
    %v7834 = vpop.f32.mrf.mxu0
    %v7835 = vadd.f32 %v7666, %v7834
    %v7836 = vpop.f32.mrf.mxu0
    %v7837 = vadd.f32 %v7668, %v7836
    %7838 = vmatmul.bf16.gmra.mxu0 %v7019
    %v7839 = vpop.f32.mrf.mxu0
    %v7840 = vadd.f32 %v7671, %v7839
    %v7841 = vpop.f32.mrf.mxu0
    %v7842 = vadd.f32 %v7673, %v7841
    %7843 = vmatmul.bf16.gmra.mxu0 %v7022
    %v7844 = vpop.f32.mrf.mxu0
    %v7845 = vadd.f32 %v7676, %v7844
    %v7846 = vpop.f32.mrf.mxu0
    %v7847 = vadd.f32 %v7678, %v7846
    %7848 = vmatmul.bf16.gmra.mxu0 %v7025
    %v7849 = vpop.f32.mrf.mxu0
    %v7850 = vadd.f32 %v7681, %v7849
    %v7851 = vpop.f32.mrf.mxu0
    %v7852 = vadd.f32 %v7683, %v7851
    %7853 = vmatmul.bf16.gmra.mxu0 %v7028
    %v7854 = vpop.f32.mrf.mxu0
    %v7855 = vadd.f32 %v7686, %v7854
    %v7856 = vpop.f32.mrf.mxu0
    %v7857 = vadd.f32 %v7688, %v7856
    %7858 = vmatmul.bf16.gmra.mxu0 %v7031
    %v7859 = vpop.f32.mrf.mxu0
    %v7860 = vadd.f32 %v7691, %v7859
    %v7861 = vpop.f32.mrf.mxu0
    %v7862 = vadd.f32 %v7693, %v7861
    %7863 = vmatmul.bf16.gmra.mxu0 %v7034
    %v7864 = vpop.f32.mrf.mxu0
    %v7865 = vadd.f32 %v7696, %v7864
    %v7866 = vpop.f32.mrf.mxu0
    %v7867 = vadd.f32 %v7698, %v7866
    %7868 = vmatmul.bf16.gmra.mxu0 %v7037
    %v7869 = vpop.f32.mrf.mxu0
    %v7870 = vadd.f32 %v7701, %v7869
    %v7871 = vpop.f32.mrf.mxu0
    %v7872 = vadd.f32 %v7703, %v7871
    %7873 = vmatmul.bf16.gmra.mxu0 %v7040
    %v7874 = vpop.f32.mrf.mxu0
    %v7875 = vadd.f32 %v7706, %v7874
    %v7876 = vpop.f32.mrf.mxu0
    %v7877 = vadd.f32 %v7708, %v7876
    %7878 = vmatmul.bf16.gmra.mxu0 %v7043
    %v7879 = vpop.f32.mrf.mxu0
    %v7880 = vadd.f32 %v7711, %v7879
    %v7881 = vpop.f32.mrf.mxu0
    %v7882 = vadd.f32 %v7713, %v7881
    %7883 = vmatmul.bf16.gmra.mxu0 %v7046
    %v7884 = vpop.f32.mrf.mxu0
    %v7885 = vadd.f32 %v7716, %v7884
    %v7886 = vpop.f32.mrf.mxu0
    %v7887 = vadd.f32 %v7718, %v7886
    %7888 = vmatmul.bf16.gmra.mxu0 %v7049
    %v7889 = vpop.f32.mrf.mxu0
    %v7890 = vadd.f32 %v7721, %v7889
    %v7891 = vpop.f32.mrf.mxu0
    %v7892 = vadd.f32 %v7723, %v7891
    %7893 = vmatmul.bf16.gmra.mxu0 %v7052
    %v7894 = vpop.f32.mrf.mxu0
    %v7895 = vadd.f32 %v7726, %v7894
    %v7896 = vpop.f32.mrf.mxu0
    %v7897 = vadd.f32 %v7728, %v7896
    %7898 = vdwg.mxu0
    %7899 = vst [vmem:[#allocation3] sm:$0xff] %v7740
    %7900 = vst [vmem:[#allocation3 + $0x8] sm:$0xff] %v7742
    %7901 = vst [vmem:[#allocation3 + $0x10] sm:$0xff] %v7745
    %7902 = vst [vmem:[#allocation3 + $0x18] sm:$0xff] %v7747
    %7903 = vst [vmem:[#allocation3 + $0x20] sm:$0xff] %v7750
    %7904 = vst [vmem:[#allocation3 + $0x28] sm:$0xff] %v7752
    %7905 = vst [vmem:[#allocation3 + $0x30] sm:$0xff] %v7755
    %7906 = vst [vmem:[#allocation3 + $0x38] sm:$0xff] %v7757
    %7907 = vst [vmem:[#allocation3 + $0x40] sm:$0xff] %v7760
    %7908 = vst [vmem:[#allocation3 + $0x48] sm:$0xff] %v7762
    %7909 = vst [vmem:[#allocation3 + $0x50] sm:$0xff] %v7765
    %7910 = vst [vmem:[#allocation3 + $0x58] sm:$0xff] %v7767
    %7911 = vst [vmem:[#allocation3 + $0x60] sm:$0xff] %v7770
    %7912 = vst [vmem:[#allocation3 + $0x68] sm:$0xff] %v7772
    %7913 = vst [vmem:[#allocation3 + $0x70] sm:$0xff] %v7775
    %7914 = vst [vmem:[#allocation3 + $0x78] sm:$0xff] %v7777
    %7915 = vst [vmem:[#allocation3 + $0x80] sm:$0xff] %v7780
    %7916 = vst [vmem:[#allocation3 + $0x88] sm:$0xff] %v7782
    %7917 = vst [vmem:[#allocation3 + $0x90] sm:$0xff] %v7785
    %7918 = vst [vmem:[#allocation3 + $0x98] sm:$0xff] %v7787
    %7919 = vst [vmem:[#allocation3 + $0xa0] sm:$0xff] %v7790
    %7920 = vst [vmem:[#allocation3 + $0xa8] sm:$0xff] %v7792
    %7921 = vst [vmem:[#allocation3 + $0xb0] sm:$0xff] %v7795
    %7922 = vst [vmem:[#allocation3 + $0xb8] sm:$0xff] %v7797
    %7923 = vst [vmem:[#allocation3 + $0xc0] sm:$0xff] %v7800
    %7924 = vst [vmem:[#allocation3 + $0xc8] sm:$0xff] %v7802
    %7925 = vst [vmem:[#allocation3 + $0xd0] sm:$0xff] %v7805
    %7926 = vst [vmem:[#allocation3 + $0xd8] sm:$0xff] %v7807
    %7927 = vst [vmem:[#allocation3 + $0xe0] sm:$0xff] %v7810
    %7928 = vst [vmem:[#allocation3 + $0xe8] sm:$0xff] %v7812
    %7929 = vst [vmem:[#allocation3 + $0xf0] sm:$0xff] %v7815
    %7930 = vst [vmem:[#allocation3 + $0xf8] sm:$0xff] %v7817
    %7931 = vst [vmem:[#allocation3 + $0x100] sm:$0xff] %v7820
    %7932 = vst [vmem:[#allocation3 + $0x108] sm:$0xff] %v7822
    %7933 = vst [vmem:[#allocation3 + $0x110] sm:$0xff] %v7825
    %7934 = vst [vmem:[#allocation3 + $0x118] sm:$0xff] %v7827
    %7935 = vst [vmem:[#allocation3 + $0x120] sm:$0xff] %v7830
    %7936 = vst [vmem:[#allocation3 + $0x128] sm:$0xff] %v7832
    %7937 = vst [vmem:[#allocation3 + $0x130] sm:$0xff] %v7835
    %7938 = vst [vmem:[#allocation3 + $0x138] sm:$0xff] %v7837
    %7939 = vst [vmem:[#allocation3 + $0x140] sm:$0xff] %v7840
    %7940 = vst [vmem:[#allocation3 + $0x148] sm:$0xff] %v7842
    %7941 = vst [vmem:[#allocation3 + $0x150] sm:$0xff] %v7845
    %7942 = vst [vmem:[#allocation3 + $0x158] sm:$0xff] %v7847
    %7943 = vst [vmem:[#allocation3 + $0x160] sm:$0xff] %v7850
    %7944 = vst [vmem:[#allocation3 + $0x168] sm:$0xff] %v7852
    %7945 = vst [vmem:[#allocation3 + $0x170] sm:$0xff] %v7855
    %7946 = vst [vmem:[#allocation3 + $0x178] sm:$0xff] %v7857
    %7947 = vst [vmem:[#allocation3 + $0x180] sm:$0xff] %v7860
    %7948 = vst [vmem:[#allocation3 + $0x188] sm:$0xff] %v7862
    %7949 = vst [vmem:[#allocation3 + $0x190] sm:$0xff] %v7865
    %7950 = vst [vmem:[#allocation3 + $0x198] sm:$0xff] %v7867
    %7951 = vst [vmem:[#allocation3 + $0x1a0] sm:$0xff] %v7870
    %7952 = vst [vmem:[#allocation3 + $0x1a8] sm:$0xff] %v7872
    %7953 = vst [vmem:[#allocation3 + $0x1b0] sm:$0xff] %v7875
    %7954 = vst [vmem:[#allocation3 + $0x1b8] sm:$0xff] %v7877
    %7955 = vst [vmem:[#allocation3 + $0x1c0] sm:$0xff] %v7880
    %7956 = vst [vmem:[#allocation3 + $0x1c8] sm:$0xff] %v7882
    %7957 = vst [vmem:[#allocation3 + $0x1d0] sm:$0xff] %v7885
    %7958 = vst [vmem:[#allocation3 + $0x1d8] sm:$0xff] %v7887
    %7959 = vst [vmem:[#allocation3 + $0x1e0] sm:$0xff] %v7890
    %7960 = vst [vmem:[#allocation3 + $0x1e8] sm:$0xff] %v7892
    %7961 = vst [vmem:[#allocation3 + $0x1f0] sm:$0xff] %v7895
    %7962 = vst [vmem:[#allocation3 + $0x1f8] sm:$0xff] %v7897
    // Predicated region
    $region46: #{tpu_custom_call.1} parent=1 // pred_check
      _
    $region47: #{tpu_custom_call.1} parent=1 // pred_check_branch
      %7964 = sbr.rel (0) target = $region49
    $region48: #{tpu_custom_call.1} parent=1 // pred_region
      %7966 = vsyncadd [#allocation4], 0
      %s7967 = sshll.u32 [#allocation3], 4
      %s7968 = int_to_ptr.vmem [resolvable:$true] %s7967
      %s7969 = sshll.u32 %s11, 4
      %s7970 = int_to_ptr.hbm [resolvable:$true] %s7969
      %7975 = dma.vmem_to_hbm [thread:$0]  %s7968, 8192, %s7970, [#allocation4], 128, 128, 8
    $region49: #{tpu_custom_call.1} parent=1 // pred_fallthru
      _
    // Predicated region
    $region50: #{tpu_custom_call.1} parent=1 // pred_check
      _
    $region51: #{tpu_custom_call.1} parent=1 // pred_check_branch
      %7977 = sbr.rel (0) target = $region53
    $region52: #{tpu_custom_call.1} parent=1 // pred_region
      %7979 = dma.done [#allocation4], 8192
    $region53: #{tpu_custom_call.1} parent=1 // pred_fallthru
      _
    %7980 = vsyncpa [#allocation4], 1

</llo_original>
